<compile_context>
chip_gen: v5e
topology: v5e:2x2
jax: 0.10.0
libtpu: 0.0.40
codegen_flags: <defaults>
</compile_context>

<pallas_src>
import functools

import jax
import jax.numpy as jnp
from jax.experimental import pallas as pl
from jax.experimental.pallas import tpu as pltpu

BN_EPS = 1e-5
_LANE = 128


def _round_up(n, m):
    return ((n + m - 1) // m) * m


def _pick_rows(nh, wh, target_rows):
    """Row-tile = d*wh with the largest divisor d of nh s.t. d*wh <= target."""
    best = 1
    for d in range(1, nh + 1):
        if nh % d == 0 and d * wh <= target_rows:
            best = d
    return best * wh


_VMEM_LIMIT_CACHE = []


def _vmem_limit():
    if not _VMEM_LIMIT_CACHE:
        try:
            cap = int(pltpu.get_tpu_info().vmem_capacity_bytes)
            lim = min(100 * 1024 * 1024, int(cap * 0.7))   # ~45MiB on v7x, ~90MiB on v5e/v6e
        except Exception:
            lim = 64 * 1024 * 1024
        _VMEM_LIMIT_CACHE.append(lim)
    return _VMEM_LIMIT_CACHE[0]


def _cp(semantics):
    return pltpu.CompilerParams(dimension_semantics=semantics,
                                vmem_limit_bytes=_vmem_limit())


# ----------------------------- Pallas kernels --------------------------------
def _conv1_stats_kernel(x_ref, w_ref, st_ref):
    """Per-tile BN partials of y = x @ w (zero-padded rows contribute 0)."""
    y = jnp.dot(x_ref[...], w_ref[...], preferred_element_type=jnp.float32)
    s = jnp.sum(y, axis=0, keepdims=True)
    ss = jnp.sum(y * y, axis=0, keepdims=True)
    st_ref[...] = jnp.concatenate([s, ss], axis=0)[None]


def _conv1norm_conv2_kernel(xs_ref, w1_ref, sc1_ref, sh1_ref, w2_ref, mask_ref,
                            y2_ref, st_ref, hp_buf, *, H, Wh, dil, P):
    """Per image: conv1(1x1)+BN1+ReLU, assemble halo image in VMEM scratch,
    3x3 conv as 3 contiguous slab matmuls (kx-wide weights), emit pre-BN y2
    (bf16) and BN2 partial stats."""
    R = H * Wh
    dW = dil * Wh
    Rs = R + 8

    # conv1 + BN1 + ReLU on all R padded rows of this image; mask padded cols.
    h1 = jnp.dot(xs_ref[...], w1_ref[...], preferred_element_type=jnp.float32)
    h1 = jnp.maximum(h1 * sc1_ref[...] + sh1_ref[...], 0.0)
    h1 = h1 * mask_ref[...]

    # Halo-padded image (column offset = dil) lives in persistent scratch;
    # zero halos are rewritten every step (cheap, megacore-safe).
    hp_buf[0:dW + dil, :] = jnp.zeros((dW + dil, P), jnp.bfloat16)
    hp_buf[dW + R:dW + R + dW + 8, :] = jnp.zeros((dW + 8, P), jnp.bfloat16)
    hp_buf[dW + dil:dW + R, :] = h1[:R - dil, :].astype(jnp.bfloat16)

    # 3x3 conv: three aligned row-slab matmuls against (P, 3P) weights.
    acc = jnp.zeros((Rs, 3 * P), jnp.float32)
    for ky in range(3):
        slab = hp_buf[ky * dW:ky * dW + Rs, :]
        acc = acc + jnp.dot(slab, w2_ref[ky], preferred_element_type=jnp.float32)
    y2 = (acc[0:R, 0:P]
          + acc[dil:dil + R, P:2 * P]
          + acc[2 * dil:2 * dil + R, 2 * P:3 * P])

    y2m = y2 * mask_ref[...]
    s = jnp.sum(y2m, axis=0, keepdims=True)
    ss = jnp.sum(y2m * y2m, axis=0, keepdims=True)
    st_ref[...] = jnp.concatenate([s, ss], axis=0)[None]
    y2_ref[...] = y2.astype(jnp.bfloat16)


def _bn2relu_conv3stats_kernel(y2_ref, sc_ref, sh_ref, w3_ref, mask_ref,
                               h2_ref, st_ref):
    """BN2 + ReLU (pure VPU) on the stored y2 tile, fused with conv3's
    BN3-stats matmul while h2 is still in VMEM."""
    h = y2_ref[...].astype(jnp.float32)
    h = jnp.maximum(h * sc_ref[...] + sh_ref[...], 0.0)
    h = h * mask_ref[...]                       # zero padded columns -> exact stats
    hb = h.astype(jnp.bfloat16)
    h2_ref[...] = hb
    y3 = jnp.dot(hb, w3_ref[...], preferred_element_type=jnp.float32)
    s = jnp.sum(y3, axis=0, keepdims=True)
    ss = jnp.sum(y3 * y3, axis=0, keepdims=True)
    st_ref[...] = jnp.concatenate([s, ss], axis=0)[None]


def _conv3_norm_res_kernel(h2_ref, w3_ref, sc_ref, sh_ref, r_ref, o_ref):
    """out = relu((h2 @ w3) * scale + shift + residual) with bf16 residual."""
    y = jnp.dot(h2_ref[...], w3_ref[...], preferred_element_type=jnp.float32)
    y = y * sc_ref[...] + sh_ref[...] + r_ref[...].astype(jnp.float32)
    o_ref[...] = jnp.maximum(y, 0.0).astype(o_ref.dtype)


# ----------------------------- pallas_call wrappers ---------------------------
def conv1_stats(xs, w1, tm):
    NR, cin = xs.shape
    p = w1.shape[1]
    nt = NR // tm
    return pl.pallas_call(
        _conv1_stats_kernel,
        out_shape=jax.ShapeDtypeStruct((nt, 2, p), jnp.float32),
        grid=(nt,),
        in_specs=[pl.BlockSpec((tm, cin), lambda i: (i, 0)),
                  pl.BlockSpec((cin, p), lambda i: (0, 0))],
        out_specs=pl.BlockSpec((1, 2, p), lambda i: (i, 0, 0)),
        compiler_params=_cp(("parallel",)),
    )(xs, w1)


def conv1norm_conv2(xs, w1, sc1, sh1, w2, mask_r, *, N, H, W, Wh, dil):
    del W
    cin = xs.shape[1]
    p = w1.shape[1]
    R = H * Wh
    dW = dil * Wh
    hp_rows = R + 2 * dW + 8
    kernel = functools.partial(_conv1norm_conv2_kernel, H=H, Wh=Wh, dil=dil, P=p)
    # TODO(synk): add a second grid axis over row tiles (with halo blocks) so
    # v7x's two TensorCores both work when N is 1-2 and very large H*W fits VMEM.
    return pl.pallas_call(
        kernel,
        out_shape=(jax.ShapeDtypeStruct((N * R, p), jnp.bfloat16),
                   jax.ShapeDtypeStruct((N, 2, p), jnp.float32)),
        grid=(N,),
        in_specs=[pl.BlockSpec((R, cin), lambda n: (n, 0)),
                  pl.BlockSpec((cin, p), lambda n: (0, 0)),
                  pl.BlockSpec((1, p), lambda n: (0, 0)),
                  pl.BlockSpec((1, p), lambda n: (0, 0)),
                  pl.BlockSpec((3, p, 3 * p), lambda n: (0, 0, 0)),
                  pl.BlockSpec((R, 1), lambda n: (0, 0))],
        out_specs=[pl.BlockSpec((R, p), lambda n: (n, 0)),
                   pl.BlockSpec((1, 2, p), lambda n: (n, 0, 0))],
        scratch_shapes=[pltpu.VMEM((hp_rows, p), jnp.bfloat16)],
        compiler_params=_cp(("parallel",)),
    )(xs, w1, sc1, sh1, w2, mask_r)


def bn2relu_conv3stats(y2, sc2, sh2, w3, mask_t, tm):
    NR, p = y2.shape
    cout = w3.shape[1]
    nt = NR // tm
    return pl.pallas_call(
        _bn2relu_conv3stats_kernel,
        out_shape=(jax.ShapeDtypeStruct((NR, p), jnp.bfloat16),
                   jax.ShapeDtypeStruct((nt, 2, cout), jnp.float32)),
        grid=(nt,),
        in_specs=[pl.BlockSpec((tm, p), lambda i: (i, 0)),
                  pl.BlockSpec((1, p), lambda i: (0, 0)),
                  pl.BlockSpec((1, p), lambda i: (0, 0)),
                  pl.BlockSpec((p, cout), lambda i: (0, 0)),
                  pl.BlockSpec((tm, 1), lambda i: (0, 0))],
        out_specs=[pl.BlockSpec((tm, p), lambda i: (i, 0)),
                   pl.BlockSpec((1, 2, cout), lambda i: (i, 0, 0))],
        compiler_params=_cp(("parallel",)),
    )(y2, sc2, sh2, w3, mask_t)


def conv3_norm_res(h2, w3, sc3, sh3, res, tm):
    NR, p = h2.shape
    cout = w3.shape[1]
    nt = NR // tm
    return pl.pallas_call(
        _conv3_norm_res_kernel,
        out_shape=jax.ShapeDtypeStruct((NR, cout), jnp.float32),
        grid=(nt,),
        in_specs=[pl.BlockSpec((tm, p), lambda i: (i, 0)),
                  pl.BlockSpec((p, cout), lambda i: (0, 0)),
                  pl.BlockSpec((1, cout), lambda i: (0, 0)),
                  pl.BlockSpec((1, cout), lambda i: (0, 0)),
                  pl.BlockSpec((tm, cout), lambda i: (i, 0))],
        out_specs=pl.BlockSpec((tm, cout), lambda i: (i, 0)),
        compiler_params=_cp(("parallel",)),
    )(h2, w3, sc3, sh3, res)


# ----------------------------- glue (tiny jnp ops) ----------------------------
def _fold_bn(partials, gamma, beta, tile_count, total_count):
    """Merge per-tile (sum, sumsq) with the parallel-variance formula and fold
    training-mode BatchNorm (biased var, eps) into per-channel scale/shift."""
    s = partials[:, 0, :]
    ss = partials[:, 1, :]
    c = float(tile_count)
    n = float(total_count)
    mean_t = s / c
    m2_t = jnp.maximum(ss - s * mean_t, 0.0)
    mean = jnp.sum(s, axis=0) / n
    m2 = jnp.sum(m2_t, axis=0) + c * jnp.sum((mean_t - mean) ** 2, axis=0)
    var = jnp.maximum(m2 / n, 0.0)
    scale = gamma * jax.lax.rsqrt(var + BN_EPS)
    shift = beta - mean * scale
    return scale.reshape(1, -1), shift.reshape(1, -1)


def prepare_params(params):
    """One-time weight prep: (in,out) layout, kx-wide 3x3 weights, zero-pad
    channels to 128-lane multiples, bf16 matmul operands."""
    P = params["w1"].shape[0]
    Cin = params["w1"].shape[1]
    Cout = params["w3"].shape[0]
    Cin_p, P_p, Cout_p = (_round_up(c, _LANE) for c in (Cin, P, Cout))

    w1 = jnp.pad(params["w1"][:, :, 0, 0].T, ((0, Cin_p - Cin), (0, P_p - P)))
    # OIHW -> (ky, in, kx, out), pad channels, -> (3, P_p, 3*P_p)
    w2 = jnp.transpose(params["w2"], (2, 1, 3, 0))
    w2 = jnp.pad(w2, ((0, 0), (0, P_p - P), (0, 0), (0, P_p - P)))
    w2 = w2.reshape(3, P_p, 3 * P_p)
    w3 = jnp.pad(params["w3"][:, :, 0, 0].T, ((0, P_p - P), (0, Cout_p - Cout)))

    def padv(v, n):
        return jnp.pad(v.astype(jnp.float32), (0, n - v.shape[0]))

    return {
        "w1": w1.astype(jnp.bfloat16),
        "w2": w2.astype(jnp.bfloat16),
        "w3": w3.astype(jnp.bfloat16),
        "g1": padv(params["g1"], P_p), "b1": padv(params["b1"], P_p),
        "g2": padv(params["g2"], P_p), "b2": padv(params["b2"], P_p),
        "g3": padv(params["g3"], Cout_p), "b3": padv(params["b3"], Cout_p),
        "dims": (Cin, P, Cout, Cin_p, P_p, Cout_p),
    }


def bottleneck_forward(x_nchw, pp, stride=1, dilation=1, row_target=1024):
    Cin, P, Cout, Cin_p, P_p, Cout_p = pp["dims"]
    assert stride == 1, "downsample=None (identity residual) requires stride == 1"
    assert 1 <= dilation <= 4
    N, C_in, H, W = x_nchw.shape
    assert C_in == Cin and Cin == Cout, "downsample=None requires inplanes == planes*4"

    dil = dilation
    Wh = _round_up(W + 2 * dil, 8)      # working width incl. halo, multiple of 8
    R = H * Wh                          # flat rows per image in the padded layout
    NR = N * R
    M = N * H * W                       # true BatchNorm element count

    # NCHW -> NHWC, zero-pad channels->Cin_p and width->Wh, flatten, cast bf16.
    # TODO(synk): in a full network keep activations in this channels-last padded
    # layout across blocks so the transpose/pad is not paid once per block.
    x = jnp.transpose(x_nchw, (0, 2, 3, 1))
    x = jnp.pad(x, ((0, 0), (0, 0), (0, Wh - W), (0, Cin_p - Cin)))
    xs = x.reshape(NR, Cin_p).astype(jnp.bfloat16)

    tm = _pick_rows(N * H, Wh, row_target)          # row tile, multiple of Wh
    valid_per_tile = (tm // Wh) * W
    col_r = jnp.arange(R, dtype=jnp.int32) % Wh
    mask_r = (col_r < W).astype(jnp.float32).reshape(R, 1)
    col_t = jnp.arange(tm, dtype=jnp.int32) % Wh
    mask_t = (col_t < W).astype(jnp.float32).reshape(tm, 1)

    # pass 1: BN1 batch statistics from the 1x1 conv (zero rows contribute 0).
    st1 = conv1_stats(xs, pp["w1"], tm)
    sc1, sh1 = _fold_bn(st1, pp["g1"], pp["b1"], valid_per_tile, M)

    # pass 2: conv1+BN1+ReLU fused with conv2(3x3) -- h1 and its halo never hit
    # HBM; emits pre-BN y2 (bf16) and BN2 partial stats.
    y2, st2 = conv1norm_conv2(xs, pp["w1"], sc1, sh1, pp["w2"], mask_r,
                              N=N, H=H, W=W, Wh=Wh, dil=dil)
    sc2, sh2 = _fold_bn(st2, pp["g2"], pp["b2"], H * W, M)

    # pass 3: BN2+ReLU (VPU only) fused with conv3's BN3-stats matmul.
    h2, st3 = bn2relu_conv3stats(y2, sc2, sh2, pp["w3"], mask_t, tm)
    sc3, sh3 = _fold_bn(st3, pp["g3"], pp["b3"], valid_per_tile, M)

    # pass 4: conv3 + BN3 + identity residual (bf16) + ReLU.
    out = conv3_norm_res(h2, pp["w3"], sc3, sh3, xs, tm)

    out = out.reshape(N, H, Wh, Cout_p)[:, :, :W, :Cout]
    return jnp.transpose(out, (0, 3, 1, 2))


# ----------------------- pure-JAX reference for sanity ------------------------
def reference_forward(x, params, dilation=1):
    def bn(y, g, b):
        mean = y.mean(axis=(0, 2, 3), keepdims=True)
        var = ((y - mean) ** 2).mean(axis=(0, 2, 3), keepdims=True)
        return (y - mean) / jnp.sqrt(var + BN_EPS) * g.reshape(1, -1, 1, 1) + b.reshape(1, -1, 1, 1)

    def conv(x_, w, d, p):
        return jax.lax.conv_general_dilated(
            x_, w, (1, 1), [(p, p), (p, p)], rhs_dilation=(d, d),
            dimension_numbers=("NCHW", "OIHW", "NCHW"),
            precision=jax.lax.Precision.HIGHEST)

    out = jax.nn.relu(bn(conv(x, params["w1"], 1, 0), params["g1"], params["b1"]))
    out = jax.nn.relu(bn(conv(out, params["w2"], dilation, dilation), params["g2"], params["b2"]))
    out = bn(conv(out, params["w3"], 1, 0), params["g3"], params["b3"])
    return jax.nn.relu(out + x)


if __name__ == "__main__":
    # Small shapes consistent with the module: planes=4, inplanes=planes*4=16.
    N, planes, Hs, Ws = 2, 4, 16, 16
    inplanes = planes * 4  # Bottleneck.expansion = 4, downsample=None

    key = jax.random.PRNGKey(0)
    ks = jax.random.split(key, 10)
    params = {
        "w1": 0.1 * jax.random.normal(ks[0], (planes, inplanes, 1, 1), jnp.float32),
        "w2": 0.1 * jax.random.normal(ks[1], (planes, planes, 3, 3), jnp.float32),
        "w3": 0.1 * jax.random.normal(ks[2], (planes * 4, planes, 1, 1), jnp.float32),
        "g1": 1.0 + 0.1 * jax.random.normal(ks[3], (planes,), jnp.float32),
        "b1": 0.1 * jax.random.normal(ks[4], (planes,), jnp.float32),
        "g2": 1.0 + 0.1 * jax.random.normal(ks[5], (planes,), jnp.float32),
        "b2": 0.1 * jax.random.normal(ks[6], (planes,), jnp.float32),
        "g3": 1.0 + 0.1 * jax.random.normal(ks[7], (planes * 4,), jnp.float32),
        "b3": 0.1 * jax.random.normal(ks[8], (planes * 4,), jnp.float32),
    }
    x = jax.random.normal(ks[9], (N, inplanes, Hs, Ws), jnp.float32)

    prepped = prepare_params(params)
    # row_target=256 -> 4 row tiles here, exercising the cross-tile two-pass BN;
    # real ResNet shapes would use the 1024-row default.
    fwd = jax.jit(functools.partial(bottleneck_forward, pp=prepped,
                                    stride=1, dilation=1, row_target=256))
    out = jax.block_until_ready(fwd(x))

    ref = jax.block_until_ready(reference_forward(x, params, dilation=1))
    assert out.shape == (N, inplanes, Hs, Ws)
    err = float(jnp.abs(out - ref).max())
    # bf16 MXU operands, bf16 stored intermediates and bf16 residual (f32
    # accumulation everywhere) -> documented, slightly looser tolerance.
    assert jnp.allclose(out, ref, atol=8e-2, rtol=8e-2), f"max abs err {err}"

    # TODO(synk): torch.utils.checkpoint (with_cp) is a training-time recompute
    # detail with no forward-semantics effect; downsample is an external module
    # (None here), so the identity residual path is used.
    print("KERNEL_OK")
</pallas_src>

<mosaic_0001>
module attributes {stable_mosaic.version = 11 : i64} {
  func.func @_conv1_stats_kernel(%arg0: i32, %arg1: memref<192x128xbf16, #tpu.memory_space<vmem>>, %arg2: memref<128x128xbf16, #tpu.memory_space<vmem>>, %arg3: memref<1x2x128xf32, #tpu.memory_space<vmem>>) attributes {dimension_semantics = [#tpu.dimension_semantics<parallel>], iteration_bounds = array<i64: 4>, scalar_prefetch = 0 : i64, scratch_operands = 0 : i64, tpu.core_type = #tpu.core_type<tc>, window_params = [{transform_indices = @transform_0, window_bounds = array<i64: 192, 128>}, {pipeline_mode = #tpu.pipeline_mode<synchronous>, transform_indices = @transform_1, window_bounds = array<i64: 128, 128>}, {transform_indices = @transform_2, window_bounds = array<i64: 1, 2, 128>}]} {
    %c0 = arith.constant 0 : index
    %c0_0 = arith.constant 0 : index
    %0 = vector.load %arg1[%c0, %c0_0] : memref<192x128xbf16, #tpu.memory_space<vmem>>, vector<192x128xbf16>
    %c0_1 = arith.constant 0 : index
    %c0_2 = arith.constant 0 : index
    %1 = vector.load %arg2[%c0_1, %c0_2] : memref<128x128xbf16, #tpu.memory_space<vmem>>, vector<128x128xbf16>
    %cst = arith.constant dense<0.000000e+00> : vector<192x128xf32>
    %2 = tpu.matmul %0, %1, %cst {dimension_numbers = #tpu.dot_dimension_numbers<[1], [0], [0], [1], [0, 0, 1, 1], [], []>} : vector<192x128xbf16>, vector<128x128xbf16>, vector<192x128xf32> -> vector<192x128xf32>
    %cst_3 = arith.constant dense<0.000000e+00> : vector<128xf32>
    %3 = vector.multi_reduction <add>, %2, %cst_3 [0] : vector<192x128xf32> to vector<128xf32>
    %4 = vector.shape_cast %3 : vector<128xf32> to vector<1x128xf32>
    %5 = arith.mulf %2, %2 : vector<192x128xf32>
    %cst_4 = arith.constant dense<0.000000e+00> : vector<128xf32>
    %6 = vector.multi_reduction <add>, %5, %cst_4 [0] : vector<192x128xf32> to vector<128xf32>
    %7 = vector.shape_cast %6 : vector<128xf32> to vector<1x128xf32>
    %8 = tpu.concatenate %4, %7 in 0 : vector<1x128xf32>, vector<1x128xf32> -> vector<2x128xf32>
    %9 = vector.shape_cast %8 : vector<2x128xf32> to vector<1x2x128xf32>
    %c0_5 = arith.constant 0 : index
    %c0_6 = arith.constant 0 : index
    %c0_7 = arith.constant 0 : index
    %10 = vector.load %arg3[%c0_5, %c0_6, %c0_7] : memref<1x2x128xf32, #tpu.memory_space<vmem>>, vector<1x2x128xf32>
    tpu.vector_store %arg3[%c0_5, %c0_6, %c0_7], %9 {strides = array<i32>} : memref<1x2x128xf32, #tpu.memory_space<vmem>>, vector<1x2x128xf32>,
    return
  }
  func.func @transform_0(%arg0: i32) -> (i32, i32) {
    %c0_i32 = arith.constant 0 : i32
    %c0_i32_0 = arith.constant 0 : i32
    return %arg0, %c0_i32 : i32, i32
  }
  func.func @transform_1(%arg0: i32) -> (i32, i32) {
    %c0_i32 = arith.constant 0 : i32
    %c0_i32_0 = arith.constant 0 : i32
    %c0_i32_1 = arith.constant 0 : i32
    return %c0_i32, %c0_i32_0 : i32, i32
  }
  func.func @transform_2(%arg0: i32) -> (i32, i32, i32) {
    %c0_i32 = arith.constant 0 : i32
    %c0_i32_0 = arith.constant 0 : i32
    %c0_i32_1 = arith.constant 0 : i32
    return %arg0, %c0_i32, %c0_i32_0 : i32, i32, i32
  }
}

module attributes {stable_mosaic.version = 11 : i64} {
  func.func @_conv1norm_conv2_kernel(%arg0: i32, %arg1: memref<384x128xbf16, #tpu.memory_space<vmem>>, %arg2: memref<128x128xbf16, #tpu.memory_space<vmem>>, %arg3: memref<1x128xf32, #tpu.memory_space<vmem>>, %arg4: memref<1x128xf32, #tpu.memory_space<vmem>>, %arg5: memref<3x128x384xbf16, #tpu.memory_space<vmem>>, %arg6: memref<384x1xf32, #tpu.memory_space<vmem>>, %arg7: memref<384x128xbf16, #tpu.memory_space<vmem>>, %arg8: memref<1x2x128xf32, #tpu.memory_space<vmem>>, %arg9: memref<440x128xbf16, #tpu.memory_space<vmem>>) attributes {dimension_semantics = [#tpu.dimension_semantics<parallel>], iteration_bounds = array<i64: 2>, scalar_prefetch = 0 : i64, scratch_operands = 1 : i64, tpu.core_type = #tpu.core_type<tc>, window_params = [{transform_indices = @transform_0, window_bounds = array<i64: 384, 128>}, {pipeline_mode = #tpu.pipeline_mode<synchronous>, transform_indices = @transform_1, window_bounds = array<i64: 128, 128>}, {pipeline_mode = #tpu.pipeline_mode<synchronous>, transform_indices = @transform_2, window_bounds = array<i64: 1, 128>}, {pipeline_mode = #tpu.pipeline_mode<synchronous>, transform_indices = @transform_3, window_bounds = array<i64: 1, 128>}, {pipeline_mode = #tpu.pipeline_mode<synchronous>, transform_indices = @transform_4, window_bounds = array<i64: 3, 128, 384>}, {pipeline_mode = #tpu.pipeline_mode<synchronous>, transform_indices = @transform_5, window_bounds = array<i64: 384, 1>}, {transform_indices = @transform_6, window_bounds = array<i64: 384, 128>}, {transform_indices = @transform_7, window_bounds = array<i64: 1, 2, 128>}]} {
    %c0 = arith.constant 0 : index
    %c0_0 = arith.constant 0 : index
    %0 = vector.load %arg1[%c0, %c0_0] : memref<384x128xbf16, #tpu.memory_space<vmem>>, vector<384x128xbf16>
    %c0_1 = arith.constant 0 : index
    %c0_2 = arith.constant 0 : index
    %1 = vector.load %arg2[%c0_1, %c0_2] : memref<128x128xbf16, #tpu.memory_space<vmem>>, vector<128x128xbf16>
    %cst = arith.constant dense<0.000000e+00> : vector<384x128xf32>
    %2 = tpu.matmul %0, %1, %cst {dimension_numbers = #tpu.dot_dimension_numbers<[1], [0], [0], [1], [0, 0, 1, 1], [], []>} : vector<384x128xbf16>, vector<128x128xbf16>, vector<384x128xf32> -> vector<384x128xf32>
    %c0_3 = arith.constant 0 : index
    %c0_4 = arith.constant 0 : index
    %3 = vector.load %arg3[%c0_3, %c0_4] : memref<1x128xf32, #tpu.memory_space<vmem>>, vector<1x128xf32>
    %4 = vector.broadcast %3 : vector<1x128xf32> to vector<384x128xf32>
    %5 = arith.mulf %2, %4 : vector<384x128xf32>
    %c0_5 = arith.constant 0 : index
    %c0_6 = arith.constant 0 : index
    %6 = vector.load %arg4[%c0_5, %c0_6] : memref<1x128xf32, #tpu.memory_space<vmem>>, vector<1x128xf32>
    %7 = vector.broadcast %6 : vector<1x128xf32> to vector<384x128xf32>
    %8 = arith.addf %5, %7 : vector<384x128xf32>
    %cst_7 = arith.constant 0.000000e+00 : f32
    %9 = vector.broadcast %cst_7 : f32 to vector<384x128xf32>
    %10 = arith.maximumf %8, %9 : vector<384x128xf32>
    %c0_8 = arith.constant 0 : index
    %c0_9 = arith.constant 0 : index
    %11 = vector.load %arg6[%c0_8, %c0_9] : memref<384x1xf32, #tpu.memory_space<vmem>>, vector<384x1xf32>
    %12 = vector.broadcast %11 : vector<384x1xf32> to vector<384x128xf32>
    %13 = arith.mulf %10, %12 : vector<384x128xf32>
    %cst_10 = arith.constant 0.000000e+00 : bf16
    %14 = vector.broadcast %cst_10 : bf16 to vector<25x128xbf16>
    %c0_11 = arith.constant 0 : index
    %c0_12 = arith.constant 0 : index
    %15 = vector.load %arg9[%c0_11, %c0_12] : memref<440x128xbf16, #tpu.memory_space<vmem>>, vector<25x128xbf16>
    tpu.vector_store %arg9[%c0_11, %c0_12], %14 {strides = array<i32>} : memref<440x128xbf16, #tpu.memory_space<vmem>>, vector<25x128xbf16>,
    %cst_13 = arith.constant 0.000000e+00 : bf16
    %16 = vector.broadcast %cst_13 : bf16 to vector<32x128xbf16>
    %c408 = arith.constant 408 : index
    %c0_14 = arith.constant 0 : index
    %17 = vector.load %arg9[%c408, %c0_14] : memref<440x128xbf16, #tpu.memory_space<vmem>>, vector<32x128xbf16>
    tpu.vector_store %arg9[%c408, %c0_14], %16 {strides = array<i32>} : memref<440x128xbf16, #tpu.memory_space<vmem>>, vector<32x128xbf16>,
    %18 = vector.extract_strided_slice %13 {offsets = [0, 0], sizes = [383, 128], strides = [1, 1]} : vector<384x128xf32> to vector<383x128xf32>
    %19 = arith.truncf %18 : vector<383x128xf32> to vector<383x128xbf16>
    %c25 = arith.constant 25 : index
    %c0_15 = arith.constant 0 : index
    %20 = vector.load %arg9[%c25, %c0_15] : memref<440x128xbf16, #tpu.memory_space<vmem>>, vector<383x128xbf16>
    tpu.vector_store %arg9[%c25, %c0_15], %19 {strides = array<i32>} : memref<440x128xbf16, #tpu.memory_space<vmem>>, vector<383x128xbf16>,
    %cst_16 = arith.constant 0.000000e+00 : f32
    %21 = vector.broadcast %cst_16 : f32 to vector<392x384xf32>
    %c0_17 = arith.constant 0 : index
    %c0_18 = arith.constant 0 : index
    %22 = vector.load %arg9[%c0_17, %c0_18] : memref<440x128xbf16, #tpu.memory_space<vmem>>, vector<392x128xbf16>
    %c0_19 = arith.constant 0 : index
    %c0_20 = arith.constant 0 : index
    %c0_21 = arith.constant 0 : index
    %23 = vector.load %arg5[%c0_19, %c0_20, %c0_21] : memref<3x128x384xbf16, #tpu.memory_space<vmem>>, vector<1x128x384xbf16>
    %24 = vector.shape_cast %23 : vector<1x128x384xbf16> to vector<128x384xbf16>
    %cst_22 = arith.constant dense<0.000000e+00> : vector<392x384xf32>
    %25 = tpu.matmul %22, %24, %cst_22 {dimension_numbers = #tpu.dot_dimension_numbers<[1], [0], [0], [1], [0, 0, 1, 1], [], []>} : vector<392x128xbf16>, vector<128x384xbf16>, vector<392x384xf32> -> vector<392x384xf32>
    %26 = arith.addf %21, %25 : vector<392x384xf32>
    %c24 = arith.constant 24 : index
    %c0_23 = arith.constant 0 : index
    %27 = vector.load %arg9[%c24, %c0_23] : memref<440x128xbf16, #tpu.memory_space<vmem>>, vector<392x128xbf16>
    %c1 = arith.constant 1 : index
    %c0_24 = arith.constant 0 : index
    %c0_25 = arith.constant 0 : index
    %28 = vector.load %arg5[%c1, %c0_24, %c0_25] : memref<3x128x384xbf16, #tpu.memory_space<vmem>>, vector<1x128x384xbf16>
    %29 = vector.shape_cast %28 : vector<1x128x384xbf16> to vector<128x384xbf16>
    %cst_26 = arith.constant dense<0.000000e+00> : vector<392x384xf32>
    %30 = tpu.matmul %27, %29, %cst_26 {dimension_numbers = #tpu.dot_dimension_numbers<[1], [0], [0], [1], [0, 0, 1, 1], [], []>} : vector<392x128xbf16>, vector<128x384xbf16>, vector<392x384xf32> -> vector<392x384xf32>
    %31 = arith.addf %26, %30 : vector<392x384xf32>
    %c48 = arith.constant 48 : index
    %c0_27 = arith.constant 0 : index
    %32 = vector.load %arg9[%c48, %c0_27] : memref<440x128xbf16, #tpu.memory_space<vmem>>, vector<392x128xbf16>
    %c2 = arith.constant 2 : index
    %c0_28 = arith.constant 0 : index
    %c0_29 = arith.constant 0 : index
    %33 = vector.load %arg5[%c2, %c0_28, %c0_29] : memref<3x128x384xbf16, #tpu.memory_space<vmem>>, vector<1x128x384xbf16>
    %34 = vector.shape_cast %33 : vector<1x128x384xbf16> to vector<128x384xbf16>
    %cst_30 = arith.constant dense<0.000000e+00> : vector<392x384xf32>
    %35 = tpu.matmul %32, %34, %cst_30 {dimension_numbers = #tpu.dot_dimension_numbers<[1], [0], [0], [1], [0, 0, 1, 1], [], []>} : vector<392x128xbf16>, vector<128x384xbf16>, vector<392x384xf32> -> vector<392x384xf32>
    %36 = arith.addf %31, %35 : vector<392x384xf32>
    %37 = vector.extract_strided_slice %36 {offsets = [0, 0], sizes = [384, 128], strides = [1, 1]} : vector<392x384xf32> to vector<384x128xf32>
    %38 = vector.extract_strided_slice %36 {offsets = [1, 128], sizes = [384, 128], strides = [1, 1]} : vector<392x384xf32> to vector<384x128xf32>
    %39 = arith.addf %37, %38 : vector<384x128xf32>
    %40 = vector.extract_strided_slice %36 {offsets = [2, 256], sizes = [384, 128], strides = [1, 1]} : vector<392x384xf32> to vector<384x128xf32>
    %41 = arith.addf %39, %40 : vector<384x128xf32>
    %c0_31 = arith.constant 0 : index
    %c0_32 = arith.constant 0 : index
    %42 = vector.load %arg6[%c0_31, %c0_32] : memref<384x1xf32, #tpu.memory_space<vmem>>, vector<384x1xf32>
    %43 = vector.broadcast %42 : vector<384x1xf32> to vector<384x128xf32>
    %44 = arith.mulf %41, %43 : vector<384x128xf32>
    %cst_33 = arith.constant dense<0.000000e+00> : vector<128xf32>
    %45 = vector.multi_reduction <add>, %44, %cst_33 [0] : vector<384x128xf32> to vector<128xf32>
    %46 = vector.shape_cast %45 : vector<128xf32> to vector<1x128xf32>
    %47 = arith.mulf %44, %44 : vector<384x128xf32>
    %cst_34 = arith.constant dense<0.000000e+00> : vector<128xf32>
    %48 = vector.multi_reduction <add>, %47, %cst_34 [0] : vector<384x128xf32> to vector<128xf32>
    %49 = vector.shape_cast %48 : vector<128xf32> to vector<1x128xf32>
    %50 = tpu.concatenate %46, %49 in 0 : vector<1x128xf32>, vector<1x128xf32> -> vector<2x128xf32>
    %51 = vector.shape_cast %50 : vector<2x128xf32> to vector<1x2x128xf32>
    %c0_35 = arith.constant 0 : index
    %c0_36 = arith.constant 0 : index
    %c0_37 = arith.constant 0 : index
    %52 = vector.load %arg8[%c0_35, %c0_36, %c0_37] : memref<1x2x128xf32, #tpu.memory_space<vmem>>, vector<1x2x128xf32>
    tpu.vector_store %arg8[%c0_35, %c0_36, %c0_37], %51 {strides = array<i32>} : memref<1x2x128xf32, #tpu.memory_space<vmem>>, vector<1x2x128xf32>,
    %53 = arith.truncf %41 : vector<384x128xf32> to vector<384x128xbf16>
    %c0_38 = arith.constant 0 : index
    %c0_39 = arith.constant 0 : index
    %54 = vector.load %arg7[%c0_38, %c0_39] : memref<384x128xbf16, #tpu.memory_space<vmem>>, vector<384x128xbf16>
    tpu.vector_store %arg7[%c0_38, %c0_39], %53 {strides = array<i32>} : memref<384x128xbf16, #tpu.memory_space<vmem>>, vector<384x128xbf16>,
    return
  }
  func.func @transform_0(%arg0: i32) -> (i32, i32) {
    %c0_i32 = arith.constant 0 : i32
    %c0_i32_0 = arith.constant 0 : i32
    return %arg0, %c0_i32 : i32, i32
  }
  func.func @transform_1(%arg0: i32) -> (i32, i32) {
    %c0_i32 = arith.constant 0 : i32
    %c0_i32_0 = arith.constant 0 : i32
    %c0_i32_1 = arith.constant 0 : i32
    return %c0_i32, %c0_i32_0 : i32, i32
  }
  func.func @transform_2(%arg0: i32) -> (i32, i32) {
    %c0_i32 = arith.constant 0 : i32
    %c0_i32_0 = arith.constant 0 : i32
    %c0_i32_1 = arith.constant 0 : i32
    return %c0_i32, %c0_i32_0 : i32, i32
  }
  func.func @transform_3(%arg0: i32) -> (i32, i32) {
    %c0_i32 = arith.constant 0 : i32
    %c0_i32_0 = arith.constant 0 : i32
    %c0_i32_1 = arith.constant 0 : i32
    return %c0_i32, %c0_i32_0 : i32, i32
  }
  func.func @transform_4(%arg0: i32) -> (i32, i32, i32) {
    %c0_i32 = arith.constant 0 : i32
    %c0_i32_0 = arith.constant 0 : i32
    %c0_i32_1 = arith.constant 0 : i32
    %c0_i32_2 = arith.constant 0 : i32
    return %c0_i32, %c0_i32_0, %c0_i32_1 : i32, i32, i32
  }
  func.func @transform_5(%arg0: i32) -> (i32, i32) {
    %c0_i32 = arith.constant 0 : i32
    %c0_i32_0 = arith.constant 0 : i32
    %c0_i32_1 = arith.constant 0 : i32
    return %c0_i32, %c0_i32_0 : i32, i32
  }
  func.func @transform_6(%arg0: i32) -> (i32, i32) {
    %c0_i32 = arith.constant 0 : i32
    %c0_i32_0 = arith.constant 0 : i32
    return %arg0, %c0_i32 : i32, i32
  }
  func.func @transform_7(%arg0: i32) -> (i32, i32, i32) {
    %c0_i32 = arith.constant 0 : i32
    %c0_i32_0 = arith.constant 0 : i32
    %c0_i32_1 = arith.constant 0 : i32
    return %arg0, %c0_i32, %c0_i32_0 : i32, i32, i32
  }
}

module attributes {stable_mosaic.version = 11 : i64} {
  func.func @_bn2relu_conv3stats_kernel(%arg0: i32, %arg1: memref<192x128xbf16, #tpu.memory_space<vmem>>, %arg2: memref<1x128xf32, #tpu.memory_space<vmem>>, %arg3: memref<1x128xf32, #tpu.memory_space<vmem>>, %arg4: memref<128x128xbf16, #tpu.memory_space<vmem>>, %arg5: memref<192x1xf32, #tpu.memory_space<vmem>>, %arg6: memref<192x128xbf16, #tpu.memory_space<vmem>>, %arg7: memref<1x2x128xf32, #tpu.memory_space<vmem>>) attributes {dimension_semantics = [#tpu.dimension_semantics<parallel>], iteration_bounds = array<i64: 4>, scalar_prefetch = 0 : i64, scratch_operands = 0 : i64, tpu.core_type = #tpu.core_type<tc>, window_params = [{transform_indices = @transform_0, window_bounds = array<i64: 192, 128>}, {pipeline_mode = #tpu.pipeline_mode<synchronous>, transform_indices = @transform_1, window_bounds = array<i64: 1, 128>}, {pipeline_mode = #tpu.pipeline_mode<synchronous>, transform_indices = @transform_2, window_bounds = array<i64: 1, 128>}, {pipeline_mode = #tpu.pipeline_mode<synchronous>, transform_indices = @transform_3, window_bounds = array<i64: 128, 128>}, {pipeline_mode = #tpu.pipeline_mode<synchronous>, transform_indices = @transform_4, window_bounds = array<i64: 192, 1>}, {transform_indices = @transform_5, window_bounds = array<i64: 192, 128>}, {transform_indices = @transform_6, window_bounds = array<i64: 1, 2, 128>}]} {
    %c0 = arith.constant 0 : index
    %c0_0 = arith.constant 0 : index
    %0 = vector.load %arg1[%c0, %c0_0] : memref<192x128xbf16, #tpu.memory_space<vmem>>, vector<192x128xbf16>
    %1 = arith.extf %0 : vector<192x128xbf16> to vector<192x128xf32>
    %c0_1 = arith.constant 0 : index
    %c0_2 = arith.constant 0 : index
    %2 = vector.load %arg2[%c0_1, %c0_2] : memref<1x128xf32, #tpu.memory_space<vmem>>, vector<1x128xf32>
    %3 = vector.broadcast %2 : vector<1x128xf32> to vector<192x128xf32>
    %4 = arith.mulf %1, %3 : vector<192x128xf32>
    %c0_3 = arith.constant 0 : index
    %c0_4 = arith.constant 0 : index
    %5 = vector.load %arg3[%c0_3, %c0_4] : memref<1x128xf32, #tpu.memory_space<vmem>>, vector<1x128xf32>
    %6 = vector.broadcast %5 : vector<1x128xf32> to vector<192x128xf32>
    %7 = arith.addf %4, %6 : vector<192x128xf32>
    %cst = arith.constant 0.000000e+00 : f32
    %8 = vector.broadcast %cst : f32 to vector<192x128xf32>
    %9 = arith.maximumf %7, %8 : vector<192x128xf32>
    %c0_5 = arith.constant 0 : index
    %c0_6 = arith.constant 0 : index
    %10 = vector.load %arg5[%c0_5, %c0_6] : memref<192x1xf32, #tpu.memory_space<vmem>>, vector<192x1xf32>
    %11 = vector.broadcast %10 : vector<192x1xf32> to vector<192x128xf32>
    %12 = arith.mulf %9, %11 : vector<192x128xf32>
    %13 = arith.truncf %12 : vector<192x128xf32> to vector<192x128xbf16>
    %c0_7 = arith.constant 0 : index
    %c0_8 = arith.constant 0 : index
    %14 = vector.load %arg6[%c0_7, %c0_8] : memref<192x128xbf16, #tpu.memory_space<vmem>>, vector<192x128xbf16>
    tpu.vector_store %arg6[%c0_7, %c0_8], %13 {strides = array<i32>} : memref<192x128xbf16, #tpu.memory_space<vmem>>, vector<192x128xbf16>,
    %c0_9 = arith.constant 0 : index
    %c0_10 = arith.constant 0 : index
    %15 = vector.load %arg4[%c0_9, %c0_10] : memref<128x128xbf16, #tpu.memory_space<vmem>>, vector<128x128xbf16>
    %cst_11 = arith.constant dense<0.000000e+00> : vector<192x128xf32>
    %16 = tpu.matmul %13, %15, %cst_11 {dimension_numbers = #tpu.dot_dimension_numbers<[1], [0], [0], [1], [0, 0, 1, 1], [], []>} : vector<192x128xbf16>, vector<128x128xbf16>, vector<192x128xf32> -> vector<192x128xf32>
    %cst_12 = arith.constant dense<0.000000e+00> : vector<128xf32>
    %17 = vector.multi_reduction <add>, %16, %cst_12 [0] : vector<192x128xf32> to vector<128xf32>
    %18 = vector.shape_cast %17 : vector<128xf32> to vector<1x128xf32>
    %19 = arith.mulf %16, %16 : vector<192x128xf32>
    %cst_13 = arith.constant dense<0.000000e+00> : vector<128xf32>
    %20 = vector.multi_reduction <add>, %19, %cst_13 [0] : vector<192x128xf32> to vector<128xf32>
    %21 = vector.shape_cast %20 : vector<128xf32> to vector<1x128xf32>
    %22 = tpu.concatenate %18, %21 in 0 : vector<1x128xf32>, vector<1x128xf32> -> vector<2x128xf32>
    %23 = vector.shape_cast %22 : vector<2x128xf32> to vector<1x2x128xf32>
    %c0_14 = arith.constant 0 : index
    %c0_15 = arith.constant 0 : index
    %c0_16 = arith.constant 0 : index
    %24 = vector.load %arg7[%c0_14, %c0_15, %c0_16] : memref<1x2x128xf32, #tpu.memory_space<vmem>>, vector<1x2x128xf32>
    tpu.vector_store %arg7[%c0_14, %c0_15, %c0_16], %23 {strides = array<i32>} : memref<1x2x128xf32, #tpu.memory_space<vmem>>, vector<1x2x128xf32>,
    return
  }
  func.func @transform_0(%arg0: i32) -> (i32, i32) {
    %c0_i32 = arith.constant 0 : i32
    %c0_i32_0 = arith.constant 0 : i32
    return %arg0, %c0_i32 : i32, i32
  }
  func.func @transform_1(%arg0: i32) -> (i32, i32) {
    %c0_i32 = arith.constant 0 : i32
    %c0_i32_0 = arith.constant 0 : i32
    %c0_i32_1 = arith.constant 0 : i32
    return %c0_i32, %c0_i32_0 : i32, i32
  }
  func.func @transform_2(%arg0: i32) -> (i32, i32) {
    %c0_i32 = arith.constant 0 : i32
    %c0_i32_0 = arith.constant 0 : i32
    %c0_i32_1 = arith.constant 0 : i32
    return %c0_i32, %c0_i32_0 : i32, i32
  }
  func.func @transform_3(%arg0: i32) -> (i32, i32) {
    %c0_i32 = arith.constant 0 : i32
    %c0_i32_0 = arith.constant 0 : i32
    %c0_i32_1 = arith.constant 0 : i32
    return %c0_i32, %c0_i32_0 : i32, i32
  }
  func.func @transform_4(%arg0: i32) -> (i32, i32) {
    %c0_i32 = arith.constant 0 : i32
    %c0_i32_0 = arith.constant 0 : i32
    %c0_i32_1 = arith.constant 0 : i32
    return %c0_i32, %c0_i32_0 : i32, i32
  }
  func.func @transform_5(%arg0: i32) -> (i32, i32) {
    %c0_i32 = arith.constant 0 : i32
    %c0_i32_0 = arith.constant 0 : i32
    return %arg0, %c0_i32 : i32, i32
  }
  func.func @transform_6(%arg0: i32) -> (i32, i32, i32) {
    %c0_i32 = arith.constant 0 : i32
    %c0_i32_0 = arith.constant 0 : i32
    %c0_i32_1 = arith.constant 0 : i32
    return %arg0, %c0_i32, %c0_i32_0 : i32, i32, i32
  }
}

module attributes {stable_mosaic.version = 11 : i64} {
  func.func @_conv3_norm_res_kernel(%arg0: i32, %arg1: memref<192x128xbf16, #tpu.memory_space<vmem>>, %arg2: memref<128x128xbf16, #tpu.memory_space<vmem>>, %arg3: memref<1x128xf32, #tpu.memory_space<vmem>>, %arg4: memref<1x128xf32, #tpu.memory_space<vmem>>, %arg5: memref<192x128xbf16, #tpu.memory_space<vmem>>, %arg6: memref<192x128xf32, #tpu.memory_space<vmem>>) attributes {dimension_semantics = [#tpu.dimension_semantics<parallel>], iteration_bounds = array<i64: 4>, scalar_prefetch = 0 : i64, scratch_operands = 0 : i64, tpu.core_type = #tpu.core_type<tc>, window_params = [{transform_indices = @transform_0, window_bounds = array<i64: 192, 128>}, {pipeline_mode = #tpu.pipeline_mode<synchronous>, transform_indices = @transform_1, window_bounds = array<i64: 128, 128>}, {pipeline_mode = #tpu.pipeline_mode<synchronous>, transform_indices = @transform_2, window_bounds = array<i64: 1, 128>}, {pipeline_mode = #tpu.pipeline_mode<synchronous>, transform_indices = @transform_3, window_bounds = array<i64: 1, 128>}, {transform_indices = @transform_4, window_bounds = array<i64: 192, 128>}, {transform_indices = @transform_5, window_bounds = array<i64: 192, 128>}]} {
    %c0 = arith.constant 0 : index
    %c0_0 = arith.constant 0 : index
    %0 = vector.load %arg1[%c0, %c0_0] : memref<192x128xbf16, #tpu.memory_space<vmem>>, vector<192x128xbf16>
    %c0_1 = arith.constant 0 : index
    %c0_2 = arith.constant 0 : index
    %1 = vector.load %arg2[%c0_1, %c0_2] : memref<128x128xbf16, #tpu.memory_space<vmem>>, vector<128x128xbf16>
    %cst = arith.constant dense<0.000000e+00> : vector<192x128xf32>
    %2 = tpu.matmul %0, %1, %cst {dimension_numbers = #tpu.dot_dimension_numbers<[1], [0], [0], [1], [0, 0, 1, 1], [], []>} : vector<192x128xbf16>, vector<128x128xbf16>, vector<192x128xf32> -> vector<192x128xf32>
    %c0_3 = arith.constant 0 : index
    %c0_4 = arith.constant 0 : index
    %3 = vector.load %arg3[%c0_3, %c0_4] : memref<1x128xf32, #tpu.memory_space<vmem>>, vector<1x128xf32>
    %4 = vector.broadcast %3 : vector<1x128xf32> to vector<192x128xf32>
    %5 = arith.mulf %2, %4 : vector<192x128xf32>
    %c0_5 = arith.constant 0 : index
    %c0_6 = arith.constant 0 : index
    %6 = vector.load %arg4[%c0_5, %c0_6] : memref<1x128xf32, #tpu.memory_space<vmem>>, vector<1x128xf32>
    %7 = vector.broadcast %6 : vector<1x128xf32> to vector<192x128xf32>
    %8 = arith.addf %5, %7 : vector<192x128xf32>
    %c0_7 = arith.constant 0 : index
    %c0_8 = arith.constant 0 : index
    %9 = vector.load %arg5[%c0_7, %c0_8] : memref<192x128xbf16, #tpu.memory_space<vmem>>, vector<192x128xbf16>
    %10 = arith.extf %9 : vector<192x128xbf16> to vector<192x128xf32>
    %11 = arith.addf %8, %10 : vector<192x128xf32>
    %cst_9 = arith.constant 0.000000e+00 : f32
    %12 = vector.broadcast %cst_9 : f32 to vector<192x128xf32>
    %13 = arith.maximumf %11, %12 : vector<192x128xf32>
    %c0_10 = arith.constant 0 : index
    %c0_11 = arith.constant 0 : index
    %14 = vector.load %arg6[%c0_10, %c0_11] : memref<192x128xf32, #tpu.memory_space<vmem>>, vector<192x128xf32>
    tpu.vector_store %arg6[%c0_10, %c0_11], %13 {strides = array<i32>} : memref<192x128xf32, #tpu.memory_space<vmem>>, vector<192x128xf32>,
    return
  }
  func.func @transform_0(%arg0: i32) -> (i32, i32) {
    %c0_i32 = arith.constant 0 : i32
    %c0_i32_0 = arith.constant 0 : i32
    return %arg0, %c0_i32 : i32, i32
  }
  func.func @transform_1(%arg0: i32) -> (i32, i32) {
    %c0_i32 = arith.constant 0 : i32
    %c0_i32_0 = arith.constant 0 : i32
    %c0_i32_1 = arith.constant 0 : i32
    return %c0_i32, %c0_i32_0 : i32, i32
  }
  func.func @transform_2(%arg0: i32) -> (i32, i32) {
    %c0_i32 = arith.constant 0 : i32
    %c0_i32_0 = arith.constant 0 : i32
    %c0_i32_1 = arith.constant 0 : i32
    return %c0_i32, %c0_i32_0 : i32, i32
  }
  func.func @transform_3(%arg0: i32) -> (i32, i32) {
    %c0_i32 = arith.constant 0 : i32
    %c0_i32_0 = arith.constant 0 : i32
    %c0_i32_1 = arith.constant 0 : i32
    return %c0_i32, %c0_i32_0 : i32, i32
  }
  func.func @transform_4(%arg0: i32) -> (i32, i32) {
    %c0_i32 = arith.constant 0 : i32
    %c0_i32_0 = arith.constant 0 : i32
    return %arg0, %c0_i32 : i32, i32
  }
  func.func @transform_5(%arg0: i32) -> (i32, i32) {
    %c0_i32 = arith.constant 0 : i32
    %c0_i32_0 = arith.constant 0 : i32
    return %arg0, %c0_i32 : i32, i32
  }
}

</mosaic_0001>

<llo_original>
// kernel: bottleneck_forward.4
$region0: #{bottleneck_forward.4}
  #allocation0 [shape = 'u32[]', space=smem, size = 0x4, offset = 0x4, fixed_abs, tag = 'smem constant byte address 0x4 - core index']
  #allocation1 [shape = 'u32[72,128]{1,0:T(1,128)}', space=vmem, size = 0x9000, scoped, tag = 'internal scratch']
  %s0 = inlined_call_operand.vmem [shape: bf16[768,128], index: 0, kind: input, shape index: {}]
  %s1 = inlined_call_operand.vmem [shape: bf16[128,128], index: 1, kind: input, shape index: {}]
  %s2 = inlined_call_operand.vmem [shape: f32[4,2,128], index: 2, kind: output, shape index: {}]
  %s3 = sld [smem:[#allocation0]]
  $region41: #{bottleneck_forward.4} parent=0
    _
  %s5 = ssub.s32 1, %s3
  %s6 = scalar_select 0, %s5, %s3
  loop: start=0, step=1, limit=6
  $region2: #{bottleneck_forward.4} parent=0 // loop_pre_header
    _
  $region3: #{bottleneck_forward.4} parent=0 // loop_header
    %s8 = sphi 0, %s12
    %p9 = scmp.ge.s32.totalorder %s8, 6
    %s18 = sphi 0, %s20
    %s21 = sphi 0, %s18
    %s22 = sphi 0, %s21
    %s38 = sphi 0, %s22
    %s42 = sphi 0, %s42
    %s44 = sphi 0, %s42
    %s45 = sphi 0, %s44
    %s59 = sphi 0, %s45
    %s65 = sphi 0, %s67
    %s68 = sphi 0, %s65
    %s69 = sphi 0, %s68
    %s85 = sphi 0, %s69
  $region4: #{bottleneck_forward.4} parent=0 // loop_header_branch
    %11 = sbr.rel (%p9) target = $region8
  $region5: #{bottleneck_forward.4} parent=0 // loop_body
    %s13 = ssub.s32 %s8, 1
    %s14 = ssub.s32 %s8, 2
    %s15 = sadd.s32 %s8, 1
    %s16 = ssub.s32 %s8, %s15
    %p17 = scmp.eq.s32.totalorder %s16, 0
    %s19 = sadd.s32 %s18, 1
    %s20 = scalar_select %p17, %s18, %s19
    %p23 = pneg %p17
    %p24 = scmp.eq.s32.totalorder %s8, 3
    %p25 = por %p23, %p24
    %p26 = scmp.ne.s32.totalorder %s18, %s21
    %p27 = scmp.eq.s32.totalorder %s8, 0
    %p28 = por %p26, %p27
    %p29 = scmp.ne.s32.totalorder %s18, %s21
    %p30 = scmp.eq.s32.totalorder %s13, 3
    %p31 = por %p29, %p30
    %p32 = scmp.ne.s32.totalorder %s21, %s22
    %p33 = scmp.eq.s32.totalorder %s13, 0
    %p34 = por %p32, %p33
    %p35 = scmp.ne.s32.totalorder %s21, %s22
    %p36 = scmp.eq.s32.totalorder %s14, 3
    %p37 = por %p35, %p36
    %p39 = scmp.ne.s32.totalorder %s22, %s38
    %p40 = scmp.eq.s32.totalorder %s14, 0
    %p41 = por %p39, %p40
    %s43 = sadd.s32 %s42, 1
    %p46 = scmp.eq.s32.totalorder %s8, 3
    %p47 = scmp.ne.s32.totalorder %s42, %s44
    %p48 = scmp.eq.s32.totalorder %s8, 0
    %p49 = por %p47, %p48
    %p50 = scmp.ne.s32.totalorder %s42, %s44
    %p51 = scmp.eq.s32.totalorder %s13, 3
    %p52 = por %p50, %p51
    %p53 = scmp.ne.s32.totalorder %s44, %s45
    %p54 = scmp.eq.s32.totalorder %s13, 0
    %p55 = por %p53, %p54
    %p56 = scmp.ne.s32.totalorder %s44, %s45
    %p57 = scmp.eq.s32.totalorder %s14, 3
    %p58 = por %p56, %p57
    %p60 = scmp.ne.s32.totalorder %s45, %s59
    %p61 = scmp.eq.s32.totalorder %s14, 0
    %p62 = por %p60, %p61
    %s63 = ssub.s32 %s8, %s15
    %p64 = scmp.eq.s32.totalorder %s63, 0
    %s66 = sadd.s32 %s65, 1
    %s67 = scalar_select %p64, %s65, %s66
    %p70 = pneg %p64
    %p71 = scmp.eq.s32.totalorder %s8, 3
    %p72 = por %p70, %p71
    %p73 = scmp.ne.s32.totalorder %s65, %s68
    %p74 = scmp.eq.s32.totalorder %s8, 0
    %p75 = por %p73, %p74
    %p76 = scmp.ne.s32.totalorder %s65, %s68
    %p77 = scmp.eq.s32.totalorder %s13, 3
    %p78 = por %p76, %p77
    %p79 = scmp.ne.s32.totalorder %s68, %s69
    %p80 = scmp.eq.s32.totalorder %s13, 0
    %p81 = por %p79, %p80
    %p82 = scmp.ne.s32.totalorder %s68, %s69
    %p83 = scmp.eq.s32.totalorder %s14, 3
    %p84 = por %p82, %p83
    %p86 = scmp.ne.s32.totalorder %s69, %s85
    %p87 = scmp.eq.s32.totalorder %s14, 0
    %p88 = por %p86, %p87
    %p89 = scmp.le.s32.totalorder 1, %s8
    %p90 = scmp.lt.s32.totalorder %s8, 5
    %p91 = pnand %p89, %p90
    %p92 = pneg %p91
    // Predicated region
    $region9: #{bottleneck_forward.4} parent=5 // pred_check
      _
    $region10: #{bottleneck_forward.4} parent=5 // pred_check_branch
      %94 = sbr.rel (%p91) target = $region12
    $region11: #{bottleneck_forward.4} parent=5 // pred_region
      %s95 = ssub.s32 %s8, 1
      // Predicated region
      $region13: #{bottleneck_forward.4} parent=11 // pred_check
        %p96 = pneg %p55
      $region14: #{bottleneck_forward.4} parent=11 // pred_check_branch
        %98 = sbr.rel (%p96) target = $region16
      $region15: #{bottleneck_forward.4} parent=11 // pred_region
        _
      $region16: #{bottleneck_forward.4} parent=11 // pred_fallthru
        _
    $region12: #{bottleneck_forward.4} parent=5 // pred_fallthru
      _
    %p99 = scmp.lt.s32.totalorder %s8, 4
    // Predicated region
    $region17: #{bottleneck_forward.4} parent=5 // pred_check
      %p100 = pneg %p99
    $region18: #{bottleneck_forward.4} parent=5 // pred_check_branch
      %102 = sbr.rel (%p100) target = $region20
    $region19: #{bottleneck_forward.4} parent=5 // pred_region
      // Predicated region
      $region21: #{bottleneck_forward.4} parent=19 // pred_check
        %p103 = pneg %p28
      $region22: #{bottleneck_forward.4} parent=19 // pred_check_branch
        %105 = sbr.rel (%p103) target = $region24
      $region23: #{bottleneck_forward.4} parent=19 // pred_region
        %s106 = smul.u32 24, %s8
        %p107 = scmp.lt.s32.totalorder %s106, 95
        %s108 = scalar_select %p107, %s106, 95
        %s109 = smul.addr %s108, 4
        %s110 = scalar_lea.vmem %s0, %s109
        %s111 = smul.u32 24, %s8
      $region24: #{bottleneck_forward.4} parent=19 // pred_fallthru
        _
    $region20: #{bottleneck_forward.4} parent=5 // pred_fallthru
      _
    %p112 = scmp.le.s32.totalorder 1, %s8
    %p113 = scmp.lt.s32.totalorder %s8, 5
    %p114 = pnand %p112, %p113
    %p115 = pneg %p114
    // Predicated region
    $region25: #{bottleneck_forward.4} parent=5 // pred_check
      _
    $region26: #{bottleneck_forward.4} parent=5 // pred_check_branch
      %117 = sbr.rel (%p114) target = $region28
    $region27: #{bottleneck_forward.4} parent=5 // pred_region
      %s118 = ssub.s32 %s8, 1
      %s119 = smul.u32 24, %s13
      %p120 = scmp.lt.s32.totalorder %s119, 95
      %s121 = scalar_select %p120, %s119, 95
      %s122 = smul.addr %s121, 4
      %s123 = scalar_lea.vmem %s0, %s122
      %p124 = pneg %p34
      %p125 = pneg %p31
      %p126 = pneg %p55
      %p127 = pneg %p52
      %p128 = pneg %p81
      %p129 = pneg %p78
      %p130 = scmp.lt.s32.totalorder %s13, 3
      %s131 = scalar_select %p130, %s13, 3
      %s132 = smul.addr %s131, 2
      %s133 = scalar_lea.vmem %s2, %s132
      %s134 = smul.u32 24, %s13
      %p135 = scmp.lt.s32.totalorder %s134, 95
      %s136 = scalar_select %p135, %s134, 95
      %s137 = smul.addr %s136, 4
      %s138 = scalar_lea.vmem %s0, %s137
      %s139 = smul.u32 24, %s13
      %p140 = scmp.lt.s32.totalorder %s13, 3
      %s141 = scalar_select %p140, %s13, 3
      %s142 = smul.addr %s141, 2
      %s143 = scalar_lea.vmem %s2, %s142
      %v144 = vld [vmem:[%s138] sm:$0xf]
      %v145 = vld [vmem:[%s138 + $0x4] sm:$0xf]
      %v146 = vld [vmem:[%s138 + $0x8] sm:$0xf]
      %v147 = vld [vmem:[%s138 + $0xc] sm:$0xf]
      %v148 = vld [vmem:[%s138 + $0x10] sm:$0xf]
      %v149 = vld [vmem:[%s138 + $0x14] sm:$0xf]
      %v150 = vld [vmem:[%s138 + $0x18] sm:$0xf]
      %v151 = vld [vmem:[%s138 + $0x1c] sm:$0xf]
      %v152 = vld [vmem:[%s138 + $0x20] sm:$0xf]
      %v153 = vld [vmem:[%s138 + $0x24] sm:$0xf]
      %v154 = vld [vmem:[%s138 + $0x28] sm:$0xf]
      %v155 = vld [vmem:[%s138 + $0x2c] sm:$0xf]
      %v156 = vld [vmem:[%s138 + $0x30] sm:$0xf]
      %v157 = vld [vmem:[%s138 + $0x34] sm:$0xf]
      %v158 = vld [vmem:[%s138 + $0x38] sm:$0xf]
      %v159 = vld [vmem:[%s138 + $0x3c] sm:$0xf]
      %v160 = vld [vmem:[%s138 + $0x40] sm:$0xf]
      %v161 = vld [vmem:[%s138 + $0x44] sm:$0xf]
      %v162 = vld [vmem:[%s138 + $0x48] sm:$0xf]
      %v163 = vld [vmem:[%s138 + $0x4c] sm:$0xf]
      %v164 = vld [vmem:[%s138 + $0x50] sm:$0xf]
      %v165 = vld [vmem:[%s138 + $0x54] sm:$0xf]
      %v166 = vld [vmem:[%s138 + $0x58] sm:$0xf]
      %v167 = vld [vmem:[%s138 + $0x5c] sm:$0xf]
      %v168 = vld [vmem:[%s1] sm:$0xf]
      %v169 = vld [vmem:[%s1 + $0x4] sm:$0xf]
      %v170 = vld [vmem:[%s1 + $0x8] sm:$0xf]
      %v171 = vld [vmem:[%s1 + $0xc] sm:$0xf]
      %v172 = vld [vmem:[%s1 + $0x10] sm:$0xf]
      %v173 = vld [vmem:[%s1 + $0x14] sm:$0xf]
      %v174 = vld [vmem:[%s1 + $0x18] sm:$0xf]
      %v175 = vld [vmem:[%s1 + $0x1c] sm:$0xf]
      %v176 = vld [vmem:[%s1 + $0x20] sm:$0xf]
      %v177 = vld [vmem:[%s1 + $0x24] sm:$0xf]
      %v178 = vld [vmem:[%s1 + $0x28] sm:$0xf]
      %v179 = vld [vmem:[%s1 + $0x2c] sm:$0xf]
      %v180 = vld [vmem:[%s1 + $0x30] sm:$0xf]
      %v181 = vld [vmem:[%s1 + $0x34] sm:$0xf]
      %v182 = vld [vmem:[%s1 + $0x38] sm:$0xf]
      %v183 = vld [vmem:[%s1 + $0x3c] sm:$0xf]
      %v208 = vunpack.c.l.b16 %v144
      %v209 = vunpack.c.l.b16 %v145
      %v210 = vunpack.c.l.b16 %v146
      %v211 = vunpack.c.l.b16 %v147
      %v212 = vunpack.c.l.b16 %v148
      %v213 = vunpack.c.l.b16 %v149
      %v214 = vunpack.c.l.b16 %v150
      %v215 = vunpack.c.l.b16 %v151
      %v216 = vunpack.c.l.b16 %v152
      %v217 = vunpack.c.l.b16 %v153
      %v218 = vunpack.c.l.b16 %v154
      %v219 = vunpack.c.l.b16 %v155
      %v220 = vunpack.c.l.b16 %v156
      %v221 = vunpack.c.l.b16 %v157
      %v222 = vunpack.c.l.b16 %v158
      %v223 = vunpack.c.l.b16 %v159
      %v224 = vunpack.c.l.b16 %v160
      %v225 = vunpack.c.l.b16 %v161
      %v226 = vunpack.c.l.b16 %v162
      %v227 = vunpack.c.l.b16 %v163
      %v228 = vunpack.c.l.b16 %v164
      %v229 = vunpack.c.l.b16 %v165
      %v230 = vunpack.c.l.b16 %v166
      %v231 = vunpack.c.l.b16 %v167
      %v232 = vpack.c.b16 %v209, %v208
      %v233 = vpack.c.b16 %v211, %v210
      %v234 = vpack.c.b16 %v213, %v212
      %v235 = vpack.c.b16 %v215, %v214
      %v236 = vpack.c.b16 %v217, %v216
      %v237 = vpack.c.b16 %v219, %v218
      %v238 = vpack.c.b16 %v221, %v220
      %v239 = vpack.c.b16 %v223, %v222
      %v240 = vpack.c.b16 %v225, %v224
      %v241 = vpack.c.b16 %v227, %v226
      %v242 = vpack.c.b16 %v229, %v228
      %v243 = vpack.c.b16 %v231, %v230
      %v272 = vunpack.c.l.b16 %v168
      %v273 = vunpack.c.l.b16 %v169
      %v274 = vunpack.c.l.b16 %v170
      %v275 = vunpack.c.l.b16 %v171
      %v276 = vunpack.c.l.b16 %v172
      %v277 = vunpack.c.l.b16 %v173
      %v278 = vunpack.c.l.b16 %v174
      %v279 = vunpack.c.l.b16 %v175
      %v280 = vunpack.c.l.b16 %v176
      %v281 = vunpack.c.l.b16 %v177
      %v282 = vunpack.c.l.b16 %v178
      %v283 = vunpack.c.l.b16 %v179
      %v284 = vunpack.c.l.b16 %v180
      %v285 = vunpack.c.l.b16 %v181
      %v286 = vunpack.c.l.b16 %v182
      %v287 = vunpack.c.l.b16 %v183
      %v288 = vpack.c.b16 %v273, %v272
      %v289 = vpack.c.b16 %v275, %v274
      %v290 = vpack.c.b16 %v277, %v276
      %v291 = vpack.c.b16 %v279, %v278
      %v292 = vpack.c.b16 %v281, %v280
      %v293 = vpack.c.b16 %v283, %v282
      %v294 = vpack.c.b16 %v285, %v284
      %v295 = vpack.c.b16 %v287, %v286
      %304 = vmatpush.bf16.msra.mxu0 %v295
      %305 = vmatpush.bf16.msra.mxu0 %v294
      %306 = vmatpush.bf16.msra.mxu0 %v293
      %307 = vmatpush.bf16.msra.mxu0 %v292
      %308 = vmatpush.bf16.msra.mxu0 %v291
      %309 = vmatpush.bf16.msra.mxu0 %v290
      %310 = vmatpush.bf16.msra.mxu0 %v289
      %311 = vmatpush.bf16.msra.mxu0 %v288
      %312 = vmatmul.bf16.gmra.mxu0 %v232
      %v313 = vpop.f32.mrf.mxu0
      %v314 = vadd.f32 0.0, %v313
      %v315 = vpop.f32.mrf.mxu0
      %v316 = vadd.f32 0.0, %v315
      %317 = vmatmul.bf16.gmra.mxu0 %v233
      %v318 = vpop.f32.mrf.mxu0
      %v319 = vadd.f32 0.0, %v318
      %v320 = vpop.f32.mrf.mxu0
      %v321 = vadd.f32 0.0, %v320
      %322 = vmatmul.bf16.gmra.mxu0 %v234
      %v323 = vpop.f32.mrf.mxu0
      %v324 = vadd.f32 0.0, %v323
      %v325 = vpop.f32.mrf.mxu0
      %v326 = vadd.f32 0.0, %v325
      %327 = vmatmul.bf16.gmra.mxu0 %v235
      %v328 = vpop.f32.mrf.mxu0
      %v329 = vadd.f32 0.0, %v328
      %v330 = vpop.f32.mrf.mxu0
      %v331 = vadd.f32 0.0, %v330
      %332 = vmatmul.bf16.gmra.mxu0 %v236
      %v333 = vpop.f32.mrf.mxu0
      %v334 = vadd.f32 0.0, %v333
      %v335 = vpop.f32.mrf.mxu0
      %v336 = vadd.f32 0.0, %v335
      %337 = vmatmul.bf16.gmra.mxu0 %v237
      %v338 = vpop.f32.mrf.mxu0
      %v339 = vadd.f32 0.0, %v338
      %v340 = vpop.f32.mrf.mxu0
      %v341 = vadd.f32 0.0, %v340
      %342 = vmatmul.bf16.gmra.mxu0 %v238
      %v343 = vpop.f32.mrf.mxu0
      %v344 = vadd.f32 0.0, %v343
      %v345 = vpop.f32.mrf.mxu0
      %v346 = vadd.f32 0.0, %v345
      %347 = vmatmul.bf16.gmra.mxu0 %v239
      %v348 = vpop.f32.mrf.mxu0
      %v349 = vadd.f32 0.0, %v348
      %v350 = vpop.f32.mrf.mxu0
      %v351 = vadd.f32 0.0, %v350
      %352 = vmatmul.bf16.gmra.mxu0 %v240
      %v353 = vpop.f32.mrf.mxu0
      %v354 = vadd.f32 0.0, %v353
      %v355 = vpop.f32.mrf.mxu0
      %v356 = vadd.f32 0.0, %v355
      %357 = vmatmul.bf16.gmra.mxu0 %v241
      %v358 = vpop.f32.mrf.mxu0
      %v359 = vadd.f32 0.0, %v358
      %v360 = vpop.f32.mrf.mxu0
      %v361 = vadd.f32 0.0, %v360
      %362 = vmatmul.bf16.gmra.mxu0 %v242
      %v363 = vpop.f32.mrf.mxu0
      %v364 = vadd.f32 0.0, %v363
      %v365 = vpop.f32.mrf.mxu0
      %v366 = vadd.f32 0.0, %v365
      %367 = vmatmul.bf16.gmra.mxu0 %v243
      %v368 = vpop.f32.mrf.mxu0
      %v369 = vadd.f32 0.0, %v368
      %v370 = vpop.f32.mrf.mxu0
      %v371 = vadd.f32 0.0, %v370
      %372 = vdwg.mxu0
      %v373 = vadd.f32 %v314, %v316
      %v374 = vadd.f32 %v373, %v319
      %v375 = vadd.f32 %v374, %v321
      %v376 = vadd.f32 %v375, %v324
      %v377 = vadd.f32 %v376, %v326
      %v378 = vadd.f32 %v377, %v329
      %v379 = vadd.f32 %v378, %v331
      %v380 = vadd.f32 %v379, %v334
      %v381 = vadd.f32 %v380, %v336
      %v382 = vadd.f32 %v381, %v339
      %v383 = vadd.f32 %v382, %v341
      %v384 = vadd.f32 %v383, %v344
      %v385 = vadd.f32 %v384, %v346
      %v386 = vadd.f32 %v385, %v349
      %v387 = vadd.f32 %v386, %v351
      %v388 = vadd.f32 %v387, %v354
      %v389 = vadd.f32 %v388, %v356
      %v390 = vadd.f32 %v389, %v359
      %v391 = vadd.f32 %v390, %v361
      %v392 = vadd.f32 %v391, %v364
      %v393 = vadd.f32 %v392, %v366
      %v394 = vadd.f32 %v393, %v369
      %v395 = vadd.f32 %v394, %v371
      %v396 = vrot.slane %v395, 4
      %v397 = vadd.f32 %v395, %v396
      %v398 = vrot.slane %v397, 2
      %v399 = vadd.f32 %v397, %v398
      %v400 = vrot.slane %v399, 1
      %v401 = vadd.f32 %v399, %v400
      %v402 = vmul.f32 %v314, %v314
      %v403 = vmul.f32 %v316, %v316
      %v404 = vmul.f32 %v319, %v319
      %v405 = vmul.f32 %v321, %v321
      %v406 = vmul.f32 %v324, %v324
      %v407 = vmul.f32 %v326, %v326
      %v408 = vmul.f32 %v329, %v329
      %v409 = vmul.f32 %v331, %v331
      %v410 = vmul.f32 %v334, %v334
      %v411 = vmul.f32 %v336, %v336
      %v412 = vmul.f32 %v339, %v339
      %v413 = vmul.f32 %v341, %v341
      %v414 = vmul.f32 %v344, %v344
      %v415 = vmul.f32 %v346, %v346
      %v416 = vmul.f32 %v349, %v349
      %v417 = vmul.f32 %v351, %v351
      %v418 = vmul.f32 %v354, %v354
      %v419 = vmul.f32 %v356, %v356
      %v420 = vmul.f32 %v359, %v359
      %v421 = vmul.f32 %v361, %v361
      %v422 = vmul.f32 %v364, %v364
      %v423 = vmul.f32 %v366, %v366
      %v424 = vmul.f32 %v369, %v369
      %v425 = vmul.f32 %v371, %v371
      %v426 = vadd.f32 %v402, %v403
      %v427 = vadd.f32 %v426, %v404
      %v428 = vadd.f32 %v427, %v405
      %v429 = vadd.f32 %v428, %v406
      %v430 = vadd.f32 %v429, %v407
      %v431 = vadd.f32 %v430, %v408
      %v432 = vadd.f32 %v431, %v409
      %v433 = vadd.f32 %v432, %v410
      %v434 = vadd.f32 %v433, %v411
      %v435 = vadd.f32 %v434, %v412
      %v436 = vadd.f32 %v435, %v413
      %v437 = vadd.f32 %v436, %v414
      %v438 = vadd.f32 %v437, %v415
      %v439 = vadd.f32 %v438, %v416
      %v440 = vadd.f32 %v439, %v417
      %v441 = vadd.f32 %v440, %v418
      %v442 = vadd.f32 %v441, %v419
      %v443 = vadd.f32 %v442, %v420
      %v444 = vadd.f32 %v443, %v421
      %v445 = vadd.f32 %v444, %v422
      %v446 = vadd.f32 %v445, %v423
      %v447 = vadd.f32 %v446, %v424
      %v448 = vadd.f32 %v447, %v425
      %v449 = vrot.slane %v448, 4
      %v450 = vadd.f32 %v448, %v449
      %v451 = vrot.slane %v450, 2
      %v452 = vadd.f32 %v450, %v451
      %v453 = vrot.slane %v452, 1
      %v454 = vadd.f32 %v452, %v453
      %vm455 = vcmask 1040384
      %v456 = vsel %vm455, %v401, %v454
      %457 = vst [vmem:[%s143] sm:$0x3] %v456
      %p458 = scmp.lt.s32.totalorder %s13, 3
      %s459 = scalar_select %p458, %s13, 3
      %s460 = smul.addr %s459, 2
      %s461 = scalar_lea.vmem %s2, %s460
      // Predicated region
      $region29: #{bottleneck_forward.4} parent=27 // pred_check
        %p462 = pneg %p78
      $region30: #{bottleneck_forward.4} parent=27 // pred_check_branch
        %464 = sbr.rel (%p462) target = $region32
      $region31: #{bottleneck_forward.4} parent=27 // pred_region
        _
      $region32: #{bottleneck_forward.4} parent=27 // pred_fallthru
        _
    $region28: #{bottleneck_forward.4} parent=5 // pred_fallthru
      _
    %p465 = scmp.le.s32.totalorder 2, %s8
    // Predicated region
    $region33: #{bottleneck_forward.4} parent=5 // pred_check
      %p466 = pneg %p465
    $region34: #{bottleneck_forward.4} parent=5 // pred_check_branch
      %468 = sbr.rel (%p466) target = $region36
    $region35: #{bottleneck_forward.4} parent=5 // pred_region
      %s469 = ssub.s32 %s8, 2
      // Predicated region
      $region37: #{bottleneck_forward.4} parent=35 // pred_check
        %p470 = pneg %p84
      $region38: #{bottleneck_forward.4} parent=35 // pred_check_branch
        %472 = sbr.rel (%p470) target = $region40
      $region39: #{bottleneck_forward.4} parent=35 // pred_region
        %p473 = scmp.lt.s32.totalorder %s14, 3
        %s474 = scalar_select %p473, %s14, 3
        %s475 = smul.addr %s474, 2
        %s476 = scalar_lea.vmem %s2, %s475
      $region40: #{bottleneck_forward.4} parent=35 // pred_fallthru
        _
    $region36: #{bottleneck_forward.4} parent=5 // pred_fallthru
      _
  $region6: #{bottleneck_forward.4} parent=0 // loop_footer
    %s12 = sadd.s32 1, %s8
  $region7: #{bottleneck_forward.4} parent=0 // loop_footer_branch
    %7 = sbr.rel target = $region3
  $region8: #{bottleneck_forward.4} parent=0 // loop_exit
    _

// kernel: bottleneck_forward.6
$region0: #{bottleneck_forward.6}
  #allocation0 [shape = 'u32[]', space=smem, size = 0x4, offset = 0x4, fixed_abs, tag = 'smem constant byte address 0x4 - core index']
  #allocation1 [shape = 'u32[72,128]{1,0:T(1,128)}', space=vmem, size = 0x9000, scoped, tag = 'internal scratch']
  %s0 = inlined_call_operand.vmem [shape: bf16[768,128], index: 0, kind: input, shape index: {}]
  %s1 = inlined_call_operand.vmem [shape: f32[1,128], index: 1, kind: input, shape index: {}]
  %s2 = inlined_call_operand.vmem [shape: f32[1,128], index: 2, kind: input, shape index: {}]
  %s3 = inlined_call_operand.vmem [shape: bf16[128,128], index: 3, kind: input, shape index: {}]
  %s4 = inlined_call_operand.vmem [shape: f32[192,1], index: 4, kind: input, shape index: {}]
  %s5 = inlined_call_operand.vmem [shape: bf16[768,128], index: 5, kind: output, shape index: {0}]
  %s6 = inlined_call_operand.vmem [shape: f32[4,2,128], index: 6, kind: output, shape index: {1}]
  %7 = xla_tuple %s5, %s6
  %s8 = sld [smem:[#allocation0]]
  $region61: #{bottleneck_forward.6} parent=0
    _
  %s10 = ssub.s32 1, %s8
  %s11 = scalar_select 0, %s10, %s8
  loop: start=0, step=1, limit=6
  $region2: #{bottleneck_forward.6} parent=0 // loop_pre_header
    _
  $region3: #{bottleneck_forward.6} parent=0 // loop_header
    %s13 = sphi 0, %s17
    %p14 = scmp.ge.s32.totalorder %s13, 6
    %s23 = sphi 0, %s25
    %s26 = sphi 0, %s23
    %s27 = sphi 0, %s26
    %s43 = sphi 0, %s27
    %s47 = sphi 0, %s47
    %s49 = sphi 0, %s47
    %s50 = sphi 0, %s49
    %s64 = sphi 0, %s50
    %s68 = sphi 0, %s68
    %s70 = sphi 0, %s68
    %s71 = sphi 0, %s70
    %s85 = sphi 0, %s71
    %s89 = sphi 0, %s89
    %s91 = sphi 0, %s89
    %s92 = sphi 0, %s91
    %s106 = sphi 0, %s92
    %s110 = sphi 0, %s110
    %s112 = sphi 0, %s110
    %s113 = sphi 0, %s112
    %s127 = sphi 0, %s113
    %s133 = sphi 0, %s135
    %s136 = sphi 0, %s133
    %s137 = sphi 0, %s136
    %s153 = sphi 0, %s137
    %s159 = sphi 0, %s161
    %s162 = sphi 0, %s159
    %s163 = sphi 0, %s162
    %s179 = sphi 0, %s163
  $region4: #{bottleneck_forward.6} parent=0 // loop_header_branch
    %16 = sbr.rel (%p14) target = $region8
  $region5: #{bottleneck_forward.6} parent=0 // loop_body
    %s18 = ssub.s32 %s13, 1
    %s19 = ssub.s32 %s13, 2
    %s20 = sadd.s32 %s13, 1
    %s21 = ssub.s32 %s13, %s20
    %p22 = scmp.eq.s32.totalorder %s21, 0
    %s24 = sadd.s32 %s23, 1
    %s25 = scalar_select %p22, %s23, %s24
    %p28 = pneg %p22
    %p29 = scmp.eq.s32.totalorder %s13, 3
    %p30 = por %p28, %p29
    %p31 = scmp.ne.s32.totalorder %s23, %s26
    %p32 = scmp.eq.s32.totalorder %s13, 0
    %p33 = por %p31, %p32
    %p34 = scmp.ne.s32.totalorder %s23, %s26
    %p35 = scmp.eq.s32.totalorder %s18, 3
    %p36 = por %p34, %p35
    %p37 = scmp.ne.s32.totalorder %s26, %s27
    %p38 = scmp.eq.s32.totalorder %s18, 0
    %p39 = por %p37, %p38
    %p40 = scmp.ne.s32.totalorder %s26, %s27
    %p41 = scmp.eq.s32.totalorder %s19, 3
    %p42 = por %p40, %p41
    %p44 = scmp.ne.s32.totalorder %s27, %s43
    %p45 = scmp.eq.s32.totalorder %s19, 0
    %p46 = por %p44, %p45
    %s48 = sadd.s32 %s47, 1
    %p51 = scmp.eq.s32.totalorder %s13, 3
    %p52 = scmp.ne.s32.totalorder %s47, %s49
    %p53 = scmp.eq.s32.totalorder %s13, 0
    %p54 = por %p52, %p53
    %p55 = scmp.ne.s32.totalorder %s47, %s49
    %p56 = scmp.eq.s32.totalorder %s18, 3
    %p57 = por %p55, %p56
    %p58 = scmp.ne.s32.totalorder %s49, %s50
    %p59 = scmp.eq.s32.totalorder %s18, 0
    %p60 = por %p58, %p59
    %p61 = scmp.ne.s32.totalorder %s49, %s50
    %p62 = scmp.eq.s32.totalorder %s19, 3
    %p63 = por %p61, %p62
    %p65 = scmp.ne.s32.totalorder %s50, %s64
    %p66 = scmp.eq.s32.totalorder %s19, 0
    %p67 = por %p65, %p66
    %s69 = sadd.s32 %s68, 1
    %p72 = scmp.eq.s32.totalorder %s13, 3
    %p73 = scmp.ne.s32.totalorder %s68, %s70
    %p74 = scmp.eq.s32.totalorder %s13, 0
    %p75 = por %p73, %p74
    %p76 = scmp.ne.s32.totalorder %s68, %s70
    %p77 = scmp.eq.s32.totalorder %s18, 3
    %p78 = por %p76, %p77
    %p79 = scmp.ne.s32.totalorder %s70, %s71
    %p80 = scmp.eq.s32.totalorder %s18, 0
    %p81 = por %p79, %p80
    %p82 = scmp.ne.s32.totalorder %s70, %s71
    %p83 = scmp.eq.s32.totalorder %s19, 3
    %p84 = por %p82, %p83
    %p86 = scmp.ne.s32.totalorder %s71, %s85
    %p87 = scmp.eq.s32.totalorder %s19, 0
    %p88 = por %p86, %p87
    %s90 = sadd.s32 %s89, 1
    %p93 = scmp.eq.s32.totalorder %s13, 3
    %p94 = scmp.ne.s32.totalorder %s89, %s91
    %p95 = scmp.eq.s32.totalorder %s13, 0
    %p96 = por %p94, %p95
    %p97 = scmp.ne.s32.totalorder %s89, %s91
    %p98 = scmp.eq.s32.totalorder %s18, 3
    %p99 = por %p97, %p98
    %p100 = scmp.ne.s32.totalorder %s91, %s92
    %p101 = scmp.eq.s32.totalorder %s18, 0
    %p102 = por %p100, %p101
    %p103 = scmp.ne.s32.totalorder %s91, %s92
    %p104 = scmp.eq.s32.totalorder %s19, 3
    %p105 = por %p103, %p104
    %p107 = scmp.ne.s32.totalorder %s92, %s106
    %p108 = scmp.eq.s32.totalorder %s19, 0
    %p109 = por %p107, %p108
    %s111 = sadd.s32 %s110, 1
    %p114 = scmp.eq.s32.totalorder %s13, 3
    %p115 = scmp.ne.s32.totalorder %s110, %s112
    %p116 = scmp.eq.s32.totalorder %s13, 0
    %p117 = por %p115, %p116
    %p118 = scmp.ne.s32.totalorder %s110, %s112
    %p119 = scmp.eq.s32.totalorder %s18, 3
    %p120 = por %p118, %p119
    %p121 = scmp.ne.s32.totalorder %s112, %s113
    %p122 = scmp.eq.s32.totalorder %s18, 0
    %p123 = por %p121, %p122
    %p124 = scmp.ne.s32.totalorder %s112, %s113
    %p125 = scmp.eq.s32.totalorder %s19, 3
    %p126 = por %p124, %p125
    %p128 = scmp.ne.s32.totalorder %s113, %s127
    %p129 = scmp.eq.s32.totalorder %s19, 0
    %p130 = por %p128, %p129
    %s131 = ssub.s32 %s13, %s20
    %p132 = scmp.eq.s32.totalorder %s131, 0
    %s134 = sadd.s32 %s133, 1
    %s135 = scalar_select %p132, %s133, %s134
    %p138 = pneg %p132
    %p139 = scmp.eq.s32.totalorder %s13, 3
    %p140 = por %p138, %p139
    %p141 = scmp.ne.s32.totalorder %s133, %s136
    %p142 = scmp.eq.s32.totalorder %s13, 0
    %p143 = por %p141, %p142
    %p144 = scmp.ne.s32.totalorder %s133, %s136
    %p145 = scmp.eq.s32.totalorder %s18, 3
    %p146 = por %p144, %p145
    %p147 = scmp.ne.s32.totalorder %s136, %s137
    %p148 = scmp.eq.s32.totalorder %s18, 0
    %p149 = por %p147, %p148
    %p150 = scmp.ne.s32.totalorder %s136, %s137
    %p151 = scmp.eq.s32.totalorder %s19, 3
    %p152 = por %p150, %p151
    %p154 = scmp.ne.s32.totalorder %s137, %s153
    %p155 = scmp.eq.s32.totalorder %s19, 0
    %p156 = por %p154, %p155
    %s157 = ssub.s32 %s13, %s20
    %p158 = scmp.eq.s32.totalorder %s157, 0
    %s160 = sadd.s32 %s159, 1
    %s161 = scalar_select %p158, %s159, %s160
    %p164 = pneg %p158
    %p165 = scmp.eq.s32.totalorder %s13, 3
    %p166 = por %p164, %p165
    %p167 = scmp.ne.s32.totalorder %s159, %s162
    %p168 = scmp.eq.s32.totalorder %s13, 0
    %p169 = por %p167, %p168
    %p170 = scmp.ne.s32.totalorder %s159, %s162
    %p171 = scmp.eq.s32.totalorder %s18, 3
    %p172 = por %p170, %p171
    %p173 = scmp.ne.s32.totalorder %s162, %s163
    %p174 = scmp.eq.s32.totalorder %s18, 0
    %p175 = por %p173, %p174
    %p176 = scmp.ne.s32.totalorder %s162, %s163
    %p177 = scmp.eq.s32.totalorder %s19, 3
    %p178 = por %p176, %p177
    %p180 = scmp.ne.s32.totalorder %s163, %s179
    %p181 = scmp.eq.s32.totalorder %s19, 0
    %p182 = por %p180, %p181
    %p183 = scmp.le.s32.totalorder 1, %s13
    %p184 = scmp.lt.s32.totalorder %s13, 5
    %p185 = pnand %p183, %p184
    %p186 = pneg %p185
    // Predicated region
    $region9: #{bottleneck_forward.6} parent=5 // pred_check
      _
    $region10: #{bottleneck_forward.6} parent=5 // pred_check_branch
      %188 = sbr.rel (%p185) target = $region12
    $region11: #{bottleneck_forward.6} parent=5 // pred_region
      %s189 = ssub.s32 %s13, 1
      // Predicated region
      $region13: #{bottleneck_forward.6} parent=11 // pred_check
        %p190 = pneg %p60
      $region14: #{bottleneck_forward.6} parent=11 // pred_check_branch
        %192 = sbr.rel (%p190) target = $region16
      $region15: #{bottleneck_forward.6} parent=11 // pred_region
        _
      $region16: #{bottleneck_forward.6} parent=11 // pred_fallthru
        _
      // Predicated region
      $region17: #{bottleneck_forward.6} parent=11 // pred_check
        %p193 = pneg %p81
      $region18: #{bottleneck_forward.6} parent=11 // pred_check_branch
        %195 = sbr.rel (%p193) target = $region20
      $region19: #{bottleneck_forward.6} parent=11 // pred_region
        _
      $region20: #{bottleneck_forward.6} parent=11 // pred_fallthru
        _
      // Predicated region
      $region21: #{bottleneck_forward.6} parent=11 // pred_check
        %p196 = pneg %p102
      $region22: #{bottleneck_forward.6} parent=11 // pred_check_branch
        %198 = sbr.rel (%p196) target = $region24
      $region23: #{bottleneck_forward.6} parent=11 // pred_region
        _
      $region24: #{bottleneck_forward.6} parent=11 // pred_fallthru
        _
      // Predicated region
      $region25: #{bottleneck_forward.6} parent=11 // pred_check
        %p199 = pneg %p123
      $region26: #{bottleneck_forward.6} parent=11 // pred_check_branch
        %201 = sbr.rel (%p199) target = $region28
      $region27: #{bottleneck_forward.6} parent=11 // pred_region
        _
      $region28: #{bottleneck_forward.6} parent=11 // pred_fallthru
        _
    $region12: #{bottleneck_forward.6} parent=5 // pred_fallthru
      _
    %p202 = scmp.lt.s32.totalorder %s13, 4
    // Predicated region
    $region29: #{bottleneck_forward.6} parent=5 // pred_check
      %p203 = pneg %p202
    $region30: #{bottleneck_forward.6} parent=5 // pred_check_branch
      %205 = sbr.rel (%p203) target = $region32
    $region31: #{bottleneck_forward.6} parent=5 // pred_region
      // Predicated region
      $region33: #{bottleneck_forward.6} parent=31 // pred_check
        %p206 = pneg %p33
      $region34: #{bottleneck_forward.6} parent=31 // pred_check_branch
        %208 = sbr.rel (%p206) target = $region36
      $region35: #{bottleneck_forward.6} parent=31 // pred_region
        %s209 = smul.u32 24, %s13
        %p210 = scmp.lt.s32.totalorder %s209, 95
        %s211 = scalar_select %p210, %s209, 95
        %s212 = smul.addr %s211, 4
        %s213 = scalar_lea.vmem %s0, %s212
        %s214 = smul.u32 24, %s13
      $region36: #{bottleneck_forward.6} parent=31 // pred_fallthru
        _
    $region32: #{bottleneck_forward.6} parent=5 // pred_fallthru
      _
    %p215 = scmp.le.s32.totalorder 1, %s13
    %p216 = scmp.lt.s32.totalorder %s13, 5
    %p217 = pnand %p215, %p216
    %p218 = pneg %p217
    // Predicated region
    $region37: #{bottleneck_forward.6} parent=5 // pred_check
      _
    $region38: #{bottleneck_forward.6} parent=5 // pred_check_branch
      %220 = sbr.rel (%p217) target = $region40
    $region39: #{bottleneck_forward.6} parent=5 // pred_region
      %s221 = ssub.s32 %s13, 1
      %s222 = smul.u32 24, %s18
      %p223 = scmp.lt.s32.totalorder %s222, 95
      %s224 = scalar_select %p223, %s222, 95
      %s225 = smul.addr %s224, 4
      %s226 = scalar_lea.vmem %s0, %s225
      %p227 = pneg %p39
      %p228 = pneg %p36
      %p229 = pneg %p60
      %p230 = pneg %p57
      %p231 = pneg %p81
      %p232 = pneg %p78
      %p233 = pneg %p102
      %p234 = pneg %p99
      %p235 = pneg %p123
      %p236 = pneg %p120
      %p237 = pneg %p149
      %p238 = pneg %p146
      %s239 = smul.u32 24, %s18
      %p240 = scmp.lt.s32.totalorder %s239, 95
      %s241 = scalar_select %p240, %s239, 95
      %s242 = smul.addr %s241, 4
      %s243 = scalar_lea.vmem %s5, %s242
      %p244 = pneg %p175
      %p245 = pneg %p172
      %p246 = scmp.lt.s32.totalorder %s18, 3
      %s247 = scalar_select %p246, %s18, 3
      %s248 = smul.addr %s247, 2
      %s249 = scalar_lea.vmem %s6, %s248
      %s250 = smul.u32 24, %s18
      %p251 = scmp.lt.s32.totalorder %s250, 95
      %s252 = scalar_select %p251, %s250, 95
      %s253 = smul.addr %s252, 4
      %s254 = scalar_lea.vmem %s0, %s253
      %s255 = smul.u32 24, %s18
      %s256 = smul.u32 24, %s18
      %p257 = scmp.lt.s32.totalorder %s256, 95
      %s258 = scalar_select %p257, %s256, 95
      %s259 = smul.addr %s258, 4
      %s260 = scalar_lea.vmem %s5, %s259
      %s261 = smul.u32 24, %s18
      %p262 = scmp.lt.s32.totalorder %s18, 3
      %s263 = scalar_select %p262, %s18, 3
      %s264 = smul.addr %s263, 2
      %s265 = scalar_lea.vmem %s6, %s264
      %v266 = vld [vmem:[%s254] sm:$0xf]
      %v267 = vld [vmem:[%s254 + $0x4] sm:$0xf]
      %v268 = vld [vmem:[%s254 + $0x8] sm:$0xf]
      %v269 = vld [vmem:[%s254 + $0xc] sm:$0xf]
      %v270 = vld [vmem:[%s254 + $0x10] sm:$0xf]
      %v271 = vld [vmem:[%s254 + $0x14] sm:$0xf]
      %v272 = vld [vmem:[%s254 + $0x18] sm:$0xf]
      %v273 = vld [vmem:[%s254 + $0x1c] sm:$0xf]
      %v274 = vld [vmem:[%s254 + $0x20] sm:$0xf]
      %v275 = vld [vmem:[%s254 + $0x24] sm:$0xf]
      %v276 = vld [vmem:[%s254 + $0x28] sm:$0xf]
      %v277 = vld [vmem:[%s254 + $0x2c] sm:$0xf]
      %v278 = vld [vmem:[%s254 + $0x30] sm:$0xf]
      %v279 = vld [vmem:[%s254 + $0x34] sm:$0xf]
      %v280 = vld [vmem:[%s254 + $0x38] sm:$0xf]
      %v281 = vld [vmem:[%s254 + $0x3c] sm:$0xf]
      %v282 = vld [vmem:[%s254 + $0x40] sm:$0xf]
      %v283 = vld [vmem:[%s254 + $0x44] sm:$0xf]
      %v284 = vld [vmem:[%s254 + $0x48] sm:$0xf]
      %v285 = vld [vmem:[%s254 + $0x4c] sm:$0xf]
      %v286 = vld [vmem:[%s254 + $0x50] sm:$0xf]
      %v287 = vld [vmem:[%s254 + $0x54] sm:$0xf]
      %v288 = vld [vmem:[%s254 + $0x58] sm:$0xf]
      %v289 = vld [vmem:[%s254 + $0x5c] sm:$0xf]
      %v290 = vunpack.c.l.bf16 %v266
      %v291 = vunpack.c.l.bf16 %v267
      %v292 = vunpack.c.l.bf16 %v268
      %v293 = vunpack.c.l.bf16 %v269
      %v294 = vunpack.c.l.bf16 %v270
      %v295 = vunpack.c.l.bf16 %v271
      %v296 = vunpack.c.l.bf16 %v272
      %v297 = vunpack.c.l.bf16 %v273
      %v298 = vunpack.c.l.bf16 %v274
      %v299 = vunpack.c.l.bf16 %v275
      %v300 = vunpack.c.l.bf16 %v276
      %v301 = vunpack.c.l.bf16 %v277
      %v302 = vunpack.c.l.bf16 %v278
      %v303 = vunpack.c.l.bf16 %v279
      %v304 = vunpack.c.l.bf16 %v280
      %v305 = vunpack.c.l.bf16 %v281
      %v306 = vunpack.c.l.bf16 %v282
      %v307 = vunpack.c.l.bf16 %v283
      %v308 = vunpack.c.l.bf16 %v284
      %v309 = vunpack.c.l.bf16 %v285
      %v310 = vunpack.c.l.bf16 %v286
      %v311 = vunpack.c.l.bf16 %v287
      %v312 = vunpack.c.l.bf16 %v288
      %v313 = vunpack.c.l.bf16 %v289
      %v314 = vld [vmem:[%s1] sm:$0x1]
      %v316 = vperm.slane %v314, 0
      %v318 = vmul.f32 %v290, %v316
      %v319 = vmul.f32 %v291, %v316
      %v320 = vmul.f32 %v292, %v316
      %v321 = vmul.f32 %v293, %v316
      %v322 = vmul.f32 %v294, %v316
      %v323 = vmul.f32 %v295, %v316
      %v324 = vmul.f32 %v296, %v316
      %v325 = vmul.f32 %v297, %v316
      %v326 = vmul.f32 %v298, %v316
      %v327 = vmul.f32 %v299, %v316
      %v328 = vmul.f32 %v300, %v316
      %v329 = vmul.f32 %v301, %v316
      %v330 = vmul.f32 %v302, %v316
      %v331 = vmul.f32 %v303, %v316
      %v332 = vmul.f32 %v304, %v316
      %v333 = vmul.f32 %v305, %v316
      %v334 = vmul.f32 %v306, %v316
      %v335 = vmul.f32 %v307, %v316
      %v336 = vmul.f32 %v308, %v316
      %v337 = vmul.f32 %v309, %v316
      %v338 = vmul.f32 %v310, %v316
      %v339 = vmul.f32 %v311, %v316
      %v340 = vmul.f32 %v312, %v316
      %v341 = vmul.f32 %v313, %v316
      %v342 = vld [vmem:[%s2] sm:$0x1]
      %v344 = vperm.slane %v342, 0
      %v346 = vadd.f32 %v318, %v344
      %v347 = vadd.f32 %v319, %v344
      %v348 = vadd.f32 %v320, %v344
      %v349 = vadd.f32 %v321, %v344
      %v350 = vadd.f32 %v322, %v344
      %v351 = vadd.f32 %v323, %v344
      %v352 = vadd.f32 %v324, %v344
      %v353 = vadd.f32 %v325, %v344
      %v354 = vadd.f32 %v326, %v344
      %v355 = vadd.f32 %v327, %v344
      %v356 = vadd.f32 %v328, %v344
      %v357 = vadd.f32 %v329, %v344
      %v358 = vadd.f32 %v330, %v344
      %v359 = vadd.f32 %v331, %v344
      %v360 = vadd.f32 %v332, %v344
      %v361 = vadd.f32 %v333, %v344
      %v362 = vadd.f32 %v334, %v344
      %v363 = vadd.f32 %v335, %v344
      %v364 = vadd.f32 %v336, %v344
      %v365 = vadd.f32 %v337, %v344
      %v366 = vadd.f32 %v338, %v344
      %v367 = vadd.f32 %v339, %v344
      %v368 = vadd.f32 %v340, %v344
      %v369 = vadd.f32 %v341, %v344
      %v370 = vmax.f32 %v346, 0.0
      %v371 = vmax.f32 %v347, 0.0
      %v372 = vmax.f32 %v348, 0.0
      %v373 = vmax.f32 %v349, 0.0
      %v374 = vmax.f32 %v350, 0.0
      %v375 = vmax.f32 %v351, 0.0
      %v376 = vmax.f32 %v352, 0.0
      %v377 = vmax.f32 %v353, 0.0
      %v378 = vmax.f32 %v354, 0.0
      %v379 = vmax.f32 %v355, 0.0
      %v380 = vmax.f32 %v356, 0.0
      %v381 = vmax.f32 %v357, 0.0
      %v382 = vmax.f32 %v358, 0.0
      %v383 = vmax.f32 %v359, 0.0
      %v384 = vmax.f32 %v360, 0.0
      %v385 = vmax.f32 %v361, 0.0
      %v386 = vmax.f32 %v362, 0.0
      %v387 = vmax.f32 %v363, 0.0
      %v388 = vmax.f32 %v364, 0.0
      %v389 = vmax.f32 %v365, 0.0
      %v390 = vmax.f32 %v366, 0.0
      %v391 = vmax.f32 %v367, 0.0
      %v392 = vmax.f32 %v368, 0.0
      %v393 = vmax.f32 %v369, 0.0
      %v394 = vld [vmem:[%s4] sm:$0xff]
      %v395 = vld [vmem:[%s4 + $0x8] sm:$0xff]
      %v396 = vld [vmem:[%s4 + $0x10] sm:$0xff]
      %v397 = vld [vmem:[%s4 + $0x18] sm:$0xff]
      %v398 = vld [vmem:[%s4 + $0x20] sm:$0xff]
      %v399 = vld [vmem:[%s4 + $0x28] sm:$0xff]
      %v400 = vld [vmem:[%s4 + $0x30] sm:$0xff]
      %v401 = vld [vmem:[%s4 + $0x38] sm:$0xff]
      %v402 = vld [vmem:[%s4 + $0x40] sm:$0xff]
      %v403 = vld [vmem:[%s4 + $0x48] sm:$0xff]
      %v404 = vld [vmem:[%s4 + $0x50] sm:$0xff]
      %v405 = vld [vmem:[%s4 + $0x58] sm:$0xff]
      %v406 = vld [vmem:[%s4 + $0x60] sm:$0xff]
      %v407 = vld [vmem:[%s4 + $0x68] sm:$0xff]
      %v408 = vld [vmem:[%s4 + $0x70] sm:$0xff]
      %v409 = vld [vmem:[%s4 + $0x78] sm:$0xff]
      %v410 = vld [vmem:[%s4 + $0x80] sm:$0xff]
      %v411 = vld [vmem:[%s4 + $0x88] sm:$0xff]
      %v412 = vld [vmem:[%s4 + $0x90] sm:$0xff]
      %v413 = vld [vmem:[%s4 + $0x98] sm:$0xff]
      %v414 = vld [vmem:[%s4 + $0xa0] sm:$0xff]
      %v415 = vld [vmem:[%s4 + $0xa8] sm:$0xff]
      %v416 = vld [vmem:[%s4 + $0xb0] sm:$0xff]
      %v417 = vld [vmem:[%s4 + $0xb8] sm:$0xff]
      %419 = vset.pattern.permute.xlu0 0
      %420 = vperm.xlu0 %419, %v394
      %v421 = vpop.permute.xlu0 %420
      %424 = vset.pattern.permute.xlu0 0
      %425 = vperm.xlu0 %424, %v395
      %v426 = vpop.permute.xlu0 %425
      %429 = vset.pattern.permute.xlu0 0
      %430 = vperm.xlu0 %429, %v396
      %v431 = vpop.permute.xlu0 %430
      %434 = vset.pattern.permute.xlu0 0
      %435 = vperm.xlu0 %434, %v397
      %v436 = vpop.permute.xlu0 %435
      %439 = vset.pattern.permute.xlu0 0
      %440 = vperm.xlu0 %439, %v398
      %v441 = vpop.permute.xlu0 %440
      %444 = vset.pattern.permute.xlu0 0
      %445 = vperm.xlu0 %444, %v399
      %v446 = vpop.permute.xlu0 %445
      %449 = vset.pattern.permute.xlu0 0
      %450 = vperm.xlu0 %449, %v400
      %v451 = vpop.permute.xlu0 %450
      %454 = vset.pattern.permute.xlu0 0
      %455 = vperm.xlu0 %454, %v401
      %v456 = vpop.permute.xlu0 %455
      %459 = vset.pattern.permute.xlu0 0
      %460 = vperm.xlu0 %459, %v402
      %v461 = vpop.permute.xlu0 %460
      %464 = vset.pattern.permute.xlu0 0
      %465 = vperm.xlu0 %464, %v403
      %v466 = vpop.permute.xlu0 %465
      %469 = vset.pattern.permute.xlu0 0
      %470 = vperm.xlu0 %469, %v404
      %v471 = vpop.permute.xlu0 %470
      %474 = vset.pattern.permute.xlu0 0
      %475 = vperm.xlu0 %474, %v405
      %v476 = vpop.permute.xlu0 %475
      %479 = vset.pattern.permute.xlu0 0
      %480 = vperm.xlu0 %479, %v406
      %v481 = vpop.permute.xlu0 %480
      %484 = vset.pattern.permute.xlu0 0
      %485 = vperm.xlu0 %484, %v407
      %v486 = vpop.permute.xlu0 %485
      %489 = vset.pattern.permute.xlu0 0
      %490 = vperm.xlu0 %489, %v408
      %v491 = vpop.permute.xlu0 %490
      %494 = vset.pattern.permute.xlu0 0
      %495 = vperm.xlu0 %494, %v409
      %v496 = vpop.permute.xlu0 %495
      %499 = vset.pattern.permute.xlu0 0
      %500 = vperm.xlu0 %499, %v410
      %v501 = vpop.permute.xlu0 %500
      %504 = vset.pattern.permute.xlu0 0
      %505 = vperm.xlu0 %504, %v411
      %v506 = vpop.permute.xlu0 %505
      %509 = vset.pattern.permute.xlu0 0
      %510 = vperm.xlu0 %509, %v412
      %v511 = vpop.permute.xlu0 %510
      %514 = vset.pattern.permute.xlu0 0
      %515 = vperm.xlu0 %514, %v413
      %v516 = vpop.permute.xlu0 %515
      %519 = vset.pattern.permute.xlu0 0
      %520 = vperm.xlu0 %519, %v414
      %v521 = vpop.permute.xlu0 %520
      %524 = vset.pattern.permute.xlu0 0
      %525 = vperm.xlu0 %524, %v415
      %v526 = vpop.permute.xlu0 %525
      %529 = vset.pattern.permute.xlu0 0
      %530 = vperm.xlu0 %529, %v416
      %v531 = vpop.permute.xlu0 %530
      %534 = vset.pattern.permute.xlu0 0
      %535 = vperm.xlu0 %534, %v417
      %v536 = vpop.permute.xlu0 %535
      %v538 = vmul.f32 %v370, %v421
      %v539 = vmul.f32 %v371, %v426
      %v540 = vmul.f32 %v372, %v431
      %v541 = vmul.f32 %v373, %v436
      %v542 = vmul.f32 %v374, %v441
      %v543 = vmul.f32 %v375, %v446
      %v544 = vmul.f32 %v376, %v451
      %v545 = vmul.f32 %v377, %v456
      %v546 = vmul.f32 %v378, %v461
      %v547 = vmul.f32 %v379, %v466
      %v548 = vmul.f32 %v380, %v471
      %v549 = vmul.f32 %v381, %v476
      %v550 = vmul.f32 %v382, %v481
      %v551 = vmul.f32 %v383, %v486
      %v552 = vmul.f32 %v384, %v491
      %v553 = vmul.f32 %v385, %v496
      %v554 = vmul.f32 %v386, %v501
      %v555 = vmul.f32 %v387, %v506
      %v556 = vmul.f32 %v388, %v511
      %v557 = vmul.f32 %v389, %v516
      %v558 = vmul.f32 %v390, %v521
      %v559 = vmul.f32 %v391, %v526
      %v560 = vmul.f32 %v392, %v531
      %v561 = vmul.f32 %v393, %v536
      %v562 = vpack.c.bf16 %v538, %v538
      %v563 = vpack.c.bf16 %v539, %v539
      %v564 = vpack.c.bf16 %v540, %v540
      %v565 = vpack.c.bf16 %v541, %v541
      %v566 = vpack.c.bf16 %v542, %v542
      %v567 = vpack.c.bf16 %v543, %v543
      %v568 = vpack.c.bf16 %v544, %v544
      %v569 = vpack.c.bf16 %v545, %v545
      %v570 = vpack.c.bf16 %v546, %v546
      %v571 = vpack.c.bf16 %v547, %v547
      %v572 = vpack.c.bf16 %v548, %v548
      %v573 = vpack.c.bf16 %v549, %v549
      %v574 = vpack.c.bf16 %v550, %v550
      %v575 = vpack.c.bf16 %v551, %v551
      %v576 = vpack.c.bf16 %v552, %v552
      %v577 = vpack.c.bf16 %v553, %v553
      %v578 = vpack.c.bf16 %v554, %v554
      %v579 = vpack.c.bf16 %v555, %v555
      %v580 = vpack.c.bf16 %v556, %v556
      %v581 = vpack.c.bf16 %v557, %v557
      %v582 = vpack.c.bf16 %v558, %v558
      %v583 = vpack.c.bf16 %v559, %v559
      %v584 = vpack.c.bf16 %v560, %v560
      %v585 = vpack.c.bf16 %v561, %v561
      %586 = vst [vmem:[%s260] sm:$0xf] %v562
      %587 = vst [vmem:[%s260 + $0x4] sm:$0xf] %v563
      %588 = vst [vmem:[%s260 + $0x8] sm:$0xf] %v564
      %589 = vst [vmem:[%s260 + $0xc] sm:$0xf] %v565
      %590 = vst [vmem:[%s260 + $0x10] sm:$0xf] %v566
      %591 = vst [vmem:[%s260 + $0x14] sm:$0xf] %v567
      %592 = vst [vmem:[%s260 + $0x18] sm:$0xf] %v568
      %593 = vst [vmem:[%s260 + $0x1c] sm:$0xf] %v569
      %594 = vst [vmem:[%s260 + $0x20] sm:$0xf] %v570
      %595 = vst [vmem:[%s260 + $0x24] sm:$0xf] %v571
      %596 = vst [vmem:[%s260 + $0x28] sm:$0xf] %v572
      %597 = vst [vmem:[%s260 + $0x2c] sm:$0xf] %v573
      %598 = vst [vmem:[%s260 + $0x30] sm:$0xf] %v574
      %599 = vst [vmem:[%s260 + $0x34] sm:$0xf] %v575
      %600 = vst [vmem:[%s260 + $0x38] sm:$0xf] %v576
      %601 = vst [vmem:[%s260 + $0x3c] sm:$0xf] %v577
      %602 = vst [vmem:[%s260 + $0x40] sm:$0xf] %v578
      %603 = vst [vmem:[%s260 + $0x44] sm:$0xf] %v579
      %604 = vst [vmem:[%s260 + $0x48] sm:$0xf] %v580
      %605 = vst [vmem:[%s260 + $0x4c] sm:$0xf] %v581
      %606 = vst [vmem:[%s260 + $0x50] sm:$0xf] %v582
      %607 = vst [vmem:[%s260 + $0x54] sm:$0xf] %v583
      %608 = vst [vmem:[%s260 + $0x58] sm:$0xf] %v584
      %609 = vst [vmem:[%s260 + $0x5c] sm:$0xf] %v585
      %v610 = vld [vmem:[%s3] sm:$0xf]
      %v611 = vld [vmem:[%s3 + $0x4] sm:$0xf]
      %v612 = vld [vmem:[%s3 + $0x8] sm:$0xf]
      %v613 = vld [vmem:[%s3 + $0xc] sm:$0xf]
      %v614 = vld [vmem:[%s3 + $0x10] sm:$0xf]
      %v615 = vld [vmem:[%s3 + $0x14] sm:$0xf]
      %v616 = vld [vmem:[%s3 + $0x18] sm:$0xf]
      %v617 = vld [vmem:[%s3 + $0x1c] sm:$0xf]
      %v618 = vld [vmem:[%s3 + $0x20] sm:$0xf]
      %v619 = vld [vmem:[%s3 + $0x24] sm:$0xf]
      %v620 = vld [vmem:[%s3 + $0x28] sm:$0xf]
      %v621 = vld [vmem:[%s3 + $0x2c] sm:$0xf]
      %v622 = vld [vmem:[%s3 + $0x30] sm:$0xf]
      %v623 = vld [vmem:[%s3 + $0x34] sm:$0xf]
      %v624 = vld [vmem:[%s3 + $0x38] sm:$0xf]
      %v625 = vld [vmem:[%s3 + $0x3c] sm:$0xf]
      %v650 = vunpack.c.l.b16 %v562
      %v651 = vunpack.c.l.b16 %v563
      %v652 = vunpack.c.l.b16 %v564
      %v653 = vunpack.c.l.b16 %v565
      %v654 = vunpack.c.l.b16 %v566
      %v655 = vunpack.c.l.b16 %v567
      %v656 = vunpack.c.l.b16 %v568
      %v657 = vunpack.c.l.b16 %v569
      %v658 = vunpack.c.l.b16 %v570
      %v659 = vunpack.c.l.b16 %v571
      %v660 = vunpack.c.l.b16 %v572
      %v661 = vunpack.c.l.b16 %v573
      %v662 = vunpack.c.l.b16 %v574
      %v663 = vunpack.c.l.b16 %v575
      %v664 = vunpack.c.l.b16 %v576
      %v665 = vunpack.c.l.b16 %v577
      %v666 = vunpack.c.l.b16 %v578
      %v667 = vunpack.c.l.b16 %v579
      %v668 = vunpack.c.l.b16 %v580
      %v669 = vunpack.c.l.b16 %v581
      %v670 = vunpack.c.l.b16 %v582
      %v671 = vunpack.c.l.b16 %v583
      %v672 = vunpack.c.l.b16 %v584
      %v673 = vunpack.c.l.b16 %v585
      %v674 = vpack.c.b16 %v651, %v650
      %v675 = vpack.c.b16 %v653, %v652
      %v676 = vpack.c.b16 %v655, %v654
      %v677 = vpack.c.b16 %v657, %v656
      %v678 = vpack.c.b16 %v659, %v658
      %v679 = vpack.c.b16 %v661, %v660
      %v680 = vpack.c.b16 %v663, %v662
      %v681 = vpack.c.b16 %v665, %v664
      %v682 = vpack.c.b16 %v667, %v666
      %v683 = vpack.c.b16 %v669, %v668
      %v684 = vpack.c.b16 %v671, %v670
      %v685 = vpack.c.b16 %v673, %v672
      %v714 = vunpack.c.l.b16 %v610
      %v715 = vunpack.c.l.b16 %v611
      %v716 = vunpack.c.l.b16 %v612
      %v717 = vunpack.c.l.b16 %v613
      %v718 = vunpack.c.l.b16 %v614
      %v719 = vunpack.c.l.b16 %v615
      %v720 = vunpack.c.l.b16 %v616
      %v721 = vunpack.c.l.b16 %v617
      %v722 = vunpack.c.l.b16 %v618
      %v723 = vunpack.c.l.b16 %v619
      %v724 = vunpack.c.l.b16 %v620
      %v725 = vunpack.c.l.b16 %v621
      %v726 = vunpack.c.l.b16 %v622
      %v727 = vunpack.c.l.b16 %v623
      %v728 = vunpack.c.l.b16 %v624
      %v729 = vunpack.c.l.b16 %v625
      %v730 = vpack.c.b16 %v715, %v714
      %v731 = vpack.c.b16 %v717, %v716
      %v732 = vpack.c.b16 %v719, %v718
      %v733 = vpack.c.b16 %v721, %v720
      %v734 = vpack.c.b16 %v723, %v722
      %v735 = vpack.c.b16 %v725, %v724
      %v736 = vpack.c.b16 %v727, %v726
      %v737 = vpack.c.b16 %v729, %v728
      %746 = vmatpush.bf16.msra.mxu0 %v737
      %747 = vmatpush.bf16.msra.mxu0 %v736
      %748 = vmatpush.bf16.msra.mxu0 %v735
      %749 = vmatpush.bf16.msra.mxu0 %v734
      %750 = vmatpush.bf16.msra.mxu0 %v733
      %751 = vmatpush.bf16.msra.mxu0 %v732
      %752 = vmatpush.bf16.msra.mxu0 %v731
      %753 = vmatpush.bf16.msra.mxu0 %v730
      %754 = vmatmul.bf16.gmra.mxu0 %v674
      %v755 = vpop.f32.mrf.mxu0
      %v756 = vadd.f32 0.0, %v755
      %v757 = vpop.f32.mrf.mxu0
      %v758 = vadd.f32 0.0, %v757
      %759 = vmatmul.bf16.gmra.mxu0 %v675
      %v760 = vpop.f32.mrf.mxu0
      %v761 = vadd.f32 0.0, %v760
      %v762 = vpop.f32.mrf.mxu0
      %v763 = vadd.f32 0.0, %v762
      %764 = vmatmul.bf16.gmra.mxu0 %v676
      %v765 = vpop.f32.mrf.mxu0
      %v766 = vadd.f32 0.0, %v765
      %v767 = vpop.f32.mrf.mxu0
      %v768 = vadd.f32 0.0, %v767
      %769 = vmatmul.bf16.gmra.mxu0 %v677
      %v770 = vpop.f32.mrf.mxu0
      %v771 = vadd.f32 0.0, %v770
      %v772 = vpop.f32.mrf.mxu0
      %v773 = vadd.f32 0.0, %v772
      %774 = vmatmul.bf16.gmra.mxu0 %v678
      %v775 = vpop.f32.mrf.mxu0
      %v776 = vadd.f32 0.0, %v775
      %v777 = vpop.f32.mrf.mxu0
      %v778 = vadd.f32 0.0, %v777
      %779 = vmatmul.bf16.gmra.mxu0 %v679
      %v780 = vpop.f32.mrf.mxu0
      %v781 = vadd.f32 0.0, %v780
      %v782 = vpop.f32.mrf.mxu0
      %v783 = vadd.f32 0.0, %v782
      %784 = vmatmul.bf16.gmra.mxu0 %v680
      %v785 = vpop.f32.mrf.mxu0
      %v786 = vadd.f32 0.0, %v785
      %v787 = vpop.f32.mrf.mxu0
      %v788 = vadd.f32 0.0, %v787
      %789 = vmatmul.bf16.gmra.mxu0 %v681
      %v790 = vpop.f32.mrf.mxu0
      %v791 = vadd.f32 0.0, %v790
      %v792 = vpop.f32.mrf.mxu0
      %v793 = vadd.f32 0.0, %v792
      %794 = vmatmul.bf16.gmra.mxu0 %v682
      %v795 = vpop.f32.mrf.mxu0
      %v796 = vadd.f32 0.0, %v795
      %v797 = vpop.f32.mrf.mxu0
      %v798 = vadd.f32 0.0, %v797
      %799 = vmatmul.bf16.gmra.mxu0 %v683
      %v800 = vpop.f32.mrf.mxu0
      %v801 = vadd.f32 0.0, %v800
      %v802 = vpop.f32.mrf.mxu0
      %v803 = vadd.f32 0.0, %v802
      %804 = vmatmul.bf16.gmra.mxu0 %v684
      %v805 = vpop.f32.mrf.mxu0
      %v806 = vadd.f32 0.0, %v805
      %v807 = vpop.f32.mrf.mxu0
      %v808 = vadd.f32 0.0, %v807
      %809 = vmatmul.bf16.gmra.mxu0 %v685
      %v810 = vpop.f32.mrf.mxu0
      %v811 = vadd.f32 0.0, %v810
      %v812 = vpop.f32.mrf.mxu0
      %v813 = vadd.f32 0.0, %v812
      %814 = vdwg.mxu0
      %v815 = vadd.f32 %v756, %v758
      %v816 = vadd.f32 %v815, %v761
      %v817 = vadd.f32 %v816, %v763
      %v818 = vadd.f32 %v817, %v766
      %v819 = vadd.f32 %v818, %v768
      %v820 = vadd.f32 %v819, %v771
      %v821 = vadd.f32 %v820, %v773
      %v822 = vadd.f32 %v821, %v776
      %v823 = vadd.f32 %v822, %v778
      %v824 = vadd.f32 %v823, %v781
      %v825 = vadd.f32 %v824, %v783
      %v826 = vadd.f32 %v825, %v786
      %v827 = vadd.f32 %v826, %v788
      %v828 = vadd.f32 %v827, %v791
      %v829 = vadd.f32 %v828, %v793
      %v830 = vadd.f32 %v829, %v796
      %v831 = vadd.f32 %v830, %v798
      %v832 = vadd.f32 %v831, %v801
      %v833 = vadd.f32 %v832, %v803
      %v834 = vadd.f32 %v833, %v806
      %v835 = vadd.f32 %v834, %v808
      %v836 = vadd.f32 %v835, %v811
      %v837 = vadd.f32 %v836, %v813
      %v838 = vrot.slane %v837, 4
      %v839 = vadd.f32 %v837, %v838
      %v840 = vrot.slane %v839, 2
      %v841 = vadd.f32 %v839, %v840
      %v842 = vrot.slane %v841, 1
      %v843 = vadd.f32 %v841, %v842
      %v844 = vmul.f32 %v756, %v756
      %v845 = vmul.f32 %v758, %v758
      %v846 = vmul.f32 %v761, %v761
      %v847 = vmul.f32 %v763, %v763
      %v848 = vmul.f32 %v766, %v766
      %v849 = vmul.f32 %v768, %v768
      %v850 = vmul.f32 %v771, %v771
      %v851 = vmul.f32 %v773, %v773
      %v852 = vmul.f32 %v776, %v776
      %v853 = vmul.f32 %v778, %v778
      %v854 = vmul.f32 %v781, %v781
      %v855 = vmul.f32 %v783, %v783
      %v856 = vmul.f32 %v786, %v786
      %v857 = vmul.f32 %v788, %v788
      %v858 = vmul.f32 %v791, %v791
      %v859 = vmul.f32 %v793, %v793
      %v860 = vmul.f32 %v796, %v796
      %v861 = vmul.f32 %v798, %v798
      %v862 = vmul.f32 %v801, %v801
      %v863 = vmul.f32 %v803, %v803
      %v864 = vmul.f32 %v806, %v806
      %v865 = vmul.f32 %v808, %v808
      %v866 = vmul.f32 %v811, %v811
      %v867 = vmul.f32 %v813, %v813
      %v868 = vadd.f32 %v844, %v845
      %v869 = vadd.f32 %v868, %v846
      %v870 = vadd.f32 %v869, %v847
      %v871 = vadd.f32 %v870, %v848
      %v872 = vadd.f32 %v871, %v849
      %v873 = vadd.f32 %v872, %v850
      %v874 = vadd.f32 %v873, %v851
      %v875 = vadd.f32 %v874, %v852
      %v876 = vadd.f32 %v875, %v853
      %v877 = vadd.f32 %v876, %v854
      %v878 = vadd.f32 %v877, %v855
      %v879 = vadd.f32 %v878, %v856
      %v880 = vadd.f32 %v879, %v857
      %v881 = vadd.f32 %v880, %v858
      %v882 = vadd.f32 %v881, %v859
      %v883 = vadd.f32 %v882, %v860
      %v884 = vadd.f32 %v883, %v861
      %v885 = vadd.f32 %v884, %v862
      %v886 = vadd.f32 %v885, %v863
      %v887 = vadd.f32 %v886, %v864
      %v888 = vadd.f32 %v887, %v865
      %v889 = vadd.f32 %v888, %v866
      %v890 = vadd.f32 %v889, %v867
      %v891 = vrot.slane %v890, 4
      %v892 = vadd.f32 %v890, %v891
      %v893 = vrot.slane %v892, 2
      %v894 = vadd.f32 %v892, %v893
      %v895 = vrot.slane %v894, 1
      %v896 = vadd.f32 %v894, %v895
      %vm897 = vcmask 1040384
      %v898 = vsel %vm897, %v843, %v896
      %899 = vst [vmem:[%s265] sm:$0x3] %v898
      %s900 = smul.u32 24, %s18
      %p901 = scmp.lt.s32.totalorder %s900, 95
      %s902 = scalar_select %p901, %s900, 95
      %s903 = smul.addr %s902, 4
      %s904 = scalar_lea.vmem %s5, %s903
      %p905 = scmp.lt.s32.totalorder %s18, 3
      %s906 = scalar_select %p905, %s18, 3
      %s907 = smul.addr %s906, 2
      %s908 = scalar_lea.vmem %s6, %s907
      // Predicated region
      $region41: #{bottleneck_forward.6} parent=39 // pred_check
        %p909 = pneg %p146
      $region42: #{bottleneck_forward.6} parent=39 // pred_check_branch
        %911 = sbr.rel (%p909) target = $region44
      $region43: #{bottleneck_forward.6} parent=39 // pred_region
        %s912 = smul.u32 24, %s18
      $region44: #{bottleneck_forward.6} parent=39 // pred_fallthru
        _
      // Predicated region
      $region45: #{bottleneck_forward.6} parent=39 // pred_check
        %p913 = pneg %p172
      $region46: #{bottleneck_forward.6} parent=39 // pred_check_branch
        %915 = sbr.rel (%p913) target = $region48
      $region47: #{bottleneck_forward.6} parent=39 // pred_region
        _
      $region48: #{bottleneck_forward.6} parent=39 // pred_fallthru
        _
    $region40: #{bottleneck_forward.6} parent=5 // pred_fallthru
      _
    %p916 = scmp.le.s32.totalorder 2, %s13
    // Predicated region
    $region49: #{bottleneck_forward.6} parent=5 // pred_check
      %p917 = pneg %p916
    $region50: #{bottleneck_forward.6} parent=5 // pred_check_branch
      %919 = sbr.rel (%p917) target = $region52
    $region51: #{bottleneck_forward.6} parent=5 // pred_region
      %s920 = ssub.s32 %s13, 2
      // Predicated region
      $region53: #{bottleneck_forward.6} parent=51 // pred_check
        %p921 = pneg %p152
      $region54: #{bottleneck_forward.6} parent=51 // pred_check_branch
        %923 = sbr.rel (%p921) target = $region56
      $region55: #{bottleneck_forward.6} parent=51 // pred_region
        %s924 = smul.u32 24, %s19
        %p925 = scmp.lt.s32.totalorder %s924, 95
        %s926 = scalar_select %p925, %s924, 95
        %s927 = smul.addr %s926, 4
        %s928 = scalar_lea.vmem %s5, %s927
      $region56: #{bottleneck_forward.6} parent=51 // pred_fallthru
        _
      // Predicated region
      $region57: #{bottleneck_forward.6} parent=51 // pred_check
        %p929 = pneg %p178
      $region58: #{bottleneck_forward.6} parent=51 // pred_check_branch
        %931 = sbr.rel (%p929) target = $region60
      $region59: #{bottleneck_forward.6} parent=51 // pred_region
        %p932 = scmp.lt.s32.totalorder %s19, 3
        %s933 = scalar_select %p932, %s19, 3
        %s934 = smul.addr %s933, 2
        %s935 = scalar_lea.vmem %s6, %s934
      $region60: #{bottleneck_forward.6} parent=51 // pred_fallthru
        _
    $region52: #{bottleneck_forward.6} parent=5 // pred_fallthru
      _
  $region6: #{bottleneck_forward.6} parent=0 // loop_footer
    %s17 = sadd.s32 1, %s13
  $region7: #{bottleneck_forward.6} parent=0 // loop_footer_branch
    %12 = sbr.rel target = $region3
  $region8: #{bottleneck_forward.6} parent=0 // loop_exit
    _

// kernel: bottleneck_forward.7
$region0: #{bottleneck_forward.7}
  #allocation0 [shape = 'u32[]', space=smem, size = 0x4, offset = 0x4, fixed_abs, tag = 'smem constant byte address 0x4 - core index']
  #allocation1 [shape = 'u32[72,128]{1,0:T(1,128)}', space=vmem, size = 0x9000, scoped, tag = 'internal scratch']
  %s0 = inlined_call_operand.vmem [shape: bf16[768,128], index: 0, kind: input, shape index: {}]
  %s1 = inlined_call_operand.vmem [shape: bf16[128,128], index: 1, kind: input, shape index: {}]
  %s2 = inlined_call_operand.vmem [shape: f32[1,128], index: 2, kind: input, shape index: {}]
  %s3 = inlined_call_operand.vmem [shape: f32[1,128], index: 3, kind: input, shape index: {}]
  %s4 = inlined_call_operand.vmem [shape: bf16[768,128], index: 4, kind: input, shape index: {}]
  %s5 = inlined_call_operand.vmem [shape: f32[768,128], index: 5, kind: output, shape index: {}]
  %s6 = sld [smem:[#allocation0]]
  $region53: #{bottleneck_forward.7} parent=0
    _
  %s8 = ssub.s32 1, %s6
  %s9 = scalar_select 0, %s8, %s6
  loop: start=0, step=1, limit=6
  $region2: #{bottleneck_forward.7} parent=0 // loop_pre_header
    _
  $region3: #{bottleneck_forward.7} parent=0 // loop_header
    %s11 = sphi 0, %s15
    %p12 = scmp.ge.s32.totalorder %s11, 6
    %s21 = sphi 0, %s23
    %s24 = sphi 0, %s21
    %s25 = sphi 0, %s24
    %s41 = sphi 0, %s25
    %s45 = sphi 0, %s45
    %s47 = sphi 0, %s45
    %s48 = sphi 0, %s47
    %s62 = sphi 0, %s48
    %s66 = sphi 0, %s66
    %s68 = sphi 0, %s66
    %s69 = sphi 0, %s68
    %s83 = sphi 0, %s69
    %s87 = sphi 0, %s87
    %s89 = sphi 0, %s87
    %s90 = sphi 0, %s89
    %s104 = sphi 0, %s90
    %s110 = sphi 0, %s112
    %s113 = sphi 0, %s110
    %s114 = sphi 0, %s113
    %s130 = sphi 0, %s114
    %s136 = sphi 0, %s138
    %s139 = sphi 0, %s136
    %s140 = sphi 0, %s139
    %s156 = sphi 0, %s140
  $region4: #{bottleneck_forward.7} parent=0 // loop_header_branch
    %14 = sbr.rel (%p12) target = $region8
  $region5: #{bottleneck_forward.7} parent=0 // loop_body
    %s16 = ssub.s32 %s11, 1
    %s17 = ssub.s32 %s11, 2
    %s18 = sadd.s32 %s11, 1
    %s19 = ssub.s32 %s11, %s18
    %p20 = scmp.eq.s32.totalorder %s19, 0
    %s22 = sadd.s32 %s21, 1
    %s23 = scalar_select %p20, %s21, %s22
    %p26 = pneg %p20
    %p27 = scmp.eq.s32.totalorder %s11, 3
    %p28 = por %p26, %p27
    %p29 = scmp.ne.s32.totalorder %s21, %s24
    %p30 = scmp.eq.s32.totalorder %s11, 0
    %p31 = por %p29, %p30
    %p32 = scmp.ne.s32.totalorder %s21, %s24
    %p33 = scmp.eq.s32.totalorder %s16, 3
    %p34 = por %p32, %p33
    %p35 = scmp.ne.s32.totalorder %s24, %s25
    %p36 = scmp.eq.s32.totalorder %s16, 0
    %p37 = por %p35, %p36
    %p38 = scmp.ne.s32.totalorder %s24, %s25
    %p39 = scmp.eq.s32.totalorder %s17, 3
    %p40 = por %p38, %p39
    %p42 = scmp.ne.s32.totalorder %s25, %s41
    %p43 = scmp.eq.s32.totalorder %s17, 0
    %p44 = por %p42, %p43
    %s46 = sadd.s32 %s45, 1
    %p49 = scmp.eq.s32.totalorder %s11, 3
    %p50 = scmp.ne.s32.totalorder %s45, %s47
    %p51 = scmp.eq.s32.totalorder %s11, 0
    %p52 = por %p50, %p51
    %p53 = scmp.ne.s32.totalorder %s45, %s47
    %p54 = scmp.eq.s32.totalorder %s16, 3
    %p55 = por %p53, %p54
    %p56 = scmp.ne.s32.totalorder %s47, %s48
    %p57 = scmp.eq.s32.totalorder %s16, 0
    %p58 = por %p56, %p57
    %p59 = scmp.ne.s32.totalorder %s47, %s48
    %p60 = scmp.eq.s32.totalorder %s17, 3
    %p61 = por %p59, %p60
    %p63 = scmp.ne.s32.totalorder %s48, %s62
    %p64 = scmp.eq.s32.totalorder %s17, 0
    %p65 = por %p63, %p64
    %s67 = sadd.s32 %s66, 1
    %p70 = scmp.eq.s32.totalorder %s11, 3
    %p71 = scmp.ne.s32.totalorder %s66, %s68
    %p72 = scmp.eq.s32.totalorder %s11, 0
    %p73 = por %p71, %p72
    %p74 = scmp.ne.s32.totalorder %s66, %s68
    %p75 = scmp.eq.s32.totalorder %s16, 3
    %p76 = por %p74, %p75
    %p77 = scmp.ne.s32.totalorder %s68, %s69
    %p78 = scmp.eq.s32.totalorder %s16, 0
    %p79 = por %p77, %p78
    %p80 = scmp.ne.s32.totalorder %s68, %s69
    %p81 = scmp.eq.s32.totalorder %s17, 3
    %p82 = por %p80, %p81
    %p84 = scmp.ne.s32.totalorder %s69, %s83
    %p85 = scmp.eq.s32.totalorder %s17, 0
    %p86 = por %p84, %p85
    %s88 = sadd.s32 %s87, 1
    %p91 = scmp.eq.s32.totalorder %s11, 3
    %p92 = scmp.ne.s32.totalorder %s87, %s89
    %p93 = scmp.eq.s32.totalorder %s11, 0
    %p94 = por %p92, %p93
    %p95 = scmp.ne.s32.totalorder %s87, %s89
    %p96 = scmp.eq.s32.totalorder %s16, 3
    %p97 = por %p95, %p96
    %p98 = scmp.ne.s32.totalorder %s89, %s90
    %p99 = scmp.eq.s32.totalorder %s16, 0
    %p100 = por %p98, %p99
    %p101 = scmp.ne.s32.totalorder %s89, %s90
    %p102 = scmp.eq.s32.totalorder %s17, 3
    %p103 = por %p101, %p102
    %p105 = scmp.ne.s32.totalorder %s90, %s104
    %p106 = scmp.eq.s32.totalorder %s17, 0
    %p107 = por %p105, %p106
    %s108 = ssub.s32 %s11, %s18
    %p109 = scmp.eq.s32.totalorder %s108, 0
    %s111 = sadd.s32 %s110, 1
    %s112 = scalar_select %p109, %s110, %s111
    %p115 = pneg %p109
    %p116 = scmp.eq.s32.totalorder %s11, 3
    %p117 = por %p115, %p116
    %p118 = scmp.ne.s32.totalorder %s110, %s113
    %p119 = scmp.eq.s32.totalorder %s11, 0
    %p120 = por %p118, %p119
    %p121 = scmp.ne.s32.totalorder %s110, %s113
    %p122 = scmp.eq.s32.totalorder %s16, 3
    %p123 = por %p121, %p122
    %p124 = scmp.ne.s32.totalorder %s113, %s114
    %p125 = scmp.eq.s32.totalorder %s16, 0
    %p126 = por %p124, %p125
    %p127 = scmp.ne.s32.totalorder %s113, %s114
    %p128 = scmp.eq.s32.totalorder %s17, 3
    %p129 = por %p127, %p128
    %p131 = scmp.ne.s32.totalorder %s114, %s130
    %p132 = scmp.eq.s32.totalorder %s17, 0
    %p133 = por %p131, %p132
    %s134 = ssub.s32 %s11, %s18
    %p135 = scmp.eq.s32.totalorder %s134, 0
    %s137 = sadd.s32 %s136, 1
    %s138 = scalar_select %p135, %s136, %s137
    %p141 = pneg %p135
    %p142 = scmp.eq.s32.totalorder %s11, 3
    %p143 = por %p141, %p142
    %p144 = scmp.ne.s32.totalorder %s136, %s139
    %p145 = scmp.eq.s32.totalorder %s11, 0
    %p146 = por %p144, %p145
    %p147 = scmp.ne.s32.totalorder %s136, %s139
    %p148 = scmp.eq.s32.totalorder %s16, 3
    %p149 = por %p147, %p148
    %p150 = scmp.ne.s32.totalorder %s139, %s140
    %p151 = scmp.eq.s32.totalorder %s16, 0
    %p152 = por %p150, %p151
    %p153 = scmp.ne.s32.totalorder %s139, %s140
    %p154 = scmp.eq.s32.totalorder %s17, 3
    %p155 = por %p153, %p154
    %p157 = scmp.ne.s32.totalorder %s140, %s156
    %p158 = scmp.eq.s32.totalorder %s17, 0
    %p159 = por %p157, %p158
    %p160 = scmp.le.s32.totalorder 1, %s11
    %p161 = scmp.lt.s32.totalorder %s11, 5
    %p162 = pnand %p160, %p161
    %p163 = pneg %p162
    // Predicated region
    $region9: #{bottleneck_forward.7} parent=5 // pred_check
      _
    $region10: #{bottleneck_forward.7} parent=5 // pred_check_branch
      %165 = sbr.rel (%p162) target = $region12
    $region11: #{bottleneck_forward.7} parent=5 // pred_region
      %s166 = ssub.s32 %s11, 1
      // Predicated region
      $region13: #{bottleneck_forward.7} parent=11 // pred_check
        %p167 = pneg %p58
      $region14: #{bottleneck_forward.7} parent=11 // pred_check_branch
        %169 = sbr.rel (%p167) target = $region16
      $region15: #{bottleneck_forward.7} parent=11 // pred_region
        _
      $region16: #{bottleneck_forward.7} parent=11 // pred_fallthru
        _
      // Predicated region
      $region17: #{bottleneck_forward.7} parent=11 // pred_check
        %p170 = pneg %p79
      $region18: #{bottleneck_forward.7} parent=11 // pred_check_branch
        %172 = sbr.rel (%p170) target = $region20
      $region19: #{bottleneck_forward.7} parent=11 // pred_region
        _
      $region20: #{bottleneck_forward.7} parent=11 // pred_fallthru
        _
      // Predicated region
      $region21: #{bottleneck_forward.7} parent=11 // pred_check
        %p173 = pneg %p100
      $region22: #{bottleneck_forward.7} parent=11 // pred_check_branch
        %175 = sbr.rel (%p173) target = $region24
      $region23: #{bottleneck_forward.7} parent=11 // pred_region
        _
      $region24: #{bottleneck_forward.7} parent=11 // pred_fallthru
        _
    $region12: #{bottleneck_forward.7} parent=5 // pred_fallthru
      _
    %p176 = scmp.lt.s32.totalorder %s11, 4
    // Predicated region
    $region25: #{bottleneck_forward.7} parent=5 // pred_check
      %p177 = pneg %p176
    $region26: #{bottleneck_forward.7} parent=5 // pred_check_branch
      %179 = sbr.rel (%p177) target = $region28
    $region27: #{bottleneck_forward.7} parent=5 // pred_region
      // Predicated region
      $region29: #{bottleneck_forward.7} parent=27 // pred_check
        %p180 = pneg %p31
      $region30: #{bottleneck_forward.7} parent=27 // pred_check_branch
        %182 = sbr.rel (%p180) target = $region32
      $region31: #{bottleneck_forward.7} parent=27 // pred_region
        %s183 = smul.u32 24, %s11
        %p184 = scmp.lt.s32.totalorder %s183, 95
        %s185 = scalar_select %p184, %s183, 95
        %s186 = smul.addr %s185, 4
        %s187 = scalar_lea.vmem %s0, %s186
        %s188 = smul.u32 24, %s11
      $region32: #{bottleneck_forward.7} parent=27 // pred_fallthru
        _
      // Predicated region
      $region33: #{bottleneck_forward.7} parent=27 // pred_check
        %p189 = pneg %p120
      $region34: #{bottleneck_forward.7} parent=27 // pred_check_branch
        %191 = sbr.rel (%p189) target = $region36
      $region35: #{bottleneck_forward.7} parent=27 // pred_region
        %s192 = smul.u32 24, %s11
        %p193 = scmp.lt.s32.totalorder %s192, 95
        %s194 = scalar_select %p193, %s192, 95
        %s195 = smul.addr %s194, 4
        %s196 = scalar_lea.vmem %s4, %s195
        %s197 = smul.u32 24, %s11
      $region36: #{bottleneck_forward.7} parent=27 // pred_fallthru
        _
    $region28: #{bottleneck_forward.7} parent=5 // pred_fallthru
      _
    %p198 = scmp.le.s32.totalorder 1, %s11
    %p199 = scmp.lt.s32.totalorder %s11, 5
    %p200 = pnand %p198, %p199
    %p201 = pneg %p200
    // Predicated region
    $region37: #{bottleneck_forward.7} parent=5 // pred_check
      _
    $region38: #{bottleneck_forward.7} parent=5 // pred_check_branch
      %203 = sbr.rel (%p200) target = $region40
    $region39: #{bottleneck_forward.7} parent=5 // pred_region
      %s204 = ssub.s32 %s11, 1
      %s205 = smul.u32 24, %s16
      %p206 = scmp.lt.s32.totalorder %s205, 95
      %s207 = scalar_select %p206, %s205, 95
      %s208 = smul.addr %s207, 4
      %s209 = scalar_lea.vmem %s0, %s208
      %p210 = pneg %p37
      %p211 = pneg %p34
      %p212 = pneg %p58
      %p213 = pneg %p55
      %p214 = pneg %p79
      %p215 = pneg %p76
      %p216 = pneg %p100
      %p217 = pneg %p97
      %s218 = smul.u32 24, %s16
      %p219 = scmp.lt.s32.totalorder %s218, 95
      %s220 = scalar_select %p219, %s218, 95
      %s221 = smul.addr %s220, 4
      %s222 = scalar_lea.vmem %s4, %s221
      %p223 = pneg %p126
      %p224 = pneg %p123
      %p225 = pneg %p152
      %p226 = pneg %p149
      %s227 = smul.u32 24, %s16
      %p228 = scmp.lt.s32.totalorder %s227, 95
      %s229 = scalar_select %p228, %s227, 95
      %s230 = smul.addr %s229, 8
      %s231 = scalar_lea.vmem %s5, %s230
      %s232 = smul.u32 24, %s16
      %p233 = scmp.lt.s32.totalorder %s232, 95
      %s234 = scalar_select %p233, %s232, 95
      %s235 = smul.addr %s234, 4
      %s236 = scalar_lea.vmem %s0, %s235
      %s237 = smul.u32 24, %s16
      %s238 = smul.u32 24, %s16
      %p239 = scmp.lt.s32.totalorder %s238, 95
      %s240 = scalar_select %p239, %s238, 95
      %s241 = smul.addr %s240, 4
      %s242 = scalar_lea.vmem %s4, %s241
      %s243 = smul.u32 24, %s16
      %s244 = smul.u32 24, %s16
      %p245 = scmp.lt.s32.totalorder %s244, 95
      %s246 = scalar_select %p245, %s244, 95
      %s247 = smul.addr %s246, 8
      %s248 = scalar_lea.vmem %s5, %s247
      %s249 = smul.u32 24, %s16
      %v250 = vld [vmem:[%s236] sm:$0xf]
      %v251 = vld [vmem:[%s236 + $0x4] sm:$0xf]
      %v252 = vld [vmem:[%s236 + $0x8] sm:$0xf]
      %v253 = vld [vmem:[%s236 + $0xc] sm:$0xf]
      %v254 = vld [vmem:[%s236 + $0x10] sm:$0xf]
      %v255 = vld [vmem:[%s236 + $0x14] sm:$0xf]
      %v256 = vld [vmem:[%s236 + $0x18] sm:$0xf]
      %v257 = vld [vmem:[%s236 + $0x1c] sm:$0xf]
      %v258 = vld [vmem:[%s236 + $0x20] sm:$0xf]
      %v259 = vld [vmem:[%s236 + $0x24] sm:$0xf]
      %v260 = vld [vmem:[%s236 + $0x28] sm:$0xf]
      %v261 = vld [vmem:[%s236 + $0x2c] sm:$0xf]
      %v262 = vld [vmem:[%s236 + $0x30] sm:$0xf]
      %v263 = vld [vmem:[%s236 + $0x34] sm:$0xf]
      %v264 = vld [vmem:[%s236 + $0x38] sm:$0xf]
      %v265 = vld [vmem:[%s236 + $0x3c] sm:$0xf]
      %v266 = vld [vmem:[%s236 + $0x40] sm:$0xf]
      %v267 = vld [vmem:[%s236 + $0x44] sm:$0xf]
      %v268 = vld [vmem:[%s236 + $0x48] sm:$0xf]
      %v269 = vld [vmem:[%s236 + $0x4c] sm:$0xf]
      %v270 = vld [vmem:[%s236 + $0x50] sm:$0xf]
      %v271 = vld [vmem:[%s236 + $0x54] sm:$0xf]
      %v272 = vld [vmem:[%s236 + $0x58] sm:$0xf]
      %v273 = vld [vmem:[%s236 + $0x5c] sm:$0xf]
      %v274 = vld [vmem:[%s1] sm:$0xf]
      %v275 = vld [vmem:[%s1 + $0x4] sm:$0xf]
      %v276 = vld [vmem:[%s1 + $0x8] sm:$0xf]
      %v277 = vld [vmem:[%s1 + $0xc] sm:$0xf]
      %v278 = vld [vmem:[%s1 + $0x10] sm:$0xf]
      %v279 = vld [vmem:[%s1 + $0x14] sm:$0xf]
      %v280 = vld [vmem:[%s1 + $0x18] sm:$0xf]
      %v281 = vld [vmem:[%s1 + $0x1c] sm:$0xf]
      %v282 = vld [vmem:[%s1 + $0x20] sm:$0xf]
      %v283 = vld [vmem:[%s1 + $0x24] sm:$0xf]
      %v284 = vld [vmem:[%s1 + $0x28] sm:$0xf]
      %v285 = vld [vmem:[%s1 + $0x2c] sm:$0xf]
      %v286 = vld [vmem:[%s1 + $0x30] sm:$0xf]
      %v287 = vld [vmem:[%s1 + $0x34] sm:$0xf]
      %v288 = vld [vmem:[%s1 + $0x38] sm:$0xf]
      %v289 = vld [vmem:[%s1 + $0x3c] sm:$0xf]
      %v314 = vunpack.c.l.b16 %v250
      %v315 = vunpack.c.l.b16 %v251
      %v316 = vunpack.c.l.b16 %v252
      %v317 = vunpack.c.l.b16 %v253
      %v318 = vunpack.c.l.b16 %v254
      %v319 = vunpack.c.l.b16 %v255
      %v320 = vunpack.c.l.b16 %v256
      %v321 = vunpack.c.l.b16 %v257
      %v322 = vunpack.c.l.b16 %v258
      %v323 = vunpack.c.l.b16 %v259
      %v324 = vunpack.c.l.b16 %v260
      %v325 = vunpack.c.l.b16 %v261
      %v326 = vunpack.c.l.b16 %v262
      %v327 = vunpack.c.l.b16 %v263
      %v328 = vunpack.c.l.b16 %v264
      %v329 = vunpack.c.l.b16 %v265
      %v330 = vunpack.c.l.b16 %v266
      %v331 = vunpack.c.l.b16 %v267
      %v332 = vunpack.c.l.b16 %v268
      %v333 = vunpack.c.l.b16 %v269
      %v334 = vunpack.c.l.b16 %v270
      %v335 = vunpack.c.l.b16 %v271
      %v336 = vunpack.c.l.b16 %v272
      %v337 = vunpack.c.l.b16 %v273
      %v338 = vpack.c.b16 %v315, %v314
      %v339 = vpack.c.b16 %v317, %v316
      %v340 = vpack.c.b16 %v319, %v318
      %v341 = vpack.c.b16 %v321, %v320
      %v342 = vpack.c.b16 %v323, %v322
      %v343 = vpack.c.b16 %v325, %v324
      %v344 = vpack.c.b16 %v327, %v326
      %v345 = vpack.c.b16 %v329, %v328
      %v346 = vpack.c.b16 %v331, %v330
      %v347 = vpack.c.b16 %v333, %v332
      %v348 = vpack.c.b16 %v335, %v334
      %v349 = vpack.c.b16 %v337, %v336
      %v378 = vunpack.c.l.b16 %v274
      %v379 = vunpack.c.l.b16 %v275
      %v380 = vunpack.c.l.b16 %v276
      %v381 = vunpack.c.l.b16 %v277
      %v382 = vunpack.c.l.b16 %v278
      %v383 = vunpack.c.l.b16 %v279
      %v384 = vunpack.c.l.b16 %v280
      %v385 = vunpack.c.l.b16 %v281
      %v386 = vunpack.c.l.b16 %v282
      %v387 = vunpack.c.l.b16 %v283
      %v388 = vunpack.c.l.b16 %v284
      %v389 = vunpack.c.l.b16 %v285
      %v390 = vunpack.c.l.b16 %v286
      %v391 = vunpack.c.l.b16 %v287
      %v392 = vunpack.c.l.b16 %v288
      %v393 = vunpack.c.l.b16 %v289
      %v394 = vpack.c.b16 %v379, %v378
      %v395 = vpack.c.b16 %v381, %v380
      %v396 = vpack.c.b16 %v383, %v382
      %v397 = vpack.c.b16 %v385, %v384
      %v398 = vpack.c.b16 %v387, %v386
      %v399 = vpack.c.b16 %v389, %v388
      %v400 = vpack.c.b16 %v391, %v390
      %v401 = vpack.c.b16 %v393, %v392
      %410 = vmatpush.bf16.msra.mxu0 %v401
      %411 = vmatpush.bf16.msra.mxu0 %v400
      %412 = vmatpush.bf16.msra.mxu0 %v399
      %413 = vmatpush.bf16.msra.mxu0 %v398
      %414 = vmatpush.bf16.msra.mxu0 %v397
      %415 = vmatpush.bf16.msra.mxu0 %v396
      %416 = vmatpush.bf16.msra.mxu0 %v395
      %417 = vmatpush.bf16.msra.mxu0 %v394
      %418 = vmatmul.bf16.gmra.mxu0 %v338
      %v419 = vpop.f32.mrf.mxu0
      %v420 = vadd.f32 0.0, %v419
      %v421 = vpop.f32.mrf.mxu0
      %v422 = vadd.f32 0.0, %v421
      %423 = vmatmul.bf16.gmra.mxu0 %v339
      %v424 = vpop.f32.mrf.mxu0
      %v425 = vadd.f32 0.0, %v424
      %v426 = vpop.f32.mrf.mxu0
      %v427 = vadd.f32 0.0, %v426
      %428 = vmatmul.bf16.gmra.mxu0 %v340
      %v429 = vpop.f32.mrf.mxu0
      %v430 = vadd.f32 0.0, %v429
      %v431 = vpop.f32.mrf.mxu0
      %v432 = vadd.f32 0.0, %v431
      %433 = vmatmul.bf16.gmra.mxu0 %v341
      %v434 = vpop.f32.mrf.mxu0
      %v435 = vadd.f32 0.0, %v434
      %v436 = vpop.f32.mrf.mxu0
      %v437 = vadd.f32 0.0, %v436
      %438 = vmatmul.bf16.gmra.mxu0 %v342
      %v439 = vpop.f32.mrf.mxu0
      %v440 = vadd.f32 0.0, %v439
      %v441 = vpop.f32.mrf.mxu0
      %v442 = vadd.f32 0.0, %v441
      %443 = vmatmul.bf16.gmra.mxu0 %v343
      %v444 = vpop.f32.mrf.mxu0
      %v445 = vadd.f32 0.0, %v444
      %v446 = vpop.f32.mrf.mxu0
      %v447 = vadd.f32 0.0, %v446
      %448 = vmatmul.bf16.gmra.mxu0 %v344
      %v449 = vpop.f32.mrf.mxu0
      %v450 = vadd.f32 0.0, %v449
      %v451 = vpop.f32.mrf.mxu0
      %v452 = vadd.f32 0.0, %v451
      %453 = vmatmul.bf16.gmra.mxu0 %v345
      %v454 = vpop.f32.mrf.mxu0
      %v455 = vadd.f32 0.0, %v454
      %v456 = vpop.f32.mrf.mxu0
      %v457 = vadd.f32 0.0, %v456
      %458 = vmatmul.bf16.gmra.mxu0 %v346
      %v459 = vpop.f32.mrf.mxu0
      %v460 = vadd.f32 0.0, %v459
      %v461 = vpop.f32.mrf.mxu0
      %v462 = vadd.f32 0.0, %v461
      %463 = vmatmul.bf16.gmra.mxu0 %v347
      %v464 = vpop.f32.mrf.mxu0
      %v465 = vadd.f32 0.0, %v464
      %v466 = vpop.f32.mrf.mxu0
      %v467 = vadd.f32 0.0, %v466
      %468 = vmatmul.bf16.gmra.mxu0 %v348
      %v469 = vpop.f32.mrf.mxu0
      %v470 = vadd.f32 0.0, %v469
      %v471 = vpop.f32.mrf.mxu0
      %v472 = vadd.f32 0.0, %v471
      %473 = vmatmul.bf16.gmra.mxu0 %v349
      %v474 = vpop.f32.mrf.mxu0
      %v475 = vadd.f32 0.0, %v474
      %v476 = vpop.f32.mrf.mxu0
      %v477 = vadd.f32 0.0, %v476
      %478 = vdwg.mxu0
      %v479 = vld [vmem:[%s2] sm:$0x1]
      %v481 = vperm.slane %v479, 0
      %v483 = vmul.f32 %v420, %v481
      %v484 = vmul.f32 %v422, %v481
      %v485 = vmul.f32 %v425, %v481
      %v486 = vmul.f32 %v427, %v481
      %v487 = vmul.f32 %v430, %v481
      %v488 = vmul.f32 %v432, %v481
      %v489 = vmul.f32 %v435, %v481
      %v490 = vmul.f32 %v437, %v481
      %v491 = vmul.f32 %v440, %v481
      %v492 = vmul.f32 %v442, %v481
      %v493 = vmul.f32 %v445, %v481
      %v494 = vmul.f32 %v447, %v481
      %v495 = vmul.f32 %v450, %v481
      %v496 = vmul.f32 %v452, %v481
      %v497 = vmul.f32 %v455, %v481
      %v498 = vmul.f32 %v457, %v481
      %v499 = vmul.f32 %v460, %v481
      %v500 = vmul.f32 %v462, %v481
      %v501 = vmul.f32 %v465, %v481
      %v502 = vmul.f32 %v467, %v481
      %v503 = vmul.f32 %v470, %v481
      %v504 = vmul.f32 %v472, %v481
      %v505 = vmul.f32 %v475, %v481
      %v506 = vmul.f32 %v477, %v481
      %v507 = vld [vmem:[%s3] sm:$0x1]
      %v509 = vperm.slane %v507, 0
      %v511 = vadd.f32 %v483, %v509
      %v512 = vadd.f32 %v484, %v509
      %v513 = vadd.f32 %v485, %v509
      %v514 = vadd.f32 %v486, %v509
      %v515 = vadd.f32 %v487, %v509
      %v516 = vadd.f32 %v488, %v509
      %v517 = vadd.f32 %v489, %v509
      %v518 = vadd.f32 %v490, %v509
      %v519 = vadd.f32 %v491, %v509
      %v520 = vadd.f32 %v492, %v509
      %v521 = vadd.f32 %v493, %v509
      %v522 = vadd.f32 %v494, %v509
      %v523 = vadd.f32 %v495, %v509
      %v524 = vadd.f32 %v496, %v509
      %v525 = vadd.f32 %v497, %v509
      %v526 = vadd.f32 %v498, %v509
      %v527 = vadd.f32 %v499, %v509
      %v528 = vadd.f32 %v500, %v509
      %v529 = vadd.f32 %v501, %v509
      %v530 = vadd.f32 %v502, %v509
      %v531 = vadd.f32 %v503, %v509
      %v532 = vadd.f32 %v504, %v509
      %v533 = vadd.f32 %v505, %v509
      %v534 = vadd.f32 %v506, %v509
      %v535 = vld [vmem:[%s242] sm:$0xf]
      %v536 = vld [vmem:[%s242 + $0x4] sm:$0xf]
      %v537 = vld [vmem:[%s242 + $0x8] sm:$0xf]
      %v538 = vld [vmem:[%s242 + $0xc] sm:$0xf]
      %v539 = vld [vmem:[%s242 + $0x10] sm:$0xf]
      %v540 = vld [vmem:[%s242 + $0x14] sm:$0xf]
      %v541 = vld [vmem:[%s242 + $0x18] sm:$0xf]
      %v542 = vld [vmem:[%s242 + $0x1c] sm:$0xf]
      %v543 = vld [vmem:[%s242 + $0x20] sm:$0xf]
      %v544 = vld [vmem:[%s242 + $0x24] sm:$0xf]
      %v545 = vld [vmem:[%s242 + $0x28] sm:$0xf]
      %v546 = vld [vmem:[%s242 + $0x2c] sm:$0xf]
      %v547 = vld [vmem:[%s242 + $0x30] sm:$0xf]
      %v548 = vld [vmem:[%s242 + $0x34] sm:$0xf]
      %v549 = vld [vmem:[%s242 + $0x38] sm:$0xf]
      %v550 = vld [vmem:[%s242 + $0x3c] sm:$0xf]
      %v551 = vld [vmem:[%s242 + $0x40] sm:$0xf]
      %v552 = vld [vmem:[%s242 + $0x44] sm:$0xf]
      %v553 = vld [vmem:[%s242 + $0x48] sm:$0xf]
      %v554 = vld [vmem:[%s242 + $0x4c] sm:$0xf]
      %v555 = vld [vmem:[%s242 + $0x50] sm:$0xf]
      %v556 = vld [vmem:[%s242 + $0x54] sm:$0xf]
      %v557 = vld [vmem:[%s242 + $0x58] sm:$0xf]
      %v558 = vld [vmem:[%s242 + $0x5c] sm:$0xf]
      %v559 = vunpack.c.l.bf16 %v535
      %v560 = vunpack.c.l.bf16 %v536
      %v561 = vunpack.c.l.bf16 %v537
      %v562 = vunpack.c.l.bf16 %v538
      %v563 = vunpack.c.l.bf16 %v539
      %v564 = vunpack.c.l.bf16 %v540
      %v565 = vunpack.c.l.bf16 %v541
      %v566 = vunpack.c.l.bf16 %v542
      %v567 = vunpack.c.l.bf16 %v543
      %v568 = vunpack.c.l.bf16 %v544
      %v569 = vunpack.c.l.bf16 %v545
      %v570 = vunpack.c.l.bf16 %v546
      %v571 = vunpack.c.l.bf16 %v547
      %v572 = vunpack.c.l.bf16 %v548
      %v573 = vunpack.c.l.bf16 %v549
      %v574 = vunpack.c.l.bf16 %v550
      %v575 = vunpack.c.l.bf16 %v551
      %v576 = vunpack.c.l.bf16 %v552
      %v577 = vunpack.c.l.bf16 %v553
      %v578 = vunpack.c.l.bf16 %v554
      %v579 = vunpack.c.l.bf16 %v555
      %v580 = vunpack.c.l.bf16 %v556
      %v581 = vunpack.c.l.bf16 %v557
      %v582 = vunpack.c.l.bf16 %v558
      %v583 = vadd.f32 %v511, %v559
      %v584 = vadd.f32 %v512, %v560
      %v585 = vadd.f32 %v513, %v561
      %v586 = vadd.f32 %v514, %v562
      %v587 = vadd.f32 %v515, %v563
      %v588 = vadd.f32 %v516, %v564
      %v589 = vadd.f32 %v517, %v565
      %v590 = vadd.f32 %v518, %v566
      %v591 = vadd.f32 %v519, %v567
      %v592 = vadd.f32 %v520, %v568
      %v593 = vadd.f32 %v521, %v569
      %v594 = vadd.f32 %v522, %v570
      %v595 = vadd.f32 %v523, %v571
      %v596 = vadd.f32 %v524, %v572
      %v597 = vadd.f32 %v525, %v573
      %v598 = vadd.f32 %v526, %v574
      %v599 = vadd.f32 %v527, %v575
      %v600 = vadd.f32 %v528, %v576
      %v601 = vadd.f32 %v529, %v577
      %v602 = vadd.f32 %v530, %v578
      %v603 = vadd.f32 %v531, %v579
      %v604 = vadd.f32 %v532, %v580
      %v605 = vadd.f32 %v533, %v581
      %v606 = vadd.f32 %v534, %v582
      %v607 = vmax.f32 %v583, 0.0
      %v608 = vmax.f32 %v584, 0.0
      %v609 = vmax.f32 %v585, 0.0
      %v610 = vmax.f32 %v586, 0.0
      %v611 = vmax.f32 %v587, 0.0
      %v612 = vmax.f32 %v588, 0.0
      %v613 = vmax.f32 %v589, 0.0
      %v614 = vmax.f32 %v590, 0.0
      %v615 = vmax.f32 %v591, 0.0
      %v616 = vmax.f32 %v592, 0.0
      %v617 = vmax.f32 %v593, 0.0
      %v618 = vmax.f32 %v594, 0.0
      %v619 = vmax.f32 %v595, 0.0
      %v620 = vmax.f32 %v596, 0.0
      %v621 = vmax.f32 %v597, 0.0
      %v622 = vmax.f32 %v598, 0.0
      %v623 = vmax.f32 %v599, 0.0
      %v624 = vmax.f32 %v600, 0.0
      %v625 = vmax.f32 %v601, 0.0
      %v626 = vmax.f32 %v602, 0.0
      %v627 = vmax.f32 %v603, 0.0
      %v628 = vmax.f32 %v604, 0.0
      %v629 = vmax.f32 %v605, 0.0
      %v630 = vmax.f32 %v606, 0.0
      %631 = vst [vmem:[%s248] sm:$0xff] %v607
      %632 = vst [vmem:[%s248 + $0x8] sm:$0xff] %v608
      %633 = vst [vmem:[%s248 + $0x10] sm:$0xff] %v609
      %634 = vst [vmem:[%s248 + $0x18] sm:$0xff] %v610
      %635 = vst [vmem:[%s248 + $0x20] sm:$0xff] %v611
      %636 = vst [vmem:[%s248 + $0x28] sm:$0xff] %v612
      %637 = vst [vmem:[%s248 + $0x30] sm:$0xff] %v613
      %638 = vst [vmem:[%s248 + $0x38] sm:$0xff] %v614
      %639 = vst [vmem:[%s248 + $0x40] sm:$0xff] %v615
      %640 = vst [vmem:[%s248 + $0x48] sm:$0xff] %v616
      %641 = vst [vmem:[%s248 + $0x50] sm:$0xff] %v617
      %642 = vst [vmem:[%s248 + $0x58] sm:$0xff] %v618
      %643 = vst [vmem:[%s248 + $0x60] sm:$0xff] %v619
      %644 = vst [vmem:[%s248 + $0x68] sm:$0xff] %v620
      %645 = vst [vmem:[%s248 + $0x70] sm:$0xff] %v621
      %646 = vst [vmem:[%s248 + $0x78] sm:$0xff] %v622
      %647 = vst [vmem:[%s248 + $0x80] sm:$0xff] %v623
      %648 = vst [vmem:[%s248 + $0x88] sm:$0xff] %v624
      %649 = vst [vmem:[%s248 + $0x90] sm:$0xff] %v625
      %650 = vst [vmem:[%s248 + $0x98] sm:$0xff] %v626
      %651 = vst [vmem:[%s248 + $0xa0] sm:$0xff] %v627
      %652 = vst [vmem:[%s248 + $0xa8] sm:$0xff] %v628
      %653 = vst [vmem:[%s248 + $0xb0] sm:$0xff] %v629
      %654 = vst [vmem:[%s248 + $0xb8] sm:$0xff] %v630
      %s655 = smul.u32 24, %s16
      %p656 = scmp.lt.s32.totalorder %s655, 95
      %s657 = scalar_select %p656, %s655, 95
      %s658 = smul.addr %s657, 8
      %s659 = scalar_lea.vmem %s5, %s658
      // Predicated region
      $region41: #{bottleneck_forward.7} parent=39 // pred_check
        %p660 = pneg %p149
      $region42: #{bottleneck_forward.7} parent=39 // pred_check_branch
        %662 = sbr.rel (%p660) target = $region44
      $region43: #{bottleneck_forward.7} parent=39 // pred_region
        %s663 = smul.u32 24, %s16
      $region44: #{bottleneck_forward.7} parent=39 // pred_fallthru
        _
    $region40: #{bottleneck_forward.7} parent=5 // pred_fallthru
      _
    %p664 = scmp.le.s32.totalorder 2, %s11
    // Predicated region
    $region45: #{bottleneck_forward.7} parent=5 // pred_check
      %p665 = pneg %p664
    $region46: #{bottleneck_forward.7} parent=5 // pred_check_branch
      %667 = sbr.rel (%p665) target = $region48
    $region47: #{bottleneck_forward.7} parent=5 // pred_region
      %s668 = ssub.s32 %s11, 2
      // Predicated region
      $region49: #{bottleneck_forward.7} parent=47 // pred_check
        %p669 = pneg %p155
      $region50: #{bottleneck_forward.7} parent=47 // pred_check_branch
        %671 = sbr.rel (%p669) target = $region52
      $region51: #{bottleneck_forward.7} parent=47 // pred_region
        %s672 = smul.u32 24, %s17
        %p673 = scmp.lt.s32.totalorder %s672, 95
        %s674 = scalar_select %p673, %s672, 95
        %s675 = smul.addr %s674, 8
        %s676 = scalar_lea.vmem %s5, %s675
      $region52: #{bottleneck_forward.7} parent=47 // pred_fallthru
        _
    $region48: #{bottleneck_forward.7} parent=5 // pred_fallthru
      _
  $region6: #{bottleneck_forward.7} parent=0 // loop_footer
    %s15 = sadd.s32 1, %s11
  $region7: #{bottleneck_forward.7} parent=0 // loop_footer_branch
    %10 = sbr.rel target = $region3
  $region8: #{bottleneck_forward.7} parent=0 // loop_exit
    _

// kernel: bottleneck_forward.5
$region0: #{bottleneck_forward.5}
  #allocation0 [shape = 'u32[]', space=smem, size = 0x4, offset = 0x4, fixed_abs, tag = 'smem constant byte address 0x4 - core index']
  #allocation1 [shape = 'u32[72,128]{1,0:T(1,128)}', space=vmem, size = 0x9000, scoped, tag = 'internal scratch']
  #allocation2 [shape = 'bf16[440,128]{1,0:T(8,128)(2,1)}', space=vmem, size = 0x1b800, scoped, tag = 'scratch operand']
  %s0 = inlined_call_operand.vmem [shape: bf16[768,128], index: 0, kind: input, shape index: {}]
  %s1 = inlined_call_operand.vmem [shape: bf16[128,128], index: 1, kind: input, shape index: {}]
  %s2 = inlined_call_operand.vmem [shape: f32[1,128], index: 2, kind: input, shape index: {}]
  %s3 = inlined_call_operand.vmem [shape: f32[1,128], index: 3, kind: input, shape index: {}]
  %s4 = inlined_call_operand.vmem [shape: bf16[3,128,384], index: 4, kind: input, shape index: {}]
  %s5 = inlined_call_operand.vmem [shape: f32[384,1], index: 5, kind: input, shape index: {}]
  %s6 = inlined_call_operand.vmem [shape: bf16[768,128], index: 6, kind: output, shape index: {0}]
  %s7 = inlined_call_operand.vmem [shape: f32[2,2,128], index: 7, kind: output, shape index: {1}]
  %8 = xla_tuple %s6, %s7
  %s9 = sld [smem:[#allocation0]]
  $region65: #{bottleneck_forward.5} parent=0
    _
  %s11 = ssub.s32 1, %s9
  %s12 = scalar_select 0, %s11, %s9
  loop: start=0, step=1, limit=4
  $region2: #{bottleneck_forward.5} parent=0 // loop_pre_header
    _
  $region3: #{bottleneck_forward.5} parent=0 // loop_header
    %s14 = sphi 0, %s18
    %p15 = scmp.ge.s32.totalorder %s14, 4
    %s24 = sphi 0, %s26
    %s27 = sphi 0, %s24
    %s28 = sphi 0, %s27
    %s44 = sphi 0, %s28
    %s48 = sphi 0, %s48
    %s50 = sphi 0, %s48
    %s51 = sphi 0, %s50
    %s65 = sphi 0, %s51
    %s69 = sphi 0, %s69
    %s71 = sphi 0, %s69
    %s72 = sphi 0, %s71
    %s86 = sphi 0, %s72
    %s90 = sphi 0, %s90
    %s92 = sphi 0, %s90
    %s93 = sphi 0, %s92
    %s107 = sphi 0, %s93
    %s111 = sphi 0, %s111
    %s113 = sphi 0, %s111
    %s114 = sphi 0, %s113
    %s128 = sphi 0, %s114
    %s132 = sphi 0, %s132
    %s134 = sphi 0, %s132
    %s135 = sphi 0, %s134
    %s149 = sphi 0, %s135
    %s155 = sphi 0, %s157
    %s158 = sphi 0, %s155
    %s159 = sphi 0, %s158
    %s175 = sphi 0, %s159
    %s181 = sphi 0, %s183
    %s184 = sphi 0, %s181
    %s185 = sphi 0, %s184
    %s201 = sphi 0, %s185
  $region4: #{bottleneck_forward.5} parent=0 // loop_header_branch
    %17 = sbr.rel (%p15) target = $region8
  $region5: #{bottleneck_forward.5} parent=0 // loop_body
    %s19 = ssub.s32 %s14, 1
    %s20 = ssub.s32 %s14, 2
    %s21 = sadd.s32 %s14, 1
    %s22 = ssub.s32 %s14, %s21
    %p23 = scmp.eq.s32.totalorder %s22, 0
    %s25 = sadd.s32 %s24, 1
    %s26 = scalar_select %p23, %s24, %s25
    %p29 = pneg %p23
    %p30 = scmp.eq.s32.totalorder %s14, 1
    %p31 = por %p29, %p30
    %p32 = scmp.ne.s32.totalorder %s24, %s27
    %p33 = scmp.eq.s32.totalorder %s14, 0
    %p34 = por %p32, %p33
    %p35 = scmp.ne.s32.totalorder %s24, %s27
    %p36 = scmp.eq.s32.totalorder %s19, 1
    %p37 = por %p35, %p36
    %p38 = scmp.ne.s32.totalorder %s27, %s28
    %p39 = scmp.eq.s32.totalorder %s19, 0
    %p40 = por %p38, %p39
    %p41 = scmp.ne.s32.totalorder %s27, %s28
    %p42 = scmp.eq.s32.totalorder %s20, 1
    %p43 = por %p41, %p42
    %p45 = scmp.ne.s32.totalorder %s28, %s44
    %p46 = scmp.eq.s32.totalorder %s20, 0
    %p47 = por %p45, %p46
    %s49 = sadd.s32 %s48, 1
    %p52 = scmp.eq.s32.totalorder %s14, 1
    %p53 = scmp.ne.s32.totalorder %s48, %s50
    %p54 = scmp.eq.s32.totalorder %s14, 0
    %p55 = por %p53, %p54
    %p56 = scmp.ne.s32.totalorder %s48, %s50
    %p57 = scmp.eq.s32.totalorder %s19, 1
    %p58 = por %p56, %p57
    %p59 = scmp.ne.s32.totalorder %s50, %s51
    %p60 = scmp.eq.s32.totalorder %s19, 0
    %p61 = por %p59, %p60
    %p62 = scmp.ne.s32.totalorder %s50, %s51
    %p63 = scmp.eq.s32.totalorder %s20, 1
    %p64 = por %p62, %p63
    %p66 = scmp.ne.s32.totalorder %s51, %s65
    %p67 = scmp.eq.s32.totalorder %s20, 0
    %p68 = por %p66, %p67
    %s70 = sadd.s32 %s69, 1
    %p73 = scmp.eq.s32.totalorder %s14, 1
    %p74 = scmp.ne.s32.totalorder %s69, %s71
    %p75 = scmp.eq.s32.totalorder %s14, 0
    %p76 = por %p74, %p75
    %p77 = scmp.ne.s32.totalorder %s69, %s71
    %p78 = scmp.eq.s32.totalorder %s19, 1
    %p79 = por %p77, %p78
    %p80 = scmp.ne.s32.totalorder %s71, %s72
    %p81 = scmp.eq.s32.totalorder %s19, 0
    %p82 = por %p80, %p81
    %p83 = scmp.ne.s32.totalorder %s71, %s72
    %p84 = scmp.eq.s32.totalorder %s20, 1
    %p85 = por %p83, %p84
    %p87 = scmp.ne.s32.totalorder %s72, %s86
    %p88 = scmp.eq.s32.totalorder %s20, 0
    %p89 = por %p87, %p88
    %s91 = sadd.s32 %s90, 1
    %p94 = scmp.eq.s32.totalorder %s14, 1
    %p95 = scmp.ne.s32.totalorder %s90, %s92
    %p96 = scmp.eq.s32.totalorder %s14, 0
    %p97 = por %p95, %p96
    %p98 = scmp.ne.s32.totalorder %s90, %s92
    %p99 = scmp.eq.s32.totalorder %s19, 1
    %p100 = por %p98, %p99
    %p101 = scmp.ne.s32.totalorder %s92, %s93
    %p102 = scmp.eq.s32.totalorder %s19, 0
    %p103 = por %p101, %p102
    %p104 = scmp.ne.s32.totalorder %s92, %s93
    %p105 = scmp.eq.s32.totalorder %s20, 1
    %p106 = por %p104, %p105
    %p108 = scmp.ne.s32.totalorder %s93, %s107
    %p109 = scmp.eq.s32.totalorder %s20, 0
    %p110 = por %p108, %p109
    %s112 = sadd.s32 %s111, 1
    %p115 = scmp.eq.s32.totalorder %s14, 1
    %p116 = scmp.ne.s32.totalorder %s111, %s113
    %p117 = scmp.eq.s32.totalorder %s14, 0
    %p118 = por %p116, %p117
    %p119 = scmp.ne.s32.totalorder %s111, %s113
    %p120 = scmp.eq.s32.totalorder %s19, 1
    %p121 = por %p119, %p120
    %p122 = scmp.ne.s32.totalorder %s113, %s114
    %p123 = scmp.eq.s32.totalorder %s19, 0
    %p124 = por %p122, %p123
    %p125 = scmp.ne.s32.totalorder %s113, %s114
    %p126 = scmp.eq.s32.totalorder %s20, 1
    %p127 = por %p125, %p126
    %p129 = scmp.ne.s32.totalorder %s114, %s128
    %p130 = scmp.eq.s32.totalorder %s20, 0
    %p131 = por %p129, %p130
    %s133 = sadd.s32 %s132, 1
    %p136 = scmp.eq.s32.totalorder %s14, 1
    %p137 = scmp.ne.s32.totalorder %s132, %s134
    %p138 = scmp.eq.s32.totalorder %s14, 0
    %p139 = por %p137, %p138
    %p140 = scmp.ne.s32.totalorder %s132, %s134
    %p141 = scmp.eq.s32.totalorder %s19, 1
    %p142 = por %p140, %p141
    %p143 = scmp.ne.s32.totalorder %s134, %s135
    %p144 = scmp.eq.s32.totalorder %s19, 0
    %p145 = por %p143, %p144
    %p146 = scmp.ne.s32.totalorder %s134, %s135
    %p147 = scmp.eq.s32.totalorder %s20, 1
    %p148 = por %p146, %p147
    %p150 = scmp.ne.s32.totalorder %s135, %s149
    %p151 = scmp.eq.s32.totalorder %s20, 0
    %p152 = por %p150, %p151
    %s153 = ssub.s32 %s14, %s21
    %p154 = scmp.eq.s32.totalorder %s153, 0
    %s156 = sadd.s32 %s155, 1
    %s157 = scalar_select %p154, %s155, %s156
    %p160 = pneg %p154
    %p161 = scmp.eq.s32.totalorder %s14, 1
    %p162 = por %p160, %p161
    %p163 = scmp.ne.s32.totalorder %s155, %s158
    %p164 = scmp.eq.s32.totalorder %s14, 0
    %p165 = por %p163, %p164
    %p166 = scmp.ne.s32.totalorder %s155, %s158
    %p167 = scmp.eq.s32.totalorder %s19, 1
    %p168 = por %p166, %p167
    %p169 = scmp.ne.s32.totalorder %s158, %s159
    %p170 = scmp.eq.s32.totalorder %s19, 0
    %p171 = por %p169, %p170
    %p172 = scmp.ne.s32.totalorder %s158, %s159
    %p173 = scmp.eq.s32.totalorder %s20, 1
    %p174 = por %p172, %p173
    %p176 = scmp.ne.s32.totalorder %s159, %s175
    %p177 = scmp.eq.s32.totalorder %s20, 0
    %p178 = por %p176, %p177
    %s179 = ssub.s32 %s14, %s21
    %p180 = scmp.eq.s32.totalorder %s179, 0
    %s182 = sadd.s32 %s181, 1
    %s183 = scalar_select %p180, %s181, %s182
    %p186 = pneg %p180
    %p187 = scmp.eq.s32.totalorder %s14, 1
    %p188 = por %p186, %p187
    %p189 = scmp.ne.s32.totalorder %s181, %s184
    %p190 = scmp.eq.s32.totalorder %s14, 0
    %p191 = por %p189, %p190
    %p192 = scmp.ne.s32.totalorder %s181, %s184
    %p193 = scmp.eq.s32.totalorder %s19, 1
    %p194 = por %p192, %p193
    %p195 = scmp.ne.s32.totalorder %s184, %s185
    %p196 = scmp.eq.s32.totalorder %s19, 0
    %p197 = por %p195, %p196
    %p198 = scmp.ne.s32.totalorder %s184, %s185
    %p199 = scmp.eq.s32.totalorder %s20, 1
    %p200 = por %p198, %p199
    %p202 = scmp.ne.s32.totalorder %s185, %s201
    %p203 = scmp.eq.s32.totalorder %s20, 0
    %p204 = por %p202, %p203
    %p205 = scmp.le.s32.totalorder 1, %s14
    %p206 = scmp.lt.s32.totalorder %s14, 3
    %p207 = pnand %p205, %p206
    %p208 = pneg %p207
    // Predicated region
    $region9: #{bottleneck_forward.5} parent=5 // pred_check
      _
    $region10: #{bottleneck_forward.5} parent=5 // pred_check_branch
      %210 = sbr.rel (%p207) target = $region12
    $region11: #{bottleneck_forward.5} parent=5 // pred_region
      %s211 = ssub.s32 %s14, 1
      // Predicated region
      $region13: #{bottleneck_forward.5} parent=11 // pred_check
        %p212 = pneg %p61
      $region14: #{bottleneck_forward.5} parent=11 // pred_check_branch
        %214 = sbr.rel (%p212) target = $region16
      $region15: #{bottleneck_forward.5} parent=11 // pred_region
        _
      $region16: #{bottleneck_forward.5} parent=11 // pred_fallthru
        _
      // Predicated region
      $region17: #{bottleneck_forward.5} parent=11 // pred_check
        %p215 = pneg %p82
      $region18: #{bottleneck_forward.5} parent=11 // pred_check_branch
        %217 = sbr.rel (%p215) target = $region20
      $region19: #{bottleneck_forward.5} parent=11 // pred_region
        _
      $region20: #{bottleneck_forward.5} parent=11 // pred_fallthru
        _
      // Predicated region
      $region21: #{bottleneck_forward.5} parent=11 // pred_check
        %p218 = pneg %p103
      $region22: #{bottleneck_forward.5} parent=11 // pred_check_branch
        %220 = sbr.rel (%p218) target = $region24
      $region23: #{bottleneck_forward.5} parent=11 // pred_region
        _
      $region24: #{bottleneck_forward.5} parent=11 // pred_fallthru
        _
      // Predicated region
      $region25: #{bottleneck_forward.5} parent=11 // pred_check
        %p221 = pneg %p124
      $region26: #{bottleneck_forward.5} parent=11 // pred_check_branch
        %223 = sbr.rel (%p221) target = $region28
      $region27: #{bottleneck_forward.5} parent=11 // pred_region
        _
      $region28: #{bottleneck_forward.5} parent=11 // pred_fallthru
        _
      // Predicated region
      $region29: #{bottleneck_forward.5} parent=11 // pred_check
        %p224 = pneg %p145
      $region30: #{bottleneck_forward.5} parent=11 // pred_check_branch
        %226 = sbr.rel (%p224) target = $region32
      $region31: #{bottleneck_forward.5} parent=11 // pred_region
        _
      $region32: #{bottleneck_forward.5} parent=11 // pred_fallthru
        _
    $region12: #{bottleneck_forward.5} parent=5 // pred_fallthru
      _
    %p227 = scmp.lt.s32.totalorder %s14, 2
    // Predicated region
    $region33: #{bottleneck_forward.5} parent=5 // pred_check
      %p228 = pneg %p227
    $region34: #{bottleneck_forward.5} parent=5 // pred_check_branch
      %230 = sbr.rel (%p228) target = $region36
    $region35: #{bottleneck_forward.5} parent=5 // pred_region
      // Predicated region
      $region37: #{bottleneck_forward.5} parent=35 // pred_check
        %p231 = pneg %p34
      $region38: #{bottleneck_forward.5} parent=35 // pred_check_branch
        %233 = sbr.rel (%p231) target = $region40
      $region39: #{bottleneck_forward.5} parent=35 // pred_region
        %s234 = smul.u32 48, %s14
        %p235 = scmp.lt.s32.totalorder %s234, 95
        %s236 = scalar_select %p235, %s234, 95
        %s237 = smul.addr %s236, 4
        %s238 = scalar_lea.vmem %s0, %s237
        %s239 = smul.u32 48, %s14
      $region40: #{bottleneck_forward.5} parent=35 // pred_fallthru
        _
    $region36: #{bottleneck_forward.5} parent=5 // pred_fallthru
      _
    %p240 = scmp.le.s32.totalorder 1, %s14
    %p241 = scmp.lt.s32.totalorder %s14, 3
    %p242 = pnand %p240, %p241
    %p243 = pneg %p242
    // Predicated region
    $region41: #{bottleneck_forward.5} parent=5 // pred_check
      _
    $region42: #{bottleneck_forward.5} parent=5 // pred_check_branch
      %245 = sbr.rel (%p242) target = $region44
    $region43: #{bottleneck_forward.5} parent=5 // pred_region
      %s246 = ssub.s32 %s14, 1
      %s247 = smul.u32 48, %s19
      %p248 = scmp.lt.s32.totalorder %s247, 95
      %s249 = scalar_select %p248, %s247, 95
      %s250 = smul.addr %s249, 4
      %s251 = scalar_lea.vmem %s0, %s250
      %p252 = pneg %p40
      %p253 = pneg %p37
      %p254 = pneg %p61
      %p255 = pneg %p58
      %p256 = pneg %p82
      %p257 = pneg %p79
      %p258 = pneg %p103
      %p259 = pneg %p100
      %p260 = pneg %p124
      %p261 = pneg %p121
      %p262 = pneg %p145
      %p263 = pneg %p142
      %p264 = pneg %p171
      %p265 = pneg %p168
      %s266 = smul.u32 48, %s19
      %p267 = scmp.lt.s32.totalorder %s266, 95
      %s268 = scalar_select %p267, %s266, 95
      %s269 = smul.addr %s268, 4
      %s270 = scalar_lea.vmem %s6, %s269
      %p271 = pneg %p197
      %p272 = pneg %p194
      %p273 = scmp.lt.s32.totalorder %s19, 1
      %s274 = scalar_select %p273, %s19, 1
      %s275 = smul.addr %s274, 2
      %s276 = scalar_lea.vmem %s7, %s275
      %s277 = smul.u32 48, %s19
      %p278 = scmp.lt.s32.totalorder %s277, 95
      %s279 = scalar_select %p278, %s277, 95
      %s280 = smul.addr %s279, 4
      %s281 = scalar_lea.vmem %s0, %s280
      %s282 = smul.u32 48, %s19
      %s283 = smul.u32 48, %s19
      %p284 = scmp.lt.s32.totalorder %s283, 95
      %s285 = scalar_select %p284, %s283, 95
      %s286 = smul.addr %s285, 4
      %s287 = scalar_lea.vmem %s6, %s286
      %s288 = smul.u32 48, %s19
      %p289 = scmp.lt.s32.totalorder %s19, 1
      %s290 = scalar_select %p289, %s19, 1
      %s291 = smul.addr %s290, 2
      %s292 = scalar_lea.vmem %s7, %s291
      %v294 = vld [vmem:[%s281] sm:$0xf]
      %v295 = vld [vmem:[%s281 + $0x4] sm:$0xf]
      %v296 = vld [vmem:[%s281 + $0x8] sm:$0xf]
      %v297 = vld [vmem:[%s281 + $0xc] sm:$0xf]
      %v298 = vld [vmem:[%s281 + $0x10] sm:$0xf]
      %v299 = vld [vmem:[%s281 + $0x14] sm:$0xf]
      %v300 = vld [vmem:[%s281 + $0x18] sm:$0xf]
      %v301 = vld [vmem:[%s281 + $0x1c] sm:$0xf]
      %v302 = vld [vmem:[%s281 + $0x20] sm:$0xf]
      %v303 = vld [vmem:[%s281 + $0x24] sm:$0xf]
      %v304 = vld [vmem:[%s281 + $0x28] sm:$0xf]
      %v305 = vld [vmem:[%s281 + $0x2c] sm:$0xf]
      %v306 = vld [vmem:[%s281 + $0x30] sm:$0xf]
      %v307 = vld [vmem:[%s281 + $0x34] sm:$0xf]
      %v308 = vld [vmem:[%s281 + $0x38] sm:$0xf]
      %v309 = vld [vmem:[%s281 + $0x3c] sm:$0xf]
      %v310 = vld [vmem:[%s281 + $0x40] sm:$0xf]
      %v311 = vld [vmem:[%s281 + $0x44] sm:$0xf]
      %v312 = vld [vmem:[%s281 + $0x48] sm:$0xf]
      %v313 = vld [vmem:[%s281 + $0x4c] sm:$0xf]
      %v314 = vld [vmem:[%s281 + $0x50] sm:$0xf]
      %v315 = vld [vmem:[%s281 + $0x54] sm:$0xf]
      %v316 = vld [vmem:[%s281 + $0x58] sm:$0xf]
      %v317 = vld [vmem:[%s281 + $0x5c] sm:$0xf]
      %v318 = vld [vmem:[%s281 + $0x60] sm:$0xf]
      %v319 = vld [vmem:[%s281 + $0x64] sm:$0xf]
      %v320 = vld [vmem:[%s281 + $0x68] sm:$0xf]
      %v321 = vld [vmem:[%s281 + $0x6c] sm:$0xf]
      %v322 = vld [vmem:[%s281 + $0x70] sm:$0xf]
      %v323 = vld [vmem:[%s281 + $0x74] sm:$0xf]
      %v324 = vld [vmem:[%s281 + $0x78] sm:$0xf]
      %v325 = vld [vmem:[%s281 + $0x7c] sm:$0xf]
      %v326 = vld [vmem:[%s281 + $0x80] sm:$0xf]
      %v327 = vld [vmem:[%s281 + $0x84] sm:$0xf]
      %v328 = vld [vmem:[%s281 + $0x88] sm:$0xf]
      %v329 = vld [vmem:[%s281 + $0x8c] sm:$0xf]
      %v330 = vld [vmem:[%s281 + $0x90] sm:$0xf]
      %v331 = vld [vmem:[%s281 + $0x94] sm:$0xf]
      %v332 = vld [vmem:[%s281 + $0x98] sm:$0xf]
      %v333 = vld [vmem:[%s281 + $0x9c] sm:$0xf]
      %v334 = vld [vmem:[%s281 + $0xa0] sm:$0xf]
      %v335 = vld [vmem:[%s281 + $0xa4] sm:$0xf]
      %v336 = vld [vmem:[%s281 + $0xa8] sm:$0xf]
      %v337 = vld [vmem:[%s281 + $0xac] sm:$0xf]
      %v338 = vld [vmem:[%s281 + $0xb0] sm:$0xf]
      %v339 = vld [vmem:[%s281 + $0xb4] sm:$0xf]
      %v340 = vld [vmem:[%s281 + $0xb8] sm:$0xf]
      %v341 = vld [vmem:[%s281 + $0xbc] sm:$0xf]
      %v342 = vld [vmem:[%s1] sm:$0xf]
      %v343 = vld [vmem:[%s1 + $0x4] sm:$0xf]
      %v344 = vld [vmem:[%s1 + $0x8] sm:$0xf]
      %v345 = vld [vmem:[%s1 + $0xc] sm:$0xf]
      %v346 = vld [vmem:[%s1 + $0x10] sm:$0xf]
      %v347 = vld [vmem:[%s1 + $0x14] sm:$0xf]
      %v348 = vld [vmem:[%s1 + $0x18] sm:$0xf]
      %v349 = vld [vmem:[%s1 + $0x1c] sm:$0xf]
      %v350 = vld [vmem:[%s1 + $0x20] sm:$0xf]
      %v351 = vld [vmem:[%s1 + $0x24] sm:$0xf]
      %v352 = vld [vmem:[%s1 + $0x28] sm:$0xf]
      %v353 = vld [vmem:[%s1 + $0x2c] sm:$0xf]
      %v354 = vld [vmem:[%s1 + $0x30] sm:$0xf]
      %v355 = vld [vmem:[%s1 + $0x34] sm:$0xf]
      %v356 = vld [vmem:[%s1 + $0x38] sm:$0xf]
      %v357 = vld [vmem:[%s1 + $0x3c] sm:$0xf]
      %v406 = vunpack.c.l.b16 %v294
      %v407 = vunpack.c.l.b16 %v295
      %v408 = vunpack.c.l.b16 %v296
      %v409 = vunpack.c.l.b16 %v297
      %v410 = vunpack.c.l.b16 %v298
      %v411 = vunpack.c.l.b16 %v299
      %v412 = vunpack.c.l.b16 %v300
      %v413 = vunpack.c.l.b16 %v301
      %v414 = vunpack.c.l.b16 %v302
      %v415 = vunpack.c.l.b16 %v303
      %v416 = vunpack.c.l.b16 %v304
      %v417 = vunpack.c.l.b16 %v305
      %v418 = vunpack.c.l.b16 %v306
      %v419 = vunpack.c.l.b16 %v307
      %v420 = vunpack.c.l.b16 %v308
      %v421 = vunpack.c.l.b16 %v309
      %v422 = vunpack.c.l.b16 %v310
      %v423 = vunpack.c.l.b16 %v311
      %v424 = vunpack.c.l.b16 %v312
      %v425 = vunpack.c.l.b16 %v313
      %v426 = vunpack.c.l.b16 %v314
      %v427 = vunpack.c.l.b16 %v315
      %v428 = vunpack.c.l.b16 %v316
      %v429 = vunpack.c.l.b16 %v317
      %v430 = vunpack.c.l.b16 %v318
      %v431 = vunpack.c.l.b16 %v319
      %v432 = vunpack.c.l.b16 %v320
      %v433 = vunpack.c.l.b16 %v321
      %v434 = vunpack.c.l.b16 %v322
      %v435 = vunpack.c.l.b16 %v323
      %v436 = vunpack.c.l.b16 %v324
      %v437 = vunpack.c.l.b16 %v325
      %v438 = vunpack.c.l.b16 %v326
      %v439 = vunpack.c.l.b16 %v327
      %v440 = vunpack.c.l.b16 %v328
      %v441 = vunpack.c.l.b16 %v329
      %v442 = vunpack.c.l.b16 %v330
      %v443 = vunpack.c.l.b16 %v331
      %v444 = vunpack.c.l.b16 %v332
      %v445 = vunpack.c.l.b16 %v333
      %v446 = vunpack.c.l.b16 %v334
      %v447 = vunpack.c.l.b16 %v335
      %v448 = vunpack.c.l.b16 %v336
      %v449 = vunpack.c.l.b16 %v337
      %v450 = vunpack.c.l.b16 %v338
      %v451 = vunpack.c.l.b16 %v339
      %v452 = vunpack.c.l.b16 %v340
      %v453 = vunpack.c.l.b16 %v341
      %v454 = vpack.c.b16 %v407, %v406
      %v455 = vpack.c.b16 %v409, %v408
      %v456 = vpack.c.b16 %v411, %v410
      %v457 = vpack.c.b16 %v413, %v412
      %v458 = vpack.c.b16 %v415, %v414
      %v459 = vpack.c.b16 %v417, %v416
      %v460 = vpack.c.b16 %v419, %v418
      %v461 = vpack.c.b16 %v421, %v420
      %v462 = vpack.c.b16 %v423, %v422
      %v463 = vpack.c.b16 %v425, %v424
      %v464 = vpack.c.b16 %v427, %v426
      %v465 = vpack.c.b16 %v429, %v428
      %v466 = vpack.c.b16 %v431, %v430
      %v467 = vpack.c.b16 %v433, %v432
      %v468 = vpack.c.b16 %v435, %v434
      %v469 = vpack.c.b16 %v437, %v436
      %v470 = vpack.c.b16 %v439, %v438
      %v471 = vpack.c.b16 %v441, %v440
      %v472 = vpack.c.b16 %v443, %v442
      %v473 = vpack.c.b16 %v445, %v444
      %v474 = vpack.c.b16 %v447, %v446
      %v475 = vpack.c.b16 %v449, %v448
      %v476 = vpack.c.b16 %v451, %v450
      %v477 = vpack.c.b16 %v453, %v452
      %v518 = vunpack.c.l.b16 %v342
      %v519 = vunpack.c.l.b16 %v343
      %v520 = vunpack.c.l.b16 %v344
      %v521 = vunpack.c.l.b16 %v345
      %v522 = vunpack.c.l.b16 %v346
      %v523 = vunpack.c.l.b16 %v347
      %v524 = vunpack.c.l.b16 %v348
      %v525 = vunpack.c.l.b16 %v349
      %v526 = vunpack.c.l.b16 %v350
      %v527 = vunpack.c.l.b16 %v351
      %v528 = vunpack.c.l.b16 %v352
      %v529 = vunpack.c.l.b16 %v353
      %v530 = vunpack.c.l.b16 %v354
      %v531 = vunpack.c.l.b16 %v355
      %v532 = vunpack.c.l.b16 %v356
      %v533 = vunpack.c.l.b16 %v357
      %v534 = vpack.c.b16 %v519, %v518
      %v535 = vpack.c.b16 %v521, %v520
      %v536 = vpack.c.b16 %v523, %v522
      %v537 = vpack.c.b16 %v525, %v524
      %v538 = vpack.c.b16 %v527, %v526
      %v539 = vpack.c.b16 %v529, %v528
      %v540 = vpack.c.b16 %v531, %v530
      %v541 = vpack.c.b16 %v533, %v532
      %550 = vmatpush.bf16.msra.mxu0 %v541
      %551 = vmatpush.bf16.msra.mxu0 %v540
      %552 = vmatpush.bf16.msra.mxu0 %v539
      %553 = vmatpush.bf16.msra.mxu0 %v538
      %554 = vmatpush.bf16.msra.mxu0 %v537
      %555 = vmatpush.bf16.msra.mxu0 %v536
      %556 = vmatpush.bf16.msra.mxu0 %v535
      %557 = vmatpush.bf16.msra.mxu0 %v534
      %558 = vmatmul.bf16.gmra.mxu0 %v454
      %v559 = vpop.f32.mrf.mxu0
      %v560 = vadd.f32 0.0, %v559
      %v561 = vpop.f32.mrf.mxu0
      %v562 = vadd.f32 0.0, %v561
      %563 = vmatmul.bf16.gmra.mxu0 %v455
      %v564 = vpop.f32.mrf.mxu0
      %v565 = vadd.f32 0.0, %v564
      %v566 = vpop.f32.mrf.mxu0
      %v567 = vadd.f32 0.0, %v566
      %568 = vmatmul.bf16.gmra.mxu0 %v456
      %v569 = vpop.f32.mrf.mxu0
      %v570 = vadd.f32 0.0, %v569
      %v571 = vpop.f32.mrf.mxu0
      %v572 = vadd.f32 0.0, %v571
      %573 = vmatmul.bf16.gmra.mxu0 %v457
      %v574 = vpop.f32.mrf.mxu0
      %v575 = vadd.f32 0.0, %v574
      %v576 = vpop.f32.mrf.mxu0
      %v577 = vadd.f32 0.0, %v576
      %578 = vmatmul.bf16.gmra.mxu0 %v458
      %v579 = vpop.f32.mrf.mxu0
      %v580 = vadd.f32 0.0, %v579
      %v581 = vpop.f32.mrf.mxu0
      %v582 = vadd.f32 0.0, %v581
      %583 = vmatmul.bf16.gmra.mxu0 %v459
      %v584 = vpop.f32.mrf.mxu0
      %v585 = vadd.f32 0.0, %v584
      %v586 = vpop.f32.mrf.mxu0
      %v587 = vadd.f32 0.0, %v586
      %588 = vmatmul.bf16.gmra.mxu0 %v460
      %v589 = vpop.f32.mrf.mxu0
      %v590 = vadd.f32 0.0, %v589
      %v591 = vpop.f32.mrf.mxu0
      %v592 = vadd.f32 0.0, %v591
      %593 = vmatmul.bf16.gmra.mxu0 %v461
      %v594 = vpop.f32.mrf.mxu0
      %v595 = vadd.f32 0.0, %v594
      %v596 = vpop.f32.mrf.mxu0
      %v597 = vadd.f32 0.0, %v596
      %598 = vmatmul.bf16.gmra.mxu0 %v462
      %v599 = vpop.f32.mrf.mxu0
      %v600 = vadd.f32 0.0, %v599
      %v601 = vpop.f32.mrf.mxu0
      %v602 = vadd.f32 0.0, %v601
      %603 = vmatmul.bf16.gmra.mxu0 %v463
      %v604 = vpop.f32.mrf.mxu0
      %v605 = vadd.f32 0.0, %v604
      %v606 = vpop.f32.mrf.mxu0
      %v607 = vadd.f32 0.0, %v606
      %608 = vmatmul.bf16.gmra.mxu0 %v464
      %v609 = vpop.f32.mrf.mxu0
      %v610 = vadd.f32 0.0, %v609
      %v611 = vpop.f32.mrf.mxu0
      %v612 = vadd.f32 0.0, %v611
      %613 = vmatmul.bf16.gmra.mxu0 %v465
      %v614 = vpop.f32.mrf.mxu0
      %v615 = vadd.f32 0.0, %v614
      %v616 = vpop.f32.mrf.mxu0
      %v617 = vadd.f32 0.0, %v616
      %618 = vmatmul.bf16.gmra.mxu0 %v466
      %v619 = vpop.f32.mrf.mxu0
      %v620 = vadd.f32 0.0, %v619
      %v621 = vpop.f32.mrf.mxu0
      %v622 = vadd.f32 0.0, %v621
      %623 = vmatmul.bf16.gmra.mxu0 %v467
      %v624 = vpop.f32.mrf.mxu0
      %v625 = vadd.f32 0.0, %v624
      %v626 = vpop.f32.mrf.mxu0
      %v627 = vadd.f32 0.0, %v626
      %628 = vmatmul.bf16.gmra.mxu0 %v468
      %v629 = vpop.f32.mrf.mxu0
      %v630 = vadd.f32 0.0, %v629
      %v631 = vpop.f32.mrf.mxu0
      %v632 = vadd.f32 0.0, %v631
      %633 = vmatmul.bf16.gmra.mxu0 %v469
      %v634 = vpop.f32.mrf.mxu0
      %v635 = vadd.f32 0.0, %v634
      %v636 = vpop.f32.mrf.mxu0
      %v637 = vadd.f32 0.0, %v636
      %638 = vmatmul.bf16.gmra.mxu0 %v470
      %v639 = vpop.f32.mrf.mxu0
      %v640 = vadd.f32 0.0, %v639
      %v641 = vpop.f32.mrf.mxu0
      %v642 = vadd.f32 0.0, %v641
      %643 = vmatmul.bf16.gmra.mxu0 %v471
      %v644 = vpop.f32.mrf.mxu0
      %v645 = vadd.f32 0.0, %v644
      %v646 = vpop.f32.mrf.mxu0
      %v647 = vadd.f32 0.0, %v646
      %648 = vmatmul.bf16.gmra.mxu0 %v472
      %v649 = vpop.f32.mrf.mxu0
      %v650 = vadd.f32 0.0, %v649
      %v651 = vpop.f32.mrf.mxu0
      %v652 = vadd.f32 0.0, %v651
      %653 = vmatmul.bf16.gmra.mxu0 %v473
      %v654 = vpop.f32.mrf.mxu0
      %v655 = vadd.f32 0.0, %v654
      %v656 = vpop.f32.mrf.mxu0
      %v657 = vadd.f32 0.0, %v656
      %658 = vmatmul.bf16.gmra.mxu0 %v474
      %v659 = vpop.f32.mrf.mxu0
      %v660 = vadd.f32 0.0, %v659
      %v661 = vpop.f32.mrf.mxu0
      %v662 = vadd.f32 0.0, %v661
      %663 = vmatmul.bf16.gmra.mxu0 %v475
      %v664 = vpop.f32.mrf.mxu0
      %v665 = vadd.f32 0.0, %v664
      %v666 = vpop.f32.mrf.mxu0
      %v667 = vadd.f32 0.0, %v666
      %668 = vmatmul.bf16.gmra.mxu0 %v476
      %v669 = vpop.f32.mrf.mxu0
      %v670 = vadd.f32 0.0, %v669
      %v671 = vpop.f32.mrf.mxu0
      %v672 = vadd.f32 0.0, %v671
      %673 = vmatmul.bf16.gmra.mxu0 %v477
      %v674 = vpop.f32.mrf.mxu0
      %v675 = vadd.f32 0.0, %v674
      %v676 = vpop.f32.mrf.mxu0
      %v677 = vadd.f32 0.0, %v676
      %678 = vdwg.mxu0
      %v679 = vld [vmem:[%s2] sm:$0x1]
      %v681 = vperm.slane %v679, 0
      %v683 = vmul.f32 %v560, %v681
      %v684 = vmul.f32 %v562, %v681
      %v685 = vmul.f32 %v565, %v681
      %v686 = vmul.f32 %v567, %v681
      %v687 = vmul.f32 %v570, %v681
      %v688 = vmul.f32 %v572, %v681
      %v689 = vmul.f32 %v575, %v681
      %v690 = vmul.f32 %v577, %v681
      %v691 = vmul.f32 %v580, %v681
      %v692 = vmul.f32 %v582, %v681
      %v693 = vmul.f32 %v585, %v681
      %v694 = vmul.f32 %v587, %v681
      %v695 = vmul.f32 %v590, %v681
      %v696 = vmul.f32 %v592, %v681
      %v697 = vmul.f32 %v595, %v681
      %v698 = vmul.f32 %v597, %v681
      %v699 = vmul.f32 %v600, %v681
      %v700 = vmul.f32 %v602, %v681
      %v701 = vmul.f32 %v605, %v681
      %v702 = vmul.f32 %v607, %v681
      %v703 = vmul.f32 %v610, %v681
      %v704 = vmul.f32 %v612, %v681
      %v705 = vmul.f32 %v615, %v681
      %v706 = vmul.f32 %v617, %v681
      %v707 = vmul.f32 %v620, %v681
      %v708 = vmul.f32 %v622, %v681
      %v709 = vmul.f32 %v625, %v681
      %v710 = vmul.f32 %v627, %v681
      %v711 = vmul.f32 %v630, %v681
      %v712 = vmul.f32 %v632, %v681
      %v713 = vmul.f32 %v635, %v681
      %v714 = vmul.f32 %v637, %v681
      %v715 = vmul.f32 %v640, %v681
      %v716 = vmul.f32 %v642, %v681
      %v717 = vmul.f32 %v645, %v681
      %v718 = vmul.f32 %v647, %v681
      %v719 = vmul.f32 %v650, %v681
      %v720 = vmul.f32 %v652, %v681
      %v721 = vmul.f32 %v655, %v681
      %v722 = vmul.f32 %v657, %v681
      %v723 = vmul.f32 %v660, %v681
      %v724 = vmul.f32 %v662, %v681
      %v725 = vmul.f32 %v665, %v681
      %v726 = vmul.f32 %v667, %v681
      %v727 = vmul.f32 %v670, %v681
      %v728 = vmul.f32 %v672, %v681
      %v729 = vmul.f32 %v675, %v681
      %v730 = vmul.f32 %v677, %v681
      %v731 = vld [vmem:[%s3] sm:$0x1]
      %v733 = vperm.slane %v731, 0
      %v735 = vadd.f32 %v683, %v733
      %v736 = vadd.f32 %v684, %v733
      %v737 = vadd.f32 %v685, %v733
      %v738 = vadd.f32 %v686, %v733
      %v739 = vadd.f32 %v687, %v733
      %v740 = vadd.f32 %v688, %v733
      %v741 = vadd.f32 %v689, %v733
      %v742 = vadd.f32 %v690, %v733
      %v743 = vadd.f32 %v691, %v733
      %v744 = vadd.f32 %v692, %v733
      %v745 = vadd.f32 %v693, %v733
      %v746 = vadd.f32 %v694, %v733
      %v747 = vadd.f32 %v695, %v733
      %v748 = vadd.f32 %v696, %v733
      %v749 = vadd.f32 %v697, %v733
      %v750 = vadd.f32 %v698, %v733
      %v751 = vadd.f32 %v699, %v733
      %v752 = vadd.f32 %v700, %v733
      %v753 = vadd.f32 %v701, %v733
      %v754 = vadd.f32 %v702, %v733
      %v755 = vadd.f32 %v703, %v733
      %v756 = vadd.f32 %v704, %v733
      %v757 = vadd.f32 %v705, %v733
      %v758 = vadd.f32 %v706, %v733
      %v759 = vadd.f32 %v707, %v733
      %v760 = vadd.f32 %v708, %v733
      %v761 = vadd.f32 %v709, %v733
      %v762 = vadd.f32 %v710, %v733
      %v763 = vadd.f32 %v711, %v733
      %v764 = vadd.f32 %v712, %v733
      %v765 = vadd.f32 %v713, %v733
      %v766 = vadd.f32 %v714, %v733
      %v767 = vadd.f32 %v715, %v733
      %v768 = vadd.f32 %v716, %v733
      %v769 = vadd.f32 %v717, %v733
      %v770 = vadd.f32 %v718, %v733
      %v771 = vadd.f32 %v719, %v733
      %v772 = vadd.f32 %v720, %v733
      %v773 = vadd.f32 %v721, %v733
      %v774 = vadd.f32 %v722, %v733
      %v775 = vadd.f32 %v723, %v733
      %v776 = vadd.f32 %v724, %v733
      %v777 = vadd.f32 %v725, %v733
      %v778 = vadd.f32 %v726, %v733
      %v779 = vadd.f32 %v727, %v733
      %v780 = vadd.f32 %v728, %v733
      %v781 = vadd.f32 %v729, %v733
      %v782 = vadd.f32 %v730, %v733
      %v783 = vmax.f32 %v735, 0.0
      %v784 = vmax.f32 %v736, 0.0
      %v785 = vmax.f32 %v737, 0.0
      %v786 = vmax.f32 %v738, 0.0
      %v787 = vmax.f32 %v739, 0.0
      %v788 = vmax.f32 %v740, 0.0
      %v789 = vmax.f32 %v741, 0.0
      %v790 = vmax.f32 %v742, 0.0
      %v791 = vmax.f32 %v743, 0.0
      %v792 = vmax.f32 %v744, 0.0
      %v793 = vmax.f32 %v745, 0.0
      %v794 = vmax.f32 %v746, 0.0
      %v795 = vmax.f32 %v747, 0.0
      %v796 = vmax.f32 %v748, 0.0
      %v797 = vmax.f32 %v749, 0.0
      %v798 = vmax.f32 %v750, 0.0
      %v799 = vmax.f32 %v751, 0.0
      %v800 = vmax.f32 %v752, 0.0
      %v801 = vmax.f32 %v753, 0.0
      %v802 = vmax.f32 %v754, 0.0
      %v803 = vmax.f32 %v755, 0.0
      %v804 = vmax.f32 %v756, 0.0
      %v805 = vmax.f32 %v757, 0.0
      %v806 = vmax.f32 %v758, 0.0
      %v807 = vmax.f32 %v759, 0.0
      %v808 = vmax.f32 %v760, 0.0
      %v809 = vmax.f32 %v761, 0.0
      %v810 = vmax.f32 %v762, 0.0
      %v811 = vmax.f32 %v763, 0.0
      %v812 = vmax.f32 %v764, 0.0
      %v813 = vmax.f32 %v765, 0.0
      %v814 = vmax.f32 %v766, 0.0
      %v815 = vmax.f32 %v767, 0.0
      %v816 = vmax.f32 %v768, 0.0
      %v817 = vmax.f32 %v769, 0.0
      %v818 = vmax.f32 %v770, 0.0
      %v819 = vmax.f32 %v771, 0.0
      %v820 = vmax.f32 %v772, 0.0
      %v821 = vmax.f32 %v773, 0.0
      %v822 = vmax.f32 %v774, 0.0
      %v823 = vmax.f32 %v775, 0.0
      %v824 = vmax.f32 %v776, 0.0
      %v825 = vmax.f32 %v777, 0.0
      %v826 = vmax.f32 %v778, 0.0
      %v827 = vmax.f32 %v779, 0.0
      %v828 = vmax.f32 %v780, 0.0
      %v829 = vmax.f32 %v781, 0.0
      %v830 = vmax.f32 %v782, 0.0
      %v831 = vld [vmem:[%s5] sm:$0xff]
      %v832 = vld [vmem:[%s5 + $0x8] sm:$0xff]
      %v833 = vld [vmem:[%s5 + $0x10] sm:$0xff]
      %v834 = vld [vmem:[%s5 + $0x18] sm:$0xff]
      %v835 = vld [vmem:[%s5 + $0x20] sm:$0xff]
      %v836 = vld [vmem:[%s5 + $0x28] sm:$0xff]
      %v837 = vld [vmem:[%s5 + $0x30] sm:$0xff]
      %v838 = vld [vmem:[%s5 + $0x38] sm:$0xff]
      %v839 = vld [vmem:[%s5 + $0x40] sm:$0xff]
      %v840 = vld [vmem:[%s5 + $0x48] sm:$0xff]
      %v841 = vld [vmem:[%s5 + $0x50] sm:$0xff]
      %v842 = vld [vmem:[%s5 + $0x58] sm:$0xff]
      %v843 = vld [vmem:[%s5 + $0x60] sm:$0xff]
      %v844 = vld [vmem:[%s5 + $0x68] sm:$0xff]
      %v845 = vld [vmem:[%s5 + $0x70] sm:$0xff]
      %v846 = vld [vmem:[%s5 + $0x78] sm:$0xff]
      %v847 = vld [vmem:[%s5 + $0x80] sm:$0xff]
      %v848 = vld [vmem:[%s5 + $0x88] sm:$0xff]
      %v849 = vld [vmem:[%s5 + $0x90] sm:$0xff]
      %v850 = vld [vmem:[%s5 + $0x98] sm:$0xff]
      %v851 = vld [vmem:[%s5 + $0xa0] sm:$0xff]
      %v852 = vld [vmem:[%s5 + $0xa8] sm:$0xff]
      %v853 = vld [vmem:[%s5 + $0xb0] sm:$0xff]
      %v854 = vld [vmem:[%s5 + $0xb8] sm:$0xff]
      %v855 = vld [vmem:[%s5 + $0xc0] sm:$0xff]
      %v856 = vld [vmem:[%s5 + $0xc8] sm:$0xff]
      %v857 = vld [vmem:[%s5 + $0xd0] sm:$0xff]
      %v858 = vld [vmem:[%s5 + $0xd8] sm:$0xff]
      %v859 = vld [vmem:[%s5 + $0xe0] sm:$0xff]
      %v860 = vld [vmem:[%s5 + $0xe8] sm:$0xff]
      %v861 = vld [vmem:[%s5 + $0xf0] sm:$0xff]
      %v862 = vld [vmem:[%s5 + $0xf8] sm:$0xff]
      %v863 = vld [vmem:[%s5 + $0x100] sm:$0xff]
      %v864 = vld [vmem:[%s5 + $0x108] sm:$0xff]
      %v865 = vld [vmem:[%s5 + $0x110] sm:$0xff]
      %v866 = vld [vmem:[%s5 + $0x118] sm:$0xff]
      %v867 = vld [vmem:[%s5 + $0x120] sm:$0xff]
      %v868 = vld [vmem:[%s5 + $0x128] sm:$0xff]
      %v869 = vld [vmem:[%s5 + $0x130] sm:$0xff]
      %v870 = vld [vmem:[%s5 + $0x138] sm:$0xff]
      %v871 = vld [vmem:[%s5 + $0x140] sm:$0xff]
      %v872 = vld [vmem:[%s5 + $0x148] sm:$0xff]
      %v873 = vld [vmem:[%s5 + $0x150] sm:$0xff]
      %v874 = vld [vmem:[%s5 + $0x158] sm:$0xff]
      %v875 = vld [vmem:[%s5 + $0x160] sm:$0xff]
      %v876 = vld [vmem:[%s5 + $0x168] sm:$0xff]
      %v877 = vld [vmem:[%s5 + $0x170] sm:$0xff]
      %v878 = vld [vmem:[%s5 + $0x178] sm:$0xff]
      %880 = vset.pattern.permute.xlu0 0
      %881 = vperm.xlu0 %880, %v831
      %v882 = vpop.permute.xlu0 %881
      %885 = vset.pattern.permute.xlu0 0
      %886 = vperm.xlu0 %885, %v832
      %v887 = vpop.permute.xlu0 %886
      %890 = vset.pattern.permute.xlu0 0
      %891 = vperm.xlu0 %890, %v833
      %v892 = vpop.permute.xlu0 %891
      %895 = vset.pattern.permute.xlu0 0
      %896 = vperm.xlu0 %895, %v834
      %v897 = vpop.permute.xlu0 %896
      %900 = vset.pattern.permute.xlu0 0
      %901 = vperm.xlu0 %900, %v835
      %v902 = vpop.permute.xlu0 %901
      %905 = vset.pattern.permute.xlu0 0
      %906 = vperm.xlu0 %905, %v836
      %v907 = vpop.permute.xlu0 %906
      %910 = vset.pattern.permute.xlu0 0
      %911 = vperm.xlu0 %910, %v837
      %v912 = vpop.permute.xlu0 %911
      %915 = vset.pattern.permute.xlu0 0
      %916 = vperm.xlu0 %915, %v838
      %v917 = vpop.permute.xlu0 %916
      %920 = vset.pattern.permute.xlu0 0
      %921 = vperm.xlu0 %920, %v839
      %v922 = vpop.permute.xlu0 %921
      %925 = vset.pattern.permute.xlu0 0
      %926 = vperm.xlu0 %925, %v840
      %v927 = vpop.permute.xlu0 %926
      %930 = vset.pattern.permute.xlu0 0
      %931 = vperm.xlu0 %930, %v841
      %v932 = vpop.permute.xlu0 %931
      %935 = vset.pattern.permute.xlu0 0
      %936 = vperm.xlu0 %935, %v842
      %v937 = vpop.permute.xlu0 %936
      %940 = vset.pattern.permute.xlu0 0
      %941 = vperm.xlu0 %940, %v843
      %v942 = vpop.permute.xlu0 %941
      %945 = vset.pattern.permute.xlu0 0
      %946 = vperm.xlu0 %945, %v844
      %v947 = vpop.permute.xlu0 %946
      %950 = vset.pattern.permute.xlu0 0
      %951 = vperm.xlu0 %950, %v845
      %v952 = vpop.permute.xlu0 %951
      %955 = vset.pattern.permute.xlu0 0
      %956 = vperm.xlu0 %955, %v846
      %v957 = vpop.permute.xlu0 %956
      %960 = vset.pattern.permute.xlu0 0
      %961 = vperm.xlu0 %960, %v847
      %v962 = vpop.permute.xlu0 %961
      %965 = vset.pattern.permute.xlu0 0
      %966 = vperm.xlu0 %965, %v848
      %v967 = vpop.permute.xlu0 %966
      %970 = vset.pattern.permute.xlu0 0
      %971 = vperm.xlu0 %970, %v849
      %v972 = vpop.permute.xlu0 %971
      %975 = vset.pattern.permute.xlu0 0
      %976 = vperm.xlu0 %975, %v850
      %v977 = vpop.permute.xlu0 %976
      %980 = vset.pattern.permute.xlu0 0
      %981 = vperm.xlu0 %980, %v851
      %v982 = vpop.permute.xlu0 %981
      %985 = vset.pattern.permute.xlu0 0
      %986 = vperm.xlu0 %985, %v852
      %v987 = vpop.permute.xlu0 %986
      %990 = vset.pattern.permute.xlu0 0
      %991 = vperm.xlu0 %990, %v853
      %v992 = vpop.permute.xlu0 %991
      %995 = vset.pattern.permute.xlu0 0
      %996 = vperm.xlu0 %995, %v854
      %v997 = vpop.permute.xlu0 %996
      %1000 = vset.pattern.permute.xlu0 0
      %1001 = vperm.xlu0 %1000, %v855
      %v1002 = vpop.permute.xlu0 %1001
      %1005 = vset.pattern.permute.xlu0 0
      %1006 = vperm.xlu0 %1005, %v856
      %v1007 = vpop.permute.xlu0 %1006
      %1010 = vset.pattern.permute.xlu0 0
      %1011 = vperm.xlu0 %1010, %v857
      %v1012 = vpop.permute.xlu0 %1011
      %1015 = vset.pattern.permute.xlu0 0
      %1016 = vperm.xlu0 %1015, %v858
      %v1017 = vpop.permute.xlu0 %1016
      %1020 = vset.pattern.permute.xlu0 0
      %1021 = vperm.xlu0 %1020, %v859
      %v1022 = vpop.permute.xlu0 %1021
      %1025 = vset.pattern.permute.xlu0 0
      %1026 = vperm.xlu0 %1025, %v860
      %v1027 = vpop.permute.xlu0 %1026
      %1030 = vset.pattern.permute.xlu0 0
      %1031 = vperm.xlu0 %1030, %v861
      %v1032 = vpop.permute.xlu0 %1031
      %1035 = vset.pattern.permute.xlu0 0
      %1036 = vperm.xlu0 %1035, %v862
      %v1037 = vpop.permute.xlu0 %1036
      %1040 = vset.pattern.permute.xlu0 0
      %1041 = vperm.xlu0 %1040, %v863
      %v1042 = vpop.permute.xlu0 %1041
      %1045 = vset.pattern.permute.xlu0 0
      %1046 = vperm.xlu0 %1045, %v864
      %v1047 = vpop.permute.xlu0 %1046
      %1050 = vset.pattern.permute.xlu0 0
      %1051 = vperm.xlu0 %1050, %v865
      %v1052 = vpop.permute.xlu0 %1051
      %1055 = vset.pattern.permute.xlu0 0
      %1056 = vperm.xlu0 %1055, %v866
      %v1057 = vpop.permute.xlu0 %1056
      %1060 = vset.pattern.permute.xlu0 0
      %1061 = vperm.xlu0 %1060, %v867
      %v1062 = vpop.permute.xlu0 %1061
      %1065 = vset.pattern.permute.xlu0 0
      %1066 = vperm.xlu0 %1065, %v868
      %v1067 = vpop.permute.xlu0 %1066
      %1070 = vset.pattern.permute.xlu0 0
      %1071 = vperm.xlu0 %1070, %v869
      %v1072 = vpop.permute.xlu0 %1071
      %1075 = vset.pattern.permute.xlu0 0
      %1076 = vperm.xlu0 %1075, %v870
      %v1077 = vpop.permute.xlu0 %1076
      %1080 = vset.pattern.permute.xlu0 0
      %1081 = vperm.xlu0 %1080, %v871
      %v1082 = vpop.permute.xlu0 %1081
      %1085 = vset.pattern.permute.xlu0 0
      %1086 = vperm.xlu0 %1085, %v872
      %v1087 = vpop.permute.xlu0 %1086
      %1090 = vset.pattern.permute.xlu0 0
      %1091 = vperm.xlu0 %1090, %v873
      %v1092 = vpop.permute.xlu0 %1091
      %1095 = vset.pattern.permute.xlu0 0
      %1096 = vperm.xlu0 %1095, %v874
      %v1097 = vpop.permute.xlu0 %1096
      %1100 = vset.pattern.permute.xlu0 0
      %1101 = vperm.xlu0 %1100, %v875
      %v1102 = vpop.permute.xlu0 %1101
      %1105 = vset.pattern.permute.xlu0 0
      %1106 = vperm.xlu0 %1105, %v876
      %v1107 = vpop.permute.xlu0 %1106
      %1110 = vset.pattern.permute.xlu0 0
      %1111 = vperm.xlu0 %1110, %v877
      %v1112 = vpop.permute.xlu0 %1111
      %1115 = vset.pattern.permute.xlu0 0
      %1116 = vperm.xlu0 %1115, %v878
      %v1117 = vpop.permute.xlu0 %1116
      %v1119 = vmul.f32 %v783, %v882
      %v1120 = vmul.f32 %v784, %v887
      %v1121 = vmul.f32 %v785, %v892
      %v1122 = vmul.f32 %v786, %v897
      %v1123 = vmul.f32 %v787, %v902
      %v1124 = vmul.f32 %v788, %v907
      %v1125 = vmul.f32 %v789, %v912
      %v1126 = vmul.f32 %v790, %v917
      %v1127 = vmul.f32 %v791, %v922
      %v1128 = vmul.f32 %v792, %v927
      %v1129 = vmul.f32 %v793, %v932
      %v1130 = vmul.f32 %v794, %v937
      %v1131 = vmul.f32 %v795, %v942
      %v1132 = vmul.f32 %v796, %v947
      %v1133 = vmul.f32 %v797, %v952
      %v1134 = vmul.f32 %v798, %v957
      %v1135 = vmul.f32 %v799, %v962
      %v1136 = vmul.f32 %v800, %v967
      %v1137 = vmul.f32 %v801, %v972
      %v1138 = vmul.f32 %v802, %v977
      %v1139 = vmul.f32 %v803, %v982
      %v1140 = vmul.f32 %v804, %v987
      %v1141 = vmul.f32 %v805, %v992
      %v1142 = vmul.f32 %v806, %v997
      %v1143 = vmul.f32 %v807, %v1002
      %v1144 = vmul.f32 %v808, %v1007
      %v1145 = vmul.f32 %v809, %v1012
      %v1146 = vmul.f32 %v810, %v1017
      %v1147 = vmul.f32 %v811, %v1022
      %v1148 = vmul.f32 %v812, %v1027
      %v1149 = vmul.f32 %v813, %v1032
      %v1150 = vmul.f32 %v814, %v1037
      %v1151 = vmul.f32 %v815, %v1042
      %v1152 = vmul.f32 %v816, %v1047
      %v1153 = vmul.f32 %v817, %v1052
      %v1154 = vmul.f32 %v818, %v1057
      %v1155 = vmul.f32 %v819, %v1062
      %v1156 = vmul.f32 %v820, %v1067
      %v1157 = vmul.f32 %v821, %v1072
      %v1158 = vmul.f32 %v822, %v1077
      %v1159 = vmul.f32 %v823, %v1082
      %v1160 = vmul.f32 %v824, %v1087
      %v1161 = vmul.f32 %v825, %v1092
      %v1162 = vmul.f32 %v826, %v1097
      %v1163 = vmul.f32 %v827, %v1102
      %v1164 = vmul.f32 %v828, %v1107
      %v1165 = vmul.f32 %v829, %v1112
      %v1166 = vmul.f32 %v830, %v1117
      %1167 = vst [vmem:[#allocation2] sm:$0xf] 0
      %1168 = vst [vmem:[#allocation2 + $0x4] sm:$0xf] 0
      %1169 = vst [vmem:[#allocation2 + $0x8] sm:$0xf] 0
      %vm1170 = vcmask 1040384
      %vm1171 = vsmask.f32 256
      %vm1172 = vmand %vm1170, %vm1171
      %v1173 = vld [vmem:[#allocation2 + $0xc] sm:$0x1]
      %v1174 = vsel %vm1172, 0, %v1173
      %1175 = vst [vmem:[#allocation2 + $0xc] sm:$0x1] %v1174
      %1176 = vst [vmem:[#allocation2 + $0xcc] sm:$0xf] 0
      %1177 = vst [vmem:[#allocation2 + $0xd0] sm:$0xf] 0
      %1178 = vst [vmem:[#allocation2 + $0xd4] sm:$0xf] 0
      %1179 = vst [vmem:[#allocation2 + $0xd8] sm:$0xf] 0
      %v1180 = vpack.c.bf16 %v1119, %v1119
      %v1181 = vpack.c.bf16 %v1120, %v1120
      %v1182 = vpack.c.bf16 %v1121, %v1121
      %v1183 = vpack.c.bf16 %v1122, %v1122
      %v1184 = vpack.c.bf16 %v1123, %v1123
      %v1185 = vpack.c.bf16 %v1124, %v1124
      %v1186 = vpack.c.bf16 %v1125, %v1125
      %v1187 = vpack.c.bf16 %v1126, %v1126
      %v1188 = vpack.c.bf16 %v1127, %v1127
      %v1189 = vpack.c.bf16 %v1128, %v1128
      %v1190 = vpack.c.bf16 %v1129, %v1129
      %v1191 = vpack.c.bf16 %v1130, %v1130
      %v1192 = vpack.c.bf16 %v1131, %v1131
      %v1193 = vpack.c.bf16 %v1132, %v1132
      %v1194 = vpack.c.bf16 %v1133, %v1133
      %v1195 = vpack.c.bf16 %v1134, %v1134
      %v1196 = vpack.c.bf16 %v1135, %v1135
      %v1197 = vpack.c.bf16 %v1136, %v1136
      %v1198 = vpack.c.bf16 %v1137, %v1137
      %v1199 = vpack.c.bf16 %v1138, %v1138
      %v1200 = vpack.c.bf16 %v1139, %v1139
      %v1201 = vpack.c.bf16 %v1140, %v1140
      %v1202 = vpack.c.bf16 %v1141, %v1141
      %v1203 = vpack.c.bf16 %v1142, %v1142
      %v1204 = vpack.c.bf16 %v1143, %v1143
      %v1205 = vpack.c.bf16 %v1144, %v1144
      %v1206 = vpack.c.bf16 %v1145, %v1145
      %v1207 = vpack.c.bf16 %v1146, %v1146
      %v1208 = vpack.c.bf16 %v1147, %v1147
      %v1209 = vpack.c.bf16 %v1148, %v1148
      %v1210 = vpack.c.bf16 %v1149, %v1149
      %v1211 = vpack.c.bf16 %v1150, %v1150
      %v1212 = vpack.c.bf16 %v1151, %v1151
      %v1213 = vpack.c.bf16 %v1152, %v1152
      %v1214 = vpack.c.bf16 %v1153, %v1153
      %v1215 = vpack.c.bf16 %v1154, %v1154
      %v1216 = vpack.c.bf16 %v1155, %v1155
      %v1217 = vpack.c.bf16 %v1156, %v1156
      %v1218 = vpack.c.bf16 %v1157, %v1157
      %v1219 = vpack.c.bf16 %v1158, %v1158
      %v1220 = vpack.c.bf16 %v1159, %v1159
      %v1221 = vpack.c.bf16 %v1160, %v1160
      %v1222 = vpack.c.bf16 %v1161, %v1161
      %v1223 = vpack.c.bf16 %v1162, %v1162
      %v1224 = vpack.c.bf16 %v1163, %v1163
      %v1225 = vpack.c.bf16 %v1164, %v1164
      %v1226 = vpack.c.bf16 %v1165, %v1165
      %v1227 = vpack.c.bf16 %v1166, %v1166
      %vm1228 = vsmask.f32 4368
      %vm1229 = vmor %vm1171, %vm1228
      %v1231 = vshrl.u32 %v1180, 16
      %v1233 = vrot.slane %v1231, 7
      %v1234 = vshll.u32 %v1180, 16
      %v1236 = vor.u32 %v1233, %v1234
      %v1237 = vrot.slane %v1233, 4
      %v1239 = vshrl.u32 %v1181, 16
      %v1241 = vrot.slane %v1239, 7
      %v1242 = vshll.u32 %v1181, 16
      %v1244 = vor.u32 %v1241, %v1242
      %v1245 = vsel %vm1229, %v1237, %v1244
      %v1246 = vrot.slane %v1241, 4
      %v1248 = vshrl.u32 %v1182, 16
      %v1250 = vrot.slane %v1248, 7
      %v1251 = vshll.u32 %v1182, 16
      %v1253 = vor.u32 %v1250, %v1251
      %v1254 = vsel %vm1229, %v1246, %v1253
      %v1255 = vrot.slane %v1250, 4
      %v1257 = vshrl.u32 %v1183, 16
      %v1259 = vrot.slane %v1257, 7
      %v1260 = vshll.u32 %v1183, 16
      %v1262 = vor.u32 %v1259, %v1260
      %v1263 = vsel %vm1229, %v1255, %v1262
      %v1264 = vrot.slane %v1259, 4
      %v1266 = vshrl.u32 %v1184, 16
      %v1268 = vrot.slane %v1266, 7
      %v1269 = vshll.u32 %v1184, 16
      %v1271 = vor.u32 %v1268, %v1269
      %v1272 = vsel %vm1229, %v1264, %v1271
      %v1273 = vrot.slane %v1268, 4
      %v1275 = vshrl.u32 %v1185, 16
      %v1277 = vrot.slane %v1275, 7
      %v1278 = vshll.u32 %v1185, 16
      %v1280 = vor.u32 %v1277, %v1278
      %v1281 = vsel %vm1229, %v1273, %v1280
      %v1282 = vrot.slane %v1277, 4
      %v1284 = vshrl.u32 %v1186, 16
      %v1286 = vrot.slane %v1284, 7
      %v1287 = vshll.u32 %v1186, 16
      %v1289 = vor.u32 %v1286, %v1287
      %v1290 = vsel %vm1229, %v1282, %v1289
      %v1291 = vrot.slane %v1286, 4
      %v1293 = vshrl.u32 %v1187, 16
      %v1295 = vrot.slane %v1293, 7
      %v1296 = vshll.u32 %v1187, 16
      %v1298 = vor.u32 %v1295, %v1296
      %v1299 = vsel %vm1229, %v1291, %v1298
      %v1300 = vrot.slane %v1295, 4
      %v1302 = vshrl.u32 %v1188, 16
      %v1304 = vrot.slane %v1302, 7
      %v1305 = vshll.u32 %v1188, 16
      %v1307 = vor.u32 %v1304, %v1305
      %v1308 = vsel %vm1229, %v1300, %v1307
      %v1309 = vrot.slane %v1304, 4
      %v1311 = vshrl.u32 %v1189, 16
      %v1313 = vrot.slane %v1311, 7
      %v1314 = vshll.u32 %v1189, 16
      %v1316 = vor.u32 %v1313, %v1314
      %v1317 = vsel %vm1229, %v1309, %v1316
      %v1318 = vrot.slane %v1313, 4
      %v1320 = vshrl.u32 %v1190, 16
      %v1322 = vrot.slane %v1320, 7
      %v1323 = vshll.u32 %v1190, 16
      %v1325 = vor.u32 %v1322, %v1323
      %v1326 = vsel %vm1229, %v1318, %v1325
      %v1327 = vrot.slane %v1322, 4
      %v1329 = vshrl.u32 %v1191, 16
      %v1331 = vrot.slane %v1329, 7
      %v1332 = vshll.u32 %v1191, 16
      %v1334 = vor.u32 %v1331, %v1332
      %v1335 = vsel %vm1229, %v1327, %v1334
      %v1336 = vrot.slane %v1331, 4
      %v1338 = vshrl.u32 %v1192, 16
      %v1340 = vrot.slane %v1338, 7
      %v1341 = vshll.u32 %v1192, 16
      %v1343 = vor.u32 %v1340, %v1341
      %v1344 = vsel %vm1229, %v1336, %v1343
      %v1345 = vrot.slane %v1340, 4
      %v1347 = vshrl.u32 %v1193, 16
      %v1349 = vrot.slane %v1347, 7
      %v1350 = vshll.u32 %v1193, 16
      %v1352 = vor.u32 %v1349, %v1350
      %v1353 = vsel %vm1229, %v1345, %v1352
      %v1354 = vrot.slane %v1349, 4
      %v1356 = vshrl.u32 %v1194, 16
      %v1358 = vrot.slane %v1356, 7
      %v1359 = vshll.u32 %v1194, 16
      %v1361 = vor.u32 %v1358, %v1359
      %v1362 = vsel %vm1229, %v1354, %v1361
      %v1363 = vrot.slane %v1358, 4
      %v1365 = vshrl.u32 %v1195, 16
      %v1367 = vrot.slane %v1365, 7
      %v1368 = vshll.u32 %v1195, 16
      %v1370 = vor.u32 %v1367, %v1368
      %v1371 = vsel %vm1229, %v1363, %v1370
      %v1372 = vrot.slane %v1367, 4
      %v1374 = vshrl.u32 %v1196, 16
      %v1376 = vrot.slane %v1374, 7
      %v1377 = vshll.u32 %v1196, 16
      %v1379 = vor.u32 %v1376, %v1377
      %v1380 = vsel %vm1229, %v1372, %v1379
      %v1381 = vrot.slane %v1376, 4
      %v1383 = vshrl.u32 %v1197, 16
      %v1385 = vrot.slane %v1383, 7
      %v1386 = vshll.u32 %v1197, 16
      %v1388 = vor.u32 %v1385, %v1386
      %v1389 = vsel %vm1229, %v1381, %v1388
      %v1390 = vrot.slane %v1385, 4
      %v1392 = vshrl.u32 %v1198, 16
      %v1394 = vrot.slane %v1392, 7
      %v1395 = vshll.u32 %v1198, 16
      %v1397 = vor.u32 %v1394, %v1395
      %v1398 = vsel %vm1229, %v1390, %v1397
      %v1399 = vrot.slane %v1394, 4
      %v1401 = vshrl.u32 %v1199, 16
      %v1403 = vrot.slane %v1401, 7
      %v1404 = vshll.u32 %v1199, 16
      %v1406 = vor.u32 %v1403, %v1404
      %v1407 = vsel %vm1229, %v1399, %v1406
      %v1408 = vrot.slane %v1403, 4
      %v1410 = vshrl.u32 %v1200, 16
      %v1412 = vrot.slane %v1410, 7
      %v1413 = vshll.u32 %v1200, 16
      %v1415 = vor.u32 %v1412, %v1413
      %v1416 = vsel %vm1229, %v1408, %v1415
      %v1417 = vrot.slane %v1412, 4
      %v1419 = vshrl.u32 %v1201, 16
      %v1421 = vrot.slane %v1419, 7
      %v1422 = vshll.u32 %v1201, 16
      %v1424 = vor.u32 %v1421, %v1422
      %v1425 = vsel %vm1229, %v1417, %v1424
      %v1426 = vrot.slane %v1421, 4
      %v1428 = vshrl.u32 %v1202, 16
      %v1430 = vrot.slane %v1428, 7
      %v1431 = vshll.u32 %v1202, 16
      %v1433 = vor.u32 %v1430, %v1431
      %v1434 = vsel %vm1229, %v1426, %v1433
      %v1435 = vrot.slane %v1430, 4
      %v1437 = vshrl.u32 %v1203, 16
      %v1439 = vrot.slane %v1437, 7
      %v1440 = vshll.u32 %v1203, 16
      %v1442 = vor.u32 %v1439, %v1440
      %v1443 = vsel %vm1229, %v1435, %v1442
      %v1444 = vrot.slane %v1439, 4
      %v1446 = vshrl.u32 %v1204, 16
      %v1448 = vrot.slane %v1446, 7
      %v1449 = vshll.u32 %v1204, 16
      %v1451 = vor.u32 %v1448, %v1449
      %v1452 = vsel %vm1229, %v1444, %v1451
      %v1453 = vrot.slane %v1448, 4
      %v1455 = vshrl.u32 %v1205, 16
      %v1457 = vrot.slane %v1455, 7
      %v1458 = vshll.u32 %v1205, 16
      %v1460 = vor.u32 %v1457, %v1458
      %v1461 = vsel %vm1229, %v1453, %v1460
      %v1462 = vrot.slane %v1457, 4
      %v1464 = vshrl.u32 %v1206, 16
      %v1466 = vrot.slane %v1464, 7
      %v1467 = vshll.u32 %v1206, 16
      %v1469 = vor.u32 %v1466, %v1467
      %v1470 = vsel %vm1229, %v1462, %v1469
      %v1471 = vrot.slane %v1466, 4
      %v1473 = vshrl.u32 %v1207, 16
      %v1475 = vrot.slane %v1473, 7
      %v1476 = vshll.u32 %v1207, 16
      %v1478 = vor.u32 %v1475, %v1476
      %v1479 = vsel %vm1229, %v1471, %v1478
      %v1480 = vrot.slane %v1475, 4
      %v1482 = vshrl.u32 %v1208, 16
      %v1484 = vrot.slane %v1482, 7
      %v1485 = vshll.u32 %v1208, 16
      %v1487 = vor.u32 %v1484, %v1485
      %v1488 = vsel %vm1229, %v1480, %v1487
      %v1489 = vrot.slane %v1484, 4
      %v1491 = vshrl.u32 %v1209, 16
      %v1493 = vrot.slane %v1491, 7
      %v1494 = vshll.u32 %v1209, 16
      %v1496 = vor.u32 %v1493, %v1494
      %v1497 = vsel %vm1229, %v1489, %v1496
      %v1498 = vrot.slane %v1493, 4
      %v1500 = vshrl.u32 %v1210, 16
      %v1502 = vrot.slane %v1500, 7
      %v1503 = vshll.u32 %v1210, 16
      %v1505 = vor.u32 %v1502, %v1503
      %v1506 = vsel %vm1229, %v1498, %v1505
      %v1507 = vrot.slane %v1502, 4
      %v1509 = vshrl.u32 %v1211, 16
      %v1511 = vrot.slane %v1509, 7
      %v1512 = vshll.u32 %v1211, 16
      %v1514 = vor.u32 %v1511, %v1512
      %v1515 = vsel %vm1229, %v1507, %v1514
      %v1516 = vrot.slane %v1511, 4
      %v1518 = vshrl.u32 %v1212, 16
      %v1520 = vrot.slane %v1518, 7
      %v1521 = vshll.u32 %v1212, 16
      %v1523 = vor.u32 %v1520, %v1521
      %v1524 = vsel %vm1229, %v1516, %v1523
      %v1525 = vrot.slane %v1520, 4
      %v1527 = vshrl.u32 %v1213, 16
      %v1529 = vrot.slane %v1527, 7
      %v1530 = vshll.u32 %v1213, 16
      %v1532 = vor.u32 %v1529, %v1530
      %v1533 = vsel %vm1229, %v1525, %v1532
      %v1534 = vrot.slane %v1529, 4
      %v1536 = vshrl.u32 %v1214, 16
      %v1538 = vrot.slane %v1536, 7
      %v1539 = vshll.u32 %v1214, 16
      %v1541 = vor.u32 %v1538, %v1539
      %v1542 = vsel %vm1229, %v1534, %v1541
      %v1543 = vrot.slane %v1538, 4
      %v1545 = vshrl.u32 %v1215, 16
      %v1547 = vrot.slane %v1545, 7
      %v1548 = vshll.u32 %v1215, 16
      %v1550 = vor.u32 %v1547, %v1548
      %v1551 = vsel %vm1229, %v1543, %v1550
      %v1552 = vrot.slane %v1547, 4
      %v1554 = vshrl.u32 %v1216, 16
      %v1556 = vrot.slane %v1554, 7
      %v1557 = vshll.u32 %v1216, 16
      %v1559 = vor.u32 %v1556, %v1557
      %v1560 = vsel %vm1229, %v1552, %v1559
      %v1561 = vrot.slane %v1556, 4
      %v1563 = vshrl.u32 %v1217, 16
      %v1565 = vrot.slane %v1563, 7
      %v1566 = vshll.u32 %v1217, 16
      %v1568 = vor.u32 %v1565, %v1566
      %v1569 = vsel %vm1229, %v1561, %v1568
      %v1570 = vrot.slane %v1565, 4
      %v1572 = vshrl.u32 %v1218, 16
      %v1574 = vrot.slane %v1572, 7
      %v1575 = vshll.u32 %v1218, 16
      %v1577 = vor.u32 %v1574, %v1575
      %v1578 = vsel %vm1229, %v1570, %v1577
      %v1579 = vrot.slane %v1574, 4
      %v1581 = vshrl.u32 %v1219, 16
      %v1583 = vrot.slane %v1581, 7
      %v1584 = vshll.u32 %v1219, 16
      %v1586 = vor.u32 %v1583, %v1584
      %v1587 = vsel %vm1229, %v1579, %v1586
      %v1588 = vrot.slane %v1583, 4
      %v1590 = vshrl.u32 %v1220, 16
      %v1592 = vrot.slane %v1590, 7
      %v1593 = vshll.u32 %v1220, 16
      %v1595 = vor.u32 %v1592, %v1593
      %v1596 = vsel %vm1229, %v1588, %v1595
      %v1597 = vrot.slane %v1592, 4
      %v1599 = vshrl.u32 %v1221, 16
      %v1601 = vrot.slane %v1599, 7
      %v1602 = vshll.u32 %v1221, 16
      %v1604 = vor.u32 %v1601, %v1602
      %v1605 = vsel %vm1229, %v1597, %v1604
      %v1606 = vrot.slane %v1601, 4
      %v1608 = vshrl.u32 %v1222, 16
      %v1610 = vrot.slane %v1608, 7
      %v1611 = vshll.u32 %v1222, 16
      %v1613 = vor.u32 %v1610, %v1611
      %v1614 = vsel %vm1229, %v1606, %v1613
      %v1615 = vrot.slane %v1610, 4
      %v1617 = vshrl.u32 %v1223, 16
      %v1619 = vrot.slane %v1617, 7
      %v1620 = vshll.u32 %v1223, 16
      %v1622 = vor.u32 %v1619, %v1620
      %v1623 = vsel %vm1229, %v1615, %v1622
      %v1624 = vrot.slane %v1619, 4
      %v1626 = vshrl.u32 %v1224, 16
      %v1628 = vrot.slane %v1626, 7
      %v1629 = vshll.u32 %v1224, 16
      %v1631 = vor.u32 %v1628, %v1629
      %v1632 = vsel %vm1229, %v1624, %v1631
      %v1633 = vrot.slane %v1628, 4
      %v1635 = vshrl.u32 %v1225, 16
      %v1637 = vrot.slane %v1635, 7
      %v1638 = vshll.u32 %v1225, 16
      %v1640 = vor.u32 %v1637, %v1638
      %v1641 = vsel %vm1229, %v1633, %v1640
      %v1642 = vrot.slane %v1637, 4
      %v1644 = vshrl.u32 %v1226, 16
      %v1646 = vrot.slane %v1644, 7
      %v1647 = vshll.u32 %v1226, 16
      %v1649 = vor.u32 %v1646, %v1647
      %v1650 = vsel %vm1229, %v1642, %v1649
      %v1651 = vrot.slane %v1646, 4
      %v1653 = vshrl.u32 %v1227, 16
      %v1655 = vrot.slane %v1653, 7
      %v1656 = vshll.u32 %v1227, 16
      %v1658 = vor.u32 %v1655, %v1656
      %v1659 = vsel %vm1229, %v1651, %v1658
      %vm1708 = vcmask 1043456
      %vm1709 = vsmask.f32 7938
      %vm1710 = vmand %vm1708, %vm1709
      %v1711 = vld [vmem:[#allocation2 + $0xc] sm:$0xf]
      %v1712 = vsel %vm1710, %v1236, %v1711
      %1713 = vst [vmem:[#allocation2 + $0xc] sm:$0xf] %v1712
      %1714 = vst [vmem:[#allocation2 + $0x10] sm:$0xf] %v1245
      %1715 = vst [vmem:[#allocation2 + $0x14] sm:$0xf] %v1254
      %1716 = vst [vmem:[#allocation2 + $0x18] sm:$0xf] %v1263
      %1717 = vst [vmem:[#allocation2 + $0x1c] sm:$0xf] %v1272
      %1718 = vst [vmem:[#allocation2 + $0x20] sm:$0xf] %v1281
      %1719 = vst [vmem:[#allocation2 + $0x24] sm:$0xf] %v1290
      %1720 = vst [vmem:[#allocation2 + $0x28] sm:$0xf] %v1299
      %1721 = vst [vmem:[#allocation2 + $0x2c] sm:$0xf] %v1308
      %1722 = vst [vmem:[#allocation2 + $0x30] sm:$0xf] %v1317
      %1723 = vst [vmem:[#allocation2 + $0x34] sm:$0xf] %v1326
      %1724 = vst [vmem:[#allocation2 + $0x38] sm:$0xf] %v1335
      %1725 = vst [vmem:[#allocation2 + $0x3c] sm:$0xf] %v1344
      %1726 = vst [vmem:[#allocation2 + $0x40] sm:$0xf] %v1353
      %1727 = vst [vmem:[#allocation2 + $0x44] sm:$0xf] %v1362
      %1728 = vst [vmem:[#allocation2 + $0x48] sm:$0xf] %v1371
      %1729 = vst [vmem:[#allocation2 + $0x4c] sm:$0xf] %v1380
      %1730 = vst [vmem:[#allocation2 + $0x50] sm:$0xf] %v1389
      %1731 = vst [vmem:[#allocation2 + $0x54] sm:$0xf] %v1398
      %1732 = vst [vmem:[#allocation2 + $0x58] sm:$0xf] %v1407
      %1733 = vst [vmem:[#allocation2 + $0x5c] sm:$0xf] %v1416
      %1734 = vst [vmem:[#allocation2 + $0x60] sm:$0xf] %v1425
      %1735 = vst [vmem:[#allocation2 + $0x64] sm:$0xf] %v1434
      %1736 = vst [vmem:[#allocation2 + $0x68] sm:$0xf] %v1443
      %1737 = vst [vmem:[#allocation2 + $0x6c] sm:$0xf] %v1452
      %1738 = vst [vmem:[#allocation2 + $0x70] sm:$0xf] %v1461
      %1739 = vst [vmem:[#allocation2 + $0x74] sm:$0xf] %v1470
      %1740 = vst [vmem:[#allocation2 + $0x78] sm:$0xf] %v1479
      %1741 = vst [vmem:[#allocation2 + $0x7c] sm:$0xf] %v1488
      %1742 = vst [vmem:[#allocation2 + $0x80] sm:$0xf] %v1497
      %1743 = vst [vmem:[#allocation2 + $0x84] sm:$0xf] %v1506
      %1744 = vst [vmem:[#allocation2 + $0x88] sm:$0xf] %v1515
      %1745 = vst [vmem:[#allocation2 + $0x8c] sm:$0xf] %v1524
      %1746 = vst [vmem:[#allocation2 + $0x90] sm:$0xf] %v1533
      %1747 = vst [vmem:[#allocation2 + $0x94] sm:$0xf] %v1542
      %1748 = vst [vmem:[#allocation2 + $0x98] sm:$0xf] %v1551
      %1749 = vst [vmem:[#allocation2 + $0x9c] sm:$0xf] %v1560
      %1750 = vst [vmem:[#allocation2 + $0xa0] sm:$0xf] %v1569
      %1751 = vst [vmem:[#allocation2 + $0xa4] sm:$0xf] %v1578
      %1752 = vst [vmem:[#allocation2 + $0xa8] sm:$0xf] %v1587
      %1753 = vst [vmem:[#allocation2 + $0xac] sm:$0xf] %v1596
      %1754 = vst [vmem:[#allocation2 + $0xb0] sm:$0xf] %v1605
      %1755 = vst [vmem:[#allocation2 + $0xb4] sm:$0xf] %v1614
      %1756 = vst [vmem:[#allocation2 + $0xb8] sm:$0xf] %v1623
      %1757 = vst [vmem:[#allocation2 + $0xbc] sm:$0xf] %v1632
      %1758 = vst [vmem:[#allocation2 + $0xc0] sm:$0xf] %v1641
      %1759 = vst [vmem:[#allocation2 + $0xc4] sm:$0xf] %v1650
      %1760 = vst [vmem:[#allocation2 + $0xc8] sm:$0xf] %v1659
      %v1761 = vld [vmem:[#allocation2] sm:$0xf]
      %v1762 = vld [vmem:[#allocation2 + $0x4] sm:$0xf]
      %v1763 = vld [vmem:[#allocation2 + $0x8] sm:$0xf]
      %v1764 = vld [vmem:[#allocation2 + $0xc] sm:$0xf]
      %v1765 = vld [vmem:[#allocation2 + $0x10] sm:$0xf]
      %v1766 = vld [vmem:[#allocation2 + $0x14] sm:$0xf]
      %v1767 = vld [vmem:[#allocation2 + $0x18] sm:$0xf]
      %v1768 = vld [vmem:[#allocation2 + $0x1c] sm:$0xf]
      %v1769 = vld [vmem:[#allocation2 + $0x20] sm:$0xf]
      %v1770 = vld [vmem:[#allocation2 + $0x24] sm:$0xf]
      %v1771 = vld [vmem:[#allocation2 + $0x28] sm:$0xf]
      %v1772 = vld [vmem:[#allocation2 + $0x2c] sm:$0xf]
      %v1773 = vld [vmem:[#allocation2 + $0x30] sm:$0xf]
      %v1774 = vld [vmem:[#allocation2 + $0x34] sm:$0xf]
      %v1775 = vld [vmem:[#allocation2 + $0x38] sm:$0xf]
      %v1776 = vld [vmem:[#allocation2 + $0x3c] sm:$0xf]
      %v1777 = vld [vmem:[#allocation2 + $0x40] sm:$0xf]
      %v1778 = vld [vmem:[#allocation2 + $0x44] sm:$0xf]
      %v1779 = vld [vmem:[#allocation2 + $0x48] sm:$0xf]
      %v1780 = vld [vmem:[#allocation2 + $0x4c] sm:$0xf]
      %v1781 = vld [vmem:[#allocation2 + $0x50] sm:$0xf]
      %v1782 = vld [vmem:[#allocation2 + $0x54] sm:$0xf]
      %v1783 = vld [vmem:[#allocation2 + $0x58] sm:$0xf]
      %v1784 = vld [vmem:[#allocation2 + $0x5c] sm:$0xf]
      %v1785 = vld [vmem:[#allocation2 + $0x60] sm:$0xf]
      %v1786 = vld [vmem:[#allocation2 + $0x64] sm:$0xf]
      %v1787 = vld [vmem:[#allocation2 + $0x68] sm:$0xf]
      %v1788 = vld [vmem:[#allocation2 + $0x6c] sm:$0xf]
      %v1789 = vld [vmem:[#allocation2 + $0x70] sm:$0xf]
      %v1790 = vld [vmem:[#allocation2 + $0x74] sm:$0xf]
      %v1791 = vld [vmem:[#allocation2 + $0x78] sm:$0xf]
      %v1792 = vld [vmem:[#allocation2 + $0x7c] sm:$0xf]
      %v1793 = vld [vmem:[#allocation2 + $0x80] sm:$0xf]
      %v1794 = vld [vmem:[#allocation2 + $0x84] sm:$0xf]
      %v1795 = vld [vmem:[#allocation2 + $0x88] sm:$0xf]
      %v1796 = vld [vmem:[#allocation2 + $0x8c] sm:$0xf]
      %v1797 = vld [vmem:[#allocation2 + $0x90] sm:$0xf]
      %v1798 = vld [vmem:[#allocation2 + $0x94] sm:$0xf]
      %v1799 = vld [vmem:[#allocation2 + $0x98] sm:$0xf]
      %v1800 = vld [vmem:[#allocation2 + $0x9c] sm:$0xf]
      %v1801 = vld [vmem:[#allocation2 + $0xa0] sm:$0xf]
      %v1802 = vld [vmem:[#allocation2 + $0xa4] sm:$0xf]
      %v1803 = vld [vmem:[#allocation2 + $0xa8] sm:$0xf]
      %v1804 = vld [vmem:[#allocation2 + $0xac] sm:$0xf]
      %v1805 = vld [vmem:[#allocation2 + $0xb0] sm:$0xf]
      %v1806 = vld [vmem:[#allocation2 + $0xb4] sm:$0xf]
      %v1807 = vld [vmem:[#allocation2 + $0xb8] sm:$0xf]
      %v1808 = vld [vmem:[#allocation2 + $0xbc] sm:$0xf]
      %v1809 = vld [vmem:[#allocation2 + $0xc0] sm:$0xf]
      %v1810 = vld [vmem:[%s4] sm:$0xff]
      %v1811 = vld [vmem:[%s4 + $0x8] sm:$0xf]
      %v1812 = vld [vmem:[%s4 + $0xc] sm:$0xff]
      %v1813 = vld [vmem:[%s4 + $0x14] sm:$0xf]
      %v1814 = vld [vmem:[%s4 + $0x18] sm:$0xff]
      %v1815 = vld [vmem:[%s4 + $0x20] sm:$0xf]
      %v1816 = vld [vmem:[%s4 + $0x24] sm:$0xff]
      %v1817 = vld [vmem:[%s4 + $0x2c] sm:$0xf]
      %v1818 = vld [vmem:[%s4 + $0x30] sm:$0xff]
      %v1819 = vld [vmem:[%s4 + $0x38] sm:$0xf]
      %v1820 = vld [vmem:[%s4 + $0x3c] sm:$0xff]
      %v1821 = vld [vmem:[%s4 + $0x44] sm:$0xf]
      %v1822 = vld [vmem:[%s4 + $0x48] sm:$0xff]
      %v1823 = vld [vmem:[%s4 + $0x50] sm:$0xf]
      %v1824 = vld [vmem:[%s4 + $0x54] sm:$0xff]
      %v1825 = vld [vmem:[%s4 + $0x5c] sm:$0xf]
      %v1826 = vld [vmem:[%s4 + $0x60] sm:$0xff]
      %v1827 = vld [vmem:[%s4 + $0x68] sm:$0xf]
      %v1828 = vld [vmem:[%s4 + $0x6c] sm:$0xff]
      %v1829 = vld [vmem:[%s4 + $0x74] sm:$0xf]
      %v1830 = vld [vmem:[%s4 + $0x78] sm:$0xff]
      %v1831 = vld [vmem:[%s4 + $0x80] sm:$0xf]
      %v1832 = vld [vmem:[%s4 + $0x84] sm:$0xff]
      %v1833 = vld [vmem:[%s4 + $0x8c] sm:$0xf]
      %v1834 = vld [vmem:[%s4 + $0x90] sm:$0xff]
      %v1835 = vld [vmem:[%s4 + $0x98] sm:$0xf]
      %v1836 = vld [vmem:[%s4 + $0x9c] sm:$0xff]
      %v1837 = vld [vmem:[%s4 + $0xa4] sm:$0xf]
      %v1838 = vld [vmem:[%s4 + $0xa8] sm:$0xff]
      %v1839 = vld [vmem:[%s4 + $0xb0] sm:$0xf]
      %v1840 = vld [vmem:[%s4 + $0xb4] sm:$0xff]
      %v1841 = vld [vmem:[%s4 + $0xbc] sm:$0xf]
      %v1842 = vld [vmem:[#allocation2 + $0xc4] sm:$0xf]
      %v1843 = vld [vmem:[#allocation2 + $0xc8] sm:$0xf]
      %v1844 = vld [vmem:[#allocation2 + $0xcc] sm:$0xf]
      %s1845 = scalar_lea.vmem %s4, 192
      %v1846 = vld [vmem:[%s1845] sm:$0xff]
      %v1847 = vld [vmem:[%s1845 + $0x8] sm:$0xf]
      %v1848 = vld [vmem:[%s1845 + $0xc] sm:$0xff]
      %v1849 = vld [vmem:[%s1845 + $0x14] sm:$0xf]
      %v1850 = vld [vmem:[%s1845 + $0x18] sm:$0xff]
      %v1851 = vld [vmem:[%s1845 + $0x20] sm:$0xf]
      %v1852 = vld [vmem:[%s1845 + $0x24] sm:$0xff]
      %v1853 = vld [vmem:[%s1845 + $0x2c] sm:$0xf]
      %v1854 = vld [vmem:[%s1845 + $0x30] sm:$0xff]
      %v1855 = vld [vmem:[%s1845 + $0x38] sm:$0xf]
      %v1856 = vld [vmem:[%s1845 + $0x3c] sm:$0xff]
      %v1857 = vld [vmem:[%s1845 + $0x44] sm:$0xf]
      %v1858 = vld [vmem:[%s1845 + $0x48] sm:$0xff]
      %v1859 = vld [vmem:[%s1845 + $0x50] sm:$0xf]
      %v1860 = vld [vmem:[%s1845 + $0x54] sm:$0xff]
      %v1861 = vld [vmem:[%s1845 + $0x5c] sm:$0xf]
      %v1862 = vld [vmem:[%s1845 + $0x60] sm:$0xff]
      %v1863 = vld [vmem:[%s1845 + $0x68] sm:$0xf]
      %v1864 = vld [vmem:[%s1845 + $0x6c] sm:$0xff]
      %v1865 = vld [vmem:[%s1845 + $0x74] sm:$0xf]
      %v1866 = vld [vmem:[%s1845 + $0x78] sm:$0xff]
      %v1867 = vld [vmem:[%s1845 + $0x80] sm:$0xf]
      %v1868 = vld [vmem:[%s1845 + $0x84] sm:$0xff]
      %v1869 = vld [vmem:[%s1845 + $0x8c] sm:$0xf]
      %v1870 = vld [vmem:[%s1845 + $0x90] sm:$0xff]
      %v1871 = vld [vmem:[%s1845 + $0x98] sm:$0xf]
      %v1872 = vld [vmem:[%s1845 + $0x9c] sm:$0xff]
      %v1873 = vld [vmem:[%s1845 + $0xa4] sm:$0xf]
      %v1874 = vld [vmem:[%s1845 + $0xa8] sm:$0xff]
      %v1875 = vld [vmem:[%s1845 + $0xb0] sm:$0xf]
      %v1876 = vld [vmem:[%s1845 + $0xb4] sm:$0xff]
      %v1877 = vld [vmem:[%s1845 + $0xbc] sm:$0xf]
      %v1927 = vunpack.c.l.b16 %v1764
      %v1928 = vunpack.c.l.b16 %v1765
      %v1929 = vunpack.c.l.b16 %v1766
      %v1930 = vunpack.c.l.b16 %v1767
      %v1931 = vunpack.c.l.b16 %v1768
      %v1932 = vunpack.c.l.b16 %v1769
      %v1933 = vunpack.c.l.b16 %v1770
      %v1934 = vunpack.c.l.b16 %v1771
      %v1935 = vunpack.c.l.b16 %v1772
      %v1936 = vunpack.c.l.b16 %v1773
      %v1937 = vunpack.c.l.b16 %v1774
      %v1938 = vunpack.c.l.b16 %v1775
      %v1939 = vunpack.c.l.b16 %v1776
      %v1940 = vunpack.c.l.b16 %v1777
      %v1941 = vunpack.c.l.b16 %v1778
      %v1942 = vunpack.c.l.b16 %v1779
      %v1943 = vunpack.c.l.b16 %v1780
      %v1944 = vunpack.c.l.b16 %v1781
      %v1945 = vunpack.c.l.b16 %v1782
      %v1946 = vunpack.c.l.b16 %v1783
      %v1947 = vunpack.c.l.b16 %v1784
      %v1948 = vunpack.c.l.b16 %v1785
      %v1949 = vunpack.c.l.b16 %v1786
      %v1950 = vunpack.c.l.b16 %v1787
      %v1951 = vunpack.c.l.b16 %v1788
      %v1952 = vunpack.c.l.b16 %v1789
      %v1953 = vunpack.c.l.b16 %v1790
      %v1954 = vunpack.c.l.b16 %v1791
      %v1955 = vunpack.c.l.b16 %v1792
      %v1956 = vunpack.c.l.b16 %v1793
      %v1957 = vunpack.c.l.b16 %v1794
      %v1958 = vunpack.c.l.b16 %v1795
      %v1959 = vunpack.c.l.b16 %v1796
      %v1960 = vunpack.c.l.b16 %v1797
      %v1961 = vunpack.c.l.b16 %v1798
      %v1962 = vunpack.c.l.b16 %v1799
      %v1963 = vunpack.c.l.b16 %v1800
      %v1964 = vunpack.c.l.b16 %v1801
      %v1965 = vunpack.c.l.b16 %v1802
      %v1966 = vunpack.c.l.b16 %v1803
      %v1967 = vunpack.c.l.b16 %v1804
      %v1968 = vunpack.c.l.b16 %v1805
      %v1969 = vunpack.c.l.b16 %v1806
      %v1970 = vunpack.c.l.b16 %v1807
      %v1971 = vunpack.c.l.b16 %v1808
      %v1972 = vunpack.c.l.b16 %v1809
      %v1973 = vunpack.c.l.b16 %v1842
      %v1974 = vunpack.c.l.b16 %v1843
      %v1975 = vunpack.c.l.b16 %v1844
      %v1976 = vpack.c.b16 %v1928, %v1927
      %v1977 = vpack.c.b16 %v1930, %v1929
      %v1978 = vpack.c.b16 %v1932, %v1931
      %v1979 = vpack.c.b16 %v1934, %v1933
      %v1980 = vpack.c.b16 %v1936, %v1935
      %v1981 = vpack.c.b16 %v1938, %v1937
      %v1982 = vpack.c.b16 %v1940, %v1939
      %v1983 = vpack.c.b16 %v1942, %v1941
      %v1984 = vpack.c.b16 %v1944, %v1943
      %v1985 = vpack.c.b16 %v1946, %v1945
      %v1986 = vpack.c.b16 %v1948, %v1947
      %v1987 = vpack.c.b16 %v1950, %v1949
      %v1988 = vpack.c.b16 %v1952, %v1951
      %v1989 = vpack.c.b16 %v1954, %v1953
      %v1990 = vpack.c.b16 %v1956, %v1955
      %v1991 = vpack.c.b16 %v1958, %v1957
      %v1992 = vpack.c.b16 %v1960, %v1959
      %v1993 = vpack.c.b16 %v1962, %v1961
      %v1994 = vpack.c.b16 %v1964, %v1963
      %v1995 = vpack.c.b16 %v1966, %v1965
      %v1996 = vpack.c.b16 %v1968, %v1967
      %v1997 = vpack.c.b16 %v1970, %v1969
      %v1998 = vpack.c.b16 %v1972, %v1971
      %v1999 = vpack.c.b16 %v1974, %v1973
      %v2000 = vpack.c.b16 %v1975, %v1975
      %v2058 = vunpack.c.l.b16 %v1846
      %v2059 = vunpack.c.h.b16 %v1846
      %v2060 = vunpack.c.l.b16 %v1847
      %v2061 = vunpack.c.l.b16 %v1848
      %v2062 = vunpack.c.h.b16 %v1848
      %v2063 = vunpack.c.l.b16 %v1849
      %v2064 = vunpack.c.l.b16 %v1850
      %v2065 = vunpack.c.h.b16 %v1850
      %v2066 = vunpack.c.l.b16 %v1851
      %v2067 = vunpack.c.l.b16 %v1852
      %v2068 = vunpack.c.h.b16 %v1852
      %v2069 = vunpack.c.l.b16 %v1853
      %v2070 = vunpack.c.l.b16 %v1854
      %v2071 = vunpack.c.h.b16 %v1854
      %v2072 = vunpack.c.l.b16 %v1855
      %v2073 = vunpack.c.l.b16 %v1856
      %v2074 = vunpack.c.h.b16 %v1856
      %v2075 = vunpack.c.l.b16 %v1857
      %v2076 = vunpack.c.l.b16 %v1858
      %v2077 = vunpack.c.h.b16 %v1858
      %v2078 = vunpack.c.l.b16 %v1859
      %v2079 = vunpack.c.l.b16 %v1860
      %v2080 = vunpack.c.h.b16 %v1860
      %v2081 = vunpack.c.l.b16 %v1861
      %v2082 = vunpack.c.l.b16 %v1862
      %v2083 = vunpack.c.h.b16 %v1862
      %v2084 = vunpack.c.l.b16 %v1863
      %v2085 = vunpack.c.l.b16 %v1864
      %v2086 = vunpack.c.h.b16 %v1864
      %v2087 = vunpack.c.l.b16 %v1865
      %v2088 = vunpack.c.l.b16 %v1866
      %v2089 = vunpack.c.h.b16 %v1866
      %v2090 = vunpack.c.l.b16 %v1867
      %v2091 = vunpack.c.l.b16 %v1868
      %v2092 = vunpack.c.h.b16 %v1868
      %v2093 = vunpack.c.l.b16 %v1869
      %v2094 = vunpack.c.l.b16 %v1870
      %v2095 = vunpack.c.h.b16 %v1870
      %v2096 = vunpack.c.l.b16 %v1871
      %v2097 = vunpack.c.l.b16 %v1872
      %v2098 = vunpack.c.h.b16 %v1872
      %v2099 = vunpack.c.l.b16 %v1873
      %v2100 = vunpack.c.l.b16 %v1874
      %v2101 = vunpack.c.h.b16 %v1874
      %v2102 = vunpack.c.l.b16 %v1875
      %v2103 = vunpack.c.l.b16 %v1876
      %v2104 = vunpack.c.h.b16 %v1876
      %v2105 = vunpack.c.l.b16 %v1877
      %v2106 = vpack.c.b16 %v2061, %v2058
      %v2107 = vpack.c.b16 %v2062, %v2059
      %v2108 = vpack.c.b16 %v2063, %v2060
      %v2109 = vpack.c.b16 %v2067, %v2064
      %v2110 = vpack.c.b16 %v2068, %v2065
      %v2111 = vpack.c.b16 %v2069, %v2066
      %v2112 = vpack.c.b16 %v2073, %v2070
      %v2113 = vpack.c.b16 %v2074, %v2071
      %v2114 = vpack.c.b16 %v2075, %v2072
      %v2115 = vpack.c.b16 %v2079, %v2076
      %v2116 = vpack.c.b16 %v2080, %v2077
      %v2117 = vpack.c.b16 %v2081, %v2078
      %v2118 = vpack.c.b16 %v2085, %v2082
      %v2119 = vpack.c.b16 %v2086, %v2083
      %v2120 = vpack.c.b16 %v2087, %v2084
      %v2121 = vpack.c.b16 %v2091, %v2088
      %v2122 = vpack.c.b16 %v2092, %v2089
      %v2123 = vpack.c.b16 %v2093, %v2090
      %v2124 = vpack.c.b16 %v2097, %v2094
      %v2125 = vpack.c.b16 %v2098, %v2095
      %v2126 = vpack.c.b16 %v2099, %v2096
      %v2127 = vpack.c.b16 %v2103, %v2100
      %v2128 = vpack.c.b16 %v2104, %v2101
      %v2129 = vpack.c.b16 %v2105, %v2102
      %2154 = vmatpush.bf16.msra.mxu0 %v2127
      %2155 = vmatpush.bf16.msra.mxu0 %v2124
      %2156 = vmatpush.bf16.msra.mxu0 %v2121
      %2157 = vmatpush.bf16.msra.mxu0 %v2118
      %2158 = vmatpush.bf16.msra.mxu0 %v2115
      %2159 = vmatpush.bf16.msra.mxu0 %v2112
      %2160 = vmatpush.bf16.msra.mxu0 %v2109
      %2161 = vmatpush.bf16.msra.mxu0 %v2106
      %2162 = vmatmul.bf16.gmra.mxu0 %v1976
      %v2163 = vpop.f32.mrf.mxu0
      %v2164 = vadd.f32 0.0, %v2163
      %v2165 = vpop.f32.mrf.mxu0
      %v2166 = vadd.f32 0.0, %v2165
      %2167 = vmatmul.bf16.gmra.mxu0 %v1977
      %v2168 = vpop.f32.mrf.mxu0
      %v2169 = vadd.f32 0.0, %v2168
      %v2170 = vpop.f32.mrf.mxu0
      %v2171 = vadd.f32 0.0, %v2170
      %2172 = vmatmul.bf16.gmra.mxu0 %v1978
      %v2173 = vpop.f32.mrf.mxu0
      %v2174 = vadd.f32 0.0, %v2173
      %v2175 = vpop.f32.mrf.mxu0
      %v2176 = vadd.f32 0.0, %v2175
      %2177 = vmatmul.bf16.gmra.mxu0 %v1979
      %v2178 = vpop.f32.mrf.mxu0
      %v2179 = vadd.f32 0.0, %v2178
      %v2180 = vpop.f32.mrf.mxu0
      %v2181 = vadd.f32 0.0, %v2180
      %2182 = vmatmul.bf16.gmra.mxu0 %v1980
      %v2183 = vpop.f32.mrf.mxu0
      %v2184 = vadd.f32 0.0, %v2183
      %v2185 = vpop.f32.mrf.mxu0
      %v2186 = vadd.f32 0.0, %v2185
      %2187 = vmatmul.bf16.gmra.mxu0 %v1981
      %v2188 = vpop.f32.mrf.mxu0
      %v2189 = vadd.f32 0.0, %v2188
      %v2190 = vpop.f32.mrf.mxu0
      %v2191 = vadd.f32 0.0, %v2190
      %2192 = vmatmul.bf16.gmra.mxu0 %v1982
      %v2193 = vpop.f32.mrf.mxu0
      %v2194 = vadd.f32 0.0, %v2193
      %v2195 = vpop.f32.mrf.mxu0
      %v2196 = vadd.f32 0.0, %v2195
      %2197 = vmatmul.bf16.gmra.mxu0 %v1983
      %v2198 = vpop.f32.mrf.mxu0
      %v2199 = vadd.f32 0.0, %v2198
      %v2200 = vpop.f32.mrf.mxu0
      %v2201 = vadd.f32 0.0, %v2200
      %2202 = vmatmul.bf16.gmra.mxu0 %v1984
      %v2203 = vpop.f32.mrf.mxu0
      %v2204 = vadd.f32 0.0, %v2203
      %v2205 = vpop.f32.mrf.mxu0
      %v2206 = vadd.f32 0.0, %v2205
      %2207 = vmatmul.bf16.gmra.mxu0 %v1985
      %v2208 = vpop.f32.mrf.mxu0
      %v2209 = vadd.f32 0.0, %v2208
      %v2210 = vpop.f32.mrf.mxu0
      %v2211 = vadd.f32 0.0, %v2210
      %2212 = vmatmul.bf16.gmra.mxu0 %v1986
      %v2213 = vpop.f32.mrf.mxu0
      %v2214 = vadd.f32 0.0, %v2213
      %v2215 = vpop.f32.mrf.mxu0
      %v2216 = vadd.f32 0.0, %v2215
      %2217 = vmatmul.bf16.gmra.mxu0 %v1987
      %v2218 = vpop.f32.mrf.mxu0
      %v2219 = vadd.f32 0.0, %v2218
      %v2220 = vpop.f32.mrf.mxu0
      %v2221 = vadd.f32 0.0, %v2220
      %2222 = vmatmul.bf16.gmra.mxu0 %v1988
      %v2223 = vpop.f32.mrf.mxu0
      %v2224 = vadd.f32 0.0, %v2223
      %v2225 = vpop.f32.mrf.mxu0
      %v2226 = vadd.f32 0.0, %v2225
      %2227 = vmatmul.bf16.gmra.mxu0 %v1989
      %v2228 = vpop.f32.mrf.mxu0
      %v2229 = vadd.f32 0.0, %v2228
      %v2230 = vpop.f32.mrf.mxu0
      %v2231 = vadd.f32 0.0, %v2230
      %2232 = vmatmul.bf16.gmra.mxu0 %v1990
      %v2233 = vpop.f32.mrf.mxu0
      %v2234 = vadd.f32 0.0, %v2233
      %v2235 = vpop.f32.mrf.mxu0
      %v2236 = vadd.f32 0.0, %v2235
      %2237 = vmatmul.bf16.gmra.mxu0 %v1991
      %v2238 = vpop.f32.mrf.mxu0
      %v2239 = vadd.f32 0.0, %v2238
      %v2240 = vpop.f32.mrf.mxu0
      %v2241 = vadd.f32 0.0, %v2240
      %2242 = vmatmul.bf16.gmra.mxu0 %v1992
      %v2243 = vpop.f32.mrf.mxu0
      %v2244 = vadd.f32 0.0, %v2243
      %v2245 = vpop.f32.mrf.mxu0
      %v2246 = vadd.f32 0.0, %v2245
      %2247 = vmatmul.bf16.gmra.mxu0 %v1993
      %v2248 = vpop.f32.mrf.mxu0
      %v2249 = vadd.f32 0.0, %v2248
      %v2250 = vpop.f32.mrf.mxu0
      %v2251 = vadd.f32 0.0, %v2250
      %2252 = vmatmul.bf16.gmra.mxu0 %v1994
      %v2253 = vpop.f32.mrf.mxu0
      %v2254 = vadd.f32 0.0, %v2253
      %v2255 = vpop.f32.mrf.mxu0
      %v2256 = vadd.f32 0.0, %v2255
      %2257 = vmatmul.bf16.gmra.mxu0 %v1995
      %v2258 = vpop.f32.mrf.mxu0
      %v2259 = vadd.f32 0.0, %v2258
      %v2260 = vpop.f32.mrf.mxu0
      %v2261 = vadd.f32 0.0, %v2260
      %2262 = vmatmul.bf16.gmra.mxu0 %v1996
      %v2263 = vpop.f32.mrf.mxu0
      %v2264 = vadd.f32 0.0, %v2263
      %v2265 = vpop.f32.mrf.mxu0
      %v2266 = vadd.f32 0.0, %v2265
      %2267 = vmatmul.bf16.gmra.mxu0 %v1997
      %v2268 = vpop.f32.mrf.mxu0
      %v2269 = vadd.f32 0.0, %v2268
      %v2270 = vpop.f32.mrf.mxu0
      %v2271 = vadd.f32 0.0, %v2270
      %2272 = vmatmul.bf16.gmra.mxu0 %v1998
      %v2273 = vpop.f32.mrf.mxu0
      %v2274 = vadd.f32 0.0, %v2273
      %v2275 = vpop.f32.mrf.mxu0
      %v2276 = vadd.f32 0.0, %v2275
      %2277 = vmatmul.bf16.gmra.mxu0 %v1999
      %v2278 = vpop.f32.mrf.mxu0
      %v2279 = vadd.f32 0.0, %v2278
      %v2280 = vpop.f32.mrf.mxu0
      %v2281 = vadd.f32 0.0, %v2280
      %2282 = vmatmul.bf16.gmra.mxu0 %v2000
      %v2283 = vpop.f32.mrf.mxu0
      %v2284 = vpop.f32.mrf.mxu0
      %2285 = vdwg.mxu0
      %2286 = vmatpush.bf16.msra.mxu0 %v2128
      %2287 = vmatpush.bf16.msra.mxu0 %v2125
      %2288 = vmatpush.bf16.msra.mxu0 %v2122
      %2289 = vmatpush.bf16.msra.mxu0 %v2119
      %2290 = vmatpush.bf16.msra.mxu0 %v2116
      %2291 = vmatpush.bf16.msra.mxu0 %v2113
      %2292 = vmatpush.bf16.msra.mxu0 %v2110
      %2293 = vmatpush.bf16.msra.mxu0 %v2107
      %2294 = vmatmul.bf16.gmra.mxu0 %v1976
      %v2295 = vpop.f32.mrf.mxu0
      %v2296 = vadd.f32 0.0, %v2295
      %v2297 = vpop.f32.mrf.mxu0
      %v2298 = vadd.f32 0.0, %v2297
      %2299 = vmatmul.bf16.gmra.mxu0 %v1977
      %v2300 = vpop.f32.mrf.mxu0
      %v2301 = vadd.f32 0.0, %v2300
      %v2302 = vpop.f32.mrf.mxu0
      %v2303 = vadd.f32 0.0, %v2302
      %2304 = vmatmul.bf16.gmra.mxu0 %v1978
      %v2305 = vpop.f32.mrf.mxu0
      %v2306 = vadd.f32 0.0, %v2305
      %v2307 = vpop.f32.mrf.mxu0
      %v2308 = vadd.f32 0.0, %v2307
      %2309 = vmatmul.bf16.gmra.mxu0 %v1979
      %v2310 = vpop.f32.mrf.mxu0
      %v2311 = vadd.f32 0.0, %v2310
      %v2312 = vpop.f32.mrf.mxu0
      %v2313 = vadd.f32 0.0, %v2312
      %2314 = vmatmul.bf16.gmra.mxu0 %v1980
      %v2315 = vpop.f32.mrf.mxu0
      %v2316 = vadd.f32 0.0, %v2315
      %v2317 = vpop.f32.mrf.mxu0
      %v2318 = vadd.f32 0.0, %v2317
      %2319 = vmatmul.bf16.gmra.mxu0 %v1981
      %v2320 = vpop.f32.mrf.mxu0
      %v2321 = vadd.f32 0.0, %v2320
      %v2322 = vpop.f32.mrf.mxu0
      %v2323 = vadd.f32 0.0, %v2322
      %2324 = vmatmul.bf16.gmra.mxu0 %v1982
      %v2325 = vpop.f32.mrf.mxu0
      %v2326 = vadd.f32 0.0, %v2325
      %v2327 = vpop.f32.mrf.mxu0
      %v2328 = vadd.f32 0.0, %v2327
      %2329 = vmatmul.bf16.gmra.mxu0 %v1983
      %v2330 = vpop.f32.mrf.mxu0
      %v2331 = vadd.f32 0.0, %v2330
      %v2332 = vpop.f32.mrf.mxu0
      %v2333 = vadd.f32 0.0, %v2332
      %2334 = vmatmul.bf16.gmra.mxu0 %v1984
      %v2335 = vpop.f32.mrf.mxu0
      %v2336 = vadd.f32 0.0, %v2335
      %v2337 = vpop.f32.mrf.mxu0
      %v2338 = vadd.f32 0.0, %v2337
      %2339 = vmatmul.bf16.gmra.mxu0 %v1985
      %v2340 = vpop.f32.mrf.mxu0
      %v2341 = vadd.f32 0.0, %v2340
      %v2342 = vpop.f32.mrf.mxu0
      %v2343 = vadd.f32 0.0, %v2342
      %2344 = vmatmul.bf16.gmra.mxu0 %v1986
      %v2345 = vpop.f32.mrf.mxu0
      %v2346 = vadd.f32 0.0, %v2345
      %v2347 = vpop.f32.mrf.mxu0
      %v2348 = vadd.f32 0.0, %v2347
      %2349 = vmatmul.bf16.gmra.mxu0 %v1987
      %v2350 = vpop.f32.mrf.mxu0
      %v2351 = vadd.f32 0.0, %v2350
      %v2352 = vpop.f32.mrf.mxu0
      %v2353 = vadd.f32 0.0, %v2352
      %2354 = vmatmul.bf16.gmra.mxu0 %v1988
      %v2355 = vpop.f32.mrf.mxu0
      %v2356 = vadd.f32 0.0, %v2355
      %v2357 = vpop.f32.mrf.mxu0
      %v2358 = vadd.f32 0.0, %v2357
      %2359 = vmatmul.bf16.gmra.mxu0 %v1989
      %v2360 = vpop.f32.mrf.mxu0
      %v2361 = vadd.f32 0.0, %v2360
      %v2362 = vpop.f32.mrf.mxu0
      %v2363 = vadd.f32 0.0, %v2362
      %2364 = vmatmul.bf16.gmra.mxu0 %v1990
      %v2365 = vpop.f32.mrf.mxu0
      %v2366 = vadd.f32 0.0, %v2365
      %v2367 = vpop.f32.mrf.mxu0
      %v2368 = vadd.f32 0.0, %v2367
      %2369 = vmatmul.bf16.gmra.mxu0 %v1991
      %v2370 = vpop.f32.mrf.mxu0
      %v2371 = vadd.f32 0.0, %v2370
      %v2372 = vpop.f32.mrf.mxu0
      %v2373 = vadd.f32 0.0, %v2372
      %2374 = vmatmul.bf16.gmra.mxu0 %v1992
      %v2375 = vpop.f32.mrf.mxu0
      %v2376 = vadd.f32 0.0, %v2375
      %v2377 = vpop.f32.mrf.mxu0
      %v2378 = vadd.f32 0.0, %v2377
      %2379 = vmatmul.bf16.gmra.mxu0 %v1993
      %v2380 = vpop.f32.mrf.mxu0
      %v2381 = vadd.f32 0.0, %v2380
      %v2382 = vpop.f32.mrf.mxu0
      %v2383 = vadd.f32 0.0, %v2382
      %2384 = vmatmul.bf16.gmra.mxu0 %v1994
      %v2385 = vpop.f32.mrf.mxu0
      %v2386 = vadd.f32 0.0, %v2385
      %v2387 = vpop.f32.mrf.mxu0
      %v2388 = vadd.f32 0.0, %v2387
      %2389 = vmatmul.bf16.gmra.mxu0 %v1995
      %v2390 = vpop.f32.mrf.mxu0
      %v2391 = vadd.f32 0.0, %v2390
      %v2392 = vpop.f32.mrf.mxu0
      %v2393 = vadd.f32 0.0, %v2392
      %2394 = vmatmul.bf16.gmra.mxu0 %v1996
      %v2395 = vpop.f32.mrf.mxu0
      %v2396 = vadd.f32 0.0, %v2395
      %v2397 = vpop.f32.mrf.mxu0
      %v2398 = vadd.f32 0.0, %v2397
      %2399 = vmatmul.bf16.gmra.mxu0 %v1997
      %v2400 = vpop.f32.mrf.mxu0
      %v2401 = vadd.f32 0.0, %v2400
      %v2402 = vpop.f32.mrf.mxu0
      %v2403 = vadd.f32 0.0, %v2402
      %2404 = vmatmul.bf16.gmra.mxu0 %v1998
      %v2405 = vpop.f32.mrf.mxu0
      %v2406 = vadd.f32 0.0, %v2405
      %v2407 = vpop.f32.mrf.mxu0
      %v2408 = vadd.f32 0.0, %v2407
      %2409 = vmatmul.bf16.gmra.mxu0 %v1999
      %v2410 = vpop.f32.mrf.mxu0
      %v2411 = vadd.f32 0.0, %v2410
      %v2412 = vpop.f32.mrf.mxu0
      %v2413 = vadd.f32 0.0, %v2412
      %2414 = vmatmul.bf16.gmra.mxu0 %v2000
      %v2415 = vpop.f32.mrf.mxu0
      %v2416 = vadd.f32 0.0, %v2415
      %v2417 = vpop.f32.mrf.mxu0
      %2418 = vdwg.mxu0
      %2419 = vmatpush.bf16.msra.mxu0 %v2129
      %2420 = vmatpush.bf16.msra.mxu0 %v2126
      %2421 = vmatpush.bf16.msra.mxu0 %v2123
      %2422 = vmatpush.bf16.msra.mxu0 %v2120
      %2423 = vmatpush.bf16.msra.mxu0 %v2117
      %2424 = vmatpush.bf16.msra.mxu0 %v2114
      %2425 = vmatpush.bf16.msra.mxu0 %v2111
      %2426 = vmatpush.bf16.msra.mxu0 %v2108
      %2427 = vmatmul.bf16.gmra.mxu0 %v1976
      %v2428 = vpop.f32.mrf.mxu0
      %v2429 = vadd.f32 0.0, %v2428
      %v2430 = vpop.f32.mrf.mxu0
      %v2431 = vadd.f32 0.0, %v2430
      %2432 = vmatmul.bf16.gmra.mxu0 %v1977
      %v2433 = vpop.f32.mrf.mxu0
      %v2434 = vadd.f32 0.0, %v2433
      %v2435 = vpop.f32.mrf.mxu0
      %v2436 = vadd.f32 0.0, %v2435
      %2437 = vmatmul.bf16.gmra.mxu0 %v1978
      %v2438 = vpop.f32.mrf.mxu0
      %v2439 = vadd.f32 0.0, %v2438
      %v2440 = vpop.f32.mrf.mxu0
      %v2441 = vadd.f32 0.0, %v2440
      %2442 = vmatmul.bf16.gmra.mxu0 %v1979
      %v2443 = vpop.f32.mrf.mxu0
      %v2444 = vadd.f32 0.0, %v2443
      %v2445 = vpop.f32.mrf.mxu0
      %v2446 = vadd.f32 0.0, %v2445
      %2447 = vmatmul.bf16.gmra.mxu0 %v1980
      %v2448 = vpop.f32.mrf.mxu0
      %v2449 = vadd.f32 0.0, %v2448
      %v2450 = vpop.f32.mrf.mxu0
      %v2451 = vadd.f32 0.0, %v2450
      %2452 = vmatmul.bf16.gmra.mxu0 %v1981
      %v2453 = vpop.f32.mrf.mxu0
      %v2454 = vadd.f32 0.0, %v2453
      %v2455 = vpop.f32.mrf.mxu0
      %v2456 = vadd.f32 0.0, %v2455
      %2457 = vmatmul.bf16.gmra.mxu0 %v1982
      %v2458 = vpop.f32.mrf.mxu0
      %v2459 = vadd.f32 0.0, %v2458
      %v2460 = vpop.f32.mrf.mxu0
      %v2461 = vadd.f32 0.0, %v2460
      %2462 = vmatmul.bf16.gmra.mxu0 %v1983
      %v2463 = vpop.f32.mrf.mxu0
      %v2464 = vadd.f32 0.0, %v2463
      %v2465 = vpop.f32.mrf.mxu0
      %v2466 = vadd.f32 0.0, %v2465
      %2467 = vmatmul.bf16.gmra.mxu0 %v1984
      %v2468 = vpop.f32.mrf.mxu0
      %v2469 = vadd.f32 0.0, %v2468
      %v2470 = vpop.f32.mrf.mxu0
      %v2471 = vadd.f32 0.0, %v2470
      %2472 = vmatmul.bf16.gmra.mxu0 %v1985
      %v2473 = vpop.f32.mrf.mxu0
      %v2474 = vadd.f32 0.0, %v2473
      %v2475 = vpop.f32.mrf.mxu0
      %v2476 = vadd.f32 0.0, %v2475
      %2477 = vmatmul.bf16.gmra.mxu0 %v1986
      %v2478 = vpop.f32.mrf.mxu0
      %v2479 = vadd.f32 0.0, %v2478
      %v2480 = vpop.f32.mrf.mxu0
      %v2481 = vadd.f32 0.0, %v2480
      %2482 = vmatmul.bf16.gmra.mxu0 %v1987
      %v2483 = vpop.f32.mrf.mxu0
      %v2484 = vadd.f32 0.0, %v2483
      %v2485 = vpop.f32.mrf.mxu0
      %v2486 = vadd.f32 0.0, %v2485
      %2487 = vmatmul.bf16.gmra.mxu0 %v1988
      %v2488 = vpop.f32.mrf.mxu0
      %v2489 = vadd.f32 0.0, %v2488
      %v2490 = vpop.f32.mrf.mxu0
      %v2491 = vadd.f32 0.0, %v2490
      %2492 = vmatmul.bf16.gmra.mxu0 %v1989
      %v2493 = vpop.f32.mrf.mxu0
      %v2494 = vadd.f32 0.0, %v2493
      %v2495 = vpop.f32.mrf.mxu0
      %v2496 = vadd.f32 0.0, %v2495
      %2497 = vmatmul.bf16.gmra.mxu0 %v1990
      %v2498 = vpop.f32.mrf.mxu0
      %v2499 = vadd.f32 0.0, %v2498
      %v2500 = vpop.f32.mrf.mxu0
      %v2501 = vadd.f32 0.0, %v2500
      %2502 = vmatmul.bf16.gmra.mxu0 %v1991
      %v2503 = vpop.f32.mrf.mxu0
      %v2504 = vadd.f32 0.0, %v2503
      %v2505 = vpop.f32.mrf.mxu0
      %v2506 = vadd.f32 0.0, %v2505
      %2507 = vmatmul.bf16.gmra.mxu0 %v1992
      %v2508 = vpop.f32.mrf.mxu0
      %v2509 = vadd.f32 0.0, %v2508
      %v2510 = vpop.f32.mrf.mxu0
      %v2511 = vadd.f32 0.0, %v2510
      %2512 = vmatmul.bf16.gmra.mxu0 %v1993
      %v2513 = vpop.f32.mrf.mxu0
      %v2514 = vadd.f32 0.0, %v2513
      %v2515 = vpop.f32.mrf.mxu0
      %v2516 = vadd.f32 0.0, %v2515
      %2517 = vmatmul.bf16.gmra.mxu0 %v1994
      %v2518 = vpop.f32.mrf.mxu0
      %v2519 = vadd.f32 0.0, %v2518
      %v2520 = vpop.f32.mrf.mxu0
      %v2521 = vadd.f32 0.0, %v2520
      %2522 = vmatmul.bf16.gmra.mxu0 %v1995
      %v2523 = vpop.f32.mrf.mxu0
      %v2524 = vadd.f32 0.0, %v2523
      %v2525 = vpop.f32.mrf.mxu0
      %v2526 = vadd.f32 0.0, %v2525
      %2527 = vmatmul.bf16.gmra.mxu0 %v1996
      %v2528 = vpop.f32.mrf.mxu0
      %v2529 = vadd.f32 0.0, %v2528
      %v2530 = vpop.f32.mrf.mxu0
      %v2531 = vadd.f32 0.0, %v2530
      %2532 = vmatmul.bf16.gmra.mxu0 %v1997
      %v2533 = vpop.f32.mrf.mxu0
      %v2534 = vadd.f32 0.0, %v2533
      %v2535 = vpop.f32.mrf.mxu0
      %v2536 = vadd.f32 0.0, %v2535
      %2537 = vmatmul.bf16.gmra.mxu0 %v1998
      %v2538 = vpop.f32.mrf.mxu0
      %v2539 = vadd.f32 0.0, %v2538
      %v2540 = vpop.f32.mrf.mxu0
      %v2541 = vadd.f32 0.0, %v2540
      %2542 = vmatmul.bf16.gmra.mxu0 %v1999
      %v2543 = vpop.f32.mrf.mxu0
      %v2544 = vadd.f32 0.0, %v2543
      %v2545 = vpop.f32.mrf.mxu0
      %v2546 = vadd.f32 0.0, %v2545
      %2547 = vmatmul.bf16.gmra.mxu0 %v2000
      %v2548 = vpop.f32.mrf.mxu0
      %v2549 = vadd.f32 0.0, %v2548
      %v2550 = vpop.f32.mrf.mxu0
      %2551 = vdwg.mxu0
      %v2555 = vunpack.c.l.b16 %v1761
      %v2556 = vunpack.c.l.b16 %v1762
      %v2557 = vunpack.c.l.b16 %v1763
      %v2558 = vpack.c.b16 %v2556, %v2555
      %v2559 = vpack.c.b16 %v1927, %v2557
      %v2560 = vpack.c.b16 %v1929, %v1928
      %v2561 = vpack.c.b16 %v1931, %v1930
      %v2562 = vpack.c.b16 %v1933, %v1932
      %v2563 = vpack.c.b16 %v1935, %v1934
      %v2564 = vpack.c.b16 %v1937, %v1936
      %v2565 = vpack.c.b16 %v1939, %v1938
      %v2566 = vpack.c.b16 %v1941, %v1940
      %v2567 = vpack.c.b16 %v1943, %v1942
      %v2568 = vpack.c.b16 %v1945, %v1944
      %v2569 = vpack.c.b16 %v1947, %v1946
      %v2570 = vpack.c.b16 %v1949, %v1948
      %v2571 = vpack.c.b16 %v1951, %v1950
      %v2572 = vpack.c.b16 %v1953, %v1952
      %v2573 = vpack.c.b16 %v1955, %v1954
      %v2574 = vpack.c.b16 %v1957, %v1956
      %v2575 = vpack.c.b16 %v1959, %v1958
      %v2576 = vpack.c.b16 %v1961, %v1960
      %v2577 = vpack.c.b16 %v1963, %v1962
      %v2578 = vpack.c.b16 %v1965, %v1964
      %v2579 = vpack.c.b16 %v1967, %v1966
      %v2580 = vpack.c.b16 %v1969, %v1968
      %v2581 = vpack.c.b16 %v1971, %v1970
      %v2582 = vpack.c.b16 %v1972, %v1972
      %v2640 = vunpack.c.l.b16 %v1810
      %v2641 = vunpack.c.h.b16 %v1810
      %v2642 = vunpack.c.l.b16 %v1811
      %v2643 = vunpack.c.l.b16 %v1812
      %v2644 = vunpack.c.h.b16 %v1812
      %v2645 = vunpack.c.l.b16 %v1813
      %v2646 = vunpack.c.l.b16 %v1814
      %v2647 = vunpack.c.h.b16 %v1814
      %v2648 = vunpack.c.l.b16 %v1815
      %v2649 = vunpack.c.l.b16 %v1816
      %v2650 = vunpack.c.h.b16 %v1816
      %v2651 = vunpack.c.l.b16 %v1817
      %v2652 = vunpack.c.l.b16 %v1818
      %v2653 = vunpack.c.h.b16 %v1818
      %v2654 = vunpack.c.l.b16 %v1819
      %v2655 = vunpack.c.l.b16 %v1820
      %v2656 = vunpack.c.h.b16 %v1820
      %v2657 = vunpack.c.l.b16 %v1821
      %v2658 = vunpack.c.l.b16 %v1822
      %v2659 = vunpack.c.h.b16 %v1822
      %v2660 = vunpack.c.l.b16 %v1823
      %v2661 = vunpack.c.l.b16 %v1824
      %v2662 = vunpack.c.h.b16 %v1824
      %v2663 = vunpack.c.l.b16 %v1825
      %v2664 = vunpack.c.l.b16 %v1826
      %v2665 = vunpack.c.h.b16 %v1826
      %v2666 = vunpack.c.l.b16 %v1827
      %v2667 = vunpack.c.l.b16 %v1828
      %v2668 = vunpack.c.h.b16 %v1828
      %v2669 = vunpack.c.l.b16 %v1829
      %v2670 = vunpack.c.l.b16 %v1830
      %v2671 = vunpack.c.h.b16 %v1830
      %v2672 = vunpack.c.l.b16 %v1831
      %v2673 = vunpack.c.l.b16 %v1832
      %v2674 = vunpack.c.h.b16 %v1832
      %v2675 = vunpack.c.l.b16 %v1833
      %v2676 = vunpack.c.l.b16 %v1834
      %v2677 = vunpack.c.h.b16 %v1834
      %v2678 = vunpack.c.l.b16 %v1835
      %v2679 = vunpack.c.l.b16 %v1836
      %v2680 = vunpack.c.h.b16 %v1836
      %v2681 = vunpack.c.l.b16 %v1837
      %v2682 = vunpack.c.l.b16 %v1838
      %v2683 = vunpack.c.h.b16 %v1838
      %v2684 = vunpack.c.l.b16 %v1839
      %v2685 = vunpack.c.l.b16 %v1840
      %v2686 = vunpack.c.h.b16 %v1840
      %v2687 = vunpack.c.l.b16 %v1841
      %v2688 = vpack.c.b16 %v2643, %v2640
      %v2689 = vpack.c.b16 %v2644, %v2641
      %v2690 = vpack.c.b16 %v2645, %v2642
      %v2691 = vpack.c.b16 %v2649, %v2646
      %v2692 = vpack.c.b16 %v2650, %v2647
      %v2693 = vpack.c.b16 %v2651, %v2648
      %v2694 = vpack.c.b16 %v2655, %v2652
      %v2695 = vpack.c.b16 %v2656, %v2653
      %v2696 = vpack.c.b16 %v2657, %v2654
      %v2697 = vpack.c.b16 %v2661, %v2658
      %v2698 = vpack.c.b16 %v2662, %v2659
      %v2699 = vpack.c.b16 %v2663, %v2660
      %v2700 = vpack.c.b16 %v2667, %v2664
      %v2701 = vpack.c.b16 %v2668, %v2665
      %v2702 = vpack.c.b16 %v2669, %v2666
      %v2703 = vpack.c.b16 %v2673, %v2670
      %v2704 = vpack.c.b16 %v2674, %v2671
      %v2705 = vpack.c.b16 %v2675, %v2672
      %v2706 = vpack.c.b16 %v2679, %v2676
      %v2707 = vpack.c.b16 %v2680, %v2677
      %v2708 = vpack.c.b16 %v2681, %v2678
      %v2709 = vpack.c.b16 %v2685, %v2682
      %v2710 = vpack.c.b16 %v2686, %v2683
      %v2711 = vpack.c.b16 %v2687, %v2684
      %2736 = vmatpush.bf16.msra.mxu0 %v2709
      %2737 = vmatpush.bf16.msra.mxu0 %v2706
      %2738 = vmatpush.bf16.msra.mxu0 %v2703
      %2739 = vmatpush.bf16.msra.mxu0 %v2700
      %2740 = vmatpush.bf16.msra.mxu0 %v2697
      %2741 = vmatpush.bf16.msra.mxu0 %v2694
      %2742 = vmatpush.bf16.msra.mxu0 %v2691
      %2743 = vmatpush.bf16.msra.mxu0 %v2688
      %2744 = vmatmul.bf16.gmra.mxu0 %v2558
      %v2745 = vpop.f32.mrf.mxu0
      %v2746 = vadd.f32 %v2164, %v2745
      %v2747 = vpop.f32.mrf.mxu0
      %v2748 = vadd.f32 %v2166, %v2747
      %2749 = vmatmul.bf16.gmra.mxu0 %v2559
      %v2750 = vpop.f32.mrf.mxu0
      %v2751 = vadd.f32 %v2169, %v2750
      %v2752 = vpop.f32.mrf.mxu0
      %v2753 = vadd.f32 %v2171, %v2752
      %2754 = vmatmul.bf16.gmra.mxu0 %v2560
      %v2755 = vpop.f32.mrf.mxu0
      %v2756 = vadd.f32 %v2174, %v2755
      %v2757 = vpop.f32.mrf.mxu0
      %v2758 = vadd.f32 %v2176, %v2757
      %2759 = vmatmul.bf16.gmra.mxu0 %v2561
      %v2760 = vpop.f32.mrf.mxu0
      %v2761 = vadd.f32 %v2179, %v2760
      %v2762 = vpop.f32.mrf.mxu0
      %v2763 = vadd.f32 %v2181, %v2762
      %2764 = vmatmul.bf16.gmra.mxu0 %v2562
      %v2765 = vpop.f32.mrf.mxu0
      %v2766 = vadd.f32 %v2184, %v2765
      %v2767 = vpop.f32.mrf.mxu0
      %v2768 = vadd.f32 %v2186, %v2767
      %2769 = vmatmul.bf16.gmra.mxu0 %v2563
      %v2770 = vpop.f32.mrf.mxu0
      %v2771 = vadd.f32 %v2189, %v2770
      %v2772 = vpop.f32.mrf.mxu0
      %v2773 = vadd.f32 %v2191, %v2772
      %2774 = vmatmul.bf16.gmra.mxu0 %v2564
      %v2775 = vpop.f32.mrf.mxu0
      %v2776 = vadd.f32 %v2194, %v2775
      %v2777 = vpop.f32.mrf.mxu0
      %v2778 = vadd.f32 %v2196, %v2777
      %2779 = vmatmul.bf16.gmra.mxu0 %v2565
      %v2780 = vpop.f32.mrf.mxu0
      %v2781 = vadd.f32 %v2199, %v2780
      %v2782 = vpop.f32.mrf.mxu0
      %v2783 = vadd.f32 %v2201, %v2782
      %2784 = vmatmul.bf16.gmra.mxu0 %v2566
      %v2785 = vpop.f32.mrf.mxu0
      %v2786 = vadd.f32 %v2204, %v2785
      %v2787 = vpop.f32.mrf.mxu0
      %v2788 = vadd.f32 %v2206, %v2787
      %2789 = vmatmul.bf16.gmra.mxu0 %v2567
      %v2790 = vpop.f32.mrf.mxu0
      %v2791 = vadd.f32 %v2209, %v2790
      %v2792 = vpop.f32.mrf.mxu0
      %v2793 = vadd.f32 %v2211, %v2792
      %2794 = vmatmul.bf16.gmra.mxu0 %v2568
      %v2795 = vpop.f32.mrf.mxu0
      %v2796 = vadd.f32 %v2214, %v2795
      %v2797 = vpop.f32.mrf.mxu0
      %v2798 = vadd.f32 %v2216, %v2797
      %2799 = vmatmul.bf16.gmra.mxu0 %v2569
      %v2800 = vpop.f32.mrf.mxu0
      %v2801 = vadd.f32 %v2219, %v2800
      %v2802 = vpop.f32.mrf.mxu0
      %v2803 = vadd.f32 %v2221, %v2802
      %2804 = vmatmul.bf16.gmra.mxu0 %v2570
      %v2805 = vpop.f32.mrf.mxu0
      %v2806 = vadd.f32 %v2224, %v2805
      %v2807 = vpop.f32.mrf.mxu0
      %v2808 = vadd.f32 %v2226, %v2807
      %2809 = vmatmul.bf16.gmra.mxu0 %v2571
      %v2810 = vpop.f32.mrf.mxu0
      %v2811 = vadd.f32 %v2229, %v2810
      %v2812 = vpop.f32.mrf.mxu0
      %v2813 = vadd.f32 %v2231, %v2812
      %2814 = vmatmul.bf16.gmra.mxu0 %v2572
      %v2815 = vpop.f32.mrf.mxu0
      %v2816 = vadd.f32 %v2234, %v2815
      %v2817 = vpop.f32.mrf.mxu0
      %v2818 = vadd.f32 %v2236, %v2817
      %2819 = vmatmul.bf16.gmra.mxu0 %v2573
      %v2820 = vpop.f32.mrf.mxu0
      %v2821 = vadd.f32 %v2239, %v2820
      %v2822 = vpop.f32.mrf.mxu0
      %v2823 = vadd.f32 %v2241, %v2822
      %2824 = vmatmul.bf16.gmra.mxu0 %v2574
      %v2825 = vpop.f32.mrf.mxu0
      %v2826 = vadd.f32 %v2244, %v2825
      %v2827 = vpop.f32.mrf.mxu0
      %v2828 = vadd.f32 %v2246, %v2827
      %2829 = vmatmul.bf16.gmra.mxu0 %v2575
      %v2830 = vpop.f32.mrf.mxu0
      %v2831 = vadd.f32 %v2249, %v2830
      %v2832 = vpop.f32.mrf.mxu0
      %v2833 = vadd.f32 %v2251, %v2832
      %2834 = vmatmul.bf16.gmra.mxu0 %v2576
      %v2835 = vpop.f32.mrf.mxu0
      %v2836 = vadd.f32 %v2254, %v2835
      %v2837 = vpop.f32.mrf.mxu0
      %v2838 = vadd.f32 %v2256, %v2837
      %2839 = vmatmul.bf16.gmra.mxu0 %v2577
      %v2840 = vpop.f32.mrf.mxu0
      %v2841 = vadd.f32 %v2259, %v2840
      %v2842 = vpop.f32.mrf.mxu0
      %v2843 = vadd.f32 %v2261, %v2842
      %2844 = vmatmul.bf16.gmra.mxu0 %v2578
      %v2845 = vpop.f32.mrf.mxu0
      %v2846 = vadd.f32 %v2264, %v2845
      %v2847 = vpop.f32.mrf.mxu0
      %v2848 = vadd.f32 %v2266, %v2847
      %2849 = vmatmul.bf16.gmra.mxu0 %v2579
      %v2850 = vpop.f32.mrf.mxu0
      %v2851 = vadd.f32 %v2269, %v2850
      %v2852 = vpop.f32.mrf.mxu0
      %v2853 = vadd.f32 %v2271, %v2852
      %2854 = vmatmul.bf16.gmra.mxu0 %v2580
      %v2855 = vpop.f32.mrf.mxu0
      %v2856 = vadd.f32 %v2274, %v2855
      %v2857 = vpop.f32.mrf.mxu0
      %v2858 = vadd.f32 %v2276, %v2857
      %2859 = vmatmul.bf16.gmra.mxu0 %v2581
      %v2860 = vpop.f32.mrf.mxu0
      %v2861 = vadd.f32 %v2279, %v2860
      %v2862 = vpop.f32.mrf.mxu0
      %v2863 = vadd.f32 %v2281, %v2862
      %2864 = vmatmul.bf16.gmra.mxu0 %v2582
      %v2865 = vpop.f32.mrf.mxu0
      %v2866 = vpop.f32.mrf.mxu0
      %2867 = vdwg.mxu0
      %2868 = vmatpush.bf16.msra.mxu0 %v2710
      %2869 = vmatpush.bf16.msra.mxu0 %v2707
      %2870 = vmatpush.bf16.msra.mxu0 %v2704
      %2871 = vmatpush.bf16.msra.mxu0 %v2701
      %2872 = vmatpush.bf16.msra.mxu0 %v2698
      %2873 = vmatpush.bf16.msra.mxu0 %v2695
      %2874 = vmatpush.bf16.msra.mxu0 %v2692
      %2875 = vmatpush.bf16.msra.mxu0 %v2689
      %2876 = vmatmul.bf16.gmra.mxu0 %v2558
      %v2877 = vpop.f32.mrf.mxu0
      %v2878 = vadd.f32 %v2296, %v2877
      %v2879 = vpop.f32.mrf.mxu0
      %v2880 = vadd.f32 %v2298, %v2879
      %2881 = vmatmul.bf16.gmra.mxu0 %v2559
      %v2882 = vpop.f32.mrf.mxu0
      %v2883 = vadd.f32 %v2301, %v2882
      %v2884 = vpop.f32.mrf.mxu0
      %v2885 = vadd.f32 %v2303, %v2884
      %2886 = vmatmul.bf16.gmra.mxu0 %v2560
      %v2887 = vpop.f32.mrf.mxu0
      %v2888 = vadd.f32 %v2306, %v2887
      %v2889 = vpop.f32.mrf.mxu0
      %v2890 = vadd.f32 %v2308, %v2889
      %2891 = vmatmul.bf16.gmra.mxu0 %v2561
      %v2892 = vpop.f32.mrf.mxu0
      %v2893 = vadd.f32 %v2311, %v2892
      %v2894 = vpop.f32.mrf.mxu0
      %v2895 = vadd.f32 %v2313, %v2894
      %2896 = vmatmul.bf16.gmra.mxu0 %v2562
      %v2897 = vpop.f32.mrf.mxu0
      %v2898 = vadd.f32 %v2316, %v2897
      %v2899 = vpop.f32.mrf.mxu0
      %v2900 = vadd.f32 %v2318, %v2899
      %2901 = vmatmul.bf16.gmra.mxu0 %v2563
      %v2902 = vpop.f32.mrf.mxu0
      %v2903 = vadd.f32 %v2321, %v2902
      %v2904 = vpop.f32.mrf.mxu0
      %v2905 = vadd.f32 %v2323, %v2904
      %2906 = vmatmul.bf16.gmra.mxu0 %v2564
      %v2907 = vpop.f32.mrf.mxu0
      %v2908 = vadd.f32 %v2326, %v2907
      %v2909 = vpop.f32.mrf.mxu0
      %v2910 = vadd.f32 %v2328, %v2909
      %2911 = vmatmul.bf16.gmra.mxu0 %v2565
      %v2912 = vpop.f32.mrf.mxu0
      %v2913 = vadd.f32 %v2331, %v2912
      %v2914 = vpop.f32.mrf.mxu0
      %v2915 = vadd.f32 %v2333, %v2914
      %2916 = vmatmul.bf16.gmra.mxu0 %v2566
      %v2917 = vpop.f32.mrf.mxu0
      %v2918 = vadd.f32 %v2336, %v2917
      %v2919 = vpop.f32.mrf.mxu0
      %v2920 = vadd.f32 %v2338, %v2919
      %2921 = vmatmul.bf16.gmra.mxu0 %v2567
      %v2922 = vpop.f32.mrf.mxu0
      %v2923 = vadd.f32 %v2341, %v2922
      %v2924 = vpop.f32.mrf.mxu0
      %v2925 = vadd.f32 %v2343, %v2924
      %2926 = vmatmul.bf16.gmra.mxu0 %v2568
      %v2927 = vpop.f32.mrf.mxu0
      %v2928 = vadd.f32 %v2346, %v2927
      %v2929 = vpop.f32.mrf.mxu0
      %v2930 = vadd.f32 %v2348, %v2929
      %2931 = vmatmul.bf16.gmra.mxu0 %v2569
      %v2932 = vpop.f32.mrf.mxu0
      %v2933 = vadd.f32 %v2351, %v2932
      %v2934 = vpop.f32.mrf.mxu0
      %v2935 = vadd.f32 %v2353, %v2934
      %2936 = vmatmul.bf16.gmra.mxu0 %v2570
      %v2937 = vpop.f32.mrf.mxu0
      %v2938 = vadd.f32 %v2356, %v2937
      %v2939 = vpop.f32.mrf.mxu0
      %v2940 = vadd.f32 %v2358, %v2939
      %2941 = vmatmul.bf16.gmra.mxu0 %v2571
      %v2942 = vpop.f32.mrf.mxu0
      %v2943 = vadd.f32 %v2361, %v2942
      %v2944 = vpop.f32.mrf.mxu0
      %v2945 = vadd.f32 %v2363, %v2944
      %2946 = vmatmul.bf16.gmra.mxu0 %v2572
      %v2947 = vpop.f32.mrf.mxu0
      %v2948 = vadd.f32 %v2366, %v2947
      %v2949 = vpop.f32.mrf.mxu0
      %v2950 = vadd.f32 %v2368, %v2949
      %2951 = vmatmul.bf16.gmra.mxu0 %v2573
      %v2952 = vpop.f32.mrf.mxu0
      %v2953 = vadd.f32 %v2371, %v2952
      %v2954 = vpop.f32.mrf.mxu0
      %v2955 = vadd.f32 %v2373, %v2954
      %2956 = vmatmul.bf16.gmra.mxu0 %v2574
      %v2957 = vpop.f32.mrf.mxu0
      %v2958 = vadd.f32 %v2376, %v2957
      %v2959 = vpop.f32.mrf.mxu0
      %v2960 = vadd.f32 %v2378, %v2959
      %2961 = vmatmul.bf16.gmra.mxu0 %v2575
      %v2962 = vpop.f32.mrf.mxu0
      %v2963 = vadd.f32 %v2381, %v2962
      %v2964 = vpop.f32.mrf.mxu0
      %v2965 = vadd.f32 %v2383, %v2964
      %2966 = vmatmul.bf16.gmra.mxu0 %v2576
      %v2967 = vpop.f32.mrf.mxu0
      %v2968 = vadd.f32 %v2386, %v2967
      %v2969 = vpop.f32.mrf.mxu0
      %v2970 = vadd.f32 %v2388, %v2969
      %2971 = vmatmul.bf16.gmra.mxu0 %v2577
      %v2972 = vpop.f32.mrf.mxu0
      %v2973 = vadd.f32 %v2391, %v2972
      %v2974 = vpop.f32.mrf.mxu0
      %v2975 = vadd.f32 %v2393, %v2974
      %2976 = vmatmul.bf16.gmra.mxu0 %v2578
      %v2977 = vpop.f32.mrf.mxu0
      %v2978 = vadd.f32 %v2396, %v2977
      %v2979 = vpop.f32.mrf.mxu0
      %v2980 = vadd.f32 %v2398, %v2979
      %2981 = vmatmul.bf16.gmra.mxu0 %v2579
      %v2982 = vpop.f32.mrf.mxu0
      %v2983 = vadd.f32 %v2401, %v2982
      %v2984 = vpop.f32.mrf.mxu0
      %v2985 = vadd.f32 %v2403, %v2984
      %2986 = vmatmul.bf16.gmra.mxu0 %v2580
      %v2987 = vpop.f32.mrf.mxu0
      %v2988 = vadd.f32 %v2406, %v2987
      %v2989 = vpop.f32.mrf.mxu0
      %v2990 = vadd.f32 %v2408, %v2989
      %2991 = vmatmul.bf16.gmra.mxu0 %v2581
      %v2992 = vpop.f32.mrf.mxu0
      %v2993 = vadd.f32 %v2411, %v2992
      %v2994 = vpop.f32.mrf.mxu0
      %v2995 = vadd.f32 %v2413, %v2994
      %2996 = vmatmul.bf16.gmra.mxu0 %v2582
      %v2997 = vpop.f32.mrf.mxu0
      %v2998 = vadd.f32 %v2416, %v2997
      %v2999 = vpop.f32.mrf.mxu0
      %3000 = vdwg.mxu0
      %3001 = vmatpush.bf16.msra.mxu0 %v2711
      %3002 = vmatpush.bf16.msra.mxu0 %v2708
      %3003 = vmatpush.bf16.msra.mxu0 %v2705
      %3004 = vmatpush.bf16.msra.mxu0 %v2702
      %3005 = vmatpush.bf16.msra.mxu0 %v2699
      %3006 = vmatpush.bf16.msra.mxu0 %v2696
      %3007 = vmatpush.bf16.msra.mxu0 %v2693
      %3008 = vmatpush.bf16.msra.mxu0 %v2690
      %3009 = vmatmul.bf16.gmra.mxu0 %v2558
      %v3010 = vpop.f32.mrf.mxu0
      %v3011 = vadd.f32 %v2429, %v3010
      %v3012 = vpop.f32.mrf.mxu0
      %v3013 = vadd.f32 %v2431, %v3012
      %3014 = vmatmul.bf16.gmra.mxu0 %v2559
      %v3015 = vpop.f32.mrf.mxu0
      %v3016 = vadd.f32 %v2434, %v3015
      %v3017 = vpop.f32.mrf.mxu0
      %v3018 = vadd.f32 %v2436, %v3017
      %3019 = vmatmul.bf16.gmra.mxu0 %v2560
      %v3020 = vpop.f32.mrf.mxu0
      %v3021 = vadd.f32 %v2439, %v3020
      %v3022 = vpop.f32.mrf.mxu0
      %v3023 = vadd.f32 %v2441, %v3022
      %3024 = vmatmul.bf16.gmra.mxu0 %v2561
      %v3025 = vpop.f32.mrf.mxu0
      %v3026 = vadd.f32 %v2444, %v3025
      %v3027 = vpop.f32.mrf.mxu0
      %v3028 = vadd.f32 %v2446, %v3027
      %3029 = vmatmul.bf16.gmra.mxu0 %v2562
      %v3030 = vpop.f32.mrf.mxu0
      %v3031 = vadd.f32 %v2449, %v3030
      %v3032 = vpop.f32.mrf.mxu0
      %v3033 = vadd.f32 %v2451, %v3032
      %3034 = vmatmul.bf16.gmra.mxu0 %v2563
      %v3035 = vpop.f32.mrf.mxu0
      %v3036 = vadd.f32 %v2454, %v3035
      %v3037 = vpop.f32.mrf.mxu0
      %v3038 = vadd.f32 %v2456, %v3037
      %3039 = vmatmul.bf16.gmra.mxu0 %v2564
      %v3040 = vpop.f32.mrf.mxu0
      %v3041 = vadd.f32 %v2459, %v3040
      %v3042 = vpop.f32.mrf.mxu0
      %v3043 = vadd.f32 %v2461, %v3042
      %3044 = vmatmul.bf16.gmra.mxu0 %v2565
      %v3045 = vpop.f32.mrf.mxu0
      %v3046 = vadd.f32 %v2464, %v3045
      %v3047 = vpop.f32.mrf.mxu0
      %v3048 = vadd.f32 %v2466, %v3047
      %3049 = vmatmul.bf16.gmra.mxu0 %v2566
      %v3050 = vpop.f32.mrf.mxu0
      %v3051 = vadd.f32 %v2469, %v3050
      %v3052 = vpop.f32.mrf.mxu0
      %v3053 = vadd.f32 %v2471, %v3052
      %3054 = vmatmul.bf16.gmra.mxu0 %v2567
      %v3055 = vpop.f32.mrf.mxu0
      %v3056 = vadd.f32 %v2474, %v3055
      %v3057 = vpop.f32.mrf.mxu0
      %v3058 = vadd.f32 %v2476, %v3057
      %3059 = vmatmul.bf16.gmra.mxu0 %v2568
      %v3060 = vpop.f32.mrf.mxu0
      %v3061 = vadd.f32 %v2479, %v3060
      %v3062 = vpop.f32.mrf.mxu0
      %v3063 = vadd.f32 %v2481, %v3062
      %3064 = vmatmul.bf16.gmra.mxu0 %v2569
      %v3065 = vpop.f32.mrf.mxu0
      %v3066 = vadd.f32 %v2484, %v3065
      %v3067 = vpop.f32.mrf.mxu0
      %v3068 = vadd.f32 %v2486, %v3067
      %3069 = vmatmul.bf16.gmra.mxu0 %v2570
      %v3070 = vpop.f32.mrf.mxu0
      %v3071 = vadd.f32 %v2489, %v3070
      %v3072 = vpop.f32.mrf.mxu0
      %v3073 = vadd.f32 %v2491, %v3072
      %3074 = vmatmul.bf16.gmra.mxu0 %v2571
      %v3075 = vpop.f32.mrf.mxu0
      %v3076 = vadd.f32 %v2494, %v3075
      %v3077 = vpop.f32.mrf.mxu0
      %v3078 = vadd.f32 %v2496, %v3077
      %3079 = vmatmul.bf16.gmra.mxu0 %v2572
      %v3080 = vpop.f32.mrf.mxu0
      %v3081 = vadd.f32 %v2499, %v3080
      %v3082 = vpop.f32.mrf.mxu0
      %v3083 = vadd.f32 %v2501, %v3082
      %3084 = vmatmul.bf16.gmra.mxu0 %v2573
      %v3085 = vpop.f32.mrf.mxu0
      %v3086 = vadd.f32 %v2504, %v3085
      %v3087 = vpop.f32.mrf.mxu0
      %v3088 = vadd.f32 %v2506, %v3087
      %3089 = vmatmul.bf16.gmra.mxu0 %v2574
      %v3090 = vpop.f32.mrf.mxu0
      %v3091 = vadd.f32 %v2509, %v3090
      %v3092 = vpop.f32.mrf.mxu0
      %v3093 = vadd.f32 %v2511, %v3092
      %3094 = vmatmul.bf16.gmra.mxu0 %v2575
      %v3095 = vpop.f32.mrf.mxu0
      %v3096 = vadd.f32 %v2514, %v3095
      %v3097 = vpop.f32.mrf.mxu0
      %v3098 = vadd.f32 %v2516, %v3097
      %3099 = vmatmul.bf16.gmra.mxu0 %v2576
      %v3100 = vpop.f32.mrf.mxu0
      %v3101 = vadd.f32 %v2519, %v3100
      %v3102 = vpop.f32.mrf.mxu0
      %v3103 = vadd.f32 %v2521, %v3102
      %3104 = vmatmul.bf16.gmra.mxu0 %v2577
      %v3105 = vpop.f32.mrf.mxu0
      %v3106 = vadd.f32 %v2524, %v3105
      %v3107 = vpop.f32.mrf.mxu0
      %v3108 = vadd.f32 %v2526, %v3107
      %3109 = vmatmul.bf16.gmra.mxu0 %v2578
      %v3110 = vpop.f32.mrf.mxu0
      %v3111 = vadd.f32 %v2529, %v3110
      %v3112 = vpop.f32.mrf.mxu0
      %v3113 = vadd.f32 %v2531, %v3112
      %3114 = vmatmul.bf16.gmra.mxu0 %v2579
      %v3115 = vpop.f32.mrf.mxu0
      %v3116 = vadd.f32 %v2534, %v3115
      %v3117 = vpop.f32.mrf.mxu0
      %v3118 = vadd.f32 %v2536, %v3117
      %3119 = vmatmul.bf16.gmra.mxu0 %v2580
      %v3120 = vpop.f32.mrf.mxu0
      %v3121 = vadd.f32 %v2539, %v3120
      %v3122 = vpop.f32.mrf.mxu0
      %v3123 = vadd.f32 %v2541, %v3122
      %3124 = vmatmul.bf16.gmra.mxu0 %v2581
      %v3125 = vpop.f32.mrf.mxu0
      %v3126 = vadd.f32 %v2544, %v3125
      %v3127 = vpop.f32.mrf.mxu0
      %v3128 = vadd.f32 %v2546, %v3127
      %3129 = vmatmul.bf16.gmra.mxu0 %v2582
      %v3130 = vpop.f32.mrf.mxu0
      %v3131 = vadd.f32 %v2549, %v3130
      %v3132 = vpop.f32.mrf.mxu0
      %3133 = vdwg.mxu0
      %v3134 = vld [vmem:[#allocation2 + $0x18] sm:$0xf]
      %v3135 = vld [vmem:[#allocation2 + $0x1c] sm:$0xf]
      %v3136 = vld [vmem:[#allocation2 + $0x20] sm:$0xf]
      %v3137 = vld [vmem:[#allocation2 + $0x24] sm:$0xf]
      %v3138 = vld [vmem:[#allocation2 + $0x28] sm:$0xf]
      %v3139 = vld [vmem:[#allocation2 + $0x2c] sm:$0xf]
      %v3140 = vld [vmem:[#allocation2 + $0x30] sm:$0xf]
      %v3141 = vld [vmem:[#allocation2 + $0x34] sm:$0xf]
      %v3142 = vld [vmem:[#allocation2 + $0x38] sm:$0xf]
      %v3143 = vld [vmem:[#allocation2 + $0x3c] sm:$0xf]
      %v3144 = vld [vmem:[#allocation2 + $0x40] sm:$0xf]
      %v3145 = vld [vmem:[#allocation2 + $0x44] sm:$0xf]
      %v3146 = vld [vmem:[#allocation2 + $0x48] sm:$0xf]
      %v3147 = vld [vmem:[#allocation2 + $0x4c] sm:$0xf]
      %v3148 = vld [vmem:[#allocation2 + $0x50] sm:$0xf]
      %v3149 = vld [vmem:[#allocation2 + $0x54] sm:$0xf]
      %v3150 = vld [vmem:[#allocation2 + $0x58] sm:$0xf]
      %v3151 = vld [vmem:[#allocation2 + $0x5c] sm:$0xf]
      %v3152 = vld [vmem:[#allocation2 + $0x60] sm:$0xf]
      %v3153 = vld [vmem:[#allocation2 + $0x64] sm:$0xf]
      %v3154 = vld [vmem:[#allocation2 + $0x68] sm:$0xf]
      %v3155 = vld [vmem:[#allocation2 + $0x6c] sm:$0xf]
      %v3156 = vld [vmem:[#allocation2 + $0x70] sm:$0xf]
      %v3157 = vld [vmem:[#allocation2 + $0x74] sm:$0xf]
      %v3158 = vld [vmem:[#allocation2 + $0x78] sm:$0xf]
      %v3159 = vld [vmem:[#allocation2 + $0x7c] sm:$0xf]
      %v3160 = vld [vmem:[#allocation2 + $0x80] sm:$0xf]
      %v3161 = vld [vmem:[#allocation2 + $0x84] sm:$0xf]
      %v3162 = vld [vmem:[#allocation2 + $0x88] sm:$0xf]
      %v3163 = vld [vmem:[#allocation2 + $0x8c] sm:$0xf]
      %v3164 = vld [vmem:[#allocation2 + $0x90] sm:$0xf]
      %v3165 = vld [vmem:[#allocation2 + $0x94] sm:$0xf]
      %v3166 = vld [vmem:[#allocation2 + $0x98] sm:$0xf]
      %v3167 = vld [vmem:[#allocation2 + $0x9c] sm:$0xf]
      %v3168 = vld [vmem:[#allocation2 + $0xa0] sm:$0xf]
      %v3169 = vld [vmem:[#allocation2 + $0xa4] sm:$0xf]
      %v3170 = vld [vmem:[#allocation2 + $0xa8] sm:$0xf]
      %v3171 = vld [vmem:[#allocation2 + $0xac] sm:$0xf]
      %v3172 = vld [vmem:[#allocation2 + $0xb0] sm:$0xf]
      %v3173 = vld [vmem:[#allocation2 + $0xb4] sm:$0xf]
      %v3174 = vld [vmem:[#allocation2 + $0xb8] sm:$0xf]
      %v3175 = vld [vmem:[#allocation2 + $0xbc] sm:$0xf]
      %v3176 = vld [vmem:[#allocation2 + $0xc0] sm:$0xf]
      %v3177 = vld [vmem:[#allocation2 + $0xc4] sm:$0xf]
      %v3178 = vld [vmem:[#allocation2 + $0xc8] sm:$0xf]
      %v3179 = vld [vmem:[#allocation2 + $0xcc] sm:$0xf]
      %v3180 = vld [vmem:[#allocation2 + $0xd0] sm:$0xf]
      %v3181 = vld [vmem:[#allocation2 + $0xd4] sm:$0xf]
      %v3182 = vld [vmem:[#allocation2 + $0xd8] sm:$0xf]
      %s3183 = scalar_lea.vmem %s4, 384
      %v3184 = vld [vmem:[%s3183] sm:$0xff]
      %v3185 = vld [vmem:[%s3183 + $0x8] sm:$0xf]
      %v3186 = vld [vmem:[%s3183 + $0xc] sm:$0xff]
      %v3187 = vld [vmem:[%s3183 + $0x14] sm:$0xf]
      %v3188 = vld [vmem:[%s3183 + $0x18] sm:$0xff]
      %v3189 = vld [vmem:[%s3183 + $0x20] sm:$0xf]
      %v3190 = vld [vmem:[%s3183 + $0x24] sm:$0xff]
      %v3191 = vld [vmem:[%s3183 + $0x2c] sm:$0xf]
      %v3192 = vld [vmem:[%s3183 + $0x30] sm:$0xff]
      %v3193 = vld [vmem:[%s3183 + $0x38] sm:$0xf]
      %v3194 = vld [vmem:[%s3183 + $0x3c] sm:$0xff]
      %v3195 = vld [vmem:[%s3183 + $0x44] sm:$0xf]
      %v3196 = vld [vmem:[%s3183 + $0x48] sm:$0xff]
      %v3197 = vld [vmem:[%s3183 + $0x50] sm:$0xf]
      %v3198 = vld [vmem:[%s3183 + $0x54] sm:$0xff]
      %v3199 = vld [vmem:[%s3183 + $0x5c] sm:$0xf]
      %v3200 = vld [vmem:[%s3183 + $0x60] sm:$0xff]
      %v3201 = vld [vmem:[%s3183 + $0x68] sm:$0xf]
      %v3202 = vld [vmem:[%s3183 + $0x6c] sm:$0xff]
      %v3203 = vld [vmem:[%s3183 + $0x74] sm:$0xf]
      %v3204 = vld [vmem:[%s3183 + $0x78] sm:$0xff]
      %v3205 = vld [vmem:[%s3183 + $0x80] sm:$0xf]
      %v3206 = vld [vmem:[%s3183 + $0x84] sm:$0xff]
      %v3207 = vld [vmem:[%s3183 + $0x8c] sm:$0xf]
      %v3208 = vld [vmem:[%s3183 + $0x90] sm:$0xff]
      %v3209 = vld [vmem:[%s3183 + $0x98] sm:$0xf]
      %v3210 = vld [vmem:[%s3183 + $0x9c] sm:$0xff]
      %v3211 = vld [vmem:[%s3183 + $0xa4] sm:$0xf]
      %v3212 = vld [vmem:[%s3183 + $0xa8] sm:$0xff]
      %v3213 = vld [vmem:[%s3183 + $0xb0] sm:$0xf]
      %v3214 = vld [vmem:[%s3183 + $0xb4] sm:$0xff]
      %v3215 = vld [vmem:[%s3183 + $0xbc] sm:$0xf]
      %v3265 = vunpack.c.l.b16 %v3134
      %v3266 = vunpack.c.l.b16 %v3135
      %v3267 = vunpack.c.l.b16 %v3136
      %v3268 = vunpack.c.l.b16 %v3137
      %v3269 = vunpack.c.l.b16 %v3138
      %v3270 = vunpack.c.l.b16 %v3139
      %v3271 = vunpack.c.l.b16 %v3140
      %v3272 = vunpack.c.l.b16 %v3141
      %v3273 = vunpack.c.l.b16 %v3142
      %v3274 = vunpack.c.l.b16 %v3143
      %v3275 = vunpack.c.l.b16 %v3144
      %v3276 = vunpack.c.l.b16 %v3145
      %v3277 = vunpack.c.l.b16 %v3146
      %v3278 = vunpack.c.l.b16 %v3147
      %v3279 = vunpack.c.l.b16 %v3148
      %v3280 = vunpack.c.l.b16 %v3149
      %v3281 = vunpack.c.l.b16 %v3150
      %v3282 = vunpack.c.l.b16 %v3151
      %v3283 = vunpack.c.l.b16 %v3152
      %v3284 = vunpack.c.l.b16 %v3153
      %v3285 = vunpack.c.l.b16 %v3154
      %v3286 = vunpack.c.l.b16 %v3155
      %v3287 = vunpack.c.l.b16 %v3156
      %v3288 = vunpack.c.l.b16 %v3157
      %v3289 = vunpack.c.l.b16 %v3158
      %v3290 = vunpack.c.l.b16 %v3159
      %v3291 = vunpack.c.l.b16 %v3160
      %v3292 = vunpack.c.l.b16 %v3161
      %v3293 = vunpack.c.l.b16 %v3162
      %v3294 = vunpack.c.l.b16 %v3163
      %v3295 = vunpack.c.l.b16 %v3164
      %v3296 = vunpack.c.l.b16 %v3165
      %v3297 = vunpack.c.l.b16 %v3166
      %v3298 = vunpack.c.l.b16 %v3167
      %v3299 = vunpack.c.l.b16 %v3168
      %v3300 = vunpack.c.l.b16 %v3169
      %v3301 = vunpack.c.l.b16 %v3170
      %v3302 = vunpack.c.l.b16 %v3171
      %v3303 = vunpack.c.l.b16 %v3172
      %v3304 = vunpack.c.l.b16 %v3173
      %v3305 = vunpack.c.l.b16 %v3174
      %v3306 = vunpack.c.l.b16 %v3175
      %v3307 = vunpack.c.l.b16 %v3176
      %v3308 = vunpack.c.l.b16 %v3177
      %v3309 = vunpack.c.l.b16 %v3178
      %v3310 = vunpack.c.l.b16 %v3179
      %v3311 = vunpack.c.l.b16 %v3180
      %v3312 = vunpack.c.l.b16 %v3181
      %v3313 = vunpack.c.l.b16 %v3182
      %v3314 = vpack.c.b16 %v3266, %v3265
      %v3315 = vpack.c.b16 %v3268, %v3267
      %v3316 = vpack.c.b16 %v3270, %v3269
      %v3317 = vpack.c.b16 %v3272, %v3271
      %v3318 = vpack.c.b16 %v3274, %v3273
      %v3319 = vpack.c.b16 %v3276, %v3275
      %v3320 = vpack.c.b16 %v3278, %v3277
      %v3321 = vpack.c.b16 %v3280, %v3279
      %v3322 = vpack.c.b16 %v3282, %v3281
      %v3323 = vpack.c.b16 %v3284, %v3283
      %v3324 = vpack.c.b16 %v3286, %v3285
      %v3325 = vpack.c.b16 %v3288, %v3287
      %v3326 = vpack.c.b16 %v3290, %v3289
      %v3327 = vpack.c.b16 %v3292, %v3291
      %v3328 = vpack.c.b16 %v3294, %v3293
      %v3329 = vpack.c.b16 %v3296, %v3295
      %v3330 = vpack.c.b16 %v3298, %v3297
      %v3331 = vpack.c.b16 %v3300, %v3299
      %v3332 = vpack.c.b16 %v3302, %v3301
      %v3333 = vpack.c.b16 %v3304, %v3303
      %v3334 = vpack.c.b16 %v3306, %v3305
      %v3335 = vpack.c.b16 %v3308, %v3307
      %v3336 = vpack.c.b16 %v3310, %v3309
      %v3337 = vpack.c.b16 %v3312, %v3311
      %v3338 = vpack.c.b16 %v3313, %v3313
      %v3396 = vunpack.c.l.b16 %v3184
      %v3397 = vunpack.c.h.b16 %v3184
      %v3398 = vunpack.c.l.b16 %v3185
      %v3399 = vunpack.c.l.b16 %v3186
      %v3400 = vunpack.c.h.b16 %v3186
      %v3401 = vunpack.c.l.b16 %v3187
      %v3402 = vunpack.c.l.b16 %v3188
      %v3403 = vunpack.c.h.b16 %v3188
      %v3404 = vunpack.c.l.b16 %v3189
      %v3405 = vunpack.c.l.b16 %v3190
      %v3406 = vunpack.c.h.b16 %v3190
      %v3407 = vunpack.c.l.b16 %v3191
      %v3408 = vunpack.c.l.b16 %v3192
      %v3409 = vunpack.c.h.b16 %v3192
      %v3410 = vunpack.c.l.b16 %v3193
      %v3411 = vunpack.c.l.b16 %v3194
      %v3412 = vunpack.c.h.b16 %v3194
      %v3413 = vunpack.c.l.b16 %v3195
      %v3414 = vunpack.c.l.b16 %v3196
      %v3415 = vunpack.c.h.b16 %v3196
      %v3416 = vunpack.c.l.b16 %v3197
      %v3417 = vunpack.c.l.b16 %v3198
      %v3418 = vunpack.c.h.b16 %v3198
      %v3419 = vunpack.c.l.b16 %v3199
      %v3420 = vunpack.c.l.b16 %v3200
      %v3421 = vunpack.c.h.b16 %v3200
      %v3422 = vunpack.c.l.b16 %v3201
      %v3423 = vunpack.c.l.b16 %v3202
      %v3424 = vunpack.c.h.b16 %v3202
      %v3425 = vunpack.c.l.b16 %v3203
      %v3426 = vunpack.c.l.b16 %v3204
      %v3427 = vunpack.c.h.b16 %v3204
      %v3428 = vunpack.c.l.b16 %v3205
      %v3429 = vunpack.c.l.b16 %v3206
      %v3430 = vunpack.c.h.b16 %v3206
      %v3431 = vunpack.c.l.b16 %v3207
      %v3432 = vunpack.c.l.b16 %v3208
      %v3433 = vunpack.c.h.b16 %v3208
      %v3434 = vunpack.c.l.b16 %v3209
      %v3435 = vunpack.c.l.b16 %v3210
      %v3436 = vunpack.c.h.b16 %v3210
      %v3437 = vunpack.c.l.b16 %v3211
      %v3438 = vunpack.c.l.b16 %v3212
      %v3439 = vunpack.c.h.b16 %v3212
      %v3440 = vunpack.c.l.b16 %v3213
      %v3441 = vunpack.c.l.b16 %v3214
      %v3442 = vunpack.c.h.b16 %v3214
      %v3443 = vunpack.c.l.b16 %v3215
      %v3444 = vpack.c.b16 %v3399, %v3396
      %v3445 = vpack.c.b16 %v3400, %v3397
      %v3446 = vpack.c.b16 %v3401, %v3398
      %v3447 = vpack.c.b16 %v3405, %v3402
      %v3448 = vpack.c.b16 %v3406, %v3403
      %v3449 = vpack.c.b16 %v3407, %v3404
      %v3450 = vpack.c.b16 %v3411, %v3408
      %v3451 = vpack.c.b16 %v3412, %v3409
      %v3452 = vpack.c.b16 %v3413, %v3410
      %v3453 = vpack.c.b16 %v3417, %v3414
      %v3454 = vpack.c.b16 %v3418, %v3415
      %v3455 = vpack.c.b16 %v3419, %v3416
      %v3456 = vpack.c.b16 %v3423, %v3420
      %v3457 = vpack.c.b16 %v3424, %v3421
      %v3458 = vpack.c.b16 %v3425, %v3422
      %v3459 = vpack.c.b16 %v3429, %v3426
      %v3460 = vpack.c.b16 %v3430, %v3427
      %v3461 = vpack.c.b16 %v3431, %v3428
      %v3462 = vpack.c.b16 %v3435, %v3432
      %v3463 = vpack.c.b16 %v3436, %v3433
      %v3464 = vpack.c.b16 %v3437, %v3434
      %v3465 = vpack.c.b16 %v3441, %v3438
      %v3466 = vpack.c.b16 %v3442, %v3439
      %v3467 = vpack.c.b16 %v3443, %v3440
      %3492 = vmatpush.bf16.msra.mxu0 %v3465
      %3493 = vmatpush.bf16.msra.mxu0 %v3462
      %3494 = vmatpush.bf16.msra.mxu0 %v3459
      %3495 = vmatpush.bf16.msra.mxu0 %v3456
      %3496 = vmatpush.bf16.msra.mxu0 %v3453
      %3497 = vmatpush.bf16.msra.mxu0 %v3450
      %3498 = vmatpush.bf16.msra.mxu0 %v3447
      %3499 = vmatpush.bf16.msra.mxu0 %v3444
      %3500 = vmatmul.bf16.gmra.mxu0 %v3314
      %v3501 = vpop.f32.mrf.mxu0
      %v3502 = vadd.f32 0.0, %v3501
      %v3503 = vpop.f32.mrf.mxu0
      %v3504 = vadd.f32 0.0, %v3503
      %3505 = vmatmul.bf16.gmra.mxu0 %v3315
      %v3506 = vpop.f32.mrf.mxu0
      %v3507 = vadd.f32 0.0, %v3506
      %v3508 = vpop.f32.mrf.mxu0
      %v3509 = vadd.f32 0.0, %v3508
      %3510 = vmatmul.bf16.gmra.mxu0 %v3316
      %v3511 = vpop.f32.mrf.mxu0
      %v3512 = vadd.f32 0.0, %v3511
      %v3513 = vpop.f32.mrf.mxu0
      %v3514 = vadd.f32 0.0, %v3513
      %3515 = vmatmul.bf16.gmra.mxu0 %v3317
      %v3516 = vpop.f32.mrf.mxu0
      %v3517 = vadd.f32 0.0, %v3516
      %v3518 = vpop.f32.mrf.mxu0
      %v3519 = vadd.f32 0.0, %v3518
      %3520 = vmatmul.bf16.gmra.mxu0 %v3318
      %v3521 = vpop.f32.mrf.mxu0
      %v3522 = vadd.f32 0.0, %v3521
      %v3523 = vpop.f32.mrf.mxu0
      %v3524 = vadd.f32 0.0, %v3523
      %3525 = vmatmul.bf16.gmra.mxu0 %v3319
      %v3526 = vpop.f32.mrf.mxu0
      %v3527 = vadd.f32 0.0, %v3526
      %v3528 = vpop.f32.mrf.mxu0
      %v3529 = vadd.f32 0.0, %v3528
      %3530 = vmatmul.bf16.gmra.mxu0 %v3320
      %v3531 = vpop.f32.mrf.mxu0
      %v3532 = vadd.f32 0.0, %v3531
      %v3533 = vpop.f32.mrf.mxu0
      %v3534 = vadd.f32 0.0, %v3533
      %3535 = vmatmul.bf16.gmra.mxu0 %v3321
      %v3536 = vpop.f32.mrf.mxu0
      %v3537 = vadd.f32 0.0, %v3536
      %v3538 = vpop.f32.mrf.mxu0
      %v3539 = vadd.f32 0.0, %v3538
      %3540 = vmatmul.bf16.gmra.mxu0 %v3322
      %v3541 = vpop.f32.mrf.mxu0
      %v3542 = vadd.f32 0.0, %v3541
      %v3543 = vpop.f32.mrf.mxu0
      %v3544 = vadd.f32 0.0, %v3543
      %3545 = vmatmul.bf16.gmra.mxu0 %v3323
      %v3546 = vpop.f32.mrf.mxu0
      %v3547 = vadd.f32 0.0, %v3546
      %v3548 = vpop.f32.mrf.mxu0
      %v3549 = vadd.f32 0.0, %v3548
      %3550 = vmatmul.bf16.gmra.mxu0 %v3324
      %v3551 = vpop.f32.mrf.mxu0
      %v3552 = vadd.f32 0.0, %v3551
      %v3553 = vpop.f32.mrf.mxu0
      %v3554 = vadd.f32 0.0, %v3553
      %3555 = vmatmul.bf16.gmra.mxu0 %v3325
      %v3556 = vpop.f32.mrf.mxu0
      %v3557 = vadd.f32 0.0, %v3556
      %v3558 = vpop.f32.mrf.mxu0
      %v3559 = vadd.f32 0.0, %v3558
      %3560 = vmatmul.bf16.gmra.mxu0 %v3326
      %v3561 = vpop.f32.mrf.mxu0
      %v3562 = vadd.f32 0.0, %v3561
      %v3563 = vpop.f32.mrf.mxu0
      %v3564 = vadd.f32 0.0, %v3563
      %3565 = vmatmul.bf16.gmra.mxu0 %v3327
      %v3566 = vpop.f32.mrf.mxu0
      %v3567 = vadd.f32 0.0, %v3566
      %v3568 = vpop.f32.mrf.mxu0
      %v3569 = vadd.f32 0.0, %v3568
      %3570 = vmatmul.bf16.gmra.mxu0 %v3328
      %v3571 = vpop.f32.mrf.mxu0
      %v3572 = vadd.f32 0.0, %v3571
      %v3573 = vpop.f32.mrf.mxu0
      %v3574 = vadd.f32 0.0, %v3573
      %3575 = vmatmul.bf16.gmra.mxu0 %v3329
      %v3576 = vpop.f32.mrf.mxu0
      %v3577 = vadd.f32 0.0, %v3576
      %v3578 = vpop.f32.mrf.mxu0
      %v3579 = vadd.f32 0.0, %v3578
      %3580 = vmatmul.bf16.gmra.mxu0 %v3330
      %v3581 = vpop.f32.mrf.mxu0
      %v3582 = vadd.f32 0.0, %v3581
      %v3583 = vpop.f32.mrf.mxu0
      %v3584 = vadd.f32 0.0, %v3583
      %3585 = vmatmul.bf16.gmra.mxu0 %v3331
      %v3586 = vpop.f32.mrf.mxu0
      %v3587 = vadd.f32 0.0, %v3586
      %v3588 = vpop.f32.mrf.mxu0
      %v3589 = vadd.f32 0.0, %v3588
      %3590 = vmatmul.bf16.gmra.mxu0 %v3332
      %v3591 = vpop.f32.mrf.mxu0
      %v3592 = vadd.f32 0.0, %v3591
      %v3593 = vpop.f32.mrf.mxu0
      %v3594 = vadd.f32 0.0, %v3593
      %3595 = vmatmul.bf16.gmra.mxu0 %v3333
      %v3596 = vpop.f32.mrf.mxu0
      %v3597 = vadd.f32 0.0, %v3596
      %v3598 = vpop.f32.mrf.mxu0
      %v3599 = vadd.f32 0.0, %v3598
      %3600 = vmatmul.bf16.gmra.mxu0 %v3334
      %v3601 = vpop.f32.mrf.mxu0
      %v3602 = vadd.f32 0.0, %v3601
      %v3603 = vpop.f32.mrf.mxu0
      %v3604 = vadd.f32 0.0, %v3603
      %3605 = vmatmul.bf16.gmra.mxu0 %v3335
      %v3606 = vpop.f32.mrf.mxu0
      %v3607 = vadd.f32 0.0, %v3606
      %v3608 = vpop.f32.mrf.mxu0
      %v3609 = vadd.f32 0.0, %v3608
      %3610 = vmatmul.bf16.gmra.mxu0 %v3336
      %v3611 = vpop.f32.mrf.mxu0
      %v3612 = vadd.f32 0.0, %v3611
      %v3613 = vpop.f32.mrf.mxu0
      %v3614 = vadd.f32 0.0, %v3613
      %3615 = vmatmul.bf16.gmra.mxu0 %v3337
      %v3616 = vpop.f32.mrf.mxu0
      %v3617 = vadd.f32 0.0, %v3616
      %v3618 = vpop.f32.mrf.mxu0
      %v3619 = vadd.f32 0.0, %v3618
      %3620 = vmatmul.bf16.gmra.mxu0 %v3338
      %v3621 = vpop.f32.mrf.mxu0
      %v3622 = vpop.f32.mrf.mxu0
      %3623 = vdwg.mxu0
      %3624 = vmatpush.bf16.msra.mxu0 %v3466
      %3625 = vmatpush.bf16.msra.mxu0 %v3463
      %3626 = vmatpush.bf16.msra.mxu0 %v3460
      %3627 = vmatpush.bf16.msra.mxu0 %v3457
      %3628 = vmatpush.bf16.msra.mxu0 %v3454
      %3629 = vmatpush.bf16.msra.mxu0 %v3451
      %3630 = vmatpush.bf16.msra.mxu0 %v3448
      %3631 = vmatpush.bf16.msra.mxu0 %v3445
      %3632 = vmatmul.bf16.gmra.mxu0 %v3314
      %v3633 = vpop.f32.mrf.mxu0
      %v3634 = vadd.f32 0.0, %v3633
      %v3635 = vpop.f32.mrf.mxu0
      %v3636 = vadd.f32 0.0, %v3635
      %3637 = vmatmul.bf16.gmra.mxu0 %v3315
      %v3638 = vpop.f32.mrf.mxu0
      %v3639 = vadd.f32 0.0, %v3638
      %v3640 = vpop.f32.mrf.mxu0
      %v3641 = vadd.f32 0.0, %v3640
      %3642 = vmatmul.bf16.gmra.mxu0 %v3316
      %v3643 = vpop.f32.mrf.mxu0
      %v3644 = vadd.f32 0.0, %v3643
      %v3645 = vpop.f32.mrf.mxu0
      %v3646 = vadd.f32 0.0, %v3645
      %3647 = vmatmul.bf16.gmra.mxu0 %v3317
      %v3648 = vpop.f32.mrf.mxu0
      %v3649 = vadd.f32 0.0, %v3648
      %v3650 = vpop.f32.mrf.mxu0
      %v3651 = vadd.f32 0.0, %v3650
      %3652 = vmatmul.bf16.gmra.mxu0 %v3318
      %v3653 = vpop.f32.mrf.mxu0
      %v3654 = vadd.f32 0.0, %v3653
      %v3655 = vpop.f32.mrf.mxu0
      %v3656 = vadd.f32 0.0, %v3655
      %3657 = vmatmul.bf16.gmra.mxu0 %v3319
      %v3658 = vpop.f32.mrf.mxu0
      %v3659 = vadd.f32 0.0, %v3658
      %v3660 = vpop.f32.mrf.mxu0
      %v3661 = vadd.f32 0.0, %v3660
      %3662 = vmatmul.bf16.gmra.mxu0 %v3320
      %v3663 = vpop.f32.mrf.mxu0
      %v3664 = vadd.f32 0.0, %v3663
      %v3665 = vpop.f32.mrf.mxu0
      %v3666 = vadd.f32 0.0, %v3665
      %3667 = vmatmul.bf16.gmra.mxu0 %v3321
      %v3668 = vpop.f32.mrf.mxu0
      %v3669 = vadd.f32 0.0, %v3668
      %v3670 = vpop.f32.mrf.mxu0
      %v3671 = vadd.f32 0.0, %v3670
      %3672 = vmatmul.bf16.gmra.mxu0 %v3322
      %v3673 = vpop.f32.mrf.mxu0
      %v3674 = vadd.f32 0.0, %v3673
      %v3675 = vpop.f32.mrf.mxu0
      %v3676 = vadd.f32 0.0, %v3675
      %3677 = vmatmul.bf16.gmra.mxu0 %v3323
      %v3678 = vpop.f32.mrf.mxu0
      %v3679 = vadd.f32 0.0, %v3678
      %v3680 = vpop.f32.mrf.mxu0
      %v3681 = vadd.f32 0.0, %v3680
      %3682 = vmatmul.bf16.gmra.mxu0 %v3324
      %v3683 = vpop.f32.mrf.mxu0
      %v3684 = vadd.f32 0.0, %v3683
      %v3685 = vpop.f32.mrf.mxu0
      %v3686 = vadd.f32 0.0, %v3685
      %3687 = vmatmul.bf16.gmra.mxu0 %v3325
      %v3688 = vpop.f32.mrf.mxu0
      %v3689 = vadd.f32 0.0, %v3688
      %v3690 = vpop.f32.mrf.mxu0
      %v3691 = vadd.f32 0.0, %v3690
      %3692 = vmatmul.bf16.gmra.mxu0 %v3326
      %v3693 = vpop.f32.mrf.mxu0
      %v3694 = vadd.f32 0.0, %v3693
      %v3695 = vpop.f32.mrf.mxu0
      %v3696 = vadd.f32 0.0, %v3695
      %3697 = vmatmul.bf16.gmra.mxu0 %v3327
      %v3698 = vpop.f32.mrf.mxu0
      %v3699 = vadd.f32 0.0, %v3698
      %v3700 = vpop.f32.mrf.mxu0
      %v3701 = vadd.f32 0.0, %v3700
      %3702 = vmatmul.bf16.gmra.mxu0 %v3328
      %v3703 = vpop.f32.mrf.mxu0
      %v3704 = vadd.f32 0.0, %v3703
      %v3705 = vpop.f32.mrf.mxu0
      %v3706 = vadd.f32 0.0, %v3705
      %3707 = vmatmul.bf16.gmra.mxu0 %v3329
      %v3708 = vpop.f32.mrf.mxu0
      %v3709 = vadd.f32 0.0, %v3708
      %v3710 = vpop.f32.mrf.mxu0
      %v3711 = vadd.f32 0.0, %v3710
      %3712 = vmatmul.bf16.gmra.mxu0 %v3330
      %v3713 = vpop.f32.mrf.mxu0
      %v3714 = vadd.f32 0.0, %v3713
      %v3715 = vpop.f32.mrf.mxu0
      %v3716 = vadd.f32 0.0, %v3715
      %3717 = vmatmul.bf16.gmra.mxu0 %v3331
      %v3718 = vpop.f32.mrf.mxu0
      %v3719 = vadd.f32 0.0, %v3718
      %v3720 = vpop.f32.mrf.mxu0
      %v3721 = vadd.f32 0.0, %v3720
      %3722 = vmatmul.bf16.gmra.mxu0 %v3332
      %v3723 = vpop.f32.mrf.mxu0
      %v3724 = vadd.f32 0.0, %v3723
      %v3725 = vpop.f32.mrf.mxu0
      %v3726 = vadd.f32 0.0, %v3725
      %3727 = vmatmul.bf16.gmra.mxu0 %v3333
      %v3728 = vpop.f32.mrf.mxu0
      %v3729 = vadd.f32 0.0, %v3728
      %v3730 = vpop.f32.mrf.mxu0
      %v3731 = vadd.f32 0.0, %v3730
      %3732 = vmatmul.bf16.gmra.mxu0 %v3334
      %v3733 = vpop.f32.mrf.mxu0
      %v3734 = vadd.f32 0.0, %v3733
      %v3735 = vpop.f32.mrf.mxu0
      %v3736 = vadd.f32 0.0, %v3735
      %3737 = vmatmul.bf16.gmra.mxu0 %v3335
      %v3738 = vpop.f32.mrf.mxu0
      %v3739 = vadd.f32 0.0, %v3738
      %v3740 = vpop.f32.mrf.mxu0
      %v3741 = vadd.f32 0.0, %v3740
      %3742 = vmatmul.bf16.gmra.mxu0 %v3336
      %v3743 = vpop.f32.mrf.mxu0
      %v3744 = vadd.f32 0.0, %v3743
      %v3745 = vpop.f32.mrf.mxu0
      %v3746 = vadd.f32 0.0, %v3745
      %3747 = vmatmul.bf16.gmra.mxu0 %v3337
      %v3748 = vpop.f32.mrf.mxu0
      %v3749 = vadd.f32 0.0, %v3748
      %v3750 = vpop.f32.mrf.mxu0
      %v3751 = vadd.f32 0.0, %v3750
      %3752 = vmatmul.bf16.gmra.mxu0 %v3338
      %v3753 = vpop.f32.mrf.mxu0
      %v3754 = vadd.f32 0.0, %v3753
      %v3755 = vpop.f32.mrf.mxu0
      %3756 = vdwg.mxu0
      %3757 = vmatpush.bf16.msra.mxu0 %v3467
      %3758 = vmatpush.bf16.msra.mxu0 %v3464
      %3759 = vmatpush.bf16.msra.mxu0 %v3461
      %3760 = vmatpush.bf16.msra.mxu0 %v3458
      %3761 = vmatpush.bf16.msra.mxu0 %v3455
      %3762 = vmatpush.bf16.msra.mxu0 %v3452
      %3763 = vmatpush.bf16.msra.mxu0 %v3449
      %3764 = vmatpush.bf16.msra.mxu0 %v3446
      %3765 = vmatmul.bf16.gmra.mxu0 %v3314
      %v3766 = vpop.f32.mrf.mxu0
      %v3767 = vadd.f32 0.0, %v3766
      %v3768 = vpop.f32.mrf.mxu0
      %v3769 = vadd.f32 0.0, %v3768
      %3770 = vmatmul.bf16.gmra.mxu0 %v3315
      %v3771 = vpop.f32.mrf.mxu0
      %v3772 = vadd.f32 0.0, %v3771
      %v3773 = vpop.f32.mrf.mxu0
      %v3774 = vadd.f32 0.0, %v3773
      %3775 = vmatmul.bf16.gmra.mxu0 %v3316
      %v3776 = vpop.f32.mrf.mxu0
      %v3777 = vadd.f32 0.0, %v3776
      %v3778 = vpop.f32.mrf.mxu0
      %v3779 = vadd.f32 0.0, %v3778
      %3780 = vmatmul.bf16.gmra.mxu0 %v3317
      %v3781 = vpop.f32.mrf.mxu0
      %v3782 = vadd.f32 0.0, %v3781
      %v3783 = vpop.f32.mrf.mxu0
      %v3784 = vadd.f32 0.0, %v3783
      %3785 = vmatmul.bf16.gmra.mxu0 %v3318
      %v3786 = vpop.f32.mrf.mxu0
      %v3787 = vadd.f32 0.0, %v3786
      %v3788 = vpop.f32.mrf.mxu0
      %v3789 = vadd.f32 0.0, %v3788
      %3790 = vmatmul.bf16.gmra.mxu0 %v3319
      %v3791 = vpop.f32.mrf.mxu0
      %v3792 = vadd.f32 0.0, %v3791
      %v3793 = vpop.f32.mrf.mxu0
      %v3794 = vadd.f32 0.0, %v3793
      %3795 = vmatmul.bf16.gmra.mxu0 %v3320
      %v3796 = vpop.f32.mrf.mxu0
      %v3797 = vadd.f32 0.0, %v3796
      %v3798 = vpop.f32.mrf.mxu0
      %v3799 = vadd.f32 0.0, %v3798
      %3800 = vmatmul.bf16.gmra.mxu0 %v3321
      %v3801 = vpop.f32.mrf.mxu0
      %v3802 = vadd.f32 0.0, %v3801
      %v3803 = vpop.f32.mrf.mxu0
      %v3804 = vadd.f32 0.0, %v3803
      %3805 = vmatmul.bf16.gmra.mxu0 %v3322
      %v3806 = vpop.f32.mrf.mxu0
      %v3807 = vadd.f32 0.0, %v3806
      %v3808 = vpop.f32.mrf.mxu0
      %v3809 = vadd.f32 0.0, %v3808
      %3810 = vmatmul.bf16.gmra.mxu0 %v3323
      %v3811 = vpop.f32.mrf.mxu0
      %v3812 = vadd.f32 0.0, %v3811
      %v3813 = vpop.f32.mrf.mxu0
      %v3814 = vadd.f32 0.0, %v3813
      %3815 = vmatmul.bf16.gmra.mxu0 %v3324
      %v3816 = vpop.f32.mrf.mxu0
      %v3817 = vadd.f32 0.0, %v3816
      %v3818 = vpop.f32.mrf.mxu0
      %v3819 = vadd.f32 0.0, %v3818
      %3820 = vmatmul.bf16.gmra.mxu0 %v3325
      %v3821 = vpop.f32.mrf.mxu0
      %v3822 = vadd.f32 0.0, %v3821
      %v3823 = vpop.f32.mrf.mxu0
      %v3824 = vadd.f32 0.0, %v3823
      %3825 = vmatmul.bf16.gmra.mxu0 %v3326
      %v3826 = vpop.f32.mrf.mxu0
      %v3827 = vadd.f32 0.0, %v3826
      %v3828 = vpop.f32.mrf.mxu0
      %v3829 = vadd.f32 0.0, %v3828
      %3830 = vmatmul.bf16.gmra.mxu0 %v3327
      %v3831 = vpop.f32.mrf.mxu0
      %v3832 = vadd.f32 0.0, %v3831
      %v3833 = vpop.f32.mrf.mxu0
      %v3834 = vadd.f32 0.0, %v3833
      %3835 = vmatmul.bf16.gmra.mxu0 %v3328
      %v3836 = vpop.f32.mrf.mxu0
      %v3837 = vadd.f32 0.0, %v3836
      %v3838 = vpop.f32.mrf.mxu0
      %v3839 = vadd.f32 0.0, %v3838
      %3840 = vmatmul.bf16.gmra.mxu0 %v3329
      %v3841 = vpop.f32.mrf.mxu0
      %v3842 = vadd.f32 0.0, %v3841
      %v3843 = vpop.f32.mrf.mxu0
      %v3844 = vadd.f32 0.0, %v3843
      %3845 = vmatmul.bf16.gmra.mxu0 %v3330
      %v3846 = vpop.f32.mrf.mxu0
      %v3847 = vadd.f32 0.0, %v3846
      %v3848 = vpop.f32.mrf.mxu0
      %v3849 = vadd.f32 0.0, %v3848
      %3850 = vmatmul.bf16.gmra.mxu0 %v3331
      %v3851 = vpop.f32.mrf.mxu0
      %v3852 = vadd.f32 0.0, %v3851
      %v3853 = vpop.f32.mrf.mxu0
      %v3854 = vadd.f32 0.0, %v3853
      %3855 = vmatmul.bf16.gmra.mxu0 %v3332
      %v3856 = vpop.f32.mrf.mxu0
      %v3857 = vadd.f32 0.0, %v3856
      %v3858 = vpop.f32.mrf.mxu0
      %v3859 = vadd.f32 0.0, %v3858
      %3860 = vmatmul.bf16.gmra.mxu0 %v3333
      %v3861 = vpop.f32.mrf.mxu0
      %v3862 = vadd.f32 0.0, %v3861
      %v3863 = vpop.f32.mrf.mxu0
      %v3864 = vadd.f32 0.0, %v3863
      %3865 = vmatmul.bf16.gmra.mxu0 %v3334
      %v3866 = vpop.f32.mrf.mxu0
      %v3867 = vadd.f32 0.0, %v3866
      %v3868 = vpop.f32.mrf.mxu0
      %v3869 = vadd.f32 0.0, %v3868
      %3870 = vmatmul.bf16.gmra.mxu0 %v3335
      %v3871 = vpop.f32.mrf.mxu0
      %v3872 = vadd.f32 0.0, %v3871
      %v3873 = vpop.f32.mrf.mxu0
      %v3874 = vadd.f32 0.0, %v3873
      %3875 = vmatmul.bf16.gmra.mxu0 %v3336
      %v3876 = vpop.f32.mrf.mxu0
      %v3877 = vadd.f32 0.0, %v3876
      %v3878 = vpop.f32.mrf.mxu0
      %v3879 = vadd.f32 0.0, %v3878
      %3880 = vmatmul.bf16.gmra.mxu0 %v3337
      %v3881 = vpop.f32.mrf.mxu0
      %v3882 = vadd.f32 0.0, %v3881
      %v3883 = vpop.f32.mrf.mxu0
      %v3884 = vadd.f32 0.0, %v3883
      %3885 = vmatmul.bf16.gmra.mxu0 %v3338
      %v3886 = vpop.f32.mrf.mxu0
      %v3887 = vadd.f32 0.0, %v3886
      %v3888 = vpop.f32.mrf.mxu0
      %3889 = vdwg.mxu0
      %v3890 = vadd.f32 %v2746, %v3502
      %v3891 = vadd.f32 %v2878, %v3634
      %v3892 = vadd.f32 %v3011, %v3767
      %v3893 = vadd.f32 %v2748, %v3504
      %v3894 = vadd.f32 %v2880, %v3636
      %v3895 = vadd.f32 %v3013, %v3769
      %v3896 = vadd.f32 %v2751, %v3507
      %v3897 = vadd.f32 %v2883, %v3639
      %v3898 = vadd.f32 %v3016, %v3772
      %v3899 = vadd.f32 %v2753, %v3509
      %v3900 = vadd.f32 %v2885, %v3641
      %v3901 = vadd.f32 %v3018, %v3774
      %v3902 = vadd.f32 %v2756, %v3512
      %v3903 = vadd.f32 %v2888, %v3644
      %v3904 = vadd.f32 %v3021, %v3777
      %v3905 = vadd.f32 %v2758, %v3514
      %v3906 = vadd.f32 %v2890, %v3646
      %v3907 = vadd.f32 %v3023, %v3779
      %v3908 = vadd.f32 %v2761, %v3517
      %v3909 = vadd.f32 %v2893, %v3649
      %v3910 = vadd.f32 %v3026, %v3782
      %v3911 = vadd.f32 %v2763, %v3519
      %v3912 = vadd.f32 %v2895, %v3651
      %v3913 = vadd.f32 %v3028, %v3784
      %v3914 = vadd.f32 %v2766, %v3522
      %v3915 = vadd.f32 %v2898, %v3654
      %v3916 = vadd.f32 %v3031, %v3787
      %v3917 = vadd.f32 %v2768, %v3524
      %v3918 = vadd.f32 %v2900, %v3656
      %v3919 = vadd.f32 %v3033, %v3789
      %v3920 = vadd.f32 %v2771, %v3527
      %v3921 = vadd.f32 %v2903, %v3659
      %v3922 = vadd.f32 %v3036, %v3792
      %v3923 = vadd.f32 %v2773, %v3529
      %v3924 = vadd.f32 %v2905, %v3661
      %v3925 = vadd.f32 %v3038, %v3794
      %v3926 = vadd.f32 %v2776, %v3532
      %v3927 = vadd.f32 %v2908, %v3664
      %v3928 = vadd.f32 %v3041, %v3797
      %v3929 = vadd.f32 %v2778, %v3534
      %v3930 = vadd.f32 %v2910, %v3666
      %v3931 = vadd.f32 %v3043, %v3799
      %v3932 = vadd.f32 %v2781, %v3537
      %v3933 = vadd.f32 %v2913, %v3669
      %v3934 = vadd.f32 %v3046, %v3802
      %v3935 = vadd.f32 %v2783, %v3539
      %v3936 = vadd.f32 %v2915, %v3671
      %v3937 = vadd.f32 %v3048, %v3804
      %v3938 = vadd.f32 %v2786, %v3542
      %v3939 = vadd.f32 %v2918, %v3674
      %v3940 = vadd.f32 %v3051, %v3807
      %v3941 = vadd.f32 %v2788, %v3544
      %v3942 = vadd.f32 %v2920, %v3676
      %v3943 = vadd.f32 %v3053, %v3809
      %v3944 = vadd.f32 %v2791, %v3547
      %v3945 = vadd.f32 %v2923, %v3679
      %v3946 = vadd.f32 %v3056, %v3812
      %v3947 = vadd.f32 %v2793, %v3549
      %v3948 = vadd.f32 %v2925, %v3681
      %v3949 = vadd.f32 %v3058, %v3814
      %v3950 = vadd.f32 %v2796, %v3552
      %v3951 = vadd.f32 %v2928, %v3684
      %v3952 = vadd.f32 %v3061, %v3817
      %v3953 = vadd.f32 %v2798, %v3554
      %v3954 = vadd.f32 %v2930, %v3686
      %v3955 = vadd.f32 %v3063, %v3819
      %v3956 = vadd.f32 %v2801, %v3557
      %v3957 = vadd.f32 %v2933, %v3689
      %v3958 = vadd.f32 %v3066, %v3822
      %v3959 = vadd.f32 %v2803, %v3559
      %v3960 = vadd.f32 %v2935, %v3691
      %v3961 = vadd.f32 %v3068, %v3824
      %v3962 = vadd.f32 %v2806, %v3562
      %v3963 = vadd.f32 %v2938, %v3694
      %v3964 = vadd.f32 %v3071, %v3827
      %v3965 = vadd.f32 %v2808, %v3564
      %v3966 = vadd.f32 %v2940, %v3696
      %v3967 = vadd.f32 %v3073, %v3829
      %v3968 = vadd.f32 %v2811, %v3567
      %v3969 = vadd.f32 %v2943, %v3699
      %v3970 = vadd.f32 %v3076, %v3832
      %v3971 = vadd.f32 %v2813, %v3569
      %v3972 = vadd.f32 %v2945, %v3701
      %v3973 = vadd.f32 %v3078, %v3834
      %v3974 = vadd.f32 %v2816, %v3572
      %v3975 = vadd.f32 %v2948, %v3704
      %v3976 = vadd.f32 %v3081, %v3837
      %v3977 = vadd.f32 %v2818, %v3574
      %v3978 = vadd.f32 %v2950, %v3706
      %v3979 = vadd.f32 %v3083, %v3839
      %v3980 = vadd.f32 %v2821, %v3577
      %v3981 = vadd.f32 %v2953, %v3709
      %v3982 = vadd.f32 %v3086, %v3842
      %v3983 = vadd.f32 %v2823, %v3579
      %v3984 = vadd.f32 %v2955, %v3711
      %v3985 = vadd.f32 %v3088, %v3844
      %v3986 = vadd.f32 %v2826, %v3582
      %v3987 = vadd.f32 %v2958, %v3714
      %v3988 = vadd.f32 %v3091, %v3847
      %v3989 = vadd.f32 %v2828, %v3584
      %v3990 = vadd.f32 %v2960, %v3716
      %v3991 = vadd.f32 %v3093, %v3849
      %v3992 = vadd.f32 %v2831, %v3587
      %v3993 = vadd.f32 %v2963, %v3719
      %v3994 = vadd.f32 %v3096, %v3852
      %v3995 = vadd.f32 %v2833, %v3589
      %v3996 = vadd.f32 %v2965, %v3721
      %v3997 = vadd.f32 %v3098, %v3854
      %v3998 = vadd.f32 %v2836, %v3592
      %v3999 = vadd.f32 %v2968, %v3724
      %v4000 = vadd.f32 %v3101, %v3857
      %v4001 = vadd.f32 %v2838, %v3594
      %v4002 = vadd.f32 %v2970, %v3726
      %v4003 = vadd.f32 %v3103, %v3859
      %v4004 = vadd.f32 %v2841, %v3597
      %v4005 = vadd.f32 %v2973, %v3729
      %v4006 = vadd.f32 %v3106, %v3862
      %v4007 = vadd.f32 %v2843, %v3599
      %v4008 = vadd.f32 %v2975, %v3731
      %v4009 = vadd.f32 %v3108, %v3864
      %v4010 = vadd.f32 %v2846, %v3602
      %v4011 = vadd.f32 %v2978, %v3734
      %v4012 = vadd.f32 %v3111, %v3867
      %v4013 = vadd.f32 %v2848, %v3604
      %v4014 = vadd.f32 %v2980, %v3736
      %v4015 = vadd.f32 %v3113, %v3869
      %v4016 = vadd.f32 %v2851, %v3607
      %v4017 = vadd.f32 %v2983, %v3739
      %v4018 = vadd.f32 %v3116, %v3872
      %v4019 = vadd.f32 %v2853, %v3609
      %v4020 = vadd.f32 %v2985, %v3741
      %v4021 = vadd.f32 %v3118, %v3874
      %v4022 = vadd.f32 %v2856, %v3612
      %v4023 = vadd.f32 %v2988, %v3744
      %v4024 = vadd.f32 %v3121, %v3877
      %v4025 = vadd.f32 %v2858, %v3614
      %v4026 = vadd.f32 %v2990, %v3746
      %v4027 = vadd.f32 %v3123, %v3879
      %v4028 = vadd.f32 %v2861, %v3617
      %v4029 = vadd.f32 %v2993, %v3749
      %v4030 = vadd.f32 %v3126, %v3882
      %v4031 = vadd.f32 %v2863, %v3619
      %v4032 = vadd.f32 %v2995, %v3751
      %v4033 = vadd.f32 %v3128, %v3884
      %v4034 = vadd.f32 %v2998, %v3754
      %v4035 = vadd.f32 %v3131, %v3887
      %vm4085 = vcmask 1046528
      %v4086 = vrot.slane %v3891, 1
      %v4087 = vrot.slane %v3894, 1
      %v4088 = vsel %vm4085, %v4086, %v4087
      %v4089 = vrot.slane %v3897, 1
      %v4090 = vsel %vm4085, %v4087, %v4089
      %v4091 = vrot.slane %v3900, 1
      %v4092 = vsel %vm4085, %v4089, %v4091
      %v4093 = vrot.slane %v3903, 1
      %v4094 = vsel %vm4085, %v4091, %v4093
      %v4095 = vrot.slane %v3906, 1
      %v4096 = vsel %vm4085, %v4093, %v4095
      %v4097 = vrot.slane %v3909, 1
      %v4098 = vsel %vm4085, %v4095, %v4097
      %v4099 = vrot.slane %v3912, 1
      %v4100 = vsel %vm4085, %v4097, %v4099
      %v4101 = vrot.slane %v3915, 1
      %v4102 = vsel %vm4085, %v4099, %v4101
      %v4103 = vrot.slane %v3918, 1
      %v4104 = vsel %vm4085, %v4101, %v4103
      %v4105 = vrot.slane %v3921, 1
      %v4106 = vsel %vm4085, %v4103, %v4105
      %v4107 = vrot.slane %v3924, 1
      %v4108 = vsel %vm4085, %v4105, %v4107
      %v4109 = vrot.slane %v3927, 1
      %v4110 = vsel %vm4085, %v4107, %v4109
      %v4111 = vrot.slane %v3930, 1
      %v4112 = vsel %vm4085, %v4109, %v4111
      %v4113 = vrot.slane %v3933, 1
      %v4114 = vsel %vm4085, %v4111, %v4113
      %v4115 = vrot.slane %v3936, 1
      %v4116 = vsel %vm4085, %v4113, %v4115
      %v4117 = vrot.slane %v3939, 1
      %v4118 = vsel %vm4085, %v4115, %v4117
      %v4119 = vrot.slane %v3942, 1
      %v4120 = vsel %vm4085, %v4117, %v4119
      %v4121 = vrot.slane %v3945, 1
      %v4122 = vsel %vm4085, %v4119, %v4121
      %v4123 = vrot.slane %v3948, 1
      %v4124 = vsel %vm4085, %v4121, %v4123
      %v4125 = vrot.slane %v3951, 1
      %v4126 = vsel %vm4085, %v4123, %v4125
      %v4127 = vrot.slane %v3954, 1
      %v4128 = vsel %vm4085, %v4125, %v4127
      %v4129 = vrot.slane %v3957, 1
      %v4130 = vsel %vm4085, %v4127, %v4129
      %v4131 = vrot.slane %v3960, 1
      %v4132 = vsel %vm4085, %v4129, %v4131
      %v4133 = vrot.slane %v3963, 1
      %v4134 = vsel %vm4085, %v4131, %v4133
      %v4135 = vrot.slane %v3966, 1
      %v4136 = vsel %vm4085, %v4133, %v4135
      %v4137 = vrot.slane %v3969, 1
      %v4138 = vsel %vm4085, %v4135, %v4137
      %v4139 = vrot.slane %v3972, 1
      %v4140 = vsel %vm4085, %v4137, %v4139
      %v4141 = vrot.slane %v3975, 1
      %v4142 = vsel %vm4085, %v4139, %v4141
      %v4143 = vrot.slane %v3978, 1
      %v4144 = vsel %vm4085, %v4141, %v4143
      %v4145 = vrot.slane %v3981, 1
      %v4146 = vsel %vm4085, %v4143, %v4145
      %v4147 = vrot.slane %v3984, 1
      %v4148 = vsel %vm4085, %v4145, %v4147
      %v4149 = vrot.slane %v3987, 1
      %v4150 = vsel %vm4085, %v4147, %v4149
      %v4151 = vrot.slane %v3990, 1
      %v4152 = vsel %vm4085, %v4149, %v4151
      %v4153 = vrot.slane %v3993, 1
      %v4154 = vsel %vm4085, %v4151, %v4153
      %v4155 = vrot.slane %v3996, 1
      %v4156 = vsel %vm4085, %v4153, %v4155
      %v4157 = vrot.slane %v3999, 1
      %v4158 = vsel %vm4085, %v4155, %v4157
      %v4159 = vrot.slane %v4002, 1
      %v4160 = vsel %vm4085, %v4157, %v4159
      %v4161 = vrot.slane %v4005, 1
      %v4162 = vsel %vm4085, %v4159, %v4161
      %v4163 = vrot.slane %v4008, 1
      %v4164 = vsel %vm4085, %v4161, %v4163
      %v4165 = vrot.slane %v4011, 1
      %v4166 = vsel %vm4085, %v4163, %v4165
      %v4167 = vrot.slane %v4014, 1
      %v4168 = vsel %vm4085, %v4165, %v4167
      %v4169 = vrot.slane %v4017, 1
      %v4170 = vsel %vm4085, %v4167, %v4169
      %v4171 = vrot.slane %v4020, 1
      %v4172 = vsel %vm4085, %v4169, %v4171
      %v4173 = vrot.slane %v4023, 1
      %v4174 = vsel %vm4085, %v4171, %v4173
      %v4175 = vrot.slane %v4026, 1
      %v4176 = vsel %vm4085, %v4173, %v4175
      %v4177 = vrot.slane %v4029, 1
      %v4178 = vsel %vm4085, %v4175, %v4177
      %v4179 = vrot.slane %v4032, 1
      %v4180 = vsel %vm4085, %v4177, %v4179
      %v4181 = vrot.slane %v4034, 1
      %v4182 = vsel %vm4085, %v4179, %v4181
      %v4231 = vadd.f32 %v3890, %v4088
      %v4232 = vadd.f32 %v3893, %v4090
      %v4233 = vadd.f32 %v3896, %v4092
      %v4234 = vadd.f32 %v3899, %v4094
      %v4235 = vadd.f32 %v3902, %v4096
      %v4236 = vadd.f32 %v3905, %v4098
      %v4237 = vadd.f32 %v3908, %v4100
      %v4238 = vadd.f32 %v3911, %v4102
      %v4239 = vadd.f32 %v3914, %v4104
      %v4240 = vadd.f32 %v3917, %v4106
      %v4241 = vadd.f32 %v3920, %v4108
      %v4242 = vadd.f32 %v3923, %v4110
      %v4243 = vadd.f32 %v3926, %v4112
      %v4244 = vadd.f32 %v3929, %v4114
      %v4245 = vadd.f32 %v3932, %v4116
      %v4246 = vadd.f32 %v3935, %v4118
      %v4247 = vadd.f32 %v3938, %v4120
      %v4248 = vadd.f32 %v3941, %v4122
      %v4249 = vadd.f32 %v3944, %v4124
      %v4250 = vadd.f32 %v3947, %v4126
      %v4251 = vadd.f32 %v3950, %v4128
      %v4252 = vadd.f32 %v3953, %v4130
      %v4253 = vadd.f32 %v3956, %v4132
      %v4254 = vadd.f32 %v3959, %v4134
      %v4255 = vadd.f32 %v3962, %v4136
      %v4256 = vadd.f32 %v3965, %v4138
      %v4257 = vadd.f32 %v3968, %v4140
      %v4258 = vadd.f32 %v3971, %v4142
      %v4259 = vadd.f32 %v3974, %v4144
      %v4260 = vadd.f32 %v3977, %v4146
      %v4261 = vadd.f32 %v3980, %v4148
      %v4262 = vadd.f32 %v3983, %v4150
      %v4263 = vadd.f32 %v3986, %v4152
      %v4264 = vadd.f32 %v3989, %v4154
      %v4265 = vadd.f32 %v3992, %v4156
      %v4266 = vadd.f32 %v3995, %v4158
      %v4267 = vadd.f32 %v3998, %v4160
      %v4268 = vadd.f32 %v4001, %v4162
      %v4269 = vadd.f32 %v4004, %v4164
      %v4270 = vadd.f32 %v4007, %v4166
      %v4271 = vadd.f32 %v4010, %v4168
      %v4272 = vadd.f32 %v4013, %v4170
      %v4273 = vadd.f32 %v4016, %v4172
      %v4274 = vadd.f32 %v4019, %v4174
      %v4275 = vadd.f32 %v4022, %v4176
      %v4276 = vadd.f32 %v4025, %v4178
      %v4277 = vadd.f32 %v4028, %v4180
      %v4278 = vadd.f32 %v4031, %v4182
      %vm4328 = vcmask 1045504
      %v4329 = vrot.slane %v3892, 2
      %v4330 = vrot.slane %v3895, 2
      %v4331 = vsel %vm4328, %v4329, %v4330
      %v4332 = vrot.slane %v3898, 2
      %v4333 = vsel %vm4328, %v4330, %v4332
      %v4334 = vrot.slane %v3901, 2
      %v4335 = vsel %vm4328, %v4332, %v4334
      %v4336 = vrot.slane %v3904, 2
      %v4337 = vsel %vm4328, %v4334, %v4336
      %v4338 = vrot.slane %v3907, 2
      %v4339 = vsel %vm4328, %v4336, %v4338
      %v4340 = vrot.slane %v3910, 2
      %v4341 = vsel %vm4328, %v4338, %v4340
      %v4342 = vrot.slane %v3913, 2
      %v4343 = vsel %vm4328, %v4340, %v4342
      %v4344 = vrot.slane %v3916, 2
      %v4345 = vsel %vm4328, %v4342, %v4344
      %v4346 = vrot.slane %v3919, 2
      %v4347 = vsel %vm4328, %v4344, %v4346
      %v4348 = vrot.slane %v3922, 2
      %v4349 = vsel %vm4328, %v4346, %v4348
      %v4350 = vrot.slane %v3925, 2
      %v4351 = vsel %vm4328, %v4348, %v4350
      %v4352 = vrot.slane %v3928, 2
      %v4353 = vsel %vm4328, %v4350, %v4352
      %v4354 = vrot.slane %v3931, 2
      %v4355 = vsel %vm4328, %v4352, %v4354
      %v4356 = vrot.slane %v3934, 2
      %v4357 = vsel %vm4328, %v4354, %v4356
      %v4358 = vrot.slane %v3937, 2
      %v4359 = vsel %vm4328, %v4356, %v4358
      %v4360 = vrot.slane %v3940, 2
      %v4361 = vsel %vm4328, %v4358, %v4360
      %v4362 = vrot.slane %v3943, 2
      %v4363 = vsel %vm4328, %v4360, %v4362
      %v4364 = vrot.slane %v3946, 2
      %v4365 = vsel %vm4328, %v4362, %v4364
      %v4366 = vrot.slane %v3949, 2
      %v4367 = vsel %vm4328, %v4364, %v4366
      %v4368 = vrot.slane %v3952, 2
      %v4369 = vsel %vm4328, %v4366, %v4368
      %v4370 = vrot.slane %v3955, 2
      %v4371 = vsel %vm4328, %v4368, %v4370
      %v4372 = vrot.slane %v3958, 2
      %v4373 = vsel %vm4328, %v4370, %v4372
      %v4374 = vrot.slane %v3961, 2
      %v4375 = vsel %vm4328, %v4372, %v4374
      %v4376 = vrot.slane %v3964, 2
      %v4377 = vsel %vm4328, %v4374, %v4376
      %v4378 = vrot.slane %v3967, 2
      %v4379 = vsel %vm4328, %v4376, %v4378
      %v4380 = vrot.slane %v3970, 2
      %v4381 = vsel %vm4328, %v4378, %v4380
      %v4382 = vrot.slane %v3973, 2
      %v4383 = vsel %vm4328, %v4380, %v4382
      %v4384 = vrot.slane %v3976, 2
      %v4385 = vsel %vm4328, %v4382, %v4384
      %v4386 = vrot.slane %v3979, 2
      %v4387 = vsel %vm4328, %v4384, %v4386
      %v4388 = vrot.slane %v3982, 2
      %v4389 = vsel %vm4328, %v4386, %v4388
      %v4390 = vrot.slane %v3985, 2
      %v4391 = vsel %vm4328, %v4388, %v4390
      %v4392 = vrot.slane %v3988, 2
      %v4393 = vsel %vm4328, %v4390, %v4392
      %v4394 = vrot.slane %v3991, 2
      %v4395 = vsel %vm4328, %v4392, %v4394
      %v4396 = vrot.slane %v3994, 2
      %v4397 = vsel %vm4328, %v4394, %v4396
      %v4398 = vrot.slane %v3997, 2
      %v4399 = vsel %vm4328, %v4396, %v4398
      %v4400 = vrot.slane %v4000, 2
      %v4401 = vsel %vm4328, %v4398, %v4400
      %v4402 = vrot.slane %v4003, 2
      %v4403 = vsel %vm4328, %v4400, %v4402
      %v4404 = vrot.slane %v4006, 2
      %v4405 = vsel %vm4328, %v4402, %v4404
      %v4406 = vrot.slane %v4009, 2
      %v4407 = vsel %vm4328, %v4404, %v4406
      %v4408 = vrot.slane %v4012, 2
      %v4409 = vsel %vm4328, %v4406, %v4408
      %v4410 = vrot.slane %v4015, 2
      %v4411 = vsel %vm4328, %v4408, %v4410
      %v4412 = vrot.slane %v4018, 2
      %v4413 = vsel %vm4328, %v4410, %v4412
      %v4414 = vrot.slane %v4021, 2
      %v4415 = vsel %vm4328, %v4412, %v4414
      %v4416 = vrot.slane %v4024, 2
      %v4417 = vsel %vm4328, %v4414, %v4416
      %v4418 = vrot.slane %v4027, 2
      %v4419 = vsel %vm4328, %v4416, %v4418
      %v4420 = vrot.slane %v4030, 2
      %v4421 = vsel %vm4328, %v4418, %v4420
      %v4422 = vrot.slane %v4033, 2
      %v4423 = vsel %vm4328, %v4420, %v4422
      %v4424 = vrot.slane %v4035, 2
      %v4425 = vsel %vm4328, %v4422, %v4424
      %v4474 = vadd.f32 %v4231, %v4331
      %v4475 = vadd.f32 %v4232, %v4333
      %v4476 = vadd.f32 %v4233, %v4335
      %v4477 = vadd.f32 %v4234, %v4337
      %v4478 = vadd.f32 %v4235, %v4339
      %v4479 = vadd.f32 %v4236, %v4341
      %v4480 = vadd.f32 %v4237, %v4343
      %v4481 = vadd.f32 %v4238, %v4345
      %v4482 = vadd.f32 %v4239, %v4347
      %v4483 = vadd.f32 %v4240, %v4349
      %v4484 = vadd.f32 %v4241, %v4351
      %v4485 = vadd.f32 %v4242, %v4353
      %v4486 = vadd.f32 %v4243, %v4355
      %v4487 = vadd.f32 %v4244, %v4357
      %v4488 = vadd.f32 %v4245, %v4359
      %v4489 = vadd.f32 %v4246, %v4361
      %v4490 = vadd.f32 %v4247, %v4363
      %v4491 = vadd.f32 %v4248, %v4365
      %v4492 = vadd.f32 %v4249, %v4367
      %v4493 = vadd.f32 %v4250, %v4369
      %v4494 = vadd.f32 %v4251, %v4371
      %v4495 = vadd.f32 %v4252, %v4373
      %v4496 = vadd.f32 %v4253, %v4375
      %v4497 = vadd.f32 %v4254, %v4377
      %v4498 = vadd.f32 %v4255, %v4379
      %v4499 = vadd.f32 %v4256, %v4381
      %v4500 = vadd.f32 %v4257, %v4383
      %v4501 = vadd.f32 %v4258, %v4385
      %v4502 = vadd.f32 %v4259, %v4387
      %v4503 = vadd.f32 %v4260, %v4389
      %v4504 = vadd.f32 %v4261, %v4391
      %v4505 = vadd.f32 %v4262, %v4393
      %v4506 = vadd.f32 %v4263, %v4395
      %v4507 = vadd.f32 %v4264, %v4397
      %v4508 = vadd.f32 %v4265, %v4399
      %v4509 = vadd.f32 %v4266, %v4401
      %v4510 = vadd.f32 %v4267, %v4403
      %v4511 = vadd.f32 %v4268, %v4405
      %v4512 = vadd.f32 %v4269, %v4407
      %v4513 = vadd.f32 %v4270, %v4409
      %v4514 = vadd.f32 %v4271, %v4411
      %v4515 = vadd.f32 %v4272, %v4413
      %v4516 = vadd.f32 %v4273, %v4415
      %v4517 = vadd.f32 %v4274, %v4417
      %v4518 = vadd.f32 %v4275, %v4419
      %v4519 = vadd.f32 %v4276, %v4421
      %v4520 = vadd.f32 %v4277, %v4423
      %v4521 = vadd.f32 %v4278, %v4425
      %v4522 = vld [vmem:[%s5] sm:$0xff]
      %v4523 = vld [vmem:[%s5 + $0x8] sm:$0xff]
      %v4524 = vld [vmem:[%s5 + $0x10] sm:$0xff]
      %v4525 = vld [vmem:[%s5 + $0x18] sm:$0xff]
      %v4526 = vld [vmem:[%s5 + $0x20] sm:$0xff]
      %v4527 = vld [vmem:[%s5 + $0x28] sm:$0xff]
      %v4528 = vld [vmem:[%s5 + $0x30] sm:$0xff]
      %v4529 = vld [vmem:[%s5 + $0x38] sm:$0xff]
      %v4530 = vld [vmem:[%s5 + $0x40] sm:$0xff]
      %v4531 = vld [vmem:[%s5 + $0x48] sm:$0xff]
      %v4532 = vld [vmem:[%s5 + $0x50] sm:$0xff]
      %v4533 = vld [vmem:[%s5 + $0x58] sm:$0xff]
      %v4534 = vld [vmem:[%s5 + $0x60] sm:$0xff]
      %v4535 = vld [vmem:[%s5 + $0x68] sm:$0xff]
      %v4536 = vld [vmem:[%s5 + $0x70] sm:$0xff]
      %v4537 = vld [vmem:[%s5 + $0x78] sm:$0xff]
      %v4538 = vld [vmem:[%s5 + $0x80] sm:$0xff]
      %v4539 = vld [vmem:[%s5 + $0x88] sm:$0xff]
      %v4540 = vld [vmem:[%s5 + $0x90] sm:$0xff]
      %v4541 = vld [vmem:[%s5 + $0x98] sm:$0xff]
      %v4542 = vld [vmem:[%s5 + $0xa0] sm:$0xff]
      %v4543 = vld [vmem:[%s5 + $0xa8] sm:$0xff]
      %v4544 = vld [vmem:[%s5 + $0xb0] sm:$0xff]
      %v4545 = vld [vmem:[%s5 + $0xb8] sm:$0xff]
      %v4546 = vld [vmem:[%s5 + $0xc0] sm:$0xff]
      %v4547 = vld [vmem:[%s5 + $0xc8] sm:$0xff]
      %v4548 = vld [vmem:[%s5 + $0xd0] sm:$0xff]
      %v4549 = vld [vmem:[%s5 + $0xd8] sm:$0xff]
      %v4550 = vld [vmem:[%s5 + $0xe0] sm:$0xff]
      %v4551 = vld [vmem:[%s5 + $0xe8] sm:$0xff]
      %v4552 = vld [vmem:[%s5 + $0xf0] sm:$0xff]
      %v4553 = vld [vmem:[%s5 + $0xf8] sm:$0xff]
      %v4554 = vld [vmem:[%s5 + $0x100] sm:$0xff]
      %v4555 = vld [vmem:[%s5 + $0x108] sm:$0xff]
      %v4556 = vld [vmem:[%s5 + $0x110] sm:$0xff]
      %v4557 = vld [vmem:[%s5 + $0x118] sm:$0xff]
      %v4558 = vld [vmem:[%s5 + $0x120] sm:$0xff]
      %v4559 = vld [vmem:[%s5 + $0x128] sm:$0xff]
      %v4560 = vld [vmem:[%s5 + $0x130] sm:$0xff]
      %v4561 = vld [vmem:[%s5 + $0x138] sm:$0xff]
      %v4562 = vld [vmem:[%s5 + $0x140] sm:$0xff]
      %v4563 = vld [vmem:[%s5 + $0x148] sm:$0xff]
      %v4564 = vld [vmem:[%s5 + $0x150] sm:$0xff]
      %v4565 = vld [vmem:[%s5 + $0x158] sm:$0xff]
      %v4566 = vld [vmem:[%s5 + $0x160] sm:$0xff]
      %v4567 = vld [vmem:[%s5 + $0x168] sm:$0xff]
      %v4568 = vld [vmem:[%s5 + $0x170] sm:$0xff]
      %v4569 = vld [vmem:[%s5 + $0x178] sm:$0xff]
      %4571 = vset.pattern.permute.xlu0 0
      %4572 = vperm.xlu0 %4571, %v4522
      %v4573 = vpop.permute.xlu0 %4572
      %4576 = vset.pattern.permute.xlu0 0
      %4577 = vperm.xlu0 %4576, %v4523
      %v4578 = vpop.permute.xlu0 %4577
      %4581 = vset.pattern.permute.xlu0 0
      %4582 = vperm.xlu0 %4581, %v4524
      %v4583 = vpop.permute.xlu0 %4582
      %4586 = vset.pattern.permute.xlu0 0
      %4587 = vperm.xlu0 %4586, %v4525
      %v4588 = vpop.permute.xlu0 %4587
      %4591 = vset.pattern.permute.xlu0 0
      %4592 = vperm.xlu0 %4591, %v4526
      %v4593 = vpop.permute.xlu0 %4592
      %4596 = vset.pattern.permute.xlu0 0
      %4597 = vperm.xlu0 %4596, %v4527
      %v4598 = vpop.permute.xlu0 %4597
      %4601 = vset.pattern.permute.xlu0 0
      %4602 = vperm.xlu0 %4601, %v4528
      %v4603 = vpop.permute.xlu0 %4602
      %4606 = vset.pattern.permute.xlu0 0
      %4607 = vperm.xlu0 %4606, %v4529
      %v4608 = vpop.permute.xlu0 %4607
      %4611 = vset.pattern.permute.xlu0 0
      %4612 = vperm.xlu0 %4611, %v4530
      %v4613 = vpop.permute.xlu0 %4612
      %4616 = vset.pattern.permute.xlu0 0
      %4617 = vperm.xlu0 %4616, %v4531
      %v4618 = vpop.permute.xlu0 %4617
      %4621 = vset.pattern.permute.xlu0 0
      %4622 = vperm.xlu0 %4621, %v4532
      %v4623 = vpop.permute.xlu0 %4622
      %4626 = vset.pattern.permute.xlu0 0
      %4627 = vperm.xlu0 %4626, %v4533
      %v4628 = vpop.permute.xlu0 %4627
      %4631 = vset.pattern.permute.xlu0 0
      %4632 = vperm.xlu0 %4631, %v4534
      %v4633 = vpop.permute.xlu0 %4632
      %4636 = vset.pattern.permute.xlu0 0
      %4637 = vperm.xlu0 %4636, %v4535
      %v4638 = vpop.permute.xlu0 %4637
      %4641 = vset.pattern.permute.xlu0 0
      %4642 = vperm.xlu0 %4641, %v4536
      %v4643 = vpop.permute.xlu0 %4642
      %4646 = vset.pattern.permute.xlu0 0
      %4647 = vperm.xlu0 %4646, %v4537
      %v4648 = vpop.permute.xlu0 %4647
      %4651 = vset.pattern.permute.xlu0 0
      %4652 = vperm.xlu0 %4651, %v4538
      %v4653 = vpop.permute.xlu0 %4652
      %4656 = vset.pattern.permute.xlu0 0
      %4657 = vperm.xlu0 %4656, %v4539
      %v4658 = vpop.permute.xlu0 %4657
      %4661 = vset.pattern.permute.xlu0 0
      %4662 = vperm.xlu0 %4661, %v4540
      %v4663 = vpop.permute.xlu0 %4662
      %4666 = vset.pattern.permute.xlu0 0
      %4667 = vperm.xlu0 %4666, %v4541
      %v4668 = vpop.permute.xlu0 %4667
      %4671 = vset.pattern.permute.xlu0 0
      %4672 = vperm.xlu0 %4671, %v4542
      %v4673 = vpop.permute.xlu0 %4672
      %4676 = vset.pattern.permute.xlu0 0
      %4677 = vperm.xlu0 %4676, %v4543
      %v4678 = vpop.permute.xlu0 %4677
      %4681 = vset.pattern.permute.xlu0 0
      %4682 = vperm.xlu0 %4681, %v4544
      %v4683 = vpop.permute.xlu0 %4682
      %4686 = vset.pattern.permute.xlu0 0
      %4687 = vperm.xlu0 %4686, %v4545
      %v4688 = vpop.permute.xlu0 %4687
      %4691 = vset.pattern.permute.xlu0 0
      %4692 = vperm.xlu0 %4691, %v4546
      %v4693 = vpop.permute.xlu0 %4692
      %4696 = vset.pattern.permute.xlu0 0
      %4697 = vperm.xlu0 %4696, %v4547
      %v4698 = vpop.permute.xlu0 %4697
      %4701 = vset.pattern.permute.xlu0 0
      %4702 = vperm.xlu0 %4701, %v4548
      %v4703 = vpop.permute.xlu0 %4702
      %4706 = vset.pattern.permute.xlu0 0
      %4707 = vperm.xlu0 %4706, %v4549
      %v4708 = vpop.permute.xlu0 %4707
      %4711 = vset.pattern.permute.xlu0 0
      %4712 = vperm.xlu0 %4711, %v4550
      %v4713 = vpop.permute.xlu0 %4712
      %4716 = vset.pattern.permute.xlu0 0
      %4717 = vperm.xlu0 %4716, %v4551
      %v4718 = vpop.permute.xlu0 %4717
      %4721 = vset.pattern.permute.xlu0 0
      %4722 = vperm.xlu0 %4721, %v4552
      %v4723 = vpop.permute.xlu0 %4722
      %4726 = vset.pattern.permute.xlu0 0
      %4727 = vperm.xlu0 %4726, %v4553
      %v4728 = vpop.permute.xlu0 %4727
      %4731 = vset.pattern.permute.xlu0 0
      %4732 = vperm.xlu0 %4731, %v4554
      %v4733 = vpop.permute.xlu0 %4732
      %4736 = vset.pattern.permute.xlu0 0
      %4737 = vperm.xlu0 %4736, %v4555
      %v4738 = vpop.permute.xlu0 %4737
      %4741 = vset.pattern.permute.xlu0 0
      %4742 = vperm.xlu0 %4741, %v4556
      %v4743 = vpop.permute.xlu0 %4742
      %4746 = vset.pattern.permute.xlu0 0
      %4747 = vperm.xlu0 %4746, %v4557
      %v4748 = vpop.permute.xlu0 %4747
      %4751 = vset.pattern.permute.xlu0 0
      %4752 = vperm.xlu0 %4751, %v4558
      %v4753 = vpop.permute.xlu0 %4752
      %4756 = vset.pattern.permute.xlu0 0
      %4757 = vperm.xlu0 %4756, %v4559
      %v4758 = vpop.permute.xlu0 %4757
      %4761 = vset.pattern.permute.xlu0 0
      %4762 = vperm.xlu0 %4761, %v4560
      %v4763 = vpop.permute.xlu0 %4762
      %4766 = vset.pattern.permute.xlu0 0
      %4767 = vperm.xlu0 %4766, %v4561
      %v4768 = vpop.permute.xlu0 %4767
      %4771 = vset.pattern.permute.xlu0 0
      %4772 = vperm.xlu0 %4771, %v4562
      %v4773 = vpop.permute.xlu0 %4772
      %4776 = vset.pattern.permute.xlu0 0
      %4777 = vperm.xlu0 %4776, %v4563
      %v4778 = vpop.permute.xlu0 %4777
      %4781 = vset.pattern.permute.xlu0 0
      %4782 = vperm.xlu0 %4781, %v4564
      %v4783 = vpop.permute.xlu0 %4782
      %4786 = vset.pattern.permute.xlu0 0
      %4787 = vperm.xlu0 %4786, %v4565
      %v4788 = vpop.permute.xlu0 %4787
      %4791 = vset.pattern.permute.xlu0 0
      %4792 = vperm.xlu0 %4791, %v4566
      %v4793 = vpop.permute.xlu0 %4792
      %4796 = vset.pattern.permute.xlu0 0
      %4797 = vperm.xlu0 %4796, %v4567
      %v4798 = vpop.permute.xlu0 %4797
      %4801 = vset.pattern.permute.xlu0 0
      %4802 = vperm.xlu0 %4801, %v4568
      %v4803 = vpop.permute.xlu0 %4802
      %4806 = vset.pattern.permute.xlu0 0
      %4807 = vperm.xlu0 %4806, %v4569
      %v4808 = vpop.permute.xlu0 %4807
      %v4810 = vmul.f32 %v4474, %v4573
      %v4811 = vmul.f32 %v4475, %v4578
      %v4812 = vmul.f32 %v4476, %v4583
      %v4813 = vmul.f32 %v4477, %v4588
      %v4814 = vmul.f32 %v4478, %v4593
      %v4815 = vmul.f32 %v4479, %v4598
      %v4816 = vmul.f32 %v4480, %v4603
      %v4817 = vmul.f32 %v4481, %v4608
      %v4818 = vmul.f32 %v4482, %v4613
      %v4819 = vmul.f32 %v4483, %v4618
      %v4820 = vmul.f32 %v4484, %v4623
      %v4821 = vmul.f32 %v4485, %v4628
      %v4822 = vmul.f32 %v4486, %v4633
      %v4823 = vmul.f32 %v4487, %v4638
      %v4824 = vmul.f32 %v4488, %v4643
      %v4825 = vmul.f32 %v4489, %v4648
      %v4826 = vmul.f32 %v4490, %v4653
      %v4827 = vmul.f32 %v4491, %v4658
      %v4828 = vmul.f32 %v4492, %v4663
      %v4829 = vmul.f32 %v4493, %v4668
      %v4830 = vmul.f32 %v4494, %v4673
      %v4831 = vmul.f32 %v4495, %v4678
      %v4832 = vmul.f32 %v4496, %v4683
      %v4833 = vmul.f32 %v4497, %v4688
      %v4834 = vmul.f32 %v4498, %v4693
      %v4835 = vmul.f32 %v4499, %v4698
      %v4836 = vmul.f32 %v4500, %v4703
      %v4837 = vmul.f32 %v4501, %v4708
      %v4838 = vmul.f32 %v4502, %v4713
      %v4839 = vmul.f32 %v4503, %v4718
      %v4840 = vmul.f32 %v4504, %v4723
      %v4841 = vmul.f32 %v4505, %v4728
      %v4842 = vmul.f32 %v4506, %v4733
      %v4843 = vmul.f32 %v4507, %v4738
      %v4844 = vmul.f32 %v4508, %v4743
      %v4845 = vmul.f32 %v4509, %v4748
      %v4846 = vmul.f32 %v4510, %v4753
      %v4847 = vmul.f32 %v4511, %v4758
      %v4848 = vmul.f32 %v4512, %v4763
      %v4849 = vmul.f32 %v4513, %v4768
      %v4850 = vmul.f32 %v4514, %v4773
      %v4851 = vmul.f32 %v4515, %v4778
      %v4852 = vmul.f32 %v4516, %v4783
      %v4853 = vmul.f32 %v4517, %v4788
      %v4854 = vmul.f32 %v4518, %v4793
      %v4855 = vmul.f32 %v4519, %v4798
      %v4856 = vmul.f32 %v4520, %v4803
      %v4857 = vmul.f32 %v4521, %v4808
      %v4858 = vadd.f32 %v4810, %v4811
      %v4859 = vadd.f32 %v4858, %v4812
      %v4860 = vadd.f32 %v4859, %v4813
      %v4861 = vadd.f32 %v4860, %v4814
      %v4862 = vadd.f32 %v4861, %v4815
      %v4863 = vadd.f32 %v4862, %v4816
      %v4864 = vadd.f32 %v4863, %v4817
      %v4865 = vadd.f32 %v4864, %v4818
      %v4866 = vadd.f32 %v4865, %v4819
      %v4867 = vadd.f32 %v4866, %v4820
      %v4868 = vadd.f32 %v4867, %v4821
      %v4869 = vadd.f32 %v4868, %v4822
      %v4870 = vadd.f32 %v4869, %v4823
      %v4871 = vadd.f32 %v4870, %v4824
      %v4872 = vadd.f32 %v4871, %v4825
      %v4873 = vadd.f32 %v4872, %v4826
      %v4874 = vadd.f32 %v4873, %v4827
      %v4875 = vadd.f32 %v4874, %v4828
      %v4876 = vadd.f32 %v4875, %v4829
      %v4877 = vadd.f32 %v4876, %v4830
      %v4878 = vadd.f32 %v4877, %v4831
      %v4879 = vadd.f32 %v4878, %v4832
      %v4880 = vadd.f32 %v4879, %v4833
      %v4881 = vadd.f32 %v4880, %v4834
      %v4882 = vadd.f32 %v4881, %v4835
      %v4883 = vadd.f32 %v4882, %v4836
      %v4884 = vadd.f32 %v4883, %v4837
      %v4885 = vadd.f32 %v4884, %v4838
      %v4886 = vadd.f32 %v4885, %v4839
      %v4887 = vadd.f32 %v4886, %v4840
      %v4888 = vadd.f32 %v4887, %v4841
      %v4889 = vadd.f32 %v4888, %v4842
      %v4890 = vadd.f32 %v4889, %v4843
      %v4891 = vadd.f32 %v4890, %v4844
      %v4892 = vadd.f32 %v4891, %v4845
      %v4893 = vadd.f32 %v4892, %v4846
      %v4894 = vadd.f32 %v4893, %v4847
      %v4895 = vadd.f32 %v4894, %v4848
      %v4896 = vadd.f32 %v4895, %v4849
      %v4897 = vadd.f32 %v4896, %v4850
      %v4898 = vadd.f32 %v4897, %v4851
      %v4899 = vadd.f32 %v4898, %v4852
      %v4900 = vadd.f32 %v4899, %v4853
      %v4901 = vadd.f32 %v4900, %v4854
      %v4902 = vadd.f32 %v4901, %v4855
      %v4903 = vadd.f32 %v4902, %v4856
      %v4904 = vadd.f32 %v4903, %v4857
      %v4905 = vrot.slane %v4904, 4
      %v4906 = vadd.f32 %v4904, %v4905
      %v4907 = vrot.slane %v4906, 2
      %v4908 = vadd.f32 %v4906, %v4907
      %v4909 = vrot.slane %v4908, 1
      %v4910 = vadd.f32 %v4908, %v4909
      %v4911 = vmul.f32 %v4810, %v4810
      %v4912 = vmul.f32 %v4811, %v4811
      %v4913 = vmul.f32 %v4812, %v4812
      %v4914 = vmul.f32 %v4813, %v4813
      %v4915 = vmul.f32 %v4814, %v4814
      %v4916 = vmul.f32 %v4815, %v4815
      %v4917 = vmul.f32 %v4816, %v4816
      %v4918 = vmul.f32 %v4817, %v4817
      %v4919 = vmul.f32 %v4818, %v4818
      %v4920 = vmul.f32 %v4819, %v4819
      %v4921 = vmul.f32 %v4820, %v4820
      %v4922 = vmul.f32 %v4821, %v4821
      %v4923 = vmul.f32 %v4822, %v4822
      %v4924 = vmul.f32 %v4823, %v4823
      %v4925 = vmul.f32 %v4824, %v4824
      %v4926 = vmul.f32 %v4825, %v4825
      %v4927 = vmul.f32 %v4826, %v4826
      %v4928 = vmul.f32 %v4827, %v4827
      %v4929 = vmul.f32 %v4828, %v4828
      %v4930 = vmul.f32 %v4829, %v4829
      %v4931 = vmul.f32 %v4830, %v4830
      %v4932 = vmul.f32 %v4831, %v4831
      %v4933 = vmul.f32 %v4832, %v4832
      %v4934 = vmul.f32 %v4833, %v4833
      %v4935 = vmul.f32 %v4834, %v4834
      %v4936 = vmul.f32 %v4835, %v4835
      %v4937 = vmul.f32 %v4836, %v4836
      %v4938 = vmul.f32 %v4837, %v4837
      %v4939 = vmul.f32 %v4838, %v4838
      %v4940 = vmul.f32 %v4839, %v4839
      %v4941 = vmul.f32 %v4840, %v4840
      %v4942 = vmul.f32 %v4841, %v4841
      %v4943 = vmul.f32 %v4842, %v4842
      %v4944 = vmul.f32 %v4843, %v4843
      %v4945 = vmul.f32 %v4844, %v4844
      %v4946 = vmul.f32 %v4845, %v4845
      %v4947 = vmul.f32 %v4846, %v4846
      %v4948 = vmul.f32 %v4847, %v4847
      %v4949 = vmul.f32 %v4848, %v4848
      %v4950 = vmul.f32 %v4849, %v4849
      %v4951 = vmul.f32 %v4850, %v4850
      %v4952 = vmul.f32 %v4851, %v4851
      %v4953 = vmul.f32 %v4852, %v4852
      %v4954 = vmul.f32 %v4853, %v4853
      %v4955 = vmul.f32 %v4854, %v4854
      %v4956 = vmul.f32 %v4855, %v4855
      %v4957 = vmul.f32 %v4856, %v4856
      %v4958 = vmul.f32 %v4857, %v4857
      %v4959 = vadd.f32 %v4911, %v4912
      %v4960 = vadd.f32 %v4959, %v4913
      %v4961 = vadd.f32 %v4960, %v4914
      %v4962 = vadd.f32 %v4961, %v4915
      %v4963 = vadd.f32 %v4962, %v4916
      %v4964 = vadd.f32 %v4963, %v4917
      %v4965 = vadd.f32 %v4964, %v4918
      %v4966 = vadd.f32 %v4965, %v4919
      %v4967 = vadd.f32 %v4966, %v4920
      %v4968 = vadd.f32 %v4967, %v4921
      %v4969 = vadd.f32 %v4968, %v4922
      %v4970 = vadd.f32 %v4969, %v4923
      %v4971 = vadd.f32 %v4970, %v4924
      %v4972 = vadd.f32 %v4971, %v4925
      %v4973 = vadd.f32 %v4972, %v4926
      %v4974 = vadd.f32 %v4973, %v4927
      %v4975 = vadd.f32 %v4974, %v4928
      %v4976 = vadd.f32 %v4975, %v4929
      %v4977 = vadd.f32 %v4976, %v4930
      %v4978 = vadd.f32 %v4977, %v4931
      %v4979 = vadd.f32 %v4978, %v4932
      %v4980 = vadd.f32 %v4979, %v4933
      %v4981 = vadd.f32 %v4980, %v4934
      %v4982 = vadd.f32 %v4981, %v4935
      %v4983 = vadd.f32 %v4982, %v4936
      %v4984 = vadd.f32 %v4983, %v4937
      %v4985 = vadd.f32 %v4984, %v4938
      %v4986 = vadd.f32 %v4985, %v4939
      %v4987 = vadd.f32 %v4986, %v4940
      %v4988 = vadd.f32 %v4987, %v4941
      %v4989 = vadd.f32 %v4988, %v4942
      %v4990 = vadd.f32 %v4989, %v4943
      %v4991 = vadd.f32 %v4990, %v4944
      %v4992 = vadd.f32 %v4991, %v4945
      %v4993 = vadd.f32 %v4992, %v4946
      %v4994 = vadd.f32 %v4993, %v4947
      %v4995 = vadd.f32 %v4994, %v4948
      %v4996 = vadd.f32 %v4995, %v4949
      %v4997 = vadd.f32 %v4996, %v4950
      %v4998 = vadd.f32 %v4997, %v4951
      %v4999 = vadd.f32 %v4998, %v4952
      %v5000 = vadd.f32 %v4999, %v4953
      %v5001 = vadd.f32 %v5000, %v4954
      %v5002 = vadd.f32 %v5001, %v4955
      %v5003 = vadd.f32 %v5002, %v4956
      %v5004 = vadd.f32 %v5003, %v4957
      %v5005 = vadd.f32 %v5004, %v4958
      %v5006 = vrot.slane %v5005, 4
      %v5007 = vadd.f32 %v5005, %v5006
      %v5008 = vrot.slane %v5007, 2
      %v5009 = vadd.f32 %v5007, %v5008
      %v5010 = vrot.slane %v5009, 1
      %v5011 = vadd.f32 %v5009, %v5010
      %vm5012 = vcmask 1040384
      %v5013 = vsel %vm5012, %v4910, %v5011
      %5014 = vst [vmem:[%s292] sm:$0x3] %v5013
      %v5015 = vpack.c.bf16 %v4474, %v4474
      %v5016 = vpack.c.bf16 %v4475, %v4475
      %v5017 = vpack.c.bf16 %v4476, %v4476
      %v5018 = vpack.c.bf16 %v4477, %v4477
      %v5019 = vpack.c.bf16 %v4478, %v4478
      %v5020 = vpack.c.bf16 %v4479, %v4479
      %v5021 = vpack.c.bf16 %v4480, %v4480
      %v5022 = vpack.c.bf16 %v4481, %v4481
      %v5023 = vpack.c.bf16 %v4482, %v4482
      %v5024 = vpack.c.bf16 %v4483, %v4483
      %v5025 = vpack.c.bf16 %v4484, %v4484
      %v5026 = vpack.c.bf16 %v4485, %v4485
      %v5027 = vpack.c.bf16 %v4486, %v4486
      %v5028 = vpack.c.bf16 %v4487, %v4487
      %v5029 = vpack.c.bf16 %v4488, %v4488
      %v5030 = vpack.c.bf16 %v4489, %v4489
      %v5031 = vpack.c.bf16 %v4490, %v4490
      %v5032 = vpack.c.bf16 %v4491, %v4491
      %v5033 = vpack.c.bf16 %v4492, %v4492
      %v5034 = vpack.c.bf16 %v4493, %v4493
      %v5035 = vpack.c.bf16 %v4494, %v4494
      %v5036 = vpack.c.bf16 %v4495, %v4495
      %v5037 = vpack.c.bf16 %v4496, %v4496
      %v5038 = vpack.c.bf16 %v4497, %v4497
      %v5039 = vpack.c.bf16 %v4498, %v4498
      %v5040 = vpack.c.bf16 %v4499, %v4499
      %v5041 = vpack.c.bf16 %v4500, %v4500
      %v5042 = vpack.c.bf16 %v4501, %v4501
      %v5043 = vpack.c.bf16 %v4502, %v4502
      %v5044 = vpack.c.bf16 %v4503, %v4503
      %v5045 = vpack.c.bf16 %v4504, %v4504
      %v5046 = vpack.c.bf16 %v4505, %v4505
      %v5047 = vpack.c.bf16 %v4506, %v4506
      %v5048 = vpack.c.bf16 %v4507, %v4507
      %v5049 = vpack.c.bf16 %v4508, %v4508
      %v5050 = vpack.c.bf16 %v4509, %v4509
      %v5051 = vpack.c.bf16 %v4510, %v4510
      %v5052 = vpack.c.bf16 %v4511, %v4511
      %v5053 = vpack.c.bf16 %v4512, %v4512
      %v5054 = vpack.c.bf16 %v4513, %v4513
      %v5055 = vpack.c.bf16 %v4514, %v4514
      %v5056 = vpack.c.bf16 %v4515, %v4515
      %v5057 = vpack.c.bf16 %v4516, %v4516
      %v5058 = vpack.c.bf16 %v4517, %v4517
      %v5059 = vpack.c.bf16 %v4518, %v4518
      %v5060 = vpack.c.bf16 %v4519, %v4519
      %v5061 = vpack.c.bf16 %v4520, %v4520
      %v5062 = vpack.c.bf16 %v4521, %v4521
      %5063 = vst [vmem:[%s287] sm:$0xf] %v5015
      %5064 = vst [vmem:[%s287 + $0x4] sm:$0xf] %v5016
      %5065 = vst [vmem:[%s287 + $0x8] sm:$0xf] %v5017
      %5066 = vst [vmem:[%s287 + $0xc] sm:$0xf] %v5018
      %5067 = vst [vmem:[%s287 + $0x10] sm:$0xf] %v5019
      %5068 = vst [vmem:[%s287 + $0x14] sm:$0xf] %v5020
      %5069 = vst [vmem:[%s287 + $0x18] sm:$0xf] %v5021
      %5070 = vst [vmem:[%s287 + $0x1c] sm:$0xf] %v5022
      %5071 = vst [vmem:[%s287 + $0x20] sm:$0xf] %v5023
      %5072 = vst [vmem:[%s287 + $0x24] sm:$0xf] %v5024
      %5073 = vst [vmem:[%s287 + $0x28] sm:$0xf] %v5025
      %5074 = vst [vmem:[%s287 + $0x2c] sm:$0xf] %v5026
      %5075 = vst [vmem:[%s287 + $0x30] sm:$0xf] %v5027
      %5076 = vst [vmem:[%s287 + $0x34] sm:$0xf] %v5028
      %5077 = vst [vmem:[%s287 + $0x38] sm:$0xf] %v5029
      %5078 = vst [vmem:[%s287 + $0x3c] sm:$0xf] %v5030
      %5079 = vst [vmem:[%s287 + $0x40] sm:$0xf] %v5031
      %5080 = vst [vmem:[%s287 + $0x44] sm:$0xf] %v5032
      %5081 = vst [vmem:[%s287 + $0x48] sm:$0xf] %v5033
      %5082 = vst [vmem:[%s287 + $0x4c] sm:$0xf] %v5034
      %5083 = vst [vmem:[%s287 + $0x50] sm:$0xf] %v5035
      %5084 = vst [vmem:[%s287 + $0x54] sm:$0xf] %v5036
      %5085 = vst [vmem:[%s287 + $0x58] sm:$0xf] %v5037
      %5086 = vst [vmem:[%s287 + $0x5c] sm:$0xf] %v5038
      %5087 = vst [vmem:[%s287 + $0x60] sm:$0xf] %v5039
      %5088 = vst [vmem:[%s287 + $0x64] sm:$0xf] %v5040
      %5089 = vst [vmem:[%s287 + $0x68] sm:$0xf] %v5041
      %5090 = vst [vmem:[%s287 + $0x6c] sm:$0xf] %v5042
      %5091 = vst [vmem:[%s287 + $0x70] sm:$0xf] %v5043
      %5092 = vst [vmem:[%s287 + $0x74] sm:$0xf] %v5044
      %5093 = vst [vmem:[%s287 + $0x78] sm:$0xf] %v5045
      %5094 = vst [vmem:[%s287 + $0x7c] sm:$0xf] %v5046
      %5095 = vst [vmem:[%s287 + $0x80] sm:$0xf] %v5047
      %5096 = vst [vmem:[%s287 + $0x84] sm:$0xf] %v5048
      %5097 = vst [vmem:[%s287 + $0x88] sm:$0xf] %v5049
      %5098 = vst [vmem:[%s287 + $0x8c] sm:$0xf] %v5050
      %5099 = vst [vmem:[%s287 + $0x90] sm:$0xf] %v5051
      %5100 = vst [vmem:[%s287 + $0x94] sm:$0xf] %v5052
      %5101 = vst [vmem:[%s287 + $0x98] sm:$0xf] %v5053
      %5102 = vst [vmem:[%s287 + $0x9c] sm:$0xf] %v5054
      %5103 = vst [vmem:[%s287 + $0xa0] sm:$0xf] %v5055
      %5104 = vst [vmem:[%s287 + $0xa4] sm:$0xf] %v5056
      %5105 = vst [vmem:[%s287 + $0xa8] sm:$0xf] %v5057
      %5106 = vst [vmem:[%s287 + $0xac] sm:$0xf] %v5058
      %5107 = vst [vmem:[%s287 + $0xb0] sm:$0xf] %v5059
      %5108 = vst [vmem:[%s287 + $0xb4] sm:$0xf] %v5060
      %5109 = vst [vmem:[%s287 + $0xb8] sm:$0xf] %v5061
      %5110 = vst [vmem:[%s287 + $0xbc] sm:$0xf] %v5062
      %s5111 = smul.u32 48, %s19
      %p5112 = scmp.lt.s32.totalorder %s5111, 95
      %s5113 = scalar_select %p5112, %s5111, 95
      %s5114 = smul.addr %s5113, 4
      %s5115 = scalar_lea.vmem %s6, %s5114
      %p5116 = scmp.lt.s32.totalorder %s19, 1
      %s5117 = scalar_select %p5116, %s19, 1
      %s5118 = smul.addr %s5117, 2
      %s5119 = scalar_lea.vmem %s7, %s5118
      // Predicated region
      $region45: #{bottleneck_forward.5} parent=43 // pred_check
        %p5120 = pneg %p168
      $region46: #{bottleneck_forward.5} parent=43 // pred_check_branch
        %5122 = sbr.rel (%p5120) target = $region48
      $region47: #{bottleneck_forward.5} parent=43 // pred_region
        %s5123 = smul.u32 48, %s19
      $region48: #{bottleneck_forward.5} parent=43 // pred_fallthru
        _
      // Predicated region
      $region49: #{bottleneck_forward.5} parent=43 // pred_check
        %p5124 = pneg %p194
      $region50: #{bottleneck_forward.5} parent=43 // pred_check_branch
        %5126 = sbr.rel (%p5124) target = $region52
      $region51: #{bottleneck_forward.5} parent=43 // pred_region
        _
      $region52: #{bottleneck_forward.5} parent=43 // pred_fallthru
        _
    $region44: #{bottleneck_forward.5} parent=5 // pred_fallthru
      _
    %p5127 = scmp.le.s32.totalorder 2, %s14
    // Predicated region
    $region53: #{bottleneck_forward.5} parent=5 // pred_check
      %p5128 = pneg %p5127
    $region54: #{bottleneck_forward.5} parent=5 // pred_check_branch
      %5130 = sbr.rel (%p5128) target = $region56
    $region55: #{bottleneck_forward.5} parent=5 // pred_region
      %s5131 = ssub.s32 %s14, 2
      // Predicated region
      $region57: #{bottleneck_forward.5} parent=55 // pred_check
        %p5132 = pneg %p174
      $region58: #{bottleneck_forward.5} parent=55 // pred_check_branch
        %5134 = sbr.rel (%p5132) target = $region60
      $region59: #{bottleneck_forward.5} parent=55 // pred_region
        %s5135 = smul.u32 48, %s20
        %p5136 = scmp.lt.s32.totalorder %s5135, 95
        %s5137 = scalar_select %p5136, %s5135, 95
        %s5138 = smul.addr %s5137, 4
        %s5139 = scalar_lea.vmem %s6, %s5138
      $region60: #{bottleneck_forward.5} parent=55 // pred_fallthru
        _
      // Predicated region
      $region61: #{bottleneck_forward.5} parent=55 // pred_check
        %p5140 = pneg %p200
      $region62: #{bottleneck_forward.5} parent=55 // pred_check_branch
        %5142 = sbr.rel (%p5140) target = $region64
      $region63: #{bottleneck_forward.5} parent=55 // pred_region
        %p5143 = scmp.lt.s32.totalorder %s20, 1
        %s5144 = scalar_select %p5143, %s20, 1
        %s5145 = smul.addr %s5144, 2
        %s5146 = scalar_lea.vmem %s7, %s5145
      $region64: #{bottleneck_forward.5} parent=55 // pred_fallthru
        _
    $region56: #{bottleneck_forward.5} parent=5 // pred_fallthru
      _
  $region6: #{bottleneck_forward.5} parent=0 // loop_footer
    %s18 = sadd.s32 1, %s14
  $region7: #{bottleneck_forward.5} parent=0 // loop_footer_branch
    %13 = sbr.rel target = $region3
  $region8: #{bottleneck_forward.5} parent=0 // loop_exit
    _

</llo_original>
